<compile_context>
chip_gen: v7x
topology: tpu7x:2x2x1
jax: 0.10.0
libtpu: 0.0.40
codegen_flags: <defaults>
</compile_context>

<pallas_src>
import functools

import jax
import jax.numpy as jnp
import numpy as np
from jax.experimental import pallas as pl
from jax.experimental.pallas import tpu as pltpu


# --------------------------------------------------------------------------
# In-kernel helpers
# --------------------------------------------------------------------------
def _lstm_cell(gates, c_prev, H):
    """One LSTM cell update from pre-activation gates (B, 4H), order i|f|o|g
    (host-permuted), so sigmoid covers 3H and tanh only the g quarter."""
    sg = jax.nn.sigmoid(gates[:, 0:3 * H])
    g = jnp.tanh(gates[:, 3 * H:4 * H])
    i = sg[:, 0:H]
    f = sg[:, H:2 * H]
    o = sg[:, 2 * H:3 * H]
    c = f * c_prev + i * g
    h = o * jnp.tanh(c)
    return h, c


# --------------------------------------------------------------------------
# Fully fused kernel: fc1 -> (fc21|fc22) -> lin1 -> lin2 -> [z = mu]
#                     -> lin3 -> lin4 -> fc3 -> (fc41|fc42)
# --------------------------------------------------------------------------
def _svs_vae_kernel(x_ref,
                    wih1_ref, whh1_ref, b1_ref,
                    wih2_ref, whh2_ref, b2_ref,
                    wl1_ref, bl1_ref, wl2_ref, bl2_ref,
                    wl3_ref, bl3_ref, wl4_ref, bl4_ref,
                    wih3_ref, whh3_ref, b3_ref,
                    wih4_ref, whh4_ref, b4_ref,
                    mu_ref, lv_ref, dec_ref,
                    *, T, B, Mi, L, Mo, Dout):
    f32 = jnp.float32
    relu = lambda v: jnp.maximum(v, 0.0)

    # ---------------- encoder: fc1 LSTM -------------------------------------
    # Hoisted all-timestep input projection (off the recurrence chain).
    gx1 = (jnp.dot(x_ref[...], wih1_ref[...], preferred_element_type=f32)
           + b1_ref[...])                                      # (T*B, 4*Mi)
    whh1 = whh1_ref[...]
    h = jnp.zeros((B, Mi), f32)
    c = jnp.zeros((B, Mi), f32)
    a1 = []                                                    # relu(h1_t), vreg-carried
    for t in range(T):
        g = gx1[t * B:(t + 1) * B, :] + jnp.dot(h, whh1,
                                                preferred_element_type=f32)
        h, c = _lstm_cell(g, c, Mi)
        a1.append(relu(h))          # ReLU on the LSTM *output*; recurrent h stays raw.

    # ---------------- encoder: fused fc21/fc22 LSTM (mean | var) -------------
    Hc = 2 * L
    wih2 = wih2_ref[...]
    whh2 = whh2_ref[...]
    b2 = b2_ref[...]
    h = jnp.zeros((B, Hc), f32)
    c = jnp.zeros((B, Hc), f32)
    h2 = []
    for t in range(T):
        # Input projection does not depend on h -> off the serial chain.
        g = (jnp.dot(a1[t], wih2, preferred_element_type=f32) + b2
             + jnp.dot(h, whh2, preferred_element_type=f32))
        h, c = _lstm_cell(g, c, Hc)
        h2.append(h)
    # De-interleave mean/var ONCE after the loop into lane-dense (B, T*L),
    # column = t*L + l (lin1 rows are host-permuted to match).
    mean_flat = jnp.concatenate([v[:, 0:L] for v in h2], axis=1)
    var_flat = jnp.concatenate([v[:, L:2 * L] for v in h2], axis=1)

    # ---------------- MLP head: lin1 -> relu -> lin2 -> relu -----------------
    wl1 = wl1_ref[...]
    bl1 = bl1_ref[...]
    wl2 = wl2_ref[...]
    bl2 = bl2_ref[...]
    mu = relu(jnp.dot(relu(jnp.dot(mean_flat, wl1, preferred_element_type=f32)
                           + bl1), wl2, preferred_element_type=f32) + bl2)
    lv = relu(jnp.dot(relu(jnp.dot(var_flat, wl1, preferred_element_type=f32)
                           + bl1), wl2, preferred_element_type=f32) + bl2)
    mu_ref[...] = mu
    lv_ref[...] = lv

    # ---------------- reparameterize (eval mode) + decoder -------------------
    # TODO(synk): training-mode path z = mu + eps*exp(0.5*logvar) needs RNG
    # noise (pltpu.prng_seed/prng_random_bits or a wrapper-supplied tensor).
    z = mu
    z1 = relu(jnp.dot(z, wl3_ref[...], preferred_element_type=f32)
              + bl3_ref[...])                                  # (B, v_mid)
    z2 = relu(jnp.dot(z1, wl4_ref[...], preferred_element_type=f32)
              + bl4_ref[...])                                  # (B, T*L), col = t*L + l

    # ---------------- decoder: fc3 LSTM --------------------------------------
    wih3 = wih3_ref[...]
    whh3 = whh3_ref[...]
    b3 = b3_ref[...]
    h = jnp.zeros((B, Mo), f32)
    c = jnp.zeros((B, Mo), f32)
    a3 = []
    for t in range(T):
        g = (jnp.dot(z2[:, t * L:(t + 1) * L], wih3,
                     preferred_element_type=f32) + b3
             + jnp.dot(h, whh3, preferred_element_type=f32))
        h, c = _lstm_cell(g, c, Mo)
        a3.append(relu(h))

    # ---------------- decoder: fused fc41/fc42 LSTM (muTheta | logvarTheta) --
    Hd = 2 * Dout
    wih4 = wih4_ref[...]
    whh4 = whh4_ref[...]
    b4 = b4_ref[...]
    h = jnp.zeros((B, Hd), f32)
    c = jnp.zeros((B, Hd), f32)
    h4 = []
    for t in range(T):
        g = (jnp.dot(a3[t], wih4, preferred_element_type=f32) + b4
             + jnp.dot(h, whh4, preferred_element_type=f32))
        h, c = _lstm_cell(g, c, Hd)
        h4.append(h)
    # One lane-dense (B, T*2*Dout) store; column block t = [muTheta_t | logvarTheta_t].
    dec_ref[...] = jnp.concatenate(h4, axis=1)


# --------------------------------------------------------------------------
# pallas_call wrapper
# --------------------------------------------------------------------------
def _full_spec(shape):
    """Whole-array block resident in VMEM for grid=(1,)."""
    return pl.BlockSpec(shape, lambda i: (0,) * len(shape))


def svs_vae_forward(params, x):
    T, B, Din = x.shape
    Mi = params["fc1"]["w_hh"].shape[0]
    L = params["fc2x"]["w_hh"].shape[0] // 2
    Mo = params["fc3"]["w_hh"].shape[0]
    Dout = params["fc4x"]["w_hh"].shape[0] // 2
    v_latent = params["lin2"]["w"].shape[1]
    x2 = x.reshape(T * B, Din)   # contiguous, free reshape

    args = (x2,
            params["fc1"]["w_ih"], params["fc1"]["w_hh"], params["fc1"]["b"],
            params["fc2x"]["w_ih"], params["fc2x"]["w_hh"], params["fc2x"]["b"],
            params["lin1"]["w"], params["lin1"]["b"],
            params["lin2"]["w"], params["lin2"]["b"],
            params["lin3"]["w"], params["lin3"]["b"],
            params["lin4"]["w"], params["lin4"]["b"],
            params["fc3"]["w_ih"], params["fc3"]["w_hh"], params["fc3"]["b"],
            params["fc4x"]["w_ih"], params["fc4x"]["w_hh"], params["fc4x"]["b"])
    kernel = functools.partial(_svs_vae_kernel,
                               T=T, B=B, Mi=Mi, L=L, Mo=Mo, Dout=Dout)
    mu, logvar, dec = pl.pallas_call(
        kernel,
        out_shape=(jax.ShapeDtypeStruct((B, v_latent), jnp.float32),
                   jax.ShapeDtypeStruct((B, v_latent), jnp.float32),
                   jax.ShapeDtypeStruct((B, T * 2 * Dout), jnp.float32)),
        grid_spec=pltpu.PrefetchScalarGridSpec(
            num_scalar_prefetch=0,
            grid=(1,),
            in_specs=[_full_spec(a.shape) for a in args],
            out_specs=(_full_spec((B, v_latent)),
                       _full_spec((B, v_latent)),
                       _full_spec((B, T * 2 * Dout)))),
        compiler_params=pltpu.CompilerParams(
            dimension_semantics=("arbitrary",)),
    )(*args)

    # Un-flatten the lane-dense decoder slab to PyTorch's (T, B, Dout) outputs.
    dec4 = dec.reshape(B, T, 2, Dout)
    mu_theta = jnp.transpose(dec4[:, :, 0, :], (1, 0, 2))
    logvar_theta = jnp.transpose(dec4[:, :, 1, :], (1, 0, 2))
    return mu_theta, logvar_theta, mu, logvar


# --------------------------------------------------------------------------
# Parameter init (PyTorch-style) + host-side weight preparation
# --------------------------------------------------------------------------
def init_lstm_params(key, in_dim, hidden):
    k = 1.0 / float(hidden) ** 0.5
    k1, k2, k3, k4 = jax.random.split(key, 4)
    w_ih = jax.random.uniform(k1, (4 * hidden, in_dim), jnp.float32, -k, k)
    w_hh = jax.random.uniform(k2, (4 * hidden, hidden), jnp.float32, -k, k)
    b_ih = jax.random.uniform(k3, (4 * hidden,), jnp.float32, -k, k)
    b_hh = jax.random.uniform(k4, (4 * hidden,), jnp.float32, -k, k)
    return dict(w_ih=w_ih.T, w_hh=w_hh.T, b=(b_ih + b_hh).reshape(1, -1))


def init_linear_params(key, in_dim, out_dim):
    k = 1.0 / float(in_dim) ** 0.5
    k1, k2 = jax.random.split(key)
    w = jax.random.uniform(k1, (out_dim, in_dim), jnp.float32, -k, k)
    b = jax.random.uniform(k2, (out_dim,), jnp.float32, -k, k)
    return dict(w=w.T, b=b.reshape(1, -1))


def init_raw_params(key, input_dim, output_dim, seq_length,
                    mid_dim_i, mid_dim_o, latent_dim, v_mid, v_latent):
    keys = jax.random.split(key, 10)
    return dict(
        fc1=init_lstm_params(keys[0], input_dim, mid_dim_i),
        fc21=init_lstm_params(keys[1], mid_dim_i, latent_dim),
        fc22=init_lstm_params(keys[2], mid_dim_i, latent_dim),
        fc3=init_lstm_params(keys[3], latent_dim, mid_dim_o),
        fc41=init_lstm_params(keys[4], mid_dim_o, output_dim),
        fc42=init_lstm_params(keys[5], mid_dim_o, output_dim),
        lin1=init_linear_params(keys[6], latent_dim * seq_length, v_mid),
        lin2=init_linear_params(keys[7], v_mid, v_latent),
        lin3=init_linear_params(keys[8], v_latent, v_mid),
        lin4=init_linear_params(keys[9], v_mid, latent_dim * seq_length),
    )


def reorder_lstm_gates(p):
    """Permute gate columns from PyTorch i|f|g|o to kernel i|f|o|g order."""
    H = p["w_hh"].shape[0]

    def perm(w):
        return jnp.concatenate(
            [w[:, 0:2 * H], w[:, 3 * H:4 * H], w[:, 2 * H:3 * H]], axis=1)

    return dict(w_ih=perm(p["w_ih"]), w_hh=perm(p["w_hh"]), b=perm(p["b"]))


def fuse_lstm_pair(pa, pb):
    """Fuse two same-shape LSTMs sharing the same input into one LSTM of hidden
    width 2H.  Gate columns use kernel order i|f|o|g with per-gate [a|b]
    interleave so the fused state keeps the layout [h_a | h_b]; recurrent
    weights become block-diagonal."""
    H = pa["w_hh"].shape[0]
    order = [0, 1, 3, 2]          # i,f,g,o -> i,f,o,g

    def ilv(a, b):
        r = a.shape[0]
        a4 = a.reshape(r, 4, H)[:, order, :]
        b4 = b.reshape(r, 4, H)[:, order, :]
        return jnp.concatenate([a4, b4], axis=-1).reshape(r, 8 * H)

    w_ih = ilv(pa["w_ih"], pb["w_ih"])
    w_hh = jnp.concatenate(
        [ilv(pa["w_hh"], jnp.zeros_like(pb["w_hh"])),
         ilv(jnp.zeros_like(pa["w_hh"]), pb["w_hh"])], axis=0)
    b = ilv(pa["b"], pb["b"])
    return dict(w_ih=w_ih, w_hh=w_hh, b=b)


def prepare_params(raw, seq_length, latent_dim):
    """Host-side weight prep: gate reorder to i|f|o|g, fuse LSTM pairs, permute
    lin1 rows / lin4 cols from the PyTorch (l*T + t) flatten order to the
    kernel's lane-dense (t*L + l)."""
    T, L = seq_length, latent_dim
    v_mid = raw["lin1"]["w"].shape[1]
    wl1 = raw["lin1"]["w"].reshape(L, T, v_mid).transpose(1, 0, 2)
    wl1 = wl1.reshape(T * L, v_mid)
    vm = raw["lin4"]["w"].shape[0]
    wl4 = raw["lin4"]["w"].reshape(vm, L, T).transpose(0, 2, 1).reshape(vm, T * L)
    bl4 = raw["lin4"]["b"].reshape(1, L, T).transpose(0, 2, 1).reshape(1, T * L)
    return dict(
        fc1=reorder_lstm_gates(raw["fc1"]),
        fc2x=fuse_lstm_pair(raw["fc21"], raw["fc22"]),
        fc3=reorder_lstm_gates(raw["fc3"]),
        fc4x=fuse_lstm_pair(raw["fc41"], raw["fc42"]),
        lin1=dict(w=wl1, b=raw["lin1"]["b"]),
        lin2=raw["lin2"],
        lin3=raw["lin3"],
        lin4=dict(w=wl4, b=bl4),
    )


# --------------------------------------------------------------------------
# Pure-JAX reference (mirrors the PyTorch module, eval mode) for self-check
# --------------------------------------------------------------------------
def _ref_lstm(x, p):
    _, B, _ = x.shape
    H = p["w_hh"].shape[0]

    def cell(carry, x_t):
        h, c = carry
        g = x_t @ p["w_ih"] + h @ p["w_hh"] + p["b"]
        i = jax.nn.sigmoid(g[:, 0:H])
        f = jax.nn.sigmoid(g[:, H:2 * H])
        gg = jnp.tanh(g[:, 2 * H:3 * H])
        o = jax.nn.sigmoid(g[:, 3 * H:4 * H])
        c = f * c + i * gg
        h = o * jnp.tanh(c)
        return (h, c), h

    init = (jnp.zeros((B, H), jnp.float32), jnp.zeros((B, H), jnp.float32))
    _, hs = jax.lax.scan(cell, init, x)
    return hs


def svs_vae_reference(raw, x, latent_dim):
    T, B, _ = x.shape
    relu = lambda v: jnp.maximum(v, 0.0)
    lin = lambda v, p: v @ p["w"] + p["b"]
    h1 = relu(_ref_lstm(x, raw["fc1"]))
    out21 = _ref_lstm(h1, raw["fc21"])
    out22 = _ref_lstm(h1, raw["fc22"])
    out_mean = jnp.transpose(out21, (1, 2, 0)).reshape(B, -1)
    out_var = jnp.transpose(out22, (1, 2, 0)).reshape(B, -1)
    mu = relu(lin(relu(lin(out_mean, raw["lin1"])), raw["lin2"]))
    logvar = relu(lin(relu(lin(out_var, raw["lin1"])), raw["lin2"]))
    z = mu
    z1 = relu(lin(z, raw["lin3"]))
    z2 = relu(lin(z1, raw["lin4"]))
    zseq = jnp.transpose(z2.reshape(B, latent_dim, T), (2, 0, 1))
    h3 = relu(_ref_lstm(zseq, raw["fc3"]))
    mu_theta = _ref_lstm(h3, raw["fc41"])
    logvar_theta = _ref_lstm(h3, raw["fc42"])
    return mu_theta, logvar_theta, mu, logvar


# --------------------------------------------------------------------------
# Main
# --------------------------------------------------------------------------
if __name__ == "__main__":
    input_dim, output_dim = 8, 8
    seq_length = 8
    mid_dim_i, mid_dim_o = 32, 64
    latent_dim = 16
    v_mid, v_latent = 128, 32
    batch = 2

    key = jax.random.PRNGKey(0)
    pkey, xkey = jax.random.split(key)
    raw = init_raw_params(pkey, input_dim, output_dim, seq_length,
                          mid_dim_i, mid_dim_o, latent_dim, v_mid, v_latent)
    params = prepare_params(raw, seq_length, latent_dim)
    x = jax.random.normal(xkey, (seq_length, batch, input_dim), jnp.float32)

    fwd = jax.jit(svs_vae_forward)
    mu_theta, logvar_theta, mu, logvar = fwd(params, x)
    jax.block_until_ready((mu_theta, logvar_theta, mu, logvar))

    assert mu_theta.shape == (seq_length, batch, output_dim)
    assert logvar_theta.shape == (seq_length, batch, output_dim)
    assert mu.shape == (batch, v_latent)
    assert logvar.shape == (batch, v_latent)

    # Numerical self-check against the pure-JAX mirror of the PyTorch module.
    r_mu_t, r_lv_t, r_mu, r_lv = jax.jit(
        functools.partial(svs_vae_reference, latent_dim=latent_dim))(raw, x)
    for got, want in ((mu_theta, r_mu_t), (logvar_theta, r_lv_t),
                      (mu, r_mu), (logvar, r_lv)):
        np.testing.assert_allclose(np.asarray(got), np.asarray(want),
                                   rtol=5e-2, atol=1e-2)

    print("KERNEL_OK")
</pallas_src>

<mosaic_0001>
module attributes {stable_mosaic.version = 11 : i64} {
  func.func @_svs_vae_kernel(%arg0: i32, %arg1: memref<16x8xf32, #tpu.memory_space<vmem>>, %arg2: memref<8x128xf32, #tpu.memory_space<vmem>>, %arg3: memref<32x128xf32, #tpu.memory_space<vmem>>, %arg4: memref<1x128xf32, #tpu.memory_space<vmem>>, %arg5: memref<32x128xf32, #tpu.memory_space<vmem>>, %arg6: memref<32x128xf32, #tpu.memory_space<vmem>>, %arg7: memref<1x128xf32, #tpu.memory_space<vmem>>, %arg8: memref<128x128xf32, #tpu.memory_space<vmem>>, %arg9: memref<1x128xf32, #tpu.memory_space<vmem>>, %arg10: memref<128x32xf32, #tpu.memory_space<vmem>>, %arg11: memref<1x32xf32, #tpu.memory_space<vmem>>, %arg12: memref<32x128xf32, #tpu.memory_space<vmem>>, %arg13: memref<1x128xf32, #tpu.memory_space<vmem>>, %arg14: memref<128x128xf32, #tpu.memory_space<vmem>>, %arg15: memref<1x128xf32, #tpu.memory_space<vmem>>, %arg16: memref<16x256xf32, #tpu.memory_space<vmem>>, %arg17: memref<64x256xf32, #tpu.memory_space<vmem>>, %arg18: memref<1x256xf32, #tpu.memory_space<vmem>>, %arg19: memref<64x64xf32, #tpu.memory_space<vmem>>, %arg20: memref<16x64xf32, #tpu.memory_space<vmem>>, %arg21: memref<1x64xf32, #tpu.memory_space<vmem>>, %arg22: memref<2x32xf32, #tpu.memory_space<vmem>>, %arg23: memref<2x32xf32, #tpu.memory_space<vmem>>, %arg24: memref<2x128xf32, #tpu.memory_space<vmem>>) attributes {dimension_semantics = [#tpu.dimension_semantics<arbitrary>], iteration_bounds = array<i64: 1>, scalar_prefetch = 0 : i64, scratch_operands = 0 : i64, tpu.core_type = #tpu.core_type<tc>, window_params = [{pipeline_mode = #tpu.pipeline_mode<synchronous>, transform_indices = @transform_0, window_bounds = array<i64: 16, 8>}, {pipeline_mode = #tpu.pipeline_mode<synchronous>, transform_indices = @transform_1, window_bounds = array<i64: 8, 128>}, {pipeline_mode = #tpu.pipeline_mode<synchronous>, transform_indices = @transform_2, window_bounds = array<i64: 32, 128>}, {pipeline_mode = #tpu.pipeline_mode<synchronous>, transform_indices = @transform_3, window_bounds = array<i64: 1, 128>}, {pipeline_mode = #tpu.pipeline_mode<synchronous>, transform_indices = @transform_4, window_bounds = array<i64: 32, 128>}, {pipeline_mode = #tpu.pipeline_mode<synchronous>, transform_indices = @transform_5, window_bounds = array<i64: 32, 128>}, {pipeline_mode = #tpu.pipeline_mode<synchronous>, transform_indices = @transform_6, window_bounds = array<i64: 1, 128>}, {pipeline_mode = #tpu.pipeline_mode<synchronous>, transform_indices = @transform_7, window_bounds = array<i64: 128, 128>}, {pipeline_mode = #tpu.pipeline_mode<synchronous>, transform_indices = @transform_8, window_bounds = array<i64: 1, 128>}, {pipeline_mode = #tpu.pipeline_mode<synchronous>, transform_indices = @transform_9, window_bounds = array<i64: 128, 32>}, {pipeline_mode = #tpu.pipeline_mode<synchronous>, transform_indices = @transform_10, window_bounds = array<i64: 1, 32>}, {pipeline_mode = #tpu.pipeline_mode<synchronous>, transform_indices = @transform_11, window_bounds = array<i64: 32, 128>}, {pipeline_mode = #tpu.pipeline_mode<synchronous>, transform_indices = @transform_12, window_bounds = array<i64: 1, 128>}, {pipeline_mode = #tpu.pipeline_mode<synchronous>, transform_indices = @transform_13, window_bounds = array<i64: 128, 128>}, {pipeline_mode = #tpu.pipeline_mode<synchronous>, transform_indices = @transform_14, window_bounds = array<i64: 1, 128>}, {pipeline_mode = #tpu.pipeline_mode<synchronous>, transform_indices = @transform_15, window_bounds = array<i64: 16, 256>}, {pipeline_mode = #tpu.pipeline_mode<synchronous>, transform_indices = @transform_16, window_bounds = array<i64: 64, 256>}, {pipeline_mode = #tpu.pipeline_mode<synchronous>, transform_indices = @transform_17, window_bounds = array<i64: 1, 256>}, {pipeline_mode = #tpu.pipeline_mode<synchronous>, transform_indices = @transform_18, window_bounds = array<i64: 64, 64>}, {pipeline_mode = #tpu.pipeline_mode<synchronous>, transform_indices = @transform_19, window_bounds = array<i64: 16, 64>}, {pipeline_mode = #tpu.pipeline_mode<synchronous>, transform_indices = @transform_20, window_bounds = array<i64: 1, 64>}, {pipeline_mode = #tpu.pipeline_mode<synchronous>, transform_indices = @transform_21, window_bounds = array<i64: 2, 32>}, {pipeline_mode = #tpu.pipeline_mode<synchronous>, transform_indices = @transform_22, window_bounds = array<i64: 2, 32>}, {pipeline_mode = #tpu.pipeline_mode<synchronous>, transform_indices = @transform_23, window_bounds = array<i64: 2, 128>}]} {
    %c0 = arith.constant 0 : index
    %c0_0 = arith.constant 0 : index
    %0 = vector.load %arg1[%c0, %c0_0] : memref<16x8xf32, #tpu.memory_space<vmem>>, vector<16x8xf32>
    %c0_1 = arith.constant 0 : index
    %c0_2 = arith.constant 0 : index
    %1 = vector.load %arg2[%c0_1, %c0_2] : memref<8x128xf32, #tpu.memory_space<vmem>>, vector<8x128xf32>
    %cst = arith.constant dense<0.000000e+00> : vector<16x128xf32>
    %2 = tpu.matmul %0, %1, %cst {dimension_numbers = #tpu.dot_dimension_numbers<[1], [0], [0], [1], [0, 0, 1, 1], [], []>} : vector<16x8xf32>, vector<8x128xf32>, vector<16x128xf32> -> vector<16x128xf32>
    %c0_3 = arith.constant 0 : index
    %c0_4 = arith.constant 0 : index
    %3 = vector.load %arg4[%c0_3, %c0_4] : memref<1x128xf32, #tpu.memory_space<vmem>>, vector<1x128xf32>
    %4 = vector.broadcast %3 : vector<1x128xf32> to vector<16x128xf32>
    %5 = arith.addf %2, %4 : vector<16x128xf32>
    %c0_5 = arith.constant 0 : index
    %c0_6 = arith.constant 0 : index
    %6 = vector.load %arg3[%c0_5, %c0_6] : memref<32x128xf32, #tpu.memory_space<vmem>>, vector<32x128xf32>
    %cst_7 = arith.constant 0.000000e+00 : f32
    %7 = vector.broadcast %cst_7 : f32 to vector<2x32xf32>
    %cst_8 = arith.constant 0.000000e+00 : f32
    %8 = vector.broadcast %cst_8 : f32 to vector<2x32xf32>
    %9 = vector.extract_strided_slice %5 {offsets = [0, 0], sizes = [2, 128], strides = [1, 1]} : vector<16x128xf32> to vector<2x128xf32>
    %cst_9 = arith.constant dense<0.000000e+00> : vector<2x128xf32>
    %10 = tpu.matmul %7, %6, %cst_9 {dimension_numbers = #tpu.dot_dimension_numbers<[1], [0], [0], [1], [0, 0, 1, 1], [], []>} : vector<2x32xf32>, vector<32x128xf32>, vector<2x128xf32> -> vector<2x128xf32>
    %11 = arith.addf %9, %10 : vector<2x128xf32>
    %12 = vector.extract_strided_slice %11 {offsets = [0, 0], sizes = [2, 96], strides = [1, 1]} : vector<2x128xf32> to vector<2x96xf32>
    %13 = arith.negf %12 : vector<2x96xf32>
    %14 = math.exp %13 : vector<2x96xf32>
    %cst_10 = arith.constant 1.000000e+00 : f32
    %15 = vector.broadcast %cst_10 : f32 to vector<2x96xf32>
    %16 = arith.addf %15, %14 : vector<2x96xf32>
    %17 = arith.divf %15, %16 : vector<2x96xf32>
    %18 = vector.extract_strided_slice %11 {offsets = [0, 96], sizes = [2, 32], strides = [1, 1]} : vector<2x128xf32> to vector<2x32xf32>
    %19 = math.tanh %18 : vector<2x32xf32>
    %20 = vector.extract_strided_slice %17 {offsets = [0, 0], sizes = [2, 32], strides = [1, 1]} : vector<2x96xf32> to vector<2x32xf32>
    %21 = vector.extract_strided_slice %17 {offsets = [0, 32], sizes = [2, 32], strides = [1, 1]} : vector<2x96xf32> to vector<2x32xf32>
    %22 = vector.extract_strided_slice %17 {offsets = [0, 64], sizes = [2, 32], strides = [1, 1]} : vector<2x96xf32> to vector<2x32xf32>
    %23 = arith.mulf %21, %8 : vector<2x32xf32>
    %24 = arith.mulf %20, %19 : vector<2x32xf32>
    %25 = arith.addf %23, %24 : vector<2x32xf32>
    %26 = math.tanh %25 : vector<2x32xf32>
    %27 = arith.mulf %22, %26 : vector<2x32xf32>
    %cst_11 = arith.constant 0.000000e+00 : f32
    %28 = vector.broadcast %cst_11 : f32 to vector<2x32xf32>
    %29 = arith.maximumf %27, %28 : vector<2x32xf32>
    %30 = vector.extract_strided_slice %5 {offsets = [2, 0], sizes = [2, 128], strides = [1, 1]} : vector<16x128xf32> to vector<2x128xf32>
    %cst_12 = arith.constant dense<0.000000e+00> : vector<2x128xf32>
    %31 = tpu.matmul %27, %6, %cst_12 {dimension_numbers = #tpu.dot_dimension_numbers<[1], [0], [0], [1], [0, 0, 1, 1], [], []>} : vector<2x32xf32>, vector<32x128xf32>, vector<2x128xf32> -> vector<2x128xf32>
    %32 = arith.addf %30, %31 : vector<2x128xf32>
    %33 = vector.extract_strided_slice %32 {offsets = [0, 0], sizes = [2, 96], strides = [1, 1]} : vector<2x128xf32> to vector<2x96xf32>
    %34 = arith.negf %33 : vector<2x96xf32>
    %35 = math.exp %34 : vector<2x96xf32>
    %cst_13 = arith.constant 1.000000e+00 : f32
    %36 = vector.broadcast %cst_13 : f32 to vector<2x96xf32>
    %37 = arith.addf %36, %35 : vector<2x96xf32>
    %38 = arith.divf %36, %37 : vector<2x96xf32>
    %39 = vector.extract_strided_slice %32 {offsets = [0, 96], sizes = [2, 32], strides = [1, 1]} : vector<2x128xf32> to vector<2x32xf32>
    %40 = math.tanh %39 : vector<2x32xf32>
    %41 = vector.extract_strided_slice %38 {offsets = [0, 0], sizes = [2, 32], strides = [1, 1]} : vector<2x96xf32> to vector<2x32xf32>
    %42 = vector.extract_strided_slice %38 {offsets = [0, 32], sizes = [2, 32], strides = [1, 1]} : vector<2x96xf32> to vector<2x32xf32>
    %43 = vector.extract_strided_slice %38 {offsets = [0, 64], sizes = [2, 32], strides = [1, 1]} : vector<2x96xf32> to vector<2x32xf32>
    %44 = arith.mulf %42, %25 : vector<2x32xf32>
    %45 = arith.mulf %41, %40 : vector<2x32xf32>
    %46 = arith.addf %44, %45 : vector<2x32xf32>
    %47 = math.tanh %46 : vector<2x32xf32>
    %48 = arith.mulf %43, %47 : vector<2x32xf32>
    %cst_14 = arith.constant 0.000000e+00 : f32
    %49 = vector.broadcast %cst_14 : f32 to vector<2x32xf32>
    %50 = arith.maximumf %48, %49 : vector<2x32xf32>
    %51 = vector.extract_strided_slice %5 {offsets = [4, 0], sizes = [2, 128], strides = [1, 1]} : vector<16x128xf32> to vector<2x128xf32>
    %cst_15 = arith.constant dense<0.000000e+00> : vector<2x128xf32>
    %52 = tpu.matmul %48, %6, %cst_15 {dimension_numbers = #tpu.dot_dimension_numbers<[1], [0], [0], [1], [0, 0, 1, 1], [], []>} : vector<2x32xf32>, vector<32x128xf32>, vector<2x128xf32> -> vector<2x128xf32>
    %53 = arith.addf %51, %52 : vector<2x128xf32>
    %54 = vector.extract_strided_slice %53 {offsets = [0, 0], sizes = [2, 96], strides = [1, 1]} : vector<2x128xf32> to vector<2x96xf32>
    %55 = arith.negf %54 : vector<2x96xf32>
    %56 = math.exp %55 : vector<2x96xf32>
    %cst_16 = arith.constant 1.000000e+00 : f32
    %57 = vector.broadcast %cst_16 : f32 to vector<2x96xf32>
    %58 = arith.addf %57, %56 : vector<2x96xf32>
    %59 = arith.divf %57, %58 : vector<2x96xf32>
    %60 = vector.extract_strided_slice %53 {offsets = [0, 96], sizes = [2, 32], strides = [1, 1]} : vector<2x128xf32> to vector<2x32xf32>
    %61 = math.tanh %60 : vector<2x32xf32>
    %62 = vector.extract_strided_slice %59 {offsets = [0, 0], sizes = [2, 32], strides = [1, 1]} : vector<2x96xf32> to vector<2x32xf32>
    %63 = vector.extract_strided_slice %59 {offsets = [0, 32], sizes = [2, 32], strides = [1, 1]} : vector<2x96xf32> to vector<2x32xf32>
    %64 = vector.extract_strided_slice %59 {offsets = [0, 64], sizes = [2, 32], strides = [1, 1]} : vector<2x96xf32> to vector<2x32xf32>
    %65 = arith.mulf %63, %46 : vector<2x32xf32>
    %66 = arith.mulf %62, %61 : vector<2x32xf32>
    %67 = arith.addf %65, %66 : vector<2x32xf32>
    %68 = math.tanh %67 : vector<2x32xf32>
    %69 = arith.mulf %64, %68 : vector<2x32xf32>
    %cst_17 = arith.constant 0.000000e+00 : f32
    %70 = vector.broadcast %cst_17 : f32 to vector<2x32xf32>
    %71 = arith.maximumf %69, %70 : vector<2x32xf32>
    %72 = vector.extract_strided_slice %5 {offsets = [6, 0], sizes = [2, 128], strides = [1, 1]} : vector<16x128xf32> to vector<2x128xf32>
    %cst_18 = arith.constant dense<0.000000e+00> : vector<2x128xf32>
    %73 = tpu.matmul %69, %6, %cst_18 {dimension_numbers = #tpu.dot_dimension_numbers<[1], [0], [0], [1], [0, 0, 1, 1], [], []>} : vector<2x32xf32>, vector<32x128xf32>, vector<2x128xf32> -> vector<2x128xf32>
    %74 = arith.addf %72, %73 : vector<2x128xf32>
    %75 = vector.extract_strided_slice %74 {offsets = [0, 0], sizes = [2, 96], strides = [1, 1]} : vector<2x128xf32> to vector<2x96xf32>
    %76 = arith.negf %75 : vector<2x96xf32>
    %77 = math.exp %76 : vector<2x96xf32>
    %cst_19 = arith.constant 1.000000e+00 : f32
    %78 = vector.broadcast %cst_19 : f32 to vector<2x96xf32>
    %79 = arith.addf %78, %77 : vector<2x96xf32>
    %80 = arith.divf %78, %79 : vector<2x96xf32>
    %81 = vector.extract_strided_slice %74 {offsets = [0, 96], sizes = [2, 32], strides = [1, 1]} : vector<2x128xf32> to vector<2x32xf32>
    %82 = math.tanh %81 : vector<2x32xf32>
    %83 = vector.extract_strided_slice %80 {offsets = [0, 0], sizes = [2, 32], strides = [1, 1]} : vector<2x96xf32> to vector<2x32xf32>
    %84 = vector.extract_strided_slice %80 {offsets = [0, 32], sizes = [2, 32], strides = [1, 1]} : vector<2x96xf32> to vector<2x32xf32>
    %85 = vector.extract_strided_slice %80 {offsets = [0, 64], sizes = [2, 32], strides = [1, 1]} : vector<2x96xf32> to vector<2x32xf32>
    %86 = arith.mulf %84, %67 : vector<2x32xf32>
    %87 = arith.mulf %83, %82 : vector<2x32xf32>
    %88 = arith.addf %86, %87 : vector<2x32xf32>
    %89 = math.tanh %88 : vector<2x32xf32>
    %90 = arith.mulf %85, %89 : vector<2x32xf32>
    %cst_20 = arith.constant 0.000000e+00 : f32
    %91 = vector.broadcast %cst_20 : f32 to vector<2x32xf32>
    %92 = arith.maximumf %90, %91 : vector<2x32xf32>
    %93 = vector.extract_strided_slice %5 {offsets = [8, 0], sizes = [2, 128], strides = [1, 1]} : vector<16x128xf32> to vector<2x128xf32>
    %cst_21 = arith.constant dense<0.000000e+00> : vector<2x128xf32>
    %94 = tpu.matmul %90, %6, %cst_21 {dimension_numbers = #tpu.dot_dimension_numbers<[1], [0], [0], [1], [0, 0, 1, 1], [], []>} : vector<2x32xf32>, vector<32x128xf32>, vector<2x128xf32> -> vector<2x128xf32>
    %95 = arith.addf %93, %94 : vector<2x128xf32>
    %96 = vector.extract_strided_slice %95 {offsets = [0, 0], sizes = [2, 96], strides = [1, 1]} : vector<2x128xf32> to vector<2x96xf32>
    %97 = arith.negf %96 : vector<2x96xf32>
    %98 = math.exp %97 : vector<2x96xf32>
    %cst_22 = arith.constant 1.000000e+00 : f32
    %99 = vector.broadcast %cst_22 : f32 to vector<2x96xf32>
    %100 = arith.addf %99, %98 : vector<2x96xf32>
    %101 = arith.divf %99, %100 : vector<2x96xf32>
    %102 = vector.extract_strided_slice %95 {offsets = [0, 96], sizes = [2, 32], strides = [1, 1]} : vector<2x128xf32> to vector<2x32xf32>
    %103 = math.tanh %102 : vector<2x32xf32>
    %104 = vector.extract_strided_slice %101 {offsets = [0, 0], sizes = [2, 32], strides = [1, 1]} : vector<2x96xf32> to vector<2x32xf32>
    %105 = vector.extract_strided_slice %101 {offsets = [0, 32], sizes = [2, 32], strides = [1, 1]} : vector<2x96xf32> to vector<2x32xf32>
    %106 = vector.extract_strided_slice %101 {offsets = [0, 64], sizes = [2, 32], strides = [1, 1]} : vector<2x96xf32> to vector<2x32xf32>
    %107 = arith.mulf %105, %88 : vector<2x32xf32>
    %108 = arith.mulf %104, %103 : vector<2x32xf32>
    %109 = arith.addf %107, %108 : vector<2x32xf32>
    %110 = math.tanh %109 : vector<2x32xf32>
    %111 = arith.mulf %106, %110 : vector<2x32xf32>
    %cst_23 = arith.constant 0.000000e+00 : f32
    %112 = vector.broadcast %cst_23 : f32 to vector<2x32xf32>
    %113 = arith.maximumf %111, %112 : vector<2x32xf32>
    %114 = vector.extract_strided_slice %5 {offsets = [10, 0], sizes = [2, 128], strides = [1, 1]} : vector<16x128xf32> to vector<2x128xf32>
    %cst_24 = arith.constant dense<0.000000e+00> : vector<2x128xf32>
    %115 = tpu.matmul %111, %6, %cst_24 {dimension_numbers = #tpu.dot_dimension_numbers<[1], [0], [0], [1], [0, 0, 1, 1], [], []>} : vector<2x32xf32>, vector<32x128xf32>, vector<2x128xf32> -> vector<2x128xf32>
    %116 = arith.addf %114, %115 : vector<2x128xf32>
    %117 = vector.extract_strided_slice %116 {offsets = [0, 0], sizes = [2, 96], strides = [1, 1]} : vector<2x128xf32> to vector<2x96xf32>
    %118 = arith.negf %117 : vector<2x96xf32>
    %119 = math.exp %118 : vector<2x96xf32>
    %cst_25 = arith.constant 1.000000e+00 : f32
    %120 = vector.broadcast %cst_25 : f32 to vector<2x96xf32>
    %121 = arith.addf %120, %119 : vector<2x96xf32>
    %122 = arith.divf %120, %121 : vector<2x96xf32>
    %123 = vector.extract_strided_slice %116 {offsets = [0, 96], sizes = [2, 32], strides = [1, 1]} : vector<2x128xf32> to vector<2x32xf32>
    %124 = math.tanh %123 : vector<2x32xf32>
    %125 = vector.extract_strided_slice %122 {offsets = [0, 0], sizes = [2, 32], strides = [1, 1]} : vector<2x96xf32> to vector<2x32xf32>
    %126 = vector.extract_strided_slice %122 {offsets = [0, 32], sizes = [2, 32], strides = [1, 1]} : vector<2x96xf32> to vector<2x32xf32>
    %127 = vector.extract_strided_slice %122 {offsets = [0, 64], sizes = [2, 32], strides = [1, 1]} : vector<2x96xf32> to vector<2x32xf32>
    %128 = arith.mulf %126, %109 : vector<2x32xf32>
    %129 = arith.mulf %125, %124 : vector<2x32xf32>
    %130 = arith.addf %128, %129 : vector<2x32xf32>
    %131 = math.tanh %130 : vector<2x32xf32>
    %132 = arith.mulf %127, %131 : vector<2x32xf32>
    %cst_26 = arith.constant 0.000000e+00 : f32
    %133 = vector.broadcast %cst_26 : f32 to vector<2x32xf32>
    %134 = arith.maximumf %132, %133 : vector<2x32xf32>
    %135 = vector.extract_strided_slice %5 {offsets = [12, 0], sizes = [2, 128], strides = [1, 1]} : vector<16x128xf32> to vector<2x128xf32>
    %cst_27 = arith.constant dense<0.000000e+00> : vector<2x128xf32>
    %136 = tpu.matmul %132, %6, %cst_27 {dimension_numbers = #tpu.dot_dimension_numbers<[1], [0], [0], [1], [0, 0, 1, 1], [], []>} : vector<2x32xf32>, vector<32x128xf32>, vector<2x128xf32> -> vector<2x128xf32>
    %137 = arith.addf %135, %136 : vector<2x128xf32>
    %138 = vector.extract_strided_slice %137 {offsets = [0, 0], sizes = [2, 96], strides = [1, 1]} : vector<2x128xf32> to vector<2x96xf32>
    %139 = arith.negf %138 : vector<2x96xf32>
    %140 = math.exp %139 : vector<2x96xf32>
    %cst_28 = arith.constant 1.000000e+00 : f32
    %141 = vector.broadcast %cst_28 : f32 to vector<2x96xf32>
    %142 = arith.addf %141, %140 : vector<2x96xf32>
    %143 = arith.divf %141, %142 : vector<2x96xf32>
    %144 = vector.extract_strided_slice %137 {offsets = [0, 96], sizes = [2, 32], strides = [1, 1]} : vector<2x128xf32> to vector<2x32xf32>
    %145 = math.tanh %144 : vector<2x32xf32>
    %146 = vector.extract_strided_slice %143 {offsets = [0, 0], sizes = [2, 32], strides = [1, 1]} : vector<2x96xf32> to vector<2x32xf32>
    %147 = vector.extract_strided_slice %143 {offsets = [0, 32], sizes = [2, 32], strides = [1, 1]} : vector<2x96xf32> to vector<2x32xf32>
    %148 = vector.extract_strided_slice %143 {offsets = [0, 64], sizes = [2, 32], strides = [1, 1]} : vector<2x96xf32> to vector<2x32xf32>
    %149 = arith.mulf %147, %130 : vector<2x32xf32>
    %150 = arith.mulf %146, %145 : vector<2x32xf32>
    %151 = arith.addf %149, %150 : vector<2x32xf32>
    %152 = math.tanh %151 : vector<2x32xf32>
    %153 = arith.mulf %148, %152 : vector<2x32xf32>
    %cst_29 = arith.constant 0.000000e+00 : f32
    %154 = vector.broadcast %cst_29 : f32 to vector<2x32xf32>
    %155 = arith.maximumf %153, %154 : vector<2x32xf32>
    %156 = vector.extract_strided_slice %5 {offsets = [14, 0], sizes = [2, 128], strides = [1, 1]} : vector<16x128xf32> to vector<2x128xf32>
    %cst_30 = arith.constant dense<0.000000e+00> : vector<2x128xf32>
    %157 = tpu.matmul %153, %6, %cst_30 {dimension_numbers = #tpu.dot_dimension_numbers<[1], [0], [0], [1], [0, 0, 1, 1], [], []>} : vector<2x32xf32>, vector<32x128xf32>, vector<2x128xf32> -> vector<2x128xf32>
    %158 = arith.addf %156, %157 : vector<2x128xf32>
    %159 = vector.extract_strided_slice %158 {offsets = [0, 0], sizes = [2, 96], strides = [1, 1]} : vector<2x128xf32> to vector<2x96xf32>
    %160 = arith.negf %159 : vector<2x96xf32>
    %161 = math.exp %160 : vector<2x96xf32>
    %cst_31 = arith.constant 1.000000e+00 : f32
    %162 = vector.broadcast %cst_31 : f32 to vector<2x96xf32>
    %163 = arith.addf %162, %161 : vector<2x96xf32>
    %164 = arith.divf %162, %163 : vector<2x96xf32>
    %165 = vector.extract_strided_slice %158 {offsets = [0, 96], sizes = [2, 32], strides = [1, 1]} : vector<2x128xf32> to vector<2x32xf32>
    %166 = math.tanh %165 : vector<2x32xf32>
    %167 = vector.extract_strided_slice %164 {offsets = [0, 0], sizes = [2, 32], strides = [1, 1]} : vector<2x96xf32> to vector<2x32xf32>
    %168 = vector.extract_strided_slice %164 {offsets = [0, 32], sizes = [2, 32], strides = [1, 1]} : vector<2x96xf32> to vector<2x32xf32>
    %169 = vector.extract_strided_slice %164 {offsets = [0, 64], sizes = [2, 32], strides = [1, 1]} : vector<2x96xf32> to vector<2x32xf32>
    %170 = arith.mulf %168, %151 : vector<2x32xf32>
    %171 = arith.mulf %167, %166 : vector<2x32xf32>
    %172 = arith.addf %170, %171 : vector<2x32xf32>
    %173 = math.tanh %172 : vector<2x32xf32>
    %174 = arith.mulf %169, %173 : vector<2x32xf32>
    %cst_32 = arith.constant 0.000000e+00 : f32
    %175 = vector.broadcast %cst_32 : f32 to vector<2x32xf32>
    %176 = arith.maximumf %174, %175 : vector<2x32xf32>
    %c0_33 = arith.constant 0 : index
    %c0_34 = arith.constant 0 : index
    %177 = vector.load %arg5[%c0_33, %c0_34] : memref<32x128xf32, #tpu.memory_space<vmem>>, vector<32x128xf32>
    %c0_35 = arith.constant 0 : index
    %c0_36 = arith.constant 0 : index
    %178 = vector.load %arg6[%c0_35, %c0_36] : memref<32x128xf32, #tpu.memory_space<vmem>>, vector<32x128xf32>
    %c0_37 = arith.constant 0 : index
    %c0_38 = arith.constant 0 : index
    %179 = vector.load %arg7[%c0_37, %c0_38] : memref<1x128xf32, #tpu.memory_space<vmem>>, vector<1x128xf32>
    %cst_39 = arith.constant 0.000000e+00 : f32
    %180 = vector.broadcast %cst_39 : f32 to vector<2x32xf32>
    %cst_40 = arith.constant 0.000000e+00 : f32
    %181 = vector.broadcast %cst_40 : f32 to vector<2x32xf32>
    %cst_41 = arith.constant dense<0.000000e+00> : vector<2x128xf32>
    %182 = tpu.matmul %29, %177, %cst_41 {dimension_numbers = #tpu.dot_dimension_numbers<[1], [0], [0], [1], [0, 0, 1, 1], [], []>} : vector<2x32xf32>, vector<32x128xf32>, vector<2x128xf32> -> vector<2x128xf32>
    %183 = vector.broadcast %179 : vector<1x128xf32> to vector<2x128xf32>
    %184 = arith.addf %182, %183 : vector<2x128xf32>
    %cst_42 = arith.constant dense<0.000000e+00> : vector<2x128xf32>
    %185 = tpu.matmul %180, %178, %cst_42 {dimension_numbers = #tpu.dot_dimension_numbers<[1], [0], [0], [1], [0, 0, 1, 1], [], []>} : vector<2x32xf32>, vector<32x128xf32>, vector<2x128xf32> -> vector<2x128xf32>
    %186 = arith.addf %184, %185 : vector<2x128xf32>
    %187 = vector.extract_strided_slice %186 {offsets = [0, 0], sizes = [2, 96], strides = [1, 1]} : vector<2x128xf32> to vector<2x96xf32>
    %188 = arith.negf %187 : vector<2x96xf32>
    %189 = math.exp %188 : vector<2x96xf32>
    %cst_43 = arith.constant 1.000000e+00 : f32
    %190 = vector.broadcast %cst_43 : f32 to vector<2x96xf32>
    %191 = arith.addf %190, %189 : vector<2x96xf32>
    %192 = arith.divf %190, %191 : vector<2x96xf32>
    %193 = vector.extract_strided_slice %186 {offsets = [0, 96], sizes = [2, 32], strides = [1, 1]} : vector<2x128xf32> to vector<2x32xf32>
    %194 = math.tanh %193 : vector<2x32xf32>
    %195 = vector.extract_strided_slice %192 {offsets = [0, 0], sizes = [2, 32], strides = [1, 1]} : vector<2x96xf32> to vector<2x32xf32>
    %196 = vector.extract_strided_slice %192 {offsets = [0, 32], sizes = [2, 32], strides = [1, 1]} : vector<2x96xf32> to vector<2x32xf32>
    %197 = vector.extract_strided_slice %192 {offsets = [0, 64], sizes = [2, 32], strides = [1, 1]} : vector<2x96xf32> to vector<2x32xf32>
    %198 = arith.mulf %196, %181 : vector<2x32xf32>
    %199 = arith.mulf %195, %194 : vector<2x32xf32>
    %200 = arith.addf %198, %199 : vector<2x32xf32>
    %201 = math.tanh %200 : vector<2x32xf32>
    %202 = arith.mulf %197, %201 : vector<2x32xf32>
    %cst_44 = arith.constant dense<0.000000e+00> : vector<2x128xf32>
    %203 = tpu.matmul %50, %177, %cst_44 {dimension_numbers = #tpu.dot_dimension_numbers<[1], [0], [0], [1], [0, 0, 1, 1], [], []>} : vector<2x32xf32>, vector<32x128xf32>, vector<2x128xf32> -> vector<2x128xf32>
    %204 = vector.broadcast %179 : vector<1x128xf32> to vector<2x128xf32>
    %205 = arith.addf %203, %204 : vector<2x128xf32>
    %cst_45 = arith.constant dense<0.000000e+00> : vector<2x128xf32>
    %206 = tpu.matmul %202, %178, %cst_45 {dimension_numbers = #tpu.dot_dimension_numbers<[1], [0], [0], [1], [0, 0, 1, 1], [], []>} : vector<2x32xf32>, vector<32x128xf32>, vector<2x128xf32> -> vector<2x128xf32>
    %207 = arith.addf %205, %206 : vector<2x128xf32>
    %208 = vector.extract_strided_slice %207 {offsets = [0, 0], sizes = [2, 96], strides = [1, 1]} : vector<2x128xf32> to vector<2x96xf32>
    %209 = arith.negf %208 : vector<2x96xf32>
    %210 = math.exp %209 : vector<2x96xf32>
    %cst_46 = arith.constant 1.000000e+00 : f32
    %211 = vector.broadcast %cst_46 : f32 to vector<2x96xf32>
    %212 = arith.addf %211, %210 : vector<2x96xf32>
    %213 = arith.divf %211, %212 : vector<2x96xf32>
    %214 = vector.extract_strided_slice %207 {offsets = [0, 96], sizes = [2, 32], strides = [1, 1]} : vector<2x128xf32> to vector<2x32xf32>
    %215 = math.tanh %214 : vector<2x32xf32>
    %216 = vector.extract_strided_slice %213 {offsets = [0, 0], sizes = [2, 32], strides = [1, 1]} : vector<2x96xf32> to vector<2x32xf32>
    %217 = vector.extract_strided_slice %213 {offsets = [0, 32], sizes = [2, 32], strides = [1, 1]} : vector<2x96xf32> to vector<2x32xf32>
    %218 = vector.extract_strided_slice %213 {offsets = [0, 64], sizes = [2, 32], strides = [1, 1]} : vector<2x96xf32> to vector<2x32xf32>
    %219 = arith.mulf %217, %200 : vector<2x32xf32>
    %220 = arith.mulf %216, %215 : vector<2x32xf32>
    %221 = arith.addf %219, %220 : vector<2x32xf32>
    %222 = math.tanh %221 : vector<2x32xf32>
    %223 = arith.mulf %218, %222 : vector<2x32xf32>
    %cst_47 = arith.constant dense<0.000000e+00> : vector<2x128xf32>
    %224 = tpu.matmul %71, %177, %cst_47 {dimension_numbers = #tpu.dot_dimension_numbers<[1], [0], [0], [1], [0, 0, 1, 1], [], []>} : vector<2x32xf32>, vector<32x128xf32>, vector<2x128xf32> -> vector<2x128xf32>
    %225 = vector.broadcast %179 : vector<1x128xf32> to vector<2x128xf32>
    %226 = arith.addf %224, %225 : vector<2x128xf32>
    %cst_48 = arith.constant dense<0.000000e+00> : vector<2x128xf32>
    %227 = tpu.matmul %223, %178, %cst_48 {dimension_numbers = #tpu.dot_dimension_numbers<[1], [0], [0], [1], [0, 0, 1, 1], [], []>} : vector<2x32xf32>, vector<32x128xf32>, vector<2x128xf32> -> vector<2x128xf32>
    %228 = arith.addf %226, %227 : vector<2x128xf32>
    %229 = vector.extract_strided_slice %228 {offsets = [0, 0], sizes = [2, 96], strides = [1, 1]} : vector<2x128xf32> to vector<2x96xf32>
    %230 = arith.negf %229 : vector<2x96xf32>
    %231 = math.exp %230 : vector<2x96xf32>
    %cst_49 = arith.constant 1.000000e+00 : f32
    %232 = vector.broadcast %cst_49 : f32 to vector<2x96xf32>
    %233 = arith.addf %232, %231 : vector<2x96xf32>
    %234 = arith.divf %232, %233 : vector<2x96xf32>
    %235 = vector.extract_strided_slice %228 {offsets = [0, 96], sizes = [2, 32], strides = [1, 1]} : vector<2x128xf32> to vector<2x32xf32>
    %236 = math.tanh %235 : vector<2x32xf32>
    %237 = vector.extract_strided_slice %234 {offsets = [0, 0], sizes = [2, 32], strides = [1, 1]} : vector<2x96xf32> to vector<2x32xf32>
    %238 = vector.extract_strided_slice %234 {offsets = [0, 32], sizes = [2, 32], strides = [1, 1]} : vector<2x96xf32> to vector<2x32xf32>
    %239 = vector.extract_strided_slice %234 {offsets = [0, 64], sizes = [2, 32], strides = [1, 1]} : vector<2x96xf32> to vector<2x32xf32>
    %240 = arith.mulf %238, %221 : vector<2x32xf32>
    %241 = arith.mulf %237, %236 : vector<2x32xf32>
    %242 = arith.addf %240, %241 : vector<2x32xf32>
    %243 = math.tanh %242 : vector<2x32xf32>
    %244 = arith.mulf %239, %243 : vector<2x32xf32>
    %cst_50 = arith.constant dense<0.000000e+00> : vector<2x128xf32>
    %245 = tpu.matmul %92, %177, %cst_50 {dimension_numbers = #tpu.dot_dimension_numbers<[1], [0], [0], [1], [0, 0, 1, 1], [], []>} : vector<2x32xf32>, vector<32x128xf32>, vector<2x128xf32> -> vector<2x128xf32>
    %246 = vector.broadcast %179 : vector<1x128xf32> to vector<2x128xf32>
    %247 = arith.addf %245, %246 : vector<2x128xf32>
    %cst_51 = arith.constant dense<0.000000e+00> : vector<2x128xf32>
    %248 = tpu.matmul %244, %178, %cst_51 {dimension_numbers = #tpu.dot_dimension_numbers<[1], [0], [0], [1], [0, 0, 1, 1], [], []>} : vector<2x32xf32>, vector<32x128xf32>, vector<2x128xf32> -> vector<2x128xf32>
    %249 = arith.addf %247, %248 : vector<2x128xf32>
    %250 = vector.extract_strided_slice %249 {offsets = [0, 0], sizes = [2, 96], strides = [1, 1]} : vector<2x128xf32> to vector<2x96xf32>
    %251 = arith.negf %250 : vector<2x96xf32>
    %252 = math.exp %251 : vector<2x96xf32>
    %cst_52 = arith.constant 1.000000e+00 : f32
    %253 = vector.broadcast %cst_52 : f32 to vector<2x96xf32>
    %254 = arith.addf %253, %252 : vector<2x96xf32>
    %255 = arith.divf %253, %254 : vector<2x96xf32>
    %256 = vector.extract_strided_slice %249 {offsets = [0, 96], sizes = [2, 32], strides = [1, 1]} : vector<2x128xf32> to vector<2x32xf32>
    %257 = math.tanh %256 : vector<2x32xf32>
    %258 = vector.extract_strided_slice %255 {offsets = [0, 0], sizes = [2, 32], strides = [1, 1]} : vector<2x96xf32> to vector<2x32xf32>
    %259 = vector.extract_strided_slice %255 {offsets = [0, 32], sizes = [2, 32], strides = [1, 1]} : vector<2x96xf32> to vector<2x32xf32>
    %260 = vector.extract_strided_slice %255 {offsets = [0, 64], sizes = [2, 32], strides = [1, 1]} : vector<2x96xf32> to vector<2x32xf32>
    %261 = arith.mulf %259, %242 : vector<2x32xf32>
    %262 = arith.mulf %258, %257 : vector<2x32xf32>
    %263 = arith.addf %261, %262 : vector<2x32xf32>
    %264 = math.tanh %263 : vector<2x32xf32>
    %265 = arith.mulf %260, %264 : vector<2x32xf32>
    %cst_53 = arith.constant dense<0.000000e+00> : vector<2x128xf32>
    %266 = tpu.matmul %113, %177, %cst_53 {dimension_numbers = #tpu.dot_dimension_numbers<[1], [0], [0], [1], [0, 0, 1, 1], [], []>} : vector<2x32xf32>, vector<32x128xf32>, vector<2x128xf32> -> vector<2x128xf32>
    %267 = vector.broadcast %179 : vector<1x128xf32> to vector<2x128xf32>
    %268 = arith.addf %266, %267 : vector<2x128xf32>
    %cst_54 = arith.constant dense<0.000000e+00> : vector<2x128xf32>
    %269 = tpu.matmul %265, %178, %cst_54 {dimension_numbers = #tpu.dot_dimension_numbers<[1], [0], [0], [1], [0, 0, 1, 1], [], []>} : vector<2x32xf32>, vector<32x128xf32>, vector<2x128xf32> -> vector<2x128xf32>
    %270 = arith.addf %268, %269 : vector<2x128xf32>
    %271 = vector.extract_strided_slice %270 {offsets = [0, 0], sizes = [2, 96], strides = [1, 1]} : vector<2x128xf32> to vector<2x96xf32>
    %272 = arith.negf %271 : vector<2x96xf32>
    %273 = math.exp %272 : vector<2x96xf32>
    %cst_55 = arith.constant 1.000000e+00 : f32
    %274 = vector.broadcast %cst_55 : f32 to vector<2x96xf32>
    %275 = arith.addf %274, %273 : vector<2x96xf32>
    %276 = arith.divf %274, %275 : vector<2x96xf32>
    %277 = vector.extract_strided_slice %270 {offsets = [0, 96], sizes = [2, 32], strides = [1, 1]} : vector<2x128xf32> to vector<2x32xf32>
    %278 = math.tanh %277 : vector<2x32xf32>
    %279 = vector.extract_strided_slice %276 {offsets = [0, 0], sizes = [2, 32], strides = [1, 1]} : vector<2x96xf32> to vector<2x32xf32>
    %280 = vector.extract_strided_slice %276 {offsets = [0, 32], sizes = [2, 32], strides = [1, 1]} : vector<2x96xf32> to vector<2x32xf32>
    %281 = vector.extract_strided_slice %276 {offsets = [0, 64], sizes = [2, 32], strides = [1, 1]} : vector<2x96xf32> to vector<2x32xf32>
    %282 = arith.mulf %280, %263 : vector<2x32xf32>
    %283 = arith.mulf %279, %278 : vector<2x32xf32>
    %284 = arith.addf %282, %283 : vector<2x32xf32>
    %285 = math.tanh %284 : vector<2x32xf32>
    %286 = arith.mulf %281, %285 : vector<2x32xf32>
    %cst_56 = arith.constant dense<0.000000e+00> : vector<2x128xf32>
    %287 = tpu.matmul %134, %177, %cst_56 {dimension_numbers = #tpu.dot_dimension_numbers<[1], [0], [0], [1], [0, 0, 1, 1], [], []>} : vector<2x32xf32>, vector<32x128xf32>, vector<2x128xf32> -> vector<2x128xf32>
    %288 = vector.broadcast %179 : vector<1x128xf32> to vector<2x128xf32>
    %289 = arith.addf %287, %288 : vector<2x128xf32>
    %cst_57 = arith.constant dense<0.000000e+00> : vector<2x128xf32>
    %290 = tpu.matmul %286, %178, %cst_57 {dimension_numbers = #tpu.dot_dimension_numbers<[1], [0], [0], [1], [0, 0, 1, 1], [], []>} : vector<2x32xf32>, vector<32x128xf32>, vector<2x128xf32> -> vector<2x128xf32>
    %291 = arith.addf %289, %290 : vector<2x128xf32>
    %292 = vector.extract_strided_slice %291 {offsets = [0, 0], sizes = [2, 96], strides = [1, 1]} : vector<2x128xf32> to vector<2x96xf32>
    %293 = arith.negf %292 : vector<2x96xf32>
    %294 = math.exp %293 : vector<2x96xf32>
    %cst_58 = arith.constant 1.000000e+00 : f32
    %295 = vector.broadcast %cst_58 : f32 to vector<2x96xf32>
    %296 = arith.addf %295, %294 : vector<2x96xf32>
    %297 = arith.divf %295, %296 : vector<2x96xf32>
    %298 = vector.extract_strided_slice %291 {offsets = [0, 96], sizes = [2, 32], strides = [1, 1]} : vector<2x128xf32> to vector<2x32xf32>
    %299 = math.tanh %298 : vector<2x32xf32>
    %300 = vector.extract_strided_slice %297 {offsets = [0, 0], sizes = [2, 32], strides = [1, 1]} : vector<2x96xf32> to vector<2x32xf32>
    %301 = vector.extract_strided_slice %297 {offsets = [0, 32], sizes = [2, 32], strides = [1, 1]} : vector<2x96xf32> to vector<2x32xf32>
    %302 = vector.extract_strided_slice %297 {offsets = [0, 64], sizes = [2, 32], strides = [1, 1]} : vector<2x96xf32> to vector<2x32xf32>
    %303 = arith.mulf %301, %284 : vector<2x32xf32>
    %304 = arith.mulf %300, %299 : vector<2x32xf32>
    %305 = arith.addf %303, %304 : vector<2x32xf32>
    %306 = math.tanh %305 : vector<2x32xf32>
    %307 = arith.mulf %302, %306 : vector<2x32xf32>
    %cst_59 = arith.constant dense<0.000000e+00> : vector<2x128xf32>
    %308 = tpu.matmul %155, %177, %cst_59 {dimension_numbers = #tpu.dot_dimension_numbers<[1], [0], [0], [1], [0, 0, 1, 1], [], []>} : vector<2x32xf32>, vector<32x128xf32>, vector<2x128xf32> -> vector<2x128xf32>
    %309 = vector.broadcast %179 : vector<1x128xf32> to vector<2x128xf32>
    %310 = arith.addf %308, %309 : vector<2x128xf32>
    %cst_60 = arith.constant dense<0.000000e+00> : vector<2x128xf32>
    %311 = tpu.matmul %307, %178, %cst_60 {dimension_numbers = #tpu.dot_dimension_numbers<[1], [0], [0], [1], [0, 0, 1, 1], [], []>} : vector<2x32xf32>, vector<32x128xf32>, vector<2x128xf32> -> vector<2x128xf32>
    %312 = arith.addf %310, %311 : vector<2x128xf32>
    %313 = vector.extract_strided_slice %312 {offsets = [0, 0], sizes = [2, 96], strides = [1, 1]} : vector<2x128xf32> to vector<2x96xf32>
    %314 = arith.negf %313 : vector<2x96xf32>
    %315 = math.exp %314 : vector<2x96xf32>
    %cst_61 = arith.constant 1.000000e+00 : f32
    %316 = vector.broadcast %cst_61 : f32 to vector<2x96xf32>
    %317 = arith.addf %316, %315 : vector<2x96xf32>
    %318 = arith.divf %316, %317 : vector<2x96xf32>
    %319 = vector.extract_strided_slice %312 {offsets = [0, 96], sizes = [2, 32], strides = [1, 1]} : vector<2x128xf32> to vector<2x32xf32>
    %320 = math.tanh %319 : vector<2x32xf32>
    %321 = vector.extract_strided_slice %318 {offsets = [0, 0], sizes = [2, 32], strides = [1, 1]} : vector<2x96xf32> to vector<2x32xf32>
    %322 = vector.extract_strided_slice %318 {offsets = [0, 32], sizes = [2, 32], strides = [1, 1]} : vector<2x96xf32> to vector<2x32xf32>
    %323 = vector.extract_strided_slice %318 {offsets = [0, 64], sizes = [2, 32], strides = [1, 1]} : vector<2x96xf32> to vector<2x32xf32>
    %324 = arith.mulf %322, %305 : vector<2x32xf32>
    %325 = arith.mulf %321, %320 : vector<2x32xf32>
    %326 = arith.addf %324, %325 : vector<2x32xf32>
    %327 = math.tanh %326 : vector<2x32xf32>
    %328 = arith.mulf %323, %327 : vector<2x32xf32>
    %cst_62 = arith.constant dense<0.000000e+00> : vector<2x128xf32>
    %329 = tpu.matmul %176, %177, %cst_62 {dimension_numbers = #tpu.dot_dimension_numbers<[1], [0], [0], [1], [0, 0, 1, 1], [], []>} : vector<2x32xf32>, vector<32x128xf32>, vector<2x128xf32> -> vector<2x128xf32>
    %330 = vector.broadcast %179 : vector<1x128xf32> to vector<2x128xf32>
    %331 = arith.addf %329, %330 : vector<2x128xf32>
    %cst_63 = arith.constant dense<0.000000e+00> : vector<2x128xf32>
    %332 = tpu.matmul %328, %178, %cst_63 {dimension_numbers = #tpu.dot_dimension_numbers<[1], [0], [0], [1], [0, 0, 1, 1], [], []>} : vector<2x32xf32>, vector<32x128xf32>, vector<2x128xf32> -> vector<2x128xf32>
    %333 = arith.addf %331, %332 : vector<2x128xf32>
    %334 = vector.extract_strided_slice %333 {offsets = [0, 0], sizes = [2, 96], strides = [1, 1]} : vector<2x128xf32> to vector<2x96xf32>
    %335 = arith.negf %334 : vector<2x96xf32>
    %336 = math.exp %335 : vector<2x96xf32>
    %cst_64 = arith.constant 1.000000e+00 : f32
    %337 = vector.broadcast %cst_64 : f32 to vector<2x96xf32>
    %338 = arith.addf %337, %336 : vector<2x96xf32>
    %339 = arith.divf %337, %338 : vector<2x96xf32>
    %340 = vector.extract_strided_slice %333 {offsets = [0, 96], sizes = [2, 32], strides = [1, 1]} : vector<2x128xf32> to vector<2x32xf32>
    %341 = math.tanh %340 : vector<2x32xf32>
    %342 = vector.extract_strided_slice %339 {offsets = [0, 0], sizes = [2, 32], strides = [1, 1]} : vector<2x96xf32> to vector<2x32xf32>
    %343 = vector.extract_strided_slice %339 {offsets = [0, 32], sizes = [2, 32], strides = [1, 1]} : vector<2x96xf32> to vector<2x32xf32>
    %344 = vector.extract_strided_slice %339 {offsets = [0, 64], sizes = [2, 32], strides = [1, 1]} : vector<2x96xf32> to vector<2x32xf32>
    %345 = arith.mulf %343, %326 : vector<2x32xf32>
    %346 = arith.mulf %342, %341 : vector<2x32xf32>
    %347 = arith.addf %345, %346 : vector<2x32xf32>
    %348 = math.tanh %347 : vector<2x32xf32>
    %349 = arith.mulf %344, %348 : vector<2x32xf32>
    %350 = vector.extract_strided_slice %202 {offsets = [0, 0], sizes = [2, 16], strides = [1, 1]} : vector<2x32xf32> to vector<2x16xf32>
    %351 = vector.extract_strided_slice %223 {offsets = [0, 0], sizes = [2, 16], strides = [1, 1]} : vector<2x32xf32> to vector<2x16xf32>
    %352 = vector.extract_strided_slice %244 {offsets = [0, 0], sizes = [2, 16], strides = [1, 1]} : vector<2x32xf32> to vector<2x16xf32>
    %353 = vector.extract_strided_slice %265 {offsets = [0, 0], sizes = [2, 16], strides = [1, 1]} : vector<2x32xf32> to vector<2x16xf32>
    %354 = vector.extract_strided_slice %286 {offsets = [0, 0], sizes = [2, 16], strides = [1, 1]} : vector<2x32xf32> to vector<2x16xf32>
    %355 = vector.extract_strided_slice %307 {offsets = [0, 0], sizes = [2, 16], strides = [1, 1]} : vector<2x32xf32> to vector<2x16xf32>
    %356 = vector.extract_strided_slice %328 {offsets = [0, 0], sizes = [2, 16], strides = [1, 1]} : vector<2x32xf32> to vector<2x16xf32>
    %357 = vector.extract_strided_slice %349 {offsets = [0, 0], sizes = [2, 16], strides = [1, 1]} : vector<2x32xf32> to vector<2x16xf32>
    %358 = tpu.concatenate %350, %351, %352, %353, %354, %355, %356, %357 in 1 : vector<2x16xf32>, vector<2x16xf32>, vector<2x16xf32>, vector<2x16xf32>, vector<2x16xf32>, vector<2x16xf32>, vector<2x16xf32>, vector<2x16xf32> -> vector<2x128xf32>
    %359 = vector.extract_strided_slice %202 {offsets = [0, 16], sizes = [2, 16], strides = [1, 1]} : vector<2x32xf32> to vector<2x16xf32>
    %360 = vector.extract_strided_slice %223 {offsets = [0, 16], sizes = [2, 16], strides = [1, 1]} : vector<2x32xf32> to vector<2x16xf32>
    %361 = vector.extract_strided_slice %244 {offsets = [0, 16], sizes = [2, 16], strides = [1, 1]} : vector<2x32xf32> to vector<2x16xf32>
    %362 = vector.extract_strided_slice %265 {offsets = [0, 16], sizes = [2, 16], strides = [1, 1]} : vector<2x32xf32> to vector<2x16xf32>
    %363 = vector.extract_strided_slice %286 {offsets = [0, 16], sizes = [2, 16], strides = [1, 1]} : vector<2x32xf32> to vector<2x16xf32>
    %364 = vector.extract_strided_slice %307 {offsets = [0, 16], sizes = [2, 16], strides = [1, 1]} : vector<2x32xf32> to vector<2x16xf32>
    %365 = vector.extract_strided_slice %328 {offsets = [0, 16], sizes = [2, 16], strides = [1, 1]} : vector<2x32xf32> to vector<2x16xf32>
    %366 = vector.extract_strided_slice %349 {offsets = [0, 16], sizes = [2, 16], strides = [1, 1]} : vector<2x32xf32> to vector<2x16xf32>
    %367 = tpu.concatenate %359, %360, %361, %362, %363, %364, %365, %366 in 1 : vector<2x16xf32>, vector<2x16xf32>, vector<2x16xf32>, vector<2x16xf32>, vector<2x16xf32>, vector<2x16xf32>, vector<2x16xf32>, vector<2x16xf32> -> vector<2x128xf32>
    %c0_65 = arith.constant 0 : index
    %c0_66 = arith.constant 0 : index
    %368 = vector.load %arg8[%c0_65, %c0_66] : memref<128x128xf32, #tpu.memory_space<vmem>>, vector<128x128xf32>
    %c0_67 = arith.constant 0 : index
    %c0_68 = arith.constant 0 : index
    %369 = vector.load %arg9[%c0_67, %c0_68] : memref<1x128xf32, #tpu.memory_space<vmem>>, vector<1x128xf32>
    %c0_69 = arith.constant 0 : index
    %c0_70 = arith.constant 0 : index
    %370 = vector.load %arg10[%c0_69, %c0_70] : memref<128x32xf32, #tpu.memory_space<vmem>>, vector<128x32xf32>
    %c0_71 = arith.constant 0 : index
    %c0_72 = arith.constant 0 : index
    %371 = vector.load %arg11[%c0_71, %c0_72] : memref<1x32xf32, #tpu.memory_space<vmem>>, vector<1x32xf32>
    %cst_73 = arith.constant dense<0.000000e+00> : vector<2x128xf32>
    %372 = tpu.matmul %358, %368, %cst_73 {dimension_numbers = #tpu.dot_dimension_numbers<[1], [0], [0], [1], [0, 0, 1, 1], [], []>} : vector<2x128xf32>, vector<128x128xf32>, vector<2x128xf32> -> vector<2x128xf32>
    %373 = vector.broadcast %369 : vector<1x128xf32> to vector<2x128xf32>
    %374 = arith.addf %372, %373 : vector<2x128xf32>
    %cst_74 = arith.constant 0.000000e+00 : f32
    %375 = vector.broadcast %cst_74 : f32 to vector<2x128xf32>
    %376 = arith.maximumf %374, %375 : vector<2x128xf32>
    %cst_75 = arith.constant dense<0.000000e+00> : vector<2x32xf32>
    %377 = tpu.matmul %376, %370, %cst_75 {dimension_numbers = #tpu.dot_dimension_numbers<[1], [0], [0], [1], [0, 0, 1, 1], [], []>} : vector<2x128xf32>, vector<128x32xf32>, vector<2x32xf32> -> vector<2x32xf32>
    %378 = vector.broadcast %371 : vector<1x32xf32> to vector<2x32xf32>
    %379 = arith.addf %377, %378 : vector<2x32xf32>
    %cst_76 = arith.constant 0.000000e+00 : f32
    %380 = vector.broadcast %cst_76 : f32 to vector<2x32xf32>
    %381 = arith.maximumf %379, %380 : vector<2x32xf32>
    %cst_77 = arith.constant dense<0.000000e+00> : vector<2x128xf32>
    %382 = tpu.matmul %367, %368, %cst_77 {dimension_numbers = #tpu.dot_dimension_numbers<[1], [0], [0], [1], [0, 0, 1, 1], [], []>} : vector<2x128xf32>, vector<128x128xf32>, vector<2x128xf32> -> vector<2x128xf32>
    %383 = vector.broadcast %369 : vector<1x128xf32> to vector<2x128xf32>
    %384 = arith.addf %382, %383 : vector<2x128xf32>
    %cst_78 = arith.constant 0.000000e+00 : f32
    %385 = vector.broadcast %cst_78 : f32 to vector<2x128xf32>
    %386 = arith.maximumf %384, %385 : vector<2x128xf32>
    %cst_79 = arith.constant dense<0.000000e+00> : vector<2x32xf32>
    %387 = tpu.matmul %386, %370, %cst_79 {dimension_numbers = #tpu.dot_dimension_numbers<[1], [0], [0], [1], [0, 0, 1, 1], [], []>} : vector<2x128xf32>, vector<128x32xf32>, vector<2x32xf32> -> vector<2x32xf32>
    %388 = vector.broadcast %371 : vector<1x32xf32> to vector<2x32xf32>
    %389 = arith.addf %387, %388 : vector<2x32xf32>
    %cst_80 = arith.constant 0.000000e+00 : f32
    %390 = vector.broadcast %cst_80 : f32 to vector<2x32xf32>
    %391 = arith.maximumf %389, %390 : vector<2x32xf32>
    %c0_81 = arith.constant 0 : index
    %c0_82 = arith.constant 0 : index
    %392 = vector.load %arg22[%c0_81, %c0_82] : memref<2x32xf32, #tpu.memory_space<vmem>>, vector<2x32xf32>
    tpu.vector_store %arg22[%c0_81, %c0_82], %381 {strides = array<i32>} : memref<2x32xf32, #tpu.memory_space<vmem>>, vector<2x32xf32>,
    %c0_83 = arith.constant 0 : index
    %c0_84 = arith.constant 0 : index
    %393 = vector.load %arg23[%c0_83, %c0_84] : memref<2x32xf32, #tpu.memory_space<vmem>>, vector<2x32xf32>
    tpu.vector_store %arg23[%c0_83, %c0_84], %391 {strides = array<i32>} : memref<2x32xf32, #tpu.memory_space<vmem>>, vector<2x32xf32>,
    %c0_85 = arith.constant 0 : index
    %c0_86 = arith.constant 0 : index
    %394 = vector.load %arg12[%c0_85, %c0_86] : memref<32x128xf32, #tpu.memory_space<vmem>>, vector<32x128xf32>
    %cst_87 = arith.constant dense<0.000000e+00> : vector<2x128xf32>
    %395 = tpu.matmul %381, %394, %cst_87 {dimension_numbers = #tpu.dot_dimension_numbers<[1], [0], [0], [1], [0, 0, 1, 1], [], []>} : vector<2x32xf32>, vector<32x128xf32>, vector<2x128xf32> -> vector<2x128xf32>
    %c0_88 = arith.constant 0 : index
    %c0_89 = arith.constant 0 : index
    %396 = vector.load %arg13[%c0_88, %c0_89] : memref<1x128xf32, #tpu.memory_space<vmem>>, vector<1x128xf32>
    %397 = vector.broadcast %396 : vector<1x128xf32> to vector<2x128xf32>
    %398 = arith.addf %395, %397 : vector<2x128xf32>
    %cst_90 = arith.constant 0.000000e+00 : f32
    %399 = vector.broadcast %cst_90 : f32 to vector<2x128xf32>
    %400 = arith.maximumf %398, %399 : vector<2x128xf32>
    %c0_91 = arith.constant 0 : index
    %c0_92 = arith.constant 0 : index
    %401 = vector.load %arg14[%c0_91, %c0_92] : memref<128x128xf32, #tpu.memory_space<vmem>>, vector<128x128xf32>
    %cst_93 = arith.constant dense<0.000000e+00> : vector<2x128xf32>
    %402 = tpu.matmul %400, %401, %cst_93 {dimension_numbers = #tpu.dot_dimension_numbers<[1], [0], [0], [1], [0, 0, 1, 1], [], []>} : vector<2x128xf32>, vector<128x128xf32>, vector<2x128xf32> -> vector<2x128xf32>
    %c0_94 = arith.constant 0 : index
    %c0_95 = arith.constant 0 : index
    %403 = vector.load %arg15[%c0_94, %c0_95] : memref<1x128xf32, #tpu.memory_space<vmem>>, vector<1x128xf32>
    %404 = vector.broadcast %403 : vector<1x128xf32> to vector<2x128xf32>
    %405 = arith.addf %402, %404 : vector<2x128xf32>
    %cst_96 = arith.constant 0.000000e+00 : f32
    %406 = vector.broadcast %cst_96 : f32 to vector<2x128xf32>
    %407 = arith.maximumf %405, %406 : vector<2x128xf32>
    %c0_97 = arith.constant 0 : index
    %c0_98 = arith.constant 0 : index
    %408 = vector.load %arg16[%c0_97, %c0_98] : memref<16x256xf32, #tpu.memory_space<vmem>>, vector<16x256xf32>
    %c0_99 = arith.constant 0 : index
    %c0_100 = arith.constant 0 : index
    %409 = vector.load %arg17[%c0_99, %c0_100] : memref<64x256xf32, #tpu.memory_space<vmem>>, vector<64x256xf32>
    %c0_101 = arith.constant 0 : index
    %c0_102 = arith.constant 0 : index
    %410 = vector.load %arg18[%c0_101, %c0_102] : memref<1x256xf32, #tpu.memory_space<vmem>>, vector<1x256xf32>
    %cst_103 = arith.constant 0.000000e+00 : f32
    %411 = vector.broadcast %cst_103 : f32 to vector<2x64xf32>
    %cst_104 = arith.constant 0.000000e+00 : f32
    %412 = vector.broadcast %cst_104 : f32 to vector<2x64xf32>
    %413 = vector.extract_strided_slice %407 {offsets = [0, 0], sizes = [2, 16], strides = [1, 1]} : vector<2x128xf32> to vector<2x16xf32>
    %cst_105 = arith.constant dense<0.000000e+00> : vector<2x256xf32>
    %414 = tpu.matmul %413, %408, %cst_105 {dimension_numbers = #tpu.dot_dimension_numbers<[1], [0], [0], [1], [0, 0, 1, 1], [], []>} : vector<2x16xf32>, vector<16x256xf32>, vector<2x256xf32> -> vector<2x256xf32>
    %415 = vector.broadcast %410 : vector<1x256xf32> to vector<2x256xf32>
    %416 = arith.addf %414, %415 : vector<2x256xf32>
    %cst_106 = arith.constant dense<0.000000e+00> : vector<2x256xf32>
    %417 = tpu.matmul %411, %409, %cst_106 {dimension_numbers = #tpu.dot_dimension_numbers<[1], [0], [0], [1], [0, 0, 1, 1], [], []>} : vector<2x64xf32>, vector<64x256xf32>, vector<2x256xf32> -> vector<2x256xf32>
    %418 = arith.addf %416, %417 : vector<2x256xf32>
    %419 = vector.extract_strided_slice %418 {offsets = [0, 0], sizes = [2, 192], strides = [1, 1]} : vector<2x256xf32> to vector<2x192xf32>
    %420 = arith.negf %419 : vector<2x192xf32>
    %421 = math.exp %420 : vector<2x192xf32>
    %cst_107 = arith.constant 1.000000e+00 : f32
    %422 = vector.broadcast %cst_107 : f32 to vector<2x192xf32>
    %423 = arith.addf %422, %421 : vector<2x192xf32>
    %424 = arith.divf %422, %423 : vector<2x192xf32>
    %425 = vector.extract_strided_slice %418 {offsets = [0, 192], sizes = [2, 64], strides = [1, 1]} : vector<2x256xf32> to vector<2x64xf32>
    %426 = math.tanh %425 : vector<2x64xf32>
    %427 = vector.extract_strided_slice %424 {offsets = [0, 0], sizes = [2, 64], strides = [1, 1]} : vector<2x192xf32> to vector<2x64xf32>
    %428 = vector.extract_strided_slice %424 {offsets = [0, 64], sizes = [2, 64], strides = [1, 1]} : vector<2x192xf32> to vector<2x64xf32>
    %429 = vector.extract_strided_slice %424 {offsets = [0, 128], sizes = [2, 64], strides = [1, 1]} : vector<2x192xf32> to vector<2x64xf32>
    %430 = arith.mulf %428, %412 : vector<2x64xf32>
    %431 = arith.mulf %427, %426 : vector<2x64xf32>
    %432 = arith.addf %430, %431 : vector<2x64xf32>
    %433 = math.tanh %432 : vector<2x64xf32>
    %434 = arith.mulf %429, %433 : vector<2x64xf32>
    %cst_108 = arith.constant 0.000000e+00 : f32
    %435 = vector.broadcast %cst_108 : f32 to vector<2x64xf32>
    %436 = arith.maximumf %434, %435 : vector<2x64xf32>
    %437 = vector.extract_strided_slice %407 {offsets = [0, 16], sizes = [2, 16], strides = [1, 1]} : vector<2x128xf32> to vector<2x16xf32>
    %cst_109 = arith.constant dense<0.000000e+00> : vector<2x256xf32>
    %438 = tpu.matmul %437, %408, %cst_109 {dimension_numbers = #tpu.dot_dimension_numbers<[1], [0], [0], [1], [0, 0, 1, 1], [], []>} : vector<2x16xf32>, vector<16x256xf32>, vector<2x256xf32> -> vector<2x256xf32>
    %439 = vector.broadcast %410 : vector<1x256xf32> to vector<2x256xf32>
    %440 = arith.addf %438, %439 : vector<2x256xf32>
    %cst_110 = arith.constant dense<0.000000e+00> : vector<2x256xf32>
    %441 = tpu.matmul %434, %409, %cst_110 {dimension_numbers = #tpu.dot_dimension_numbers<[1], [0], [0], [1], [0, 0, 1, 1], [], []>} : vector<2x64xf32>, vector<64x256xf32>, vector<2x256xf32> -> vector<2x256xf32>
    %442 = arith.addf %440, %441 : vector<2x256xf32>
    %443 = vector.extract_strided_slice %442 {offsets = [0, 0], sizes = [2, 192], strides = [1, 1]} : vector<2x256xf32> to vector<2x192xf32>
    %444 = arith.negf %443 : vector<2x192xf32>
    %445 = math.exp %444 : vector<2x192xf32>
    %cst_111 = arith.constant 1.000000e+00 : f32
    %446 = vector.broadcast %cst_111 : f32 to vector<2x192xf32>
    %447 = arith.addf %446, %445 : vector<2x192xf32>
    %448 = arith.divf %446, %447 : vector<2x192xf32>
    %449 = vector.extract_strided_slice %442 {offsets = [0, 192], sizes = [2, 64], strides = [1, 1]} : vector<2x256xf32> to vector<2x64xf32>
    %450 = math.tanh %449 : vector<2x64xf32>
    %451 = vector.extract_strided_slice %448 {offsets = [0, 0], sizes = [2, 64], strides = [1, 1]} : vector<2x192xf32> to vector<2x64xf32>
    %452 = vector.extract_strided_slice %448 {offsets = [0, 64], sizes = [2, 64], strides = [1, 1]} : vector<2x192xf32> to vector<2x64xf32>
    %453 = vector.extract_strided_slice %448 {offsets = [0, 128], sizes = [2, 64], strides = [1, 1]} : vector<2x192xf32> to vector<2x64xf32>
    %454 = arith.mulf %452, %432 : vector<2x64xf32>
    %455 = arith.mulf %451, %450 : vector<2x64xf32>
    %456 = arith.addf %454, %455 : vector<2x64xf32>
    %457 = math.tanh %456 : vector<2x64xf32>
    %458 = arith.mulf %453, %457 : vector<2x64xf32>
    %cst_112 = arith.constant 0.000000e+00 : f32
    %459 = vector.broadcast %cst_112 : f32 to vector<2x64xf32>
    %460 = arith.maximumf %458, %459 : vector<2x64xf32>
    %461 = vector.extract_strided_slice %407 {offsets = [0, 32], sizes = [2, 16], strides = [1, 1]} : vector<2x128xf32> to vector<2x16xf32>
    %cst_113 = arith.constant dense<0.000000e+00> : vector<2x256xf32>
    %462 = tpu.matmul %461, %408, %cst_113 {dimension_numbers = #tpu.dot_dimension_numbers<[1], [0], [0], [1], [0, 0, 1, 1], [], []>} : vector<2x16xf32>, vector<16x256xf32>, vector<2x256xf32> -> vector<2x256xf32>
    %463 = vector.broadcast %410 : vector<1x256xf32> to vector<2x256xf32>
    %464 = arith.addf %462, %463 : vector<2x256xf32>
    %cst_114 = arith.constant dense<0.000000e+00> : vector<2x256xf32>
    %465 = tpu.matmul %458, %409, %cst_114 {dimension_numbers = #tpu.dot_dimension_numbers<[1], [0], [0], [1], [0, 0, 1, 1], [], []>} : vector<2x64xf32>, vector<64x256xf32>, vector<2x256xf32> -> vector<2x256xf32>
    %466 = arith.addf %464, %465 : vector<2x256xf32>
    %467 = vector.extract_strided_slice %466 {offsets = [0, 0], sizes = [2, 192], strides = [1, 1]} : vector<2x256xf32> to vector<2x192xf32>
    %468 = arith.negf %467 : vector<2x192xf32>
    %469 = math.exp %468 : vector<2x192xf32>
    %cst_115 = arith.constant 1.000000e+00 : f32
    %470 = vector.broadcast %cst_115 : f32 to vector<2x192xf32>
    %471 = arith.addf %470, %469 : vector<2x192xf32>
    %472 = arith.divf %470, %471 : vector<2x192xf32>
    %473 = vector.extract_strided_slice %466 {offsets = [0, 192], sizes = [2, 64], strides = [1, 1]} : vector<2x256xf32> to vector<2x64xf32>
    %474 = math.tanh %473 : vector<2x64xf32>
    %475 = vector.extract_strided_slice %472 {offsets = [0, 0], sizes = [2, 64], strides = [1, 1]} : vector<2x192xf32> to vector<2x64xf32>
    %476 = vector.extract_strided_slice %472 {offsets = [0, 64], sizes = [2, 64], strides = [1, 1]} : vector<2x192xf32> to vector<2x64xf32>
    %477 = vector.extract_strided_slice %472 {offsets = [0, 128], sizes = [2, 64], strides = [1, 1]} : vector<2x192xf32> to vector<2x64xf32>
    %478 = arith.mulf %476, %456 : vector<2x64xf32>
    %479 = arith.mulf %475, %474 : vector<2x64xf32>
    %480 = arith.addf %478, %479 : vector<2x64xf32>
    %481 = math.tanh %480 : vector<2x64xf32>
    %482 = arith.mulf %477, %481 : vector<2x64xf32>
    %cst_116 = arith.constant 0.000000e+00 : f32
    %483 = vector.broadcast %cst_116 : f32 to vector<2x64xf32>
    %484 = arith.maximumf %482, %483 : vector<2x64xf32>
    %485 = vector.extract_strided_slice %407 {offsets = [0, 48], sizes = [2, 16], strides = [1, 1]} : vector<2x128xf32> to vector<2x16xf32>
    %cst_117 = arith.constant dense<0.000000e+00> : vector<2x256xf32>
    %486 = tpu.matmul %485, %408, %cst_117 {dimension_numbers = #tpu.dot_dimension_numbers<[1], [0], [0], [1], [0, 0, 1, 1], [], []>} : vector<2x16xf32>, vector<16x256xf32>, vector<2x256xf32> -> vector<2x256xf32>
    %487 = vector.broadcast %410 : vector<1x256xf32> to vector<2x256xf32>
    %488 = arith.addf %486, %487 : vector<2x256xf32>
    %cst_118 = arith.constant dense<0.000000e+00> : vector<2x256xf32>
    %489 = tpu.matmul %482, %409, %cst_118 {dimension_numbers = #tpu.dot_dimension_numbers<[1], [0], [0], [1], [0, 0, 1, 1], [], []>} : vector<2x64xf32>, vector<64x256xf32>, vector<2x256xf32> -> vector<2x256xf32>
    %490 = arith.addf %488, %489 : vector<2x256xf32>
    %491 = vector.extract_strided_slice %490 {offsets = [0, 0], sizes = [2, 192], strides = [1, 1]} : vector<2x256xf32> to vector<2x192xf32>
    %492 = arith.negf %491 : vector<2x192xf32>
    %493 = math.exp %492 : vector<2x192xf32>
    %cst_119 = arith.constant 1.000000e+00 : f32
    %494 = vector.broadcast %cst_119 : f32 to vector<2x192xf32>
    %495 = arith.addf %494, %493 : vector<2x192xf32>
    %496 = arith.divf %494, %495 : vector<2x192xf32>
    %497 = vector.extract_strided_slice %490 {offsets = [0, 192], sizes = [2, 64], strides = [1, 1]} : vector<2x256xf32> to vector<2x64xf32>
    %498 = math.tanh %497 : vector<2x64xf32>
    %499 = vector.extract_strided_slice %496 {offsets = [0, 0], sizes = [2, 64], strides = [1, 1]} : vector<2x192xf32> to vector<2x64xf32>
    %500 = vector.extract_strided_slice %496 {offsets = [0, 64], sizes = [2, 64], strides = [1, 1]} : vector<2x192xf32> to vector<2x64xf32>
    %501 = vector.extract_strided_slice %496 {offsets = [0, 128], sizes = [2, 64], strides = [1, 1]} : vector<2x192xf32> to vector<2x64xf32>
    %502 = arith.mulf %500, %480 : vector<2x64xf32>
    %503 = arith.mulf %499, %498 : vector<2x64xf32>
    %504 = arith.addf %502, %503 : vector<2x64xf32>
    %505 = math.tanh %504 : vector<2x64xf32>
    %506 = arith.mulf %501, %505 : vector<2x64xf32>
    %cst_120 = arith.constant 0.000000e+00 : f32
    %507 = vector.broadcast %cst_120 : f32 to vector<2x64xf32>
    %508 = arith.maximumf %506, %507 : vector<2x64xf32>
    %509 = vector.extract_strided_slice %407 {offsets = [0, 64], sizes = [2, 16], strides = [1, 1]} : vector<2x128xf32> to vector<2x16xf32>
    %cst_121 = arith.constant dense<0.000000e+00> : vector<2x256xf32>
    %510 = tpu.matmul %509, %408, %cst_121 {dimension_numbers = #tpu.dot_dimension_numbers<[1], [0], [0], [1], [0, 0, 1, 1], [], []>} : vector<2x16xf32>, vector<16x256xf32>, vector<2x256xf32> -> vector<2x256xf32>
    %511 = vector.broadcast %410 : vector<1x256xf32> to vector<2x256xf32>
    %512 = arith.addf %510, %511 : vector<2x256xf32>
    %cst_122 = arith.constant dense<0.000000e+00> : vector<2x256xf32>
    %513 = tpu.matmul %506, %409, %cst_122 {dimension_numbers = #tpu.dot_dimension_numbers<[1], [0], [0], [1], [0, 0, 1, 1], [], []>} : vector<2x64xf32>, vector<64x256xf32>, vector<2x256xf32> -> vector<2x256xf32>
    %514 = arith.addf %512, %513 : vector<2x256xf32>
    %515 = vector.extract_strided_slice %514 {offsets = [0, 0], sizes = [2, 192], strides = [1, 1]} : vector<2x256xf32> to vector<2x192xf32>
    %516 = arith.negf %515 : vector<2x192xf32>
    %517 = math.exp %516 : vector<2x192xf32>
    %cst_123 = arith.constant 1.000000e+00 : f32
    %518 = vector.broadcast %cst_123 : f32 to vector<2x192xf32>
    %519 = arith.addf %518, %517 : vector<2x192xf32>
    %520 = arith.divf %518, %519 : vector<2x192xf32>
    %521 = vector.extract_strided_slice %514 {offsets = [0, 192], sizes = [2, 64], strides = [1, 1]} : vector<2x256xf32> to vector<2x64xf32>
    %522 = math.tanh %521 : vector<2x64xf32>
    %523 = vector.extract_strided_slice %520 {offsets = [0, 0], sizes = [2, 64], strides = [1, 1]} : vector<2x192xf32> to vector<2x64xf32>
    %524 = vector.extract_strided_slice %520 {offsets = [0, 64], sizes = [2, 64], strides = [1, 1]} : vector<2x192xf32> to vector<2x64xf32>
    %525 = vector.extract_strided_slice %520 {offsets = [0, 128], sizes = [2, 64], strides = [1, 1]} : vector<2x192xf32> to vector<2x64xf32>
    %526 = arith.mulf %524, %504 : vector<2x64xf32>
    %527 = arith.mulf %523, %522 : vector<2x64xf32>
    %528 = arith.addf %526, %527 : vector<2x64xf32>
    %529 = math.tanh %528 : vector<2x64xf32>
    %530 = arith.mulf %525, %529 : vector<2x64xf32>
    %cst_124 = arith.constant 0.000000e+00 : f32
    %531 = vector.broadcast %cst_124 : f32 to vector<2x64xf32>
    %532 = arith.maximumf %530, %531 : vector<2x64xf32>
    %533 = vector.extract_strided_slice %407 {offsets = [0, 80], sizes = [2, 16], strides = [1, 1]} : vector<2x128xf32> to vector<2x16xf32>
    %cst_125 = arith.constant dense<0.000000e+00> : vector<2x256xf32>
    %534 = tpu.matmul %533, %408, %cst_125 {dimension_numbers = #tpu.dot_dimension_numbers<[1], [0], [0], [1], [0, 0, 1, 1], [], []>} : vector<2x16xf32>, vector<16x256xf32>, vector<2x256xf32> -> vector<2x256xf32>
    %535 = vector.broadcast %410 : vector<1x256xf32> to vector<2x256xf32>
    %536 = arith.addf %534, %535 : vector<2x256xf32>
    %cst_126 = arith.constant dense<0.000000e+00> : vector<2x256xf32>
    %537 = tpu.matmul %530, %409, %cst_126 {dimension_numbers = #tpu.dot_dimension_numbers<[1], [0], [0], [1], [0, 0, 1, 1], [], []>} : vector<2x64xf32>, vector<64x256xf32>, vector<2x256xf32> -> vector<2x256xf32>
    %538 = arith.addf %536, %537 : vector<2x256xf32>
    %539 = vector.extract_strided_slice %538 {offsets = [0, 0], sizes = [2, 192], strides = [1, 1]} : vector<2x256xf32> to vector<2x192xf32>
    %540 = arith.negf %539 : vector<2x192xf32>
    %541 = math.exp %540 : vector<2x192xf32>
    %cst_127 = arith.constant 1.000000e+00 : f32
    %542 = vector.broadcast %cst_127 : f32 to vector<2x192xf32>
    %543 = arith.addf %542, %541 : vector<2x192xf32>
    %544 = arith.divf %542, %543 : vector<2x192xf32>
    %545 = vector.extract_strided_slice %538 {offsets = [0, 192], sizes = [2, 64], strides = [1, 1]} : vector<2x256xf32> to vector<2x64xf32>
    %546 = math.tanh %545 : vector<2x64xf32>
    %547 = vector.extract_strided_slice %544 {offsets = [0, 0], sizes = [2, 64], strides = [1, 1]} : vector<2x192xf32> to vector<2x64xf32>
    %548 = vector.extract_strided_slice %544 {offsets = [0, 64], sizes = [2, 64], strides = [1, 1]} : vector<2x192xf32> to vector<2x64xf32>
    %549 = vector.extract_strided_slice %544 {offsets = [0, 128], sizes = [2, 64], strides = [1, 1]} : vector<2x192xf32> to vector<2x64xf32>
    %550 = arith.mulf %548, %528 : vector<2x64xf32>
    %551 = arith.mulf %547, %546 : vector<2x64xf32>
    %552 = arith.addf %550, %551 : vector<2x64xf32>
    %553 = math.tanh %552 : vector<2x64xf32>
    %554 = arith.mulf %549, %553 : vector<2x64xf32>
    %cst_128 = arith.constant 0.000000e+00 : f32
    %555 = vector.broadcast %cst_128 : f32 to vector<2x64xf32>
    %556 = arith.maximumf %554, %555 : vector<2x64xf32>
    %557 = vector.extract_strided_slice %407 {offsets = [0, 96], sizes = [2, 16], strides = [1, 1]} : vector<2x128xf32> to vector<2x16xf32>
    %cst_129 = arith.constant dense<0.000000e+00> : vector<2x256xf32>
    %558 = tpu.matmul %557, %408, %cst_129 {dimension_numbers = #tpu.dot_dimension_numbers<[1], [0], [0], [1], [0, 0, 1, 1], [], []>} : vector<2x16xf32>, vector<16x256xf32>, vector<2x256xf32> -> vector<2x256xf32>
    %559 = vector.broadcast %410 : vector<1x256xf32> to vector<2x256xf32>
    %560 = arith.addf %558, %559 : vector<2x256xf32>
    %cst_130 = arith.constant dense<0.000000e+00> : vector<2x256xf32>
    %561 = tpu.matmul %554, %409, %cst_130 {dimension_numbers = #tpu.dot_dimension_numbers<[1], [0], [0], [1], [0, 0, 1, 1], [], []>} : vector<2x64xf32>, vector<64x256xf32>, vector<2x256xf32> -> vector<2x256xf32>
    %562 = arith.addf %560, %561 : vector<2x256xf32>
    %563 = vector.extract_strided_slice %562 {offsets = [0, 0], sizes = [2, 192], strides = [1, 1]} : vector<2x256xf32> to vector<2x192xf32>
    %564 = arith.negf %563 : vector<2x192xf32>
    %565 = math.exp %564 : vector<2x192xf32>
    %cst_131 = arith.constant 1.000000e+00 : f32
    %566 = vector.broadcast %cst_131 : f32 to vector<2x192xf32>
    %567 = arith.addf %566, %565 : vector<2x192xf32>
    %568 = arith.divf %566, %567 : vector<2x192xf32>
    %569 = vector.extract_strided_slice %562 {offsets = [0, 192], sizes = [2, 64], strides = [1, 1]} : vector<2x256xf32> to vector<2x64xf32>
    %570 = math.tanh %569 : vector<2x64xf32>
    %571 = vector.extract_strided_slice %568 {offsets = [0, 0], sizes = [2, 64], strides = [1, 1]} : vector<2x192xf32> to vector<2x64xf32>
    %572 = vector.extract_strided_slice %568 {offsets = [0, 64], sizes = [2, 64], strides = [1, 1]} : vector<2x192xf32> to vector<2x64xf32>
    %573 = vector.extract_strided_slice %568 {offsets = [0, 128], sizes = [2, 64], strides = [1, 1]} : vector<2x192xf32> to vector<2x64xf32>
    %574 = arith.mulf %572, %552 : vector<2x64xf32>
    %575 = arith.mulf %571, %570 : vector<2x64xf32>
    %576 = arith.addf %574, %575 : vector<2x64xf32>
    %577 = math.tanh %576 : vector<2x64xf32>
    %578 = arith.mulf %573, %577 : vector<2x64xf32>
    %cst_132 = arith.constant 0.000000e+00 : f32
    %579 = vector.broadcast %cst_132 : f32 to vector<2x64xf32>
    %580 = arith.maximumf %578, %579 : vector<2x64xf32>
    %581 = vector.extract_strided_slice %407 {offsets = [0, 112], sizes = [2, 16], strides = [1, 1]} : vector<2x128xf32> to vector<2x16xf32>
    %cst_133 = arith.constant dense<0.000000e+00> : vector<2x256xf32>
    %582 = tpu.matmul %581, %408, %cst_133 {dimension_numbers = #tpu.dot_dimension_numbers<[1], [0], [0], [1], [0, 0, 1, 1], [], []>} : vector<2x16xf32>, vector<16x256xf32>, vector<2x256xf32> -> vector<2x256xf32>
    %583 = vector.broadcast %410 : vector<1x256xf32> to vector<2x256xf32>
    %584 = arith.addf %582, %583 : vector<2x256xf32>
    %cst_134 = arith.constant dense<0.000000e+00> : vector<2x256xf32>
    %585 = tpu.matmul %578, %409, %cst_134 {dimension_numbers = #tpu.dot_dimension_numbers<[1], [0], [0], [1], [0, 0, 1, 1], [], []>} : vector<2x64xf32>, vector<64x256xf32>, vector<2x256xf32> -> vector<2x256xf32>
    %586 = arith.addf %584, %585 : vector<2x256xf32>
    %587 = vector.extract_strided_slice %586 {offsets = [0, 0], sizes = [2, 192], strides = [1, 1]} : vector<2x256xf32> to vector<2x192xf32>
    %588 = arith.negf %587 : vector<2x192xf32>
    %589 = math.exp %588 : vector<2x192xf32>
    %cst_135 = arith.constant 1.000000e+00 : f32
    %590 = vector.broadcast %cst_135 : f32 to vector<2x192xf32>
    %591 = arith.addf %590, %589 : vector<2x192xf32>
    %592 = arith.divf %590, %591 : vector<2x192xf32>
    %593 = vector.extract_strided_slice %586 {offsets = [0, 192], sizes = [2, 64], strides = [1, 1]} : vector<2x256xf32> to vector<2x64xf32>
    %594 = math.tanh %593 : vector<2x64xf32>
    %595 = vector.extract_strided_slice %592 {offsets = [0, 0], sizes = [2, 64], strides = [1, 1]} : vector<2x192xf32> to vector<2x64xf32>
    %596 = vector.extract_strided_slice %592 {offsets = [0, 64], sizes = [2, 64], strides = [1, 1]} : vector<2x192xf32> to vector<2x64xf32>
    %597 = vector.extract_strided_slice %592 {offsets = [0, 128], sizes = [2, 64], strides = [1, 1]} : vector<2x192xf32> to vector<2x64xf32>
    %598 = arith.mulf %596, %576 : vector<2x64xf32>
    %599 = arith.mulf %595, %594 : vector<2x64xf32>
    %600 = arith.addf %598, %599 : vector<2x64xf32>
    %601 = math.tanh %600 : vector<2x64xf32>
    %602 = arith.mulf %597, %601 : vector<2x64xf32>
    %cst_136 = arith.constant 0.000000e+00 : f32
    %603 = vector.broadcast %cst_136 : f32 to vector<2x64xf32>
    %604 = arith.maximumf %602, %603 : vector<2x64xf32>
    %c0_137 = arith.constant 0 : index
    %c0_138 = arith.constant 0 : index
    %605 = vector.load %arg19[%c0_137, %c0_138] : memref<64x64xf32, #tpu.memory_space<vmem>>, vector<64x64xf32>
    %c0_139 = arith.constant 0 : index
    %c0_140 = arith.constant 0 : index
    %606 = vector.load %arg20[%c0_139, %c0_140] : memref<16x64xf32, #tpu.memory_space<vmem>>, vector<16x64xf32>
    %c0_141 = arith.constant 0 : index
    %c0_142 = arith.constant 0 : index
    %607 = vector.load %arg21[%c0_141, %c0_142] : memref<1x64xf32, #tpu.memory_space<vmem>>, vector<1x64xf32>
    %cst_143 = arith.constant 0.000000e+00 : f32
    %608 = vector.broadcast %cst_143 : f32 to vector<2x16xf32>
    %cst_144 = arith.constant 0.000000e+00 : f32
    %609 = vector.broadcast %cst_144 : f32 to vector<2x16xf32>
    %cst_145 = arith.constant dense<0.000000e+00> : vector<2x64xf32>
    %610 = tpu.matmul %436, %605, %cst_145 {dimension_numbers = #tpu.dot_dimension_numbers<[1], [0], [0], [1], [0, 0, 1, 1], [], []>} : vector<2x64xf32>, vector<64x64xf32>, vector<2x64xf32> -> vector<2x64xf32>
    %611 = vector.broadcast %607 : vector<1x64xf32> to vector<2x64xf32>
    %612 = arith.addf %610, %611 : vector<2x64xf32>
    %cst_146 = arith.constant dense<0.000000e+00> : vector<2x64xf32>
    %613 = tpu.matmul %608, %606, %cst_146 {dimension_numbers = #tpu.dot_dimension_numbers<[1], [0], [0], [1], [0, 0, 1, 1], [], []>} : vector<2x16xf32>, vector<16x64xf32>, vector<2x64xf32> -> vector<2x64xf32>
    %614 = arith.addf %612, %613 : vector<2x64xf32>
    %615 = vector.extract_strided_slice %614 {offsets = [0, 0], sizes = [2, 48], strides = [1, 1]} : vector<2x64xf32> to vector<2x48xf32>
    %616 = arith.negf %615 : vector<2x48xf32>
    %617 = math.exp %616 : vector<2x48xf32>
    %cst_147 = arith.constant 1.000000e+00 : f32
    %618 = vector.broadcast %cst_147 : f32 to vector<2x48xf32>
    %619 = arith.addf %618, %617 : vector<2x48xf32>
    %620 = arith.divf %618, %619 : vector<2x48xf32>
    %621 = vector.extract_strided_slice %614 {offsets = [0, 48], sizes = [2, 16], strides = [1, 1]} : vector<2x64xf32> to vector<2x16xf32>
    %622 = math.tanh %621 : vector<2x16xf32>
    %623 = vector.extract_strided_slice %620 {offsets = [0, 0], sizes = [2, 16], strides = [1, 1]} : vector<2x48xf32> to vector<2x16xf32>
    %624 = vector.extract_strided_slice %620 {offsets = [0, 16], sizes = [2, 16], strides = [1, 1]} : vector<2x48xf32> to vector<2x16xf32>
    %625 = vector.extract_strided_slice %620 {offsets = [0, 32], sizes = [2, 16], strides = [1, 1]} : vector<2x48xf32> to vector<2x16xf32>
    %626 = arith.mulf %624, %609 : vector<2x16xf32>
    %627 = arith.mulf %623, %622 : vector<2x16xf32>
    %628 = arith.addf %626, %627 : vector<2x16xf32>
    %629 = math.tanh %628 : vector<2x16xf32>
    %630 = arith.mulf %625, %629 : vector<2x16xf32>
    %cst_148 = arith.constant dense<0.000000e+00> : vector<2x64xf32>
    %631 = tpu.matmul %460, %605, %cst_148 {dimension_numbers = #tpu.dot_dimension_numbers<[1], [0], [0], [1], [0, 0, 1, 1], [], []>} : vector<2x64xf32>, vector<64x64xf32>, vector<2x64xf32> -> vector<2x64xf32>
    %632 = vector.broadcast %607 : vector<1x64xf32> to vector<2x64xf32>
    %633 = arith.addf %631, %632 : vector<2x64xf32>
    %cst_149 = arith.constant dense<0.000000e+00> : vector<2x64xf32>
    %634 = tpu.matmul %630, %606, %cst_149 {dimension_numbers = #tpu.dot_dimension_numbers<[1], [0], [0], [1], [0, 0, 1, 1], [], []>} : vector<2x16xf32>, vector<16x64xf32>, vector<2x64xf32> -> vector<2x64xf32>
    %635 = arith.addf %633, %634 : vector<2x64xf32>
    %636 = vector.extract_strided_slice %635 {offsets = [0, 0], sizes = [2, 48], strides = [1, 1]} : vector<2x64xf32> to vector<2x48xf32>
    %637 = arith.negf %636 : vector<2x48xf32>
    %638 = math.exp %637 : vector<2x48xf32>
    %cst_150 = arith.constant 1.000000e+00 : f32
    %639 = vector.broadcast %cst_150 : f32 to vector<2x48xf32>
    %640 = arith.addf %639, %638 : vector<2x48xf32>
    %641 = arith.divf %639, %640 : vector<2x48xf32>
    %642 = vector.extract_strided_slice %635 {offsets = [0, 48], sizes = [2, 16], strides = [1, 1]} : vector<2x64xf32> to vector<2x16xf32>
    %643 = math.tanh %642 : vector<2x16xf32>
    %644 = vector.extract_strided_slice %641 {offsets = [0, 0], sizes = [2, 16], strides = [1, 1]} : vector<2x48xf32> to vector<2x16xf32>
    %645 = vector.extract_strided_slice %641 {offsets = [0, 16], sizes = [2, 16], strides = [1, 1]} : vector<2x48xf32> to vector<2x16xf32>
    %646 = vector.extract_strided_slice %641 {offsets = [0, 32], sizes = [2, 16], strides = [1, 1]} : vector<2x48xf32> to vector<2x16xf32>
    %647 = arith.mulf %645, %628 : vector<2x16xf32>
    %648 = arith.mulf %644, %643 : vector<2x16xf32>
    %649 = arith.addf %647, %648 : vector<2x16xf32>
    %650 = math.tanh %649 : vector<2x16xf32>
    %651 = arith.mulf %646, %650 : vector<2x16xf32>
    %cst_151 = arith.constant dense<0.000000e+00> : vector<2x64xf32>
    %652 = tpu.matmul %484, %605, %cst_151 {dimension_numbers = #tpu.dot_dimension_numbers<[1], [0], [0], [1], [0, 0, 1, 1], [], []>} : vector<2x64xf32>, vector<64x64xf32>, vector<2x64xf32> -> vector<2x64xf32>
    %653 = vector.broadcast %607 : vector<1x64xf32> to vector<2x64xf32>
    %654 = arith.addf %652, %653 : vector<2x64xf32>
    %cst_152 = arith.constant dense<0.000000e+00> : vector<2x64xf32>
    %655 = tpu.matmul %651, %606, %cst_152 {dimension_numbers = #tpu.dot_dimension_numbers<[1], [0], [0], [1], [0, 0, 1, 1], [], []>} : vector<2x16xf32>, vector<16x64xf32>, vector<2x64xf32> -> vector<2x64xf32>
    %656 = arith.addf %654, %655 : vector<2x64xf32>
    %657 = vector.extract_strided_slice %656 {offsets = [0, 0], sizes = [2, 48], strides = [1, 1]} : vector<2x64xf32> to vector<2x48xf32>
    %658 = arith.negf %657 : vector<2x48xf32>
    %659 = math.exp %658 : vector<2x48xf32>
    %cst_153 = arith.constant 1.000000e+00 : f32
    %660 = vector.broadcast %cst_153 : f32 to vector<2x48xf32>
    %661 = arith.addf %660, %659 : vector<2x48xf32>
    %662 = arith.divf %660, %661 : vector<2x48xf32>
    %663 = vector.extract_strided_slice %656 {offsets = [0, 48], sizes = [2, 16], strides = [1, 1]} : vector<2x64xf32> to vector<2x16xf32>
    %664 = math.tanh %663 : vector<2x16xf32>
    %665 = vector.extract_strided_slice %662 {offsets = [0, 0], sizes = [2, 16], strides = [1, 1]} : vector<2x48xf32> to vector<2x16xf32>
    %666 = vector.extract_strided_slice %662 {offsets = [0, 16], sizes = [2, 16], strides = [1, 1]} : vector<2x48xf32> to vector<2x16xf32>
    %667 = vector.extract_strided_slice %662 {offsets = [0, 32], sizes = [2, 16], strides = [1, 1]} : vector<2x48xf32> to vector<2x16xf32>
    %668 = arith.mulf %666, %649 : vector<2x16xf32>
    %669 = arith.mulf %665, %664 : vector<2x16xf32>
    %670 = arith.addf %668, %669 : vector<2x16xf32>
    %671 = math.tanh %670 : vector<2x16xf32>
    %672 = arith.mulf %667, %671 : vector<2x16xf32>
    %cst_154 = arith.constant dense<0.000000e+00> : vector<2x64xf32>
    %673 = tpu.matmul %508, %605, %cst_154 {dimension_numbers = #tpu.dot_dimension_numbers<[1], [0], [0], [1], [0, 0, 1, 1], [], []>} : vector<2x64xf32>, vector<64x64xf32>, vector<2x64xf32> -> vector<2x64xf32>
    %674 = vector.broadcast %607 : vector<1x64xf32> to vector<2x64xf32>
    %675 = arith.addf %673, %674 : vector<2x64xf32>
    %cst_155 = arith.constant dense<0.000000e+00> : vector<2x64xf32>
    %676 = tpu.matmul %672, %606, %cst_155 {dimension_numbers = #tpu.dot_dimension_numbers<[1], [0], [0], [1], [0, 0, 1, 1], [], []>} : vector<2x16xf32>, vector<16x64xf32>, vector<2x64xf32> -> vector<2x64xf32>
    %677 = arith.addf %675, %676 : vector<2x64xf32>
    %678 = vector.extract_strided_slice %677 {offsets = [0, 0], sizes = [2, 48], strides = [1, 1]} : vector<2x64xf32> to vector<2x48xf32>
    %679 = arith.negf %678 : vector<2x48xf32>
    %680 = math.exp %679 : vector<2x48xf32>
    %cst_156 = arith.constant 1.000000e+00 : f32
    %681 = vector.broadcast %cst_156 : f32 to vector<2x48xf32>
    %682 = arith.addf %681, %680 : vector<2x48xf32>
    %683 = arith.divf %681, %682 : vector<2x48xf32>
    %684 = vector.extract_strided_slice %677 {offsets = [0, 48], sizes = [2, 16], strides = [1, 1]} : vector<2x64xf32> to vector<2x16xf32>
    %685 = math.tanh %684 : vector<2x16xf32>
    %686 = vector.extract_strided_slice %683 {offsets = [0, 0], sizes = [2, 16], strides = [1, 1]} : vector<2x48xf32> to vector<2x16xf32>
    %687 = vector.extract_strided_slice %683 {offsets = [0, 16], sizes = [2, 16], strides = [1, 1]} : vector<2x48xf32> to vector<2x16xf32>
    %688 = vector.extract_strided_slice %683 {offsets = [0, 32], sizes = [2, 16], strides = [1, 1]} : vector<2x48xf32> to vector<2x16xf32>
    %689 = arith.mulf %687, %670 : vector<2x16xf32>
    %690 = arith.mulf %686, %685 : vector<2x16xf32>
    %691 = arith.addf %689, %690 : vector<2x16xf32>
    %692 = math.tanh %691 : vector<2x16xf32>
    %693 = arith.mulf %688, %692 : vector<2x16xf32>
    %cst_157 = arith.constant dense<0.000000e+00> : vector<2x64xf32>
    %694 = tpu.matmul %532, %605, %cst_157 {dimension_numbers = #tpu.dot_dimension_numbers<[1], [0], [0], [1], [0, 0, 1, 1], [], []>} : vector<2x64xf32>, vector<64x64xf32>, vector<2x64xf32> -> vector<2x64xf32>
    %695 = vector.broadcast %607 : vector<1x64xf32> to vector<2x64xf32>
    %696 = arith.addf %694, %695 : vector<2x64xf32>
    %cst_158 = arith.constant dense<0.000000e+00> : vector<2x64xf32>
    %697 = tpu.matmul %693, %606, %cst_158 {dimension_numbers = #tpu.dot_dimension_numbers<[1], [0], [0], [1], [0, 0, 1, 1], [], []>} : vector<2x16xf32>, vector<16x64xf32>, vector<2x64xf32> -> vector<2x64xf32>
    %698 = arith.addf %696, %697 : vector<2x64xf32>
    %699 = vector.extract_strided_slice %698 {offsets = [0, 0], sizes = [2, 48], strides = [1, 1]} : vector<2x64xf32> to vector<2x48xf32>
    %700 = arith.negf %699 : vector<2x48xf32>
    %701 = math.exp %700 : vector<2x48xf32>
    %cst_159 = arith.constant 1.000000e+00 : f32
    %702 = vector.broadcast %cst_159 : f32 to vector<2x48xf32>
    %703 = arith.addf %702, %701 : vector<2x48xf32>
    %704 = arith.divf %702, %703 : vector<2x48xf32>
    %705 = vector.extract_strided_slice %698 {offsets = [0, 48], sizes = [2, 16], strides = [1, 1]} : vector<2x64xf32> to vector<2x16xf32>
    %706 = math.tanh %705 : vector<2x16xf32>
    %707 = vector.extract_strided_slice %704 {offsets = [0, 0], sizes = [2, 16], strides = [1, 1]} : vector<2x48xf32> to vector<2x16xf32>
    %708 = vector.extract_strided_slice %704 {offsets = [0, 16], sizes = [2, 16], strides = [1, 1]} : vector<2x48xf32> to vector<2x16xf32>
    %709 = vector.extract_strided_slice %704 {offsets = [0, 32], sizes = [2, 16], strides = [1, 1]} : vector<2x48xf32> to vector<2x16xf32>
    %710 = arith.mulf %708, %691 : vector<2x16xf32>
    %711 = arith.mulf %707, %706 : vector<2x16xf32>
    %712 = arith.addf %710, %711 : vector<2x16xf32>
    %713 = math.tanh %712 : vector<2x16xf32>
    %714 = arith.mulf %709, %713 : vector<2x16xf32>
    %cst_160 = arith.constant dense<0.000000e+00> : vector<2x64xf32>
    %715 = tpu.matmul %556, %605, %cst_160 {dimension_numbers = #tpu.dot_dimension_numbers<[1], [0], [0], [1], [0, 0, 1, 1], [], []>} : vector<2x64xf32>, vector<64x64xf32>, vector<2x64xf32> -> vector<2x64xf32>
    %716 = vector.broadcast %607 : vector<1x64xf32> to vector<2x64xf32>
    %717 = arith.addf %715, %716 : vector<2x64xf32>
    %cst_161 = arith.constant dense<0.000000e+00> : vector<2x64xf32>
    %718 = tpu.matmul %714, %606, %cst_161 {dimension_numbers = #tpu.dot_dimension_numbers<[1], [0], [0], [1], [0, 0, 1, 1], [], []>} : vector<2x16xf32>, vector<16x64xf32>, vector<2x64xf32> -> vector<2x64xf32>
    %719 = arith.addf %717, %718 : vector<2x64xf32>
    %720 = vector.extract_strided_slice %719 {offsets = [0, 0], sizes = [2, 48], strides = [1, 1]} : vector<2x64xf32> to vector<2x48xf32>
    %721 = arith.negf %720 : vector<2x48xf32>
    %722 = math.exp %721 : vector<2x48xf32>
    %cst_162 = arith.constant 1.000000e+00 : f32
    %723 = vector.broadcast %cst_162 : f32 to vector<2x48xf32>
    %724 = arith.addf %723, %722 : vector<2x48xf32>
    %725 = arith.divf %723, %724 : vector<2x48xf32>
    %726 = vector.extract_strided_slice %719 {offsets = [0, 48], sizes = [2, 16], strides = [1, 1]} : vector<2x64xf32> to vector<2x16xf32>
    %727 = math.tanh %726 : vector<2x16xf32>
    %728 = vector.extract_strided_slice %725 {offsets = [0, 0], sizes = [2, 16], strides = [1, 1]} : vector<2x48xf32> to vector<2x16xf32>
    %729 = vector.extract_strided_slice %725 {offsets = [0, 16], sizes = [2, 16], strides = [1, 1]} : vector<2x48xf32> to vector<2x16xf32>
    %730 = vector.extract_strided_slice %725 {offsets = [0, 32], sizes = [2, 16], strides = [1, 1]} : vector<2x48xf32> to vector<2x16xf32>
    %731 = arith.mulf %729, %712 : vector<2x16xf32>
    %732 = arith.mulf %728, %727 : vector<2x16xf32>
    %733 = arith.addf %731, %732 : vector<2x16xf32>
    %734 = math.tanh %733 : vector<2x16xf32>
    %735 = arith.mulf %730, %734 : vector<2x16xf32>
    %cst_163 = arith.constant dense<0.000000e+00> : vector<2x64xf32>
    %736 = tpu.matmul %580, %605, %cst_163 {dimension_numbers = #tpu.dot_dimension_numbers<[1], [0], [0], [1], [0, 0, 1, 1], [], []>} : vector<2x64xf32>, vector<64x64xf32>, vector<2x64xf32> -> vector<2x64xf32>
    %737 = vector.broadcast %607 : vector<1x64xf32> to vector<2x64xf32>
    %738 = arith.addf %736, %737 : vector<2x64xf32>
    %cst_164 = arith.constant dense<0.000000e+00> : vector<2x64xf32>
    %739 = tpu.matmul %735, %606, %cst_164 {dimension_numbers = #tpu.dot_dimension_numbers<[1], [0], [0], [1], [0, 0, 1, 1], [], []>} : vector<2x16xf32>, vector<16x64xf32>, vector<2x64xf32> -> vector<2x64xf32>
    %740 = arith.addf %738, %739 : vector<2x64xf32>
    %741 = vector.extract_strided_slice %740 {offsets = [0, 0], sizes = [2, 48], strides = [1, 1]} : vector<2x64xf32> to vector<2x48xf32>
    %742 = arith.negf %741 : vector<2x48xf32>
    %743 = math.exp %742 : vector<2x48xf32>
    %cst_165 = arith.constant 1.000000e+00 : f32
    %744 = vector.broadcast %cst_165 : f32 to vector<2x48xf32>
    %745 = arith.addf %744, %743 : vector<2x48xf32>
    %746 = arith.divf %744, %745 : vector<2x48xf32>
    %747 = vector.extract_strided_slice %740 {offsets = [0, 48], sizes = [2, 16], strides = [1, 1]} : vector<2x64xf32> to vector<2x16xf32>
    %748 = math.tanh %747 : vector<2x16xf32>
    %749 = vector.extract_strided_slice %746 {offsets = [0, 0], sizes = [2, 16], strides = [1, 1]} : vector<2x48xf32> to vector<2x16xf32>
    %750 = vector.extract_strided_slice %746 {offsets = [0, 16], sizes = [2, 16], strides = [1, 1]} : vector<2x48xf32> to vector<2x16xf32>
    %751 = vector.extract_strided_slice %746 {offsets = [0, 32], sizes = [2, 16], strides = [1, 1]} : vector<2x48xf32> to vector<2x16xf32>
    %752 = arith.mulf %750, %733 : vector<2x16xf32>
    %753 = arith.mulf %749, %748 : vector<2x16xf32>
    %754 = arith.addf %752, %753 : vector<2x16xf32>
    %755 = math.tanh %754 : vector<2x16xf32>
    %756 = arith.mulf %751, %755 : vector<2x16xf32>
    %cst_166 = arith.constant dense<0.000000e+00> : vector<2x64xf32>
    %757 = tpu.matmul %604, %605, %cst_166 {dimension_numbers = #tpu.dot_dimension_numbers<[1], [0], [0], [1], [0, 0, 1, 1], [], []>} : vector<2x64xf32>, vector<64x64xf32>, vector<2x64xf32> -> vector<2x64xf32>
    %758 = vector.broadcast %607 : vector<1x64xf32> to vector<2x64xf32>
    %759 = arith.addf %757, %758 : vector<2x64xf32>
    %cst_167 = arith.constant dense<0.000000e+00> : vector<2x64xf32>
    %760 = tpu.matmul %756, %606, %cst_167 {dimension_numbers = #tpu.dot_dimension_numbers<[1], [0], [0], [1], [0, 0, 1, 1], [], []>} : vector<2x16xf32>, vector<16x64xf32>, vector<2x64xf32> -> vector<2x64xf32>
    %761 = arith.addf %759, %760 : vector<2x64xf32>
    %762 = vector.extract_strided_slice %761 {offsets = [0, 0], sizes = [2, 48], strides = [1, 1]} : vector<2x64xf32> to vector<2x48xf32>
    %763 = arith.negf %762 : vector<2x48xf32>
    %764 = math.exp %763 : vector<2x48xf32>
    %cst_168 = arith.constant 1.000000e+00 : f32
    %765 = vector.broadcast %cst_168 : f32 to vector<2x48xf32>
    %766 = arith.addf %765, %764 : vector<2x48xf32>
    %767 = arith.divf %765, %766 : vector<2x48xf32>
    %768 = vector.extract_strided_slice %761 {offsets = [0, 48], sizes = [2, 16], strides = [1, 1]} : vector<2x64xf32> to vector<2x16xf32>
    %769 = math.tanh %768 : vector<2x16xf32>
    %770 = vector.extract_strided_slice %767 {offsets = [0, 0], sizes = [2, 16], strides = [1, 1]} : vector<2x48xf32> to vector<2x16xf32>
    %771 = vector.extract_strided_slice %767 {offsets = [0, 16], sizes = [2, 16], strides = [1, 1]} : vector<2x48xf32> to vector<2x16xf32>
    %772 = vector.extract_strided_slice %767 {offsets = [0, 32], sizes = [2, 16], strides = [1, 1]} : vector<2x48xf32> to vector<2x16xf32>
    %773 = arith.mulf %771, %754 : vector<2x16xf32>
    %774 = arith.mulf %770, %769 : vector<2x16xf32>
    %775 = arith.addf %773, %774 : vector<2x16xf32>
    %776 = math.tanh %775 : vector<2x16xf32>
    %777 = arith.mulf %772, %776 : vector<2x16xf32>
    %778 = tpu.concatenate %630, %651, %672, %693, %714, %735, %756, %777 in 1 : vector<2x16xf32>, vector<2x16xf32>, vector<2x16xf32>, vector<2x16xf32>, vector<2x16xf32>, vector<2x16xf32>, vector<2x16xf32>, vector<2x16xf32> -> vector<2x128xf32>
    %c0_169 = arith.constant 0 : index
    %c0_170 = arith.constant 0 : index
    %779 = vector.load %arg24[%c0_169, %c0_170] : memref<2x128xf32, #tpu.memory_space<vmem>>, vector<2x128xf32>
    tpu.vector_store %arg24[%c0_169, %c0_170], %778 {strides = array<i32>} : memref<2x128xf32, #tpu.memory_space<vmem>>, vector<2x128xf32>,
    return
  }
  func.func @transform_0(%arg0: i32) -> (i32, i32) {
    %c0_i32 = arith.constant 0 : i32
    %c0_i32_0 = arith.constant 0 : i32
    %c0_i32_1 = arith.constant 0 : i32
    return %c0_i32, %c0_i32_0 : i32, i32
  }
  func.func @transform_1(%arg0: i32) -> (i32, i32) {
    %c0_i32 = arith.constant 0 : i32
    %c0_i32_0 = arith.constant 0 : i32
    %c0_i32_1 = arith.constant 0 : i32
    return %c0_i32, %c0_i32_0 : i32, i32
  }
  func.func @transform_2(%arg0: i32) -> (i32, i32) {
    %c0_i32 = arith.constant 0 : i32
    %c0_i32_0 = arith.constant 0 : i32
    %c0_i32_1 = arith.constant 0 : i32
    return %c0_i32, %c0_i32_0 : i32, i32
  }
  func.func @transform_3(%arg0: i32) -> (i32, i32) {
    %c0_i32 = arith.constant 0 : i32
    %c0_i32_0 = arith.constant 0 : i32
    %c0_i32_1 = arith.constant 0 : i32
    return %c0_i32, %c0_i32_0 : i32, i32
  }
  func.func @transform_4(%arg0: i32) -> (i32, i32) {
    %c0_i32 = arith.constant 0 : i32
    %c0_i32_0 = arith.constant 0 : i32
    %c0_i32_1 = arith.constant 0 : i32
    return %c0_i32, %c0_i32_0 : i32, i32
  }
  func.func @transform_5(%arg0: i32) -> (i32, i32) {
    %c0_i32 = arith.constant 0 : i32
    %c0_i32_0 = arith.constant 0 : i32
    %c0_i32_1 = arith.constant 0 : i32
    return %c0_i32, %c0_i32_0 : i32, i32
  }
  func.func @transform_6(%arg0: i32) -> (i32, i32) {
    %c0_i32 = arith.constant 0 : i32
    %c0_i32_0 = arith.constant 0 : i32
    %c0_i32_1 = arith.constant 0 : i32
    return %c0_i32, %c0_i32_0 : i32, i32
  }
  func.func @transform_7(%arg0: i32) -> (i32, i32) {
    %c0_i32 = arith.constant 0 : i32
    %c0_i32_0 = arith.constant 0 : i32
    %c0_i32_1 = arith.constant 0 : i32
    return %c0_i32, %c0_i32_0 : i32, i32
  }
  func.func @transform_8(%arg0: i32) -> (i32, i32) {
    %c0_i32 = arith.constant 0 : i32
    %c0_i32_0 = arith.constant 0 : i32
    %c0_i32_1 = arith.constant 0 : i32
    return %c0_i32, %c0_i32_0 : i32, i32
  }
  func.func @transform_9(%arg0: i32) -> (i32, i32) {
    %c0_i32 = arith.constant 0 : i32
    %c0_i32_0 = arith.constant 0 : i32
    %c0_i32_1 = arith.constant 0 : i32
    return %c0_i32, %c0_i32_0 : i32, i32
  }
  func.func @transform_10(%arg0: i32) -> (i32, i32) {
    %c0_i32 = arith.constant 0 : i32
    %c0_i32_0 = arith.constant 0 : i32
    %c0_i32_1 = arith.constant 0 : i32
    return %c0_i32, %c0_i32_0 : i32, i32
  }
  func.func @transform_11(%arg0: i32) -> (i32, i32) {
    %c0_i32 = arith.constant 0 : i32
    %c0_i32_0 = arith.constant 0 : i32
    %c0_i32_1 = arith.constant 0 : i32
    return %c0_i32, %c0_i32_0 : i32, i32
  }
  func.func @transform_12(%arg0: i32) -> (i32, i32) {
    %c0_i32 = arith.constant 0 : i32
    %c0_i32_0 = arith.constant 0 : i32
    %c0_i32_1 = arith.constant 0 : i32
    return %c0_i32, %c0_i32_0 : i32, i32
  }
  func.func @transform_13(%arg0: i32) -> (i32, i32) {
    %c0_i32 = arith.constant 0 : i32
    %c0_i32_0 = arith.constant 0 : i32
    %c0_i32_1 = arith.constant 0 : i32
    return %c0_i32, %c0_i32_0 : i32, i32
  }
  func.func @transform_14(%arg0: i32) -> (i32, i32) {
    %c0_i32 = arith.constant 0 : i32
    %c0_i32_0 = arith.constant 0 : i32
    %c0_i32_1 = arith.constant 0 : i32
    return %c0_i32, %c0_i32_0 : i32, i32
  }
  func.func @transform_15(%arg0: i32) -> (i32, i32) {
    %c0_i32 = arith.constant 0 : i32
    %c0_i32_0 = arith.constant 0 : i32
    %c0_i32_1 = arith.constant 0 : i32
    return %c0_i32, %c0_i32_0 : i32, i32
  }
  func.func @transform_16(%arg0: i32) -> (i32, i32) {
    %c0_i32 = arith.constant 0 : i32
    %c0_i32_0 = arith.constant 0 : i32
    %c0_i32_1 = arith.constant 0 : i32
    return %c0_i32, %c0_i32_0 : i32, i32
  }
  func.func @transform_17(%arg0: i32) -> (i32, i32) {
    %c0_i32 = arith.constant 0 : i32
    %c0_i32_0 = arith.constant 0 : i32
    %c0_i32_1 = arith.constant 0 : i32
    return %c0_i32, %c0_i32_0 : i32, i32
  }
  func.func @transform_18(%arg0: i32) -> (i32, i32) {
    %c0_i32 = arith.constant 0 : i32
    %c0_i32_0 = arith.constant 0 : i32
    %c0_i32_1 = arith.constant 0 : i32
    return %c0_i32, %c0_i32_0 : i32, i32
  }
  func.func @transform_19(%arg0: i32) -> (i32, i32) {
    %c0_i32 = arith.constant 0 : i32
    %c0_i32_0 = arith.constant 0 : i32
    %c0_i32_1 = arith.constant 0 : i32
    return %c0_i32, %c0_i32_0 : i32, i32
  }
  func.func @transform_20(%arg0: i32) -> (i32, i32) {
    %c0_i32 = arith.constant 0 : i32
    %c0_i32_0 = arith.constant 0 : i32
    %c0_i32_1 = arith.constant 0 : i32
    return %c0_i32, %c0_i32_0 : i32, i32
  }
  func.func @transform_21(%arg0: i32) -> (i32, i32) {
    %c0_i32 = arith.constant 0 : i32
    %c0_i32_0 = arith.constant 0 : i32
    %c0_i32_1 = arith.constant 0 : i32
    return %c0_i32, %c0_i32_0 : i32, i32
  }
  func.func @transform_22(%arg0: i32) -> (i32, i32) {
    %c0_i32 = arith.constant 0 : i32
    %c0_i32_0 = arith.constant 0 : i32
    %c0_i32_1 = arith.constant 0 : i32
    return %c0_i32, %c0_i32_0 : i32, i32
  }
  func.func @transform_23(%arg0: i32) -> (i32, i32) {
    %c0_i32 = arith.constant 0 : i32
    %c0_i32_0 = arith.constant 0 : i32
    %c0_i32_1 = arith.constant 0 : i32
    return %c0_i32, %c0_i32_0 : i32, i32
  }
}

</mosaic_0001>

<llo_original>
// kernel: svs_vae_forward.1
$region0: #{svs_vae_forward.1}
  #allocation0 [shape = 'u32[]', space=smem, size = 0x4, offset = 0x4, fixed_abs, tag = 'smem constant byte address 0x4 - core index']
  #allocation1 [shape = 'u32[144,128]{1,0:T(1,128)}', space=vmem, size = 0x12000, scoped, tag = 'internal scratch']
  %s0 = inlined_call_operand.hbm [shape: f32[16,8], index: 0, kind: input, shape index: {}]
  %s1 = inlined_call_operand.hbm [shape: f32[8,128], index: 1, kind: input, shape index: {}]
  %s2 = inlined_call_operand.hbm [shape: f32[32,128], index: 2, kind: input, shape index: {}]
  %s3 = inlined_call_operand.hbm [shape: f32[1,128], index: 3, kind: input, shape index: {}]
  %s4 = inlined_call_operand.hbm [shape: f32[32,128], index: 4, kind: input, shape index: {}]
  %s5 = inlined_call_operand.hbm [shape: f32[32,128], index: 5, kind: input, shape index: {}]
  %s6 = inlined_call_operand.hbm [shape: f32[1,128], index: 6, kind: input, shape index: {}]
  %s7 = inlined_call_operand.vmem [shape: f32[128,128], index: 7, kind: input, shape index: {}]
  %s8 = inlined_call_operand.hbm [shape: f32[1,128], index: 8, kind: input, shape index: {}]
  %s9 = inlined_call_operand.vmem [shape: f32[128,32], index: 9, kind: input, shape index: {}]
  %s10 = inlined_call_operand.hbm [shape: f32[1,32], index: 10, kind: input, shape index: {}]
  %s11 = inlined_call_operand.vmem [shape: f32[32,128], index: 11, kind: input, shape index: {}]
  %s12 = inlined_call_operand.hbm [shape: f32[1,128], index: 12, kind: input, shape index: {}]
  %s13 = inlined_call_operand.hbm [shape: f32[128,128], index: 13, kind: input, shape index: {}]
  %s14 = inlined_call_operand.vmem [shape: f32[1,128], index: 14, kind: input, shape index: {}]
  %s15 = inlined_call_operand.hbm [shape: f32[16,256], index: 15, kind: input, shape index: {}]
  %s16 = inlined_call_operand.hbm [shape: f32[64,256], index: 16, kind: input, shape index: {}]
  %s17 = inlined_call_operand.hbm [shape: f32[1,256], index: 17, kind: input, shape index: {}]
  %s18 = inlined_call_operand.vmem [shape: f32[64,64], index: 18, kind: input, shape index: {}]
  %s19 = inlined_call_operand.hbm [shape: f32[16,64], index: 19, kind: input, shape index: {}]
  %s20 = inlined_call_operand.hbm [shape: f32[1,64], index: 20, kind: input, shape index: {}]
  %s21 = inlined_call_operand.hbm [shape: f32[2,32], index: 21, kind: output, shape index: {0}]
  %s22 = inlined_call_operand.hbm [shape: f32[2,32], index: 22, kind: output, shape index: {1}]
  %s23 = inlined_call_operand.vmem [shape: f32[2,128], index: 23, kind: output, shape index: {2}]
  %24 = xla_tuple %s21, %s22, %s23
  %s25 = sld [smem:[#allocation0]]
  $region174: #{svs_vae_forward.1} parent=0
    _
  %s27 = ssub.s32 1, %s25
  %s28 = scalar_select 0, %s27, %s25
  $region1: #{svs_vae_forward.1} parent=0
    #allocation2 [shape = 'u8[8192]{0}', space=vmem, size = 0x2000, scoped, tag = 'input window, operand 0, single buffered']
    #allocation3 [shape = 's32[1]{0}', space=sflag, size = 0x4, scoped, tag = 'scoped memory for svs_vae_forward.1']
    #allocation4 [shape = 's32[1]{0}', space=sflag, size = 0x4, scoped, tag = 'scoped memory for svs_vae_forward.1']
    #allocation5 [shape = 'u8[4096]{0}', space=vmem, size = 0x1000, scoped, tag = 'input window, operand 1, single buffered']
    #allocation6 [shape = 's32[1]{0}', space=sflag, size = 0x4, scoped, tag = 'scoped memory for svs_vae_forward.1']
    #allocation7 [shape = 'u8[16384]{0}', space=vmem, size = 0x4000, scoped, tag = 'input window, operand 2, single buffered']
    #allocation8 [shape = 'u8[512]{0}', space=vmem, size = 0x400, scoped, tag = 'input window, operand 3, single buffered']
    #allocation9 [shape = 's32[1]{0}', space=sflag, size = 0x4, scoped, tag = 'scoped memory for svs_vae_forward.1']
    #allocation10 [shape = 'u8[16384]{0}', space=vmem, size = 0x4000, scoped, tag = 'input window, operand 4, single buffered']
    #allocation11 [shape = 'u8[16384]{0}', space=vmem, size = 0x4000, scoped, tag = 'input window, operand 5, single buffered']
    #allocation12 [shape = 's32[1]{0}', space=sflag, size = 0x4, scoped, tag = 'scoped memory for svs_vae_forward.1']
    #allocation13 [shape = 'u8[512]{0}', space=vmem, size = 0x400, scoped, tag = 'input window, operand 6, single buffered']
    #allocation14 [shape = 'u8[512]{0}', space=vmem, size = 0x400, scoped, tag = 'input window, operand 8, single buffered']
    #allocation15 [shape = 's32[1]{0}', space=sflag, size = 0x4, scoped, tag = 'scoped memory for svs_vae_forward.1']
    #allocation16 [shape = 'u8[512]{0}', space=vmem, size = 0x400, scoped, tag = 'input window, operand 10, single buffered']
    #allocation17 [shape = 'u8[512]{0}', space=vmem, size = 0x400, scoped, tag = 'input window, operand 12, single buffered']
    #allocation18 [shape = 's32[1]{0}', space=sflag, size = 0x4, scoped, tag = 'scoped memory for svs_vae_forward.1']
    #allocation19 [shape = 'u8[65536]{0}', space=vmem, size = 0x10000, scoped, tag = 'input window, operand 13, single buffered']
    #allocation20 [shape = 'u8[16384]{0}', space=vmem, size = 0x4000, scoped, tag = 'input window, operand 15, single buffered']
    #allocation21 [shape = 's32[1]{0}', space=sflag, size = 0x4, scoped, tag = 'scoped memory for svs_vae_forward.1']
    #allocation22 [shape = 'u8[65536]{0}', space=vmem, size = 0x10000, scoped, tag = 'input window, operand 16, single buffered']
    #allocation23 [shape = 'u8[1024]{0}', space=vmem, size = 0x400, scoped, tag = 'input window, operand 17, single buffered']
    #allocation24 [shape = 's32[1]{0}', space=sflag, size = 0x4, scoped, tag = 'scoped memory for svs_vae_forward.1']
    #allocation25 [shape = 'u8[8192]{0}', space=vmem, size = 0x2000, scoped, tag = 'input window, operand 19, single buffered']
    #allocation26 [shape = 'u8[512]{0}', space=vmem, size = 0x400, scoped, tag = 'input window, operand 20, single buffered']
    #allocation27 [shape = 's32[1]{0}', space=sflag, size = 0x4, scoped, tag = 'scoped memory for svs_vae_forward.1']
    #allocation28 [shape = 'u8[1024]{0}', space=vmem, size = 0x400, scoped, tag = 'output window, operand 0, single buffered']
    #allocation29 [shape = 'u8[1024]{0}', space=vmem, size = 0x400, scoped, tag = 'output window, operand 1, single buffered']
    #allocation30 [shape = 's32[1]{0}', space=sflag, size = 0x4, scoped, tag = 'scoped memory for svs_vae_forward.1']
    %29 = vsyncpa [#allocation3], 0
    %30 = vsyncpa [#allocation6], 0
    %31 = vsyncpa [#allocation9], 0
    %32 = vsyncpa [#allocation12], 0
    %33 = vsyncpa [#allocation15], 0
    %34 = vsyncpa [#allocation18], 0
    %35 = vsyncpa [#allocation21], 0
    %36 = vsyncpa [#allocation24], 0
    %37 = vsyncpa [#allocation27], 0
    %38 = vsyncpa [#allocation4], 0
    %39 = vsyncpa [#allocation30], 0
    // Predicated region
    $region2: #{svs_vae_forward.1} parent=1 // pred_check
      _
    $region3: #{svs_vae_forward.1} parent=1 // pred_check_branch
      %41 = sbr.rel (0) target = $region5
    $region4: #{svs_vae_forward.1} parent=1 // pred_region
      %s43 = ssub.s32 256, 256
      %44 = vsyncadd [#allocation3], %s43
      %s45 = sshll.u32 [#allocation2], 4
      %s46 = int_to_ptr.vmem [resolvable:$true] %s45
      %51 = dma.hbm_to_vmem [thread:$0]  %s0, 256, %s46, [#allocation3], 128, 128, 8
    $region5: #{svs_vae_forward.1} parent=1 // pred_fallthru
      _
    // Predicated region
    $region6: #{svs_vae_forward.1} parent=1 // pred_check
      _
    $region7: #{svs_vae_forward.1} parent=1 // pred_check_branch
      %53 = sbr.rel (0) target = $region9
    $region8: #{svs_vae_forward.1} parent=1 // pred_region
      %s55 = ssub.s32 128, 128
      %56 = vsyncadd [#allocation6], %s55
      %s58 = sshll.u32 [#allocation5], 4
      %s59 = int_to_ptr.vmem [resolvable:$true] %s58
      %61 = dma.hbm_to_vmem [thread:$0]  %s1, 128, %s59, [#allocation6]
    $region9: #{svs_vae_forward.1} parent=1 // pred_fallthru
      _
    // Predicated region
    $region10: #{svs_vae_forward.1} parent=1 // pred_check
      _
    $region11: #{svs_vae_forward.1} parent=1 // pred_check_branch
      %63 = sbr.rel (0) target = $region13
    $region12: #{svs_vae_forward.1} parent=1 // pred_region
      %s65 = ssub.s32 512, 512
      %66 = vsyncadd [#allocation6], %s65
      %s67 = sshll.u32 [#allocation7], 4
      %s68 = int_to_ptr.vmem [resolvable:$true] %s67
      %73 = dma.hbm_to_vmem [thread:$0]  %s2, 512, %s68, [#allocation6], 128, 128, 8
    $region13: #{svs_vae_forward.1} parent=1 // pred_fallthru
      _
    // Predicated region
    $region14: #{svs_vae_forward.1} parent=1 // pred_check
      _
    $region15: #{svs_vae_forward.1} parent=1 // pred_check_branch
      %75 = sbr.rel (0) target = $region17
    $region16: #{svs_vae_forward.1} parent=1 // pred_region
      %s77 = ssub.s32 16, 16
      %78 = vsyncadd [#allocation9], %s77
      %s80 = sshll.u32 [#allocation8], 4
      %s81 = int_to_ptr.vmem [resolvable:$true] %s80
      %83 = dma.hbm_to_vmem [thread:$0]  %s3, 16, %s81, [#allocation9]
    $region17: #{svs_vae_forward.1} parent=1 // pred_fallthru
      _
    // Predicated region
    $region18: #{svs_vae_forward.1} parent=1 // pred_check
      _
    $region19: #{svs_vae_forward.1} parent=1 // pred_check_branch
      %85 = sbr.rel (0) target = $region21
    $region20: #{svs_vae_forward.1} parent=1 // pred_region
      %s87 = ssub.s32 512, 512
      %88 = vsyncadd [#allocation9], %s87
      %s89 = sshll.u32 [#allocation10], 4
      %s90 = int_to_ptr.vmem [resolvable:$true] %s89
      %95 = dma.hbm_to_vmem [thread:$0]  %s4, 512, %s90, [#allocation9], 128, 128, 8
    $region21: #{svs_vae_forward.1} parent=1 // pred_fallthru
      _
    // Predicated region
    $region22: #{svs_vae_forward.1} parent=1 // pred_check
      _
    $region23: #{svs_vae_forward.1} parent=1 // pred_check_branch
      %97 = sbr.rel (0) target = $region25
    $region24: #{svs_vae_forward.1} parent=1 // pred_region
      %s99 = ssub.s32 512, 512
      %100 = vsyncadd [#allocation12], %s99
      %s101 = sshll.u32 [#allocation11], 4
      %s102 = int_to_ptr.vmem [resolvable:$true] %s101
      %107 = dma.hbm_to_vmem [thread:$0]  %s5, 512, %s102, [#allocation12], 128, 128, 8
    $region25: #{svs_vae_forward.1} parent=1 // pred_fallthru
      _
    // Predicated region
    $region26: #{svs_vae_forward.1} parent=1 // pred_check
      _
    $region27: #{svs_vae_forward.1} parent=1 // pred_check_branch
      %109 = sbr.rel (0) target = $region29
    $region28: #{svs_vae_forward.1} parent=1 // pred_region
      %s111 = ssub.s32 16, 16
      %112 = vsyncadd [#allocation12], %s111
      %s114 = sshll.u32 [#allocation13], 4
      %s115 = int_to_ptr.vmem [resolvable:$true] %s114
      %117 = dma.hbm_to_vmem [thread:$0]  %s6, 16, %s115, [#allocation12]
    $region29: #{svs_vae_forward.1} parent=1 // pred_fallthru
      _
    // Predicated region
    $region30: #{svs_vae_forward.1} parent=1 // pred_check
      _
    $region31: #{svs_vae_forward.1} parent=1 // pred_check_branch
      %119 = sbr.rel (0) target = $region33
    $region32: #{svs_vae_forward.1} parent=1 // pred_region
      _
    $region33: #{svs_vae_forward.1} parent=1 // pred_fallthru
      _
    // Predicated region
    $region34: #{svs_vae_forward.1} parent=1 // pred_check
      _
    $region35: #{svs_vae_forward.1} parent=1 // pred_check_branch
      %121 = sbr.rel (0) target = $region37
    $region36: #{svs_vae_forward.1} parent=1 // pred_region
      %s123 = ssub.s32 16, 16
      %124 = vsyncadd [#allocation15], %s123
      %s126 = sshll.u32 [#allocation14], 4
      %s127 = int_to_ptr.vmem [resolvable:$true] %s126
      %129 = dma.hbm_to_vmem [thread:$0]  %s8, 16, %s127, [#allocation15]
    $region37: #{svs_vae_forward.1} parent=1 // pred_fallthru
      _
    // Predicated region
    $region38: #{svs_vae_forward.1} parent=1 // pred_check
      _
    $region39: #{svs_vae_forward.1} parent=1 // pred_check_branch
      %131 = sbr.rel (0) target = $region41
    $region40: #{svs_vae_forward.1} parent=1 // pred_region
      _
    $region41: #{svs_vae_forward.1} parent=1 // pred_fallthru
      _
    // Predicated region
    $region42: #{svs_vae_forward.1} parent=1 // pred_check
      _
    $region43: #{svs_vae_forward.1} parent=1 // pred_check_branch
      %133 = sbr.rel (0) target = $region45
    $region44: #{svs_vae_forward.1} parent=1 // pred_region
      %s135 = ssub.s32 16, 16
      %136 = vsyncadd [#allocation15], %s135
      %s138 = sshll.u32 [#allocation16], 4
      %s139 = int_to_ptr.vmem [resolvable:$true] %s138
      %141 = dma.hbm_to_vmem [thread:$0]  %s10, 16, %s139, [#allocation15]
    $region45: #{svs_vae_forward.1} parent=1 // pred_fallthru
      _
    // Predicated region
    $region46: #{svs_vae_forward.1} parent=1 // pred_check
      _
    $region47: #{svs_vae_forward.1} parent=1 // pred_check_branch
      %143 = sbr.rel (0) target = $region49
    $region48: #{svs_vae_forward.1} parent=1 // pred_region
      _
    $region49: #{svs_vae_forward.1} parent=1 // pred_fallthru
      _
    // Predicated region
    $region50: #{svs_vae_forward.1} parent=1 // pred_check
      _
    $region51: #{svs_vae_forward.1} parent=1 // pred_check_branch
      %145 = sbr.rel (0) target = $region53
    $region52: #{svs_vae_forward.1} parent=1 // pred_region
      %s147 = ssub.s32 16, 16
      %148 = vsyncadd [#allocation18], %s147
      %s150 = sshll.u32 [#allocation17], 4
      %s151 = int_to_ptr.vmem [resolvable:$true] %s150
      %153 = dma.hbm_to_vmem [thread:$0]  %s12, 16, %s151, [#allocation18]
    $region53: #{svs_vae_forward.1} parent=1 // pred_fallthru
      _
    // Predicated region
    $region54: #{svs_vae_forward.1} parent=1 // pred_check
      _
    $region55: #{svs_vae_forward.1} parent=1 // pred_check_branch
      %155 = sbr.rel (0) target = $region57
    $region56: #{svs_vae_forward.1} parent=1 // pred_region
      %s157 = ssub.s32 2048, 2048
      %158 = vsyncadd [#allocation18], %s157
      %s159 = sshll.u32 [#allocation19], 4
      %s160 = int_to_ptr.vmem [resolvable:$true] %s159
      %165 = dma.hbm_to_vmem [thread:$0]  %s13, 2048, %s160, [#allocation18], 128, 128, 8
    $region57: #{svs_vae_forward.1} parent=1 // pred_fallthru
      _
    // Predicated region
    $region58: #{svs_vae_forward.1} parent=1 // pred_check
      _
    $region59: #{svs_vae_forward.1} parent=1 // pred_check_branch
      %167 = sbr.rel (0) target = $region61
    $region60: #{svs_vae_forward.1} parent=1 // pred_region
      _
    $region61: #{svs_vae_forward.1} parent=1 // pred_fallthru
      _
    // Predicated region
    $region62: #{svs_vae_forward.1} parent=1 // pred_check
      _
    $region63: #{svs_vae_forward.1} parent=1 // pred_check_branch
      %169 = sbr.rel (0) target = $region65
    $region64: #{svs_vae_forward.1} parent=1 // pred_region
      %s171 = ssub.s32 512, 512
      %172 = vsyncadd [#allocation21], %s171
      %s173 = sshll.u32 [#allocation20], 4
      %s174 = int_to_ptr.vmem [resolvable:$true] %s173
      %179 = dma.hbm_to_vmem [thread:$0]  %s15, 512, %s174, [#allocation21], 256, 256, 16
    $region65: #{svs_vae_forward.1} parent=1 // pred_fallthru
      _
    // Predicated region
    $region66: #{svs_vae_forward.1} parent=1 // pred_check
      _
    $region67: #{svs_vae_forward.1} parent=1 // pred_check_branch
      %181 = sbr.rel (0) target = $region69
    $region68: #{svs_vae_forward.1} parent=1 // pred_region
      %s183 = ssub.s32 2048, 2048
      %184 = vsyncadd [#allocation21], %s183
      %s185 = sshll.u32 [#allocation22], 4
      %s186 = int_to_ptr.vmem [resolvable:$true] %s185
      %191 = dma.hbm_to_vmem [thread:$0]  %s16, 2048, %s186, [#allocation21], 256, 256, 16
    $region69: #{svs_vae_forward.1} parent=1 // pred_fallthru
      _
    // Predicated region
    $region70: #{svs_vae_forward.1} parent=1 // pred_check
      _
    $region71: #{svs_vae_forward.1} parent=1 // pred_check_branch
      %193 = sbr.rel (0) target = $region73
    $region72: #{svs_vae_forward.1} parent=1 // pred_region
      %s195 = ssub.s32 32, 32
      %196 = vsyncadd [#allocation24], %s195
      %s198 = sshll.u32 [#allocation23], 4
      %s199 = int_to_ptr.vmem [resolvable:$true] %s198
      %201 = dma.hbm_to_vmem [thread:$0]  %s17, 32, %s199, [#allocation24]
    $region73: #{svs_vae_forward.1} parent=1 // pred_fallthru
      _
    // Predicated region
    $region74: #{svs_vae_forward.1} parent=1 // pred_check
      _
    $region75: #{svs_vae_forward.1} parent=1 // pred_check_branch
      %203 = sbr.rel (0) target = $region77
    $region76: #{svs_vae_forward.1} parent=1 // pred_region
      _
    $region77: #{svs_vae_forward.1} parent=1 // pred_fallthru
      _
    // Predicated region
    $region78: #{svs_vae_forward.1} parent=1 // pred_check
      _
    $region79: #{svs_vae_forward.1} parent=1 // pred_check_branch
      %205 = sbr.rel (0) target = $region81
    $region80: #{svs_vae_forward.1} parent=1 // pred_region
      %s207 = ssub.s32 256, 256
      %208 = vsyncadd [#allocation24], %s207
      %s209 = sshll.u32 [#allocation25], 4
      %s210 = int_to_ptr.vmem [resolvable:$true] %s209
      %215 = dma.hbm_to_vmem [thread:$0]  %s19, 256, %s210, [#allocation24], 128, 128, 8
    $region81: #{svs_vae_forward.1} parent=1 // pred_fallthru
      _
    // Predicated region
    $region82: #{svs_vae_forward.1} parent=1 // pred_check
      _
    $region83: #{svs_vae_forward.1} parent=1 // pred_check_branch
      %217 = sbr.rel (0) target = $region85
    $region84: #{svs_vae_forward.1} parent=1 // pred_region
      %s219 = ssub.s32 16, 16
      %220 = vsyncadd [#allocation27], %s219
      %s222 = sshll.u32 [#allocation26], 4
      %s223 = int_to_ptr.vmem [resolvable:$true] %s222
      %225 = dma.hbm_to_vmem [thread:$0]  %s20, 16, %s223, [#allocation27]
    $region85: #{svs_vae_forward.1} parent=1 // pred_fallthru
      _
    // Predicated region
    $region86: #{svs_vae_forward.1} parent=1 // pred_check
      _
    $region87: #{svs_vae_forward.1} parent=1 // pred_check_branch
      %227 = sbr.rel (0) target = $region89
    $region88: #{svs_vae_forward.1} parent=1 // pred_region
      %228 = dma.done [#allocation3], 256
    $region89: #{svs_vae_forward.1} parent=1 // pred_fallthru
      _
    // Predicated region
    $region90: #{svs_vae_forward.1} parent=1 // pred_check
      _
    $region91: #{svs_vae_forward.1} parent=1 // pred_check_branch
      %230 = sbr.rel (0) target = $region93
    $region92: #{svs_vae_forward.1} parent=1 // pred_region
      %231 = dma.done [#allocation6], 128
    $region93: #{svs_vae_forward.1} parent=1 // pred_fallthru
      _
    // Predicated region
    $region94: #{svs_vae_forward.1} parent=1 // pred_check
      _
    $region95: #{svs_vae_forward.1} parent=1 // pred_check_branch
      %233 = sbr.rel (0) target = $region97
    $region96: #{svs_vae_forward.1} parent=1 // pred_region
      %234 = dma.done [#allocation6], 512
    $region97: #{svs_vae_forward.1} parent=1 // pred_fallthru
      _
    // Predicated region
    $region98: #{svs_vae_forward.1} parent=1 // pred_check
      _
    $region99: #{svs_vae_forward.1} parent=1 // pred_check_branch
      %236 = sbr.rel (0) target = $region101
    $region100: #{svs_vae_forward.1} parent=1 // pred_region
      %237 = dma.done [#allocation9], 16
    $region101: #{svs_vae_forward.1} parent=1 // pred_fallthru
      _
    // Predicated region
    $region102: #{svs_vae_forward.1} parent=1 // pred_check
      _
    $region103: #{svs_vae_forward.1} parent=1 // pred_check_branch
      %239 = sbr.rel (0) target = $region105
    $region104: #{svs_vae_forward.1} parent=1 // pred_region
      %240 = dma.done [#allocation9], 512
    $region105: #{svs_vae_forward.1} parent=1 // pred_fallthru
      _
    // Predicated region
    $region106: #{svs_vae_forward.1} parent=1 // pred_check
      _
    $region107: #{svs_vae_forward.1} parent=1 // pred_check_branch
      %242 = sbr.rel (0) target = $region109
    $region108: #{svs_vae_forward.1} parent=1 // pred_region
      %243 = dma.done [#allocation12], 512
    $region109: #{svs_vae_forward.1} parent=1 // pred_fallthru
      _
    // Predicated region
    $region110: #{svs_vae_forward.1} parent=1 // pred_check
      _
    $region111: #{svs_vae_forward.1} parent=1 // pred_check_branch
      %245 = sbr.rel (0) target = $region113
    $region112: #{svs_vae_forward.1} parent=1 // pred_region
      %246 = dma.done [#allocation12], 16
    $region113: #{svs_vae_forward.1} parent=1 // pred_fallthru
      _
    // Predicated region
    $region114: #{svs_vae_forward.1} parent=1 // pred_check
      _
    $region115: #{svs_vae_forward.1} parent=1 // pred_check_branch
      %248 = sbr.rel (0) target = $region117
    $region116: #{svs_vae_forward.1} parent=1 // pred_region
      %249 = dma.done [#allocation15], 16
    $region117: #{svs_vae_forward.1} parent=1 // pred_fallthru
      _
    // Predicated region
    $region118: #{svs_vae_forward.1} parent=1 // pred_check
      _
    $region119: #{svs_vae_forward.1} parent=1 // pred_check_branch
      %251 = sbr.rel (0) target = $region121
    $region120: #{svs_vae_forward.1} parent=1 // pred_region
      %252 = dma.done [#allocation15], 16
    $region121: #{svs_vae_forward.1} parent=1 // pred_fallthru
      _
    // Predicated region
    $region122: #{svs_vae_forward.1} parent=1 // pred_check
      _
    $region123: #{svs_vae_forward.1} parent=1 // pred_check_branch
      %254 = sbr.rel (0) target = $region125
    $region124: #{svs_vae_forward.1} parent=1 // pred_region
      %255 = dma.done [#allocation18], 16
    $region125: #{svs_vae_forward.1} parent=1 // pred_fallthru
      _
    // Predicated region
    $region126: #{svs_vae_forward.1} parent=1 // pred_check
      _
    $region127: #{svs_vae_forward.1} parent=1 // pred_check_branch
      %257 = sbr.rel (0) target = $region129
    $region128: #{svs_vae_forward.1} parent=1 // pred_region
      %258 = dma.done [#allocation18], 2048
    $region129: #{svs_vae_forward.1} parent=1 // pred_fallthru
      _
    // Predicated region
    $region130: #{svs_vae_forward.1} parent=1 // pred_check
      _
    $region131: #{svs_vae_forward.1} parent=1 // pred_check_branch
      %260 = sbr.rel (0) target = $region133
    $region132: #{svs_vae_forward.1} parent=1 // pred_region
      %261 = dma.done [#allocation21], 512
    $region133: #{svs_vae_forward.1} parent=1 // pred_fallthru
      _
    // Predicated region
    $region134: #{svs_vae_forward.1} parent=1 // pred_check
      _
    $region135: #{svs_vae_forward.1} parent=1 // pred_check_branch
      %263 = sbr.rel (0) target = $region137
    $region136: #{svs_vae_forward.1} parent=1 // pred_region
      %264 = dma.done [#allocation21], 2048
    $region137: #{svs_vae_forward.1} parent=1 // pred_fallthru
      _
    // Predicated region
    $region138: #{svs_vae_forward.1} parent=1 // pred_check
      _
    $region139: #{svs_vae_forward.1} parent=1 // pred_check_branch
      %266 = sbr.rel (0) target = $region141
    $region140: #{svs_vae_forward.1} parent=1 // pred_region
      %267 = dma.done [#allocation24], 32
    $region141: #{svs_vae_forward.1} parent=1 // pred_fallthru
      _
    // Predicated region
    $region142: #{svs_vae_forward.1} parent=1 // pred_check
      _
    $region143: #{svs_vae_forward.1} parent=1 // pred_check_branch
      %269 = sbr.rel (0) target = $region145
    $region144: #{svs_vae_forward.1} parent=1 // pred_region
      %270 = dma.done [#allocation24], 256
    $region145: #{svs_vae_forward.1} parent=1 // pred_fallthru
      _
    // Predicated region
    $region146: #{svs_vae_forward.1} parent=1 // pred_check
      _
    $region147: #{svs_vae_forward.1} parent=1 // pred_check_branch
      %272 = sbr.rel (0) target = $region149
    $region148: #{svs_vae_forward.1} parent=1 // pred_region
      %273 = dma.done [#allocation27], 16
    $region149: #{svs_vae_forward.1} parent=1 // pred_fallthru
      _
    %v274 = vld [vmem:[#allocation2] sm:$0xff]
    %v275 = vld [vmem:[#allocation2 + $0x8] sm:$0xff]
    %v276 = vld [vmem:[#allocation5] sm:$0xff]
    %v277 = vld [vmem:[#allocation8] sm:$0x1]
    %v279 = vlaneseq
    %v280 = vshrl.u32 %v279, 7
    %v281 = vsub.s32 0, %v280
    %v282 = vrot.slane %v277, %v281
    %vm284 = vcmask 64512
    %v286 = vsel %vm284, %v274, 0
    %v289 = vsel %vm284, %v275, 0
    %291 = vmatprep.subr.mxu0 0.0
    %292 = vmatpush1.msra.mxu0 %v276
    %293 = vmatprep.subr.mxu0 0.0
    %294 = vmatpush1.msra.mxu0 0.0
    %295 = vmatprep.subr.mxu0 0.0
    %296 = vmatpush1.msra.mxu0 0.0
    %297 = vmatprep.subr.mxu0 0.0
    %298 = vmatpush1.msra.mxu0 0.0
    %299 = vmatprep.subr.mxu0 0.0
    %300 = vmatpush1.msra.mxu0 0.0
    %301 = vmatprep.subr.mxu0 0.0
    %302 = vmatpush1.msra.mxu0 0.0
    %303 = vmatprep.subr.mxu0 0.0
    %304 = vmatpush1.msra.mxu0 0.0
    %305 = vmatprep.subr.mxu0 0.0
    %306 = vmatpush1.msra.mxu0 0.0
    %307 = vmatprep.subr.mxu0 0.0
    %308 = vmatpush1.msra.mxu0 0.0
    %309 = vmatprep.subr.mxu0 0.0
    %310 = vmatpush1.msra.mxu0 0.0
    %311 = vmatprep.subr.mxu0 0.0
    %312 = vmatpush1.msra.mxu0 0.0
    %313 = vmatprep.subr.mxu0 0.0
    %314 = vmatpush1.msra.mxu0 0.0
    %315 = vmatprep.subr.mxu0 0.0
    %316 = vmatpush1.msra.mxu0 0.0
    %317 = vmatprep.subr.mxu0 0.0
    %318 = vmatpush1.msra.mxu0 0.0
    %319 = vmatprep.subr.mxu0 0.0
    %320 = vmatpush1.msra.mxu0 0.0
    %321 = vmatprep.subr.mxu0 0.0
    %322 = vmatpush1.msra.mxu0 0.0
    %323 = vmatprep.subr.mxu0 0.0
    %324 = vmatpush1.msra.mxu0 0.0
    %325 = vmatprep.subr.mxu0 0.0
    %326 = vmatpush1.msra.mxu0 0.0
    %327 = vmatprep.subr.mxu0 0.0
    %328 = vmatpush1.msra.mxu0 0.0
    %329 = vmatprep.subr.mxu0 0.0
    %330 = vmatpush1.msra.mxu0 0.0
    %331 = vmatprep.subr.mxu0 0.0
    %332 = vmatpush1.msra.mxu0 0.0
    %333 = vmatprep.subr.mxu0 0.0
    %334 = vmatpush1.msra.mxu0 0.0
    %335 = vmatprep.subr.mxu0 0.0
    %336 = vmatpush1.msra.mxu0 0.0
    %337 = vmatprep.subr.mxu0 0.0
    %338 = vmatpush1.msra.mxu0 0.0
    %339 = vmatprep.subr.mxu0 0.0
    %340 = vmatpush1.msra.mxu0 0.0
    %341 = vmatprep.subr.mxu0 0.0
    %342 = vmatpush1.msra.mxu0 0.0
    %343 = vmatprep.subr.mxu0 0.0
    %344 = vmatpush1.msra.mxu0 0.0
    %345 = vmatprep.subr.mxu0 0.0
    %346 = vmatpush1.msra.mxu0 0.0
    %347 = vmatprep.subr.mxu0 0.0
    %348 = vmatpush1.msra.mxu0 0.0
    %349 = vmatprep.subr.mxu0 0.0
    %350 = vmatpush1.msra.mxu0 0.0
    %351 = vmatprep.subr.mxu0 0.0
    %352 = vmatpush1.msra.mxu0 0.0
    %353 = vmatprep.subr.mxu0 0.0
    %354 = vmatpush1.msra.mxu0 0.0
    %355 = vmatprep.mubr.f32.mxu0 0.0
    %356 = vmatmul.mubr.f32.gmra.mrb[0].mxu0 %v286
    %v357 = vpop.f32.mrb[0].mxu0
    %v358 = vadd.f32 %v282, %v357
    %v359 = vpop.f32.mrb[0].mxu0
    %360 = vmatprep.mubr.f32.mxu0 0.0
    %361 = vmatmul.mubr.f32.gmra.mrb[0].mxu0 %v289
    %v362 = vpop.f32.mrb[0].mxu0
    %v363 = vadd.f32 %v282, %v362
    %v364 = vpop.f32.mrb[0].mxu0
    %365 = vdwg.mxu0
    %v366 = vld [vmem:[#allocation7] sm:$0xff]
    %v367 = vld [vmem:[#allocation7 + $0x8] sm:$0xff]
    %v368 = vld [vmem:[#allocation7 + $0x10] sm:$0xff]
    %v369 = vld [vmem:[#allocation7 + $0x18] sm:$0xff]
    %vm370 = vcmask 261120
    %v372 = vsel %vm370, 0.0, 0
    %374 = vmatprep.subr.mxu0 0.0
    %375 = vmatpush1.msra.mxu0 %v366
    %376 = vmatprep.subr.mxu0 0.0
    %377 = vmatpush1.msra.mxu0 %v367
    %378 = vmatprep.subr.mxu0 0.0
    %379 = vmatpush1.msra.mxu0 %v368
    %380 = vmatprep.subr.mxu0 0.0
    %381 = vmatpush1.msra.mxu0 %v369
    %382 = vmatprep.subr.mxu0 0.0
    %383 = vmatpush1.msra.mxu0 0.0
    %384 = vmatprep.subr.mxu0 0.0
    %385 = vmatpush1.msra.mxu0 0.0
    %386 = vmatprep.subr.mxu0 0.0
    %387 = vmatpush1.msra.mxu0 0.0
    %388 = vmatprep.subr.mxu0 0.0
    %389 = vmatpush1.msra.mxu0 0.0
    %390 = vmatprep.subr.mxu0 0.0
    %391 = vmatpush1.msra.mxu0 0.0
    %392 = vmatprep.subr.mxu0 0.0
    %393 = vmatpush1.msra.mxu0 0.0
    %394 = vmatprep.subr.mxu0 0.0
    %395 = vmatpush1.msra.mxu0 0.0
    %396 = vmatprep.subr.mxu0 0.0
    %397 = vmatpush1.msra.mxu0 0.0
    %398 = vmatprep.subr.mxu0 0.0
    %399 = vmatpush1.msra.mxu0 0.0
    %400 = vmatprep.subr.mxu0 0.0
    %401 = vmatpush1.msra.mxu0 0.0
    %402 = vmatprep.subr.mxu0 0.0
    %403 = vmatpush1.msra.mxu0 0.0
    %404 = vmatprep.subr.mxu0 0.0
    %405 = vmatpush1.msra.mxu0 0.0
    %406 = vmatprep.subr.mxu0 0.0
    %407 = vmatpush1.msra.mxu0 0.0
    %408 = vmatprep.subr.mxu0 0.0
    %409 = vmatpush1.msra.mxu0 0.0
    %410 = vmatprep.subr.mxu0 0.0
    %411 = vmatpush1.msra.mxu0 0.0
    %412 = vmatprep.subr.mxu0 0.0
    %413 = vmatpush1.msra.mxu0 0.0
    %414 = vmatprep.subr.mxu0 0.0
    %415 = vmatpush1.msra.mxu0 0.0
    %416 = vmatprep.subr.mxu0 0.0
    %417 = vmatpush1.msra.mxu0 0.0
    %418 = vmatprep.subr.mxu0 0.0
    %419 = vmatpush1.msra.mxu0 0.0
    %420 = vmatprep.subr.mxu0 0.0
    %421 = vmatpush1.msra.mxu0 0.0
    %422 = vmatprep.subr.mxu0 0.0
    %423 = vmatpush1.msra.mxu0 0.0
    %424 = vmatprep.subr.mxu0 0.0
    %425 = vmatpush1.msra.mxu0 0.0
    %426 = vmatprep.subr.mxu0 0.0
    %427 = vmatpush1.msra.mxu0 0.0
    %428 = vmatprep.subr.mxu0 0.0
    %429 = vmatpush1.msra.mxu0 0.0
    %430 = vmatprep.subr.mxu0 0.0
    %431 = vmatpush1.msra.mxu0 0.0
    %432 = vmatprep.subr.mxu0 0.0
    %433 = vmatpush1.msra.mxu0 0.0
    %434 = vmatprep.subr.mxu0 0.0
    %435 = vmatpush1.msra.mxu0 0.0
    %436 = vmatprep.subr.mxu0 0.0
    %437 = vmatpush1.msra.mxu0 0.0
    %438 = vmatprep.mubr.f32.mxu0 0.0
    %439 = vmatmul.mubr.f32.gmra.mrb[0].mxu0 %v372
    %v440 = vpop.f32.mrb[0].mxu0
    %v441 = vadd.f32 0.0, %v440
    %v442 = vpop.f32.mrb[0].mxu0
    %443 = vdwg.mxu0
    %v444 = vadd.f32 %v358, %v441
    %v445 = vxor.u32 %v444, 2147483648
    %v446 = vmul.f32 %v445, 1.442695
    %v447 = vpow.pop %v446
    %v448 = vadd.f32 %v447, 1.0
    %v449 = vrcp.pop %v448
    %v450 = vmul.f32 1.0, %v449
    %v451 = vtanh.pop %v444
    %v452 = vmul.f32 %v450, 0.0
    %454 = vrot.lane.b32.xlu0 %v451, 32
    %v455 = vpop.permute.xlu0 %454
    %v457 = vmul.f32 %v450, %v455
    %459 = vrot.lane.b32.xlu0 %v457, 32
    %v460 = vpop.permute.xlu0 %459
    %v462 = vadd.f32 %v452, %v460
    %v463 = vtanh.pop %v462
    %465 = vrot.lane.b32.xlu0 %v463, 32
    %v466 = vpop.permute.xlu0 %465
    %v468 = vmul.f32 %v450, %v466
    %v469 = vmax.f32 %v468, 0.0
    %471 = vrot.lane.b32.xlu0 %v468, 64
    %v472 = vpop.permute.xlu0 %471
    %v473 = vsel %vm370, %v472, 0
    %475 = vmatprep.subr.mxu0 0.0
    %476 = vmatpush1.msra.mxu0 %v366
    %477 = vmatprep.subr.mxu0 0.0
    %478 = vmatpush1.msra.mxu0 %v367
    %479 = vmatprep.subr.mxu0 0.0
    %480 = vmatpush1.msra.mxu0 %v368
    %481 = vmatprep.subr.mxu0 0.0
    %482 = vmatpush1.msra.mxu0 %v369
    %483 = vmatprep.subr.mxu0 0.0
    %484 = vmatpush1.msra.mxu0 0.0
    %485 = vmatprep.subr.mxu0 0.0
    %486 = vmatpush1.msra.mxu0 0.0
    %487 = vmatprep.subr.mxu0 0.0
    %488 = vmatpush1.msra.mxu0 0.0
    %489 = vmatprep.subr.mxu0 0.0
    %490 = vmatpush1.msra.mxu0 0.0
    %491 = vmatprep.subr.mxu0 0.0
    %492 = vmatpush1.msra.mxu0 0.0
    %493 = vmatprep.subr.mxu0 0.0
    %494 = vmatpush1.msra.mxu0 0.0
    %495 = vmatprep.subr.mxu0 0.0
    %496 = vmatpush1.msra.mxu0 0.0
    %497 = vmatprep.subr.mxu0 0.0
    %498 = vmatpush1.msra.mxu0 0.0
    %499 = vmatprep.subr.mxu0 0.0
    %500 = vmatpush1.msra.mxu0 0.0
    %501 = vmatprep.subr.mxu0 0.0
    %502 = vmatpush1.msra.mxu0 0.0
    %503 = vmatprep.subr.mxu0 0.0
    %504 = vmatpush1.msra.mxu0 0.0
    %505 = vmatprep.subr.mxu0 0.0
    %506 = vmatpush1.msra.mxu0 0.0
    %507 = vmatprep.subr.mxu0 0.0
    %508 = vmatpush1.msra.mxu0 0.0
    %509 = vmatprep.subr.mxu0 0.0
    %510 = vmatpush1.msra.mxu0 0.0
    %511 = vmatprep.subr.mxu0 0.0
    %512 = vmatpush1.msra.mxu0 0.0
    %513 = vmatprep.subr.mxu0 0.0
    %514 = vmatpush1.msra.mxu0 0.0
    %515 = vmatprep.subr.mxu0 0.0
    %516 = vmatpush1.msra.mxu0 0.0
    %517 = vmatprep.subr.mxu0 0.0
    %518 = vmatpush1.msra.mxu0 0.0
    %519 = vmatprep.subr.mxu0 0.0
    %520 = vmatpush1.msra.mxu0 0.0
    %521 = vmatprep.subr.mxu0 0.0
    %522 = vmatpush1.msra.mxu0 0.0
    %523 = vmatprep.subr.mxu0 0.0
    %524 = vmatpush1.msra.mxu0 0.0
    %525 = vmatprep.subr.mxu0 0.0
    %526 = vmatpush1.msra.mxu0 0.0
    %527 = vmatprep.subr.mxu0 0.0
    %528 = vmatpush1.msra.mxu0 0.0
    %529 = vmatprep.subr.mxu0 0.0
    %530 = vmatpush1.msra.mxu0 0.0
    %531 = vmatprep.subr.mxu0 0.0
    %532 = vmatpush1.msra.mxu0 0.0
    %533 = vmatprep.subr.mxu0 0.0
    %534 = vmatpush1.msra.mxu0 0.0
    %535 = vmatprep.subr.mxu0 0.0
    %536 = vmatpush1.msra.mxu0 0.0
    %537 = vmatprep.subr.mxu0 0.0
    %538 = vmatpush1.msra.mxu0 0.0
    %539 = vmatprep.mubr.f32.mxu0 0.0
    %540 = vmatmul.mubr.f32.gmra.mrb[0].mxu0 %v473
    %v541 = vpop.f32.mrb[0].mxu0
    %v542 = vadd.f32 0.0, %v541
    %v543 = vpop.f32.mrb[0].mxu0
    %544 = vdwg.mxu0
    %v546 = vrot.slane %v542, 6
    %v548 = vadd.f32 %v358, %v546
    %v549 = vxor.u32 %v548, 2147483648
    %v550 = vmul.f32 %v549, 1.442695
    %v551 = vpow.pop %v550
    %v552 = vadd.f32 %v551, 1.0
    %v553 = vrcp.pop %v552
    %v554 = vmul.f32 1.0, %v553
    %v555 = vtanh.pop %v548
    %v557 = vrot.slane %v462, 6
    %v559 = vmul.f32 %v554, %v557
    %561 = vrot.lane.b32.xlu0 %v555, 32
    %v562 = vpop.permute.xlu0 %561
    %v564 = vmul.f32 %v554, %v562
    %566 = vrot.lane.b32.xlu0 %v564, 32
    %v567 = vpop.permute.xlu0 %566
    %v569 = vadd.f32 %v559, %v567
    %v570 = vtanh.pop %v569
    %572 = vrot.lane.b32.xlu0 %v570, 32
    %v573 = vpop.permute.xlu0 %572
    %v575 = vmul.f32 %v554, %v573
    %v576 = vmax.f32 %v575, 0.0
    %v578 = vrot.slane %v575, 2
    %579 = vrot.lane.b32.xlu0 %v578, 64
    %v580 = vpop.permute.xlu0 %579
    %v581 = vsel %vm370, %v580, 0
    %583 = vmatprep.subr.mxu0 0.0
    %584 = vmatpush1.msra.mxu0 %v366
    %585 = vmatprep.subr.mxu0 0.0
    %586 = vmatpush1.msra.mxu0 %v367
    %587 = vmatprep.subr.mxu0 0.0
    %588 = vmatpush1.msra.mxu0 %v368
    %589 = vmatprep.subr.mxu0 0.0
    %590 = vmatpush1.msra.mxu0 %v369
    %591 = vmatprep.subr.mxu0 0.0
    %592 = vmatpush1.msra.mxu0 0.0
    %593 = vmatprep.subr.mxu0 0.0
    %594 = vmatpush1.msra.mxu0 0.0
    %595 = vmatprep.subr.mxu0 0.0
    %596 = vmatpush1.msra.mxu0 0.0
    %597 = vmatprep.subr.mxu0 0.0
    %598 = vmatpush1.msra.mxu0 0.0
    %599 = vmatprep.subr.mxu0 0.0
    %600 = vmatpush1.msra.mxu0 0.0
    %601 = vmatprep.subr.mxu0 0.0
    %602 = vmatpush1.msra.mxu0 0.0
    %603 = vmatprep.subr.mxu0 0.0
    %604 = vmatpush1.msra.mxu0 0.0
    %605 = vmatprep.subr.mxu0 0.0
    %606 = vmatpush1.msra.mxu0 0.0
    %607 = vmatprep.subr.mxu0 0.0
    %608 = vmatpush1.msra.mxu0 0.0
    %609 = vmatprep.subr.mxu0 0.0
    %610 = vmatpush1.msra.mxu0 0.0
    %611 = vmatprep.subr.mxu0 0.0
    %612 = vmatpush1.msra.mxu0 0.0
    %613 = vmatprep.subr.mxu0 0.0
    %614 = vmatpush1.msra.mxu0 0.0
    %615 = vmatprep.subr.mxu0 0.0
    %616 = vmatpush1.msra.mxu0 0.0
    %617 = vmatprep.subr.mxu0 0.0
    %618 = vmatpush1.msra.mxu0 0.0
    %619 = vmatprep.subr.mxu0 0.0
    %620 = vmatpush1.msra.mxu0 0.0
    %621 = vmatprep.subr.mxu0 0.0
    %622 = vmatpush1.msra.mxu0 0.0
    %623 = vmatprep.subr.mxu0 0.0
    %624 = vmatpush1.msra.mxu0 0.0
    %625 = vmatprep.subr.mxu0 0.0
    %626 = vmatpush1.msra.mxu0 0.0
    %627 = vmatprep.subr.mxu0 0.0
    %628 = vmatpush1.msra.mxu0 0.0
    %629 = vmatprep.subr.mxu0 0.0
    %630 = vmatpush1.msra.mxu0 0.0
    %631 = vmatprep.subr.mxu0 0.0
    %632 = vmatpush1.msra.mxu0 0.0
    %633 = vmatprep.subr.mxu0 0.0
    %634 = vmatpush1.msra.mxu0 0.0
    %635 = vmatprep.subr.mxu0 0.0
    %636 = vmatpush1.msra.mxu0 0.0
    %637 = vmatprep.subr.mxu0 0.0
    %638 = vmatpush1.msra.mxu0 0.0
    %639 = vmatprep.subr.mxu0 0.0
    %640 = vmatpush1.msra.mxu0 0.0
    %641 = vmatprep.subr.mxu0 0.0
    %642 = vmatpush1.msra.mxu0 0.0
    %643 = vmatprep.subr.mxu0 0.0
    %644 = vmatpush1.msra.mxu0 0.0
    %645 = vmatprep.subr.mxu0 0.0
    %646 = vmatpush1.msra.mxu0 0.0
    %647 = vmatprep.mubr.f32.mxu0 0.0
    %648 = vmatmul.mubr.f32.gmra.mrb[0].mxu0 %v581
    %v649 = vpop.f32.mrb[0].mxu0
    %v650 = vadd.f32 0.0, %v649
    %v651 = vpop.f32.mrb[0].mxu0
    %652 = vdwg.mxu0
    %v654 = vrot.slane %v650, 4
    %v656 = vadd.f32 %v358, %v654
    %v657 = vxor.u32 %v656, 2147483648
    %v658 = vmul.f32 %v657, 1.442695
    %v659 = vpow.pop %v658
    %v660 = vadd.f32 %v659, 1.0
    %v661 = vrcp.pop %v660
    %v662 = vmul.f32 1.0, %v661
    %v663 = vtanh.pop %v656
    %v665 = vrot.slane %v569, 6
    %v667 = vmul.f32 %v662, %v665
    %669 = vrot.lane.b32.xlu0 %v663, 32
    %v670 = vpop.permute.xlu0 %669
    %v672 = vmul.f32 %v662, %v670
    %674 = vrot.lane.b32.xlu0 %v672, 32
    %v675 = vpop.permute.xlu0 %674
    %v677 = vadd.f32 %v667, %v675
    %v678 = vtanh.pop %v677
    %680 = vrot.lane.b32.xlu0 %v678, 32
    %v681 = vpop.permute.xlu0 %680
    %v683 = vmul.f32 %v662, %v681
    %v684 = vmax.f32 %v683, 0.0
    %v686 = vrot.slane %v683, 4
    %687 = vrot.lane.b32.xlu0 %v686, 64
    %v688 = vpop.permute.xlu0 %687
    %v689 = vsel %vm370, %v688, 0
    %691 = vmatprep.subr.mxu0 0.0
    %692 = vmatpush1.msra.mxu0 %v366
    %693 = vmatprep.subr.mxu0 0.0
    %694 = vmatpush1.msra.mxu0 %v367
    %695 = vmatprep.subr.mxu0 0.0
    %696 = vmatpush1.msra.mxu0 %v368
    %697 = vmatprep.subr.mxu0 0.0
    %698 = vmatpush1.msra.mxu0 %v369
    %699 = vmatprep.subr.mxu0 0.0
    %700 = vmatpush1.msra.mxu0 0.0
    %701 = vmatprep.subr.mxu0 0.0
    %702 = vmatpush1.msra.mxu0 0.0
    %703 = vmatprep.subr.mxu0 0.0
    %704 = vmatpush1.msra.mxu0 0.0
    %705 = vmatprep.subr.mxu0 0.0
    %706 = vmatpush1.msra.mxu0 0.0
    %707 = vmatprep.subr.mxu0 0.0
    %708 = vmatpush1.msra.mxu0 0.0
    %709 = vmatprep.subr.mxu0 0.0
    %710 = vmatpush1.msra.mxu0 0.0
    %711 = vmatprep.subr.mxu0 0.0
    %712 = vmatpush1.msra.mxu0 0.0
    %713 = vmatprep.subr.mxu0 0.0
    %714 = vmatpush1.msra.mxu0 0.0
    %715 = vmatprep.subr.mxu0 0.0
    %716 = vmatpush1.msra.mxu0 0.0
    %717 = vmatprep.subr.mxu0 0.0
    %718 = vmatpush1.msra.mxu0 0.0
    %719 = vmatprep.subr.mxu0 0.0
    %720 = vmatpush1.msra.mxu0 0.0
    %721 = vmatprep.subr.mxu0 0.0
    %722 = vmatpush1.msra.mxu0 0.0
    %723 = vmatprep.subr.mxu0 0.0
    %724 = vmatpush1.msra.mxu0 0.0
    %725 = vmatprep.subr.mxu0 0.0
    %726 = vmatpush1.msra.mxu0 0.0
    %727 = vmatprep.subr.mxu0 0.0
    %728 = vmatpush1.msra.mxu0 0.0
    %729 = vmatprep.subr.mxu0 0.0
    %730 = vmatpush1.msra.mxu0 0.0
    %731 = vmatprep.subr.mxu0 0.0
    %732 = vmatpush1.msra.mxu0 0.0
    %733 = vmatprep.subr.mxu0 0.0
    %734 = vmatpush1.msra.mxu0 0.0
    %735 = vmatprep.subr.mxu0 0.0
    %736 = vmatpush1.msra.mxu0 0.0
    %737 = vmatprep.subr.mxu0 0.0
    %738 = vmatpush1.msra.mxu0 0.0
    %739 = vmatprep.subr.mxu0 0.0
    %740 = vmatpush1.msra.mxu0 0.0
    %741 = vmatprep.subr.mxu0 0.0
    %742 = vmatpush1.msra.mxu0 0.0
    %743 = vmatprep.subr.mxu0 0.0
    %744 = vmatpush1.msra.mxu0 0.0
    %745 = vmatprep.subr.mxu0 0.0
    %746 = vmatpush1.msra.mxu0 0.0
    %747 = vmatprep.subr.mxu0 0.0
    %748 = vmatpush1.msra.mxu0 0.0
    %749 = vmatprep.subr.mxu0 0.0
    %750 = vmatpush1.msra.mxu0 0.0
    %751 = vmatprep.subr.mxu0 0.0
    %752 = vmatpush1.msra.mxu0 0.0
    %753 = vmatprep.subr.mxu0 0.0
    %754 = vmatpush1.msra.mxu0 0.0
    %755 = vmatprep.mubr.f32.mxu0 0.0
    %756 = vmatmul.mubr.f32.gmra.mrb[0].mxu0 %v689
    %v757 = vpop.f32.mrb[0].mxu0
    %v758 = vadd.f32 0.0, %v757
    %v759 = vpop.f32.mrb[0].mxu0
    %760 = vdwg.mxu0
    %v762 = vrot.slane %v758, 2
    %v764 = vadd.f32 %v358, %v762
    %v765 = vxor.u32 %v764, 2147483648
    %v766 = vmul.f32 %v765, 1.442695
    %v767 = vpow.pop %v766
    %v768 = vadd.f32 %v767, 1.0
    %v769 = vrcp.pop %v768
    %v770 = vmul.f32 1.0, %v769
    %v771 = vtanh.pop %v764
    %v773 = vrot.slane %v677, 6
    %v775 = vmul.f32 %v770, %v773
    %777 = vrot.lane.b32.xlu0 %v771, 32
    %v778 = vpop.permute.xlu0 %777
    %v780 = vmul.f32 %v770, %v778
    %782 = vrot.lane.b32.xlu0 %v780, 32
    %v783 = vpop.permute.xlu0 %782
    %v785 = vadd.f32 %v775, %v783
    %v786 = vtanh.pop %v785
    %788 = vrot.lane.b32.xlu0 %v786, 32
    %v789 = vpop.permute.xlu0 %788
    %v791 = vmul.f32 %v770, %v789
    %v792 = vmax.f32 %v791, 0.0
    %v794 = vrot.slane %v791, 6
    %795 = vrot.lane.b32.xlu0 %v794, 64
    %v796 = vpop.permute.xlu0 %795
    %v797 = vsel %vm370, %v796, 0
    %799 = vmatprep.subr.mxu0 0.0
    %800 = vmatpush1.msra.mxu0 %v366
    %801 = vmatprep.subr.mxu0 0.0
    %802 = vmatpush1.msra.mxu0 %v367
    %803 = vmatprep.subr.mxu0 0.0
    %804 = vmatpush1.msra.mxu0 %v368
    %805 = vmatprep.subr.mxu0 0.0
    %806 = vmatpush1.msra.mxu0 %v369
    %807 = vmatprep.subr.mxu0 0.0
    %808 = vmatpush1.msra.mxu0 0.0
    %809 = vmatprep.subr.mxu0 0.0
    %810 = vmatpush1.msra.mxu0 0.0
    %811 = vmatprep.subr.mxu0 0.0
    %812 = vmatpush1.msra.mxu0 0.0
    %813 = vmatprep.subr.mxu0 0.0
    %814 = vmatpush1.msra.mxu0 0.0
    %815 = vmatprep.subr.mxu0 0.0
    %816 = vmatpush1.msra.mxu0 0.0
    %817 = vmatprep.subr.mxu0 0.0
    %818 = vmatpush1.msra.mxu0 0.0
    %819 = vmatprep.subr.mxu0 0.0
    %820 = vmatpush1.msra.mxu0 0.0
    %821 = vmatprep.subr.mxu0 0.0
    %822 = vmatpush1.msra.mxu0 0.0
    %823 = vmatprep.subr.mxu0 0.0
    %824 = vmatpush1.msra.mxu0 0.0
    %825 = vmatprep.subr.mxu0 0.0
    %826 = vmatpush1.msra.mxu0 0.0
    %827 = vmatprep.subr.mxu0 0.0
    %828 = vmatpush1.msra.mxu0 0.0
    %829 = vmatprep.subr.mxu0 0.0
    %830 = vmatpush1.msra.mxu0 0.0
    %831 = vmatprep.subr.mxu0 0.0
    %832 = vmatpush1.msra.mxu0 0.0
    %833 = vmatprep.subr.mxu0 0.0
    %834 = vmatpush1.msra.mxu0 0.0
    %835 = vmatprep.subr.mxu0 0.0
    %836 = vmatpush1.msra.mxu0 0.0
    %837 = vmatprep.subr.mxu0 0.0
    %838 = vmatpush1.msra.mxu0 0.0
    %839 = vmatprep.subr.mxu0 0.0
    %840 = vmatpush1.msra.mxu0 0.0
    %841 = vmatprep.subr.mxu0 0.0
    %842 = vmatpush1.msra.mxu0 0.0
    %843 = vmatprep.subr.mxu0 0.0
    %844 = vmatpush1.msra.mxu0 0.0
    %845 = vmatprep.subr.mxu0 0.0
    %846 = vmatpush1.msra.mxu0 0.0
    %847 = vmatprep.subr.mxu0 0.0
    %848 = vmatpush1.msra.mxu0 0.0
    %849 = vmatprep.subr.mxu0 0.0
    %850 = vmatpush1.msra.mxu0 0.0
    %851 = vmatprep.subr.mxu0 0.0
    %852 = vmatpush1.msra.mxu0 0.0
    %853 = vmatprep.subr.mxu0 0.0
    %854 = vmatpush1.msra.mxu0 0.0
    %855 = vmatprep.subr.mxu0 0.0
    %856 = vmatpush1.msra.mxu0 0.0
    %857 = vmatprep.subr.mxu0 0.0
    %858 = vmatpush1.msra.mxu0 0.0
    %859 = vmatprep.subr.mxu0 0.0
    %860 = vmatpush1.msra.mxu0 0.0
    %861 = vmatprep.subr.mxu0 0.0
    %862 = vmatpush1.msra.mxu0 0.0
    %863 = vmatprep.mubr.f32.mxu0 0.0
    %864 = vmatmul.mubr.f32.gmra.mrb[0].mxu0 %v797
    %v865 = vpop.f32.mrb[0].mxu0
    %v866 = vadd.f32 0.0, %v865
    %v867 = vpop.f32.mrb[0].mxu0
    %868 = vdwg.mxu0
    %v869 = vadd.f32 %v363, %v866
    %v870 = vxor.u32 %v869, 2147483648
    %v871 = vmul.f32 %v870, 1.442695
    %v872 = vpow.pop %v871
    %v873 = vadd.f32 %v872, 1.0
    %v874 = vrcp.pop %v873
    %v875 = vmul.f32 1.0, %v874
    %v876 = vtanh.pop %v869
    %v878 = vrot.slane %v785, 6
    %v880 = vmul.f32 %v875, %v878
    %882 = vrot.lane.b32.xlu0 %v876, 32
    %v883 = vpop.permute.xlu0 %882
    %v885 = vmul.f32 %v875, %v883
    %887 = vrot.lane.b32.xlu0 %v885, 32
    %v888 = vpop.permute.xlu0 %887
    %v890 = vadd.f32 %v880, %v888
    %v891 = vtanh.pop %v890
    %893 = vrot.lane.b32.xlu0 %v891, 32
    %v894 = vpop.permute.xlu0 %893
    %v896 = vmul.f32 %v875, %v894
    %v897 = vmax.f32 %v896, 0.0
    %899 = vrot.lane.b32.xlu0 %v896, 64
    %v900 = vpop.permute.xlu0 %899
    %v901 = vsel %vm370, %v900, 0
    %903 = vmatprep.subr.mxu0 0.0
    %904 = vmatpush1.msra.mxu0 %v366
    %905 = vmatprep.subr.mxu0 0.0
    %906 = vmatpush1.msra.mxu0 %v367
    %907 = vmatprep.subr.mxu0 0.0
    %908 = vmatpush1.msra.mxu0 %v368
    %909 = vmatprep.subr.mxu0 0.0
    %910 = vmatpush1.msra.mxu0 %v369
    %911 = vmatprep.subr.mxu0 0.0
    %912 = vmatpush1.msra.mxu0 0.0
    %913 = vmatprep.subr.mxu0 0.0
    %914 = vmatpush1.msra.mxu0 0.0
    %915 = vmatprep.subr.mxu0 0.0
    %916 = vmatpush1.msra.mxu0 0.0
    %917 = vmatprep.subr.mxu0 0.0
    %918 = vmatpush1.msra.mxu0 0.0
    %919 = vmatprep.subr.mxu0 0.0
    %920 = vmatpush1.msra.mxu0 0.0
    %921 = vmatprep.subr.mxu0 0.0
    %922 = vmatpush1.msra.mxu0 0.0
    %923 = vmatprep.subr.mxu0 0.0
    %924 = vmatpush1.msra.mxu0 0.0
    %925 = vmatprep.subr.mxu0 0.0
    %926 = vmatpush1.msra.mxu0 0.0
    %927 = vmatprep.subr.mxu0 0.0
    %928 = vmatpush1.msra.mxu0 0.0
    %929 = vmatprep.subr.mxu0 0.0
    %930 = vmatpush1.msra.mxu0 0.0
    %931 = vmatprep.subr.mxu0 0.0
    %932 = vmatpush1.msra.mxu0 0.0
    %933 = vmatprep.subr.mxu0 0.0
    %934 = vmatpush1.msra.mxu0 0.0
    %935 = vmatprep.subr.mxu0 0.0
    %936 = vmatpush1.msra.mxu0 0.0
    %937 = vmatprep.subr.mxu0 0.0
    %938 = vmatpush1.msra.mxu0 0.0
    %939 = vmatprep.subr.mxu0 0.0
    %940 = vmatpush1.msra.mxu0 0.0
    %941 = vmatprep.subr.mxu0 0.0
    %942 = vmatpush1.msra.mxu0 0.0
    %943 = vmatprep.subr.mxu0 0.0
    %944 = vmatpush1.msra.mxu0 0.0
    %945 = vmatprep.subr.mxu0 0.0
    %946 = vmatpush1.msra.mxu0 0.0
    %947 = vmatprep.subr.mxu0 0.0
    %948 = vmatpush1.msra.mxu0 0.0
    %949 = vmatprep.subr.mxu0 0.0
    %950 = vmatpush1.msra.mxu0 0.0
    %951 = vmatprep.subr.mxu0 0.0
    %952 = vmatpush1.msra.mxu0 0.0
    %953 = vmatprep.subr.mxu0 0.0
    %954 = vmatpush1.msra.mxu0 0.0
    %955 = vmatprep.subr.mxu0 0.0
    %956 = vmatpush1.msra.mxu0 0.0
    %957 = vmatprep.subr.mxu0 0.0
    %958 = vmatpush1.msra.mxu0 0.0
    %959 = vmatprep.subr.mxu0 0.0
    %960 = vmatpush1.msra.mxu0 0.0
    %961 = vmatprep.subr.mxu0 0.0
    %962 = vmatpush1.msra.mxu0 0.0
    %963 = vmatprep.subr.mxu0 0.0
    %964 = vmatpush1.msra.mxu0 0.0
    %965 = vmatprep.subr.mxu0 0.0
    %966 = vmatpush1.msra.mxu0 0.0
    %967 = vmatprep.mubr.f32.mxu0 0.0
    %968 = vmatmul.mubr.f32.gmra.mrb[0].mxu0 %v901
    %v969 = vpop.f32.mrb[0].mxu0
    %v970 = vadd.f32 0.0, %v969
    %v971 = vpop.f32.mrb[0].mxu0
    %972 = vdwg.mxu0
    %v974 = vrot.slane %v970, 6
    %v976 = vadd.f32 %v363, %v974
    %v977 = vxor.u32 %v976, 2147483648
    %v978 = vmul.f32 %v977, 1.442695
    %v979 = vpow.pop %v978
    %v980 = vadd.f32 %v979, 1.0
    %v981 = vrcp.pop %v980
    %v982 = vmul.f32 1.0, %v981
    %v983 = vtanh.pop %v976
    %v985 = vrot.slane %v890, 6
    %v987 = vmul.f32 %v982, %v985
    %989 = vrot.lane.b32.xlu0 %v983, 32
    %v990 = vpop.permute.xlu0 %989
    %v992 = vmul.f32 %v982, %v990
    %994 = vrot.lane.b32.xlu0 %v992, 32
    %v995 = vpop.permute.xlu0 %994
    %v997 = vadd.f32 %v987, %v995
    %v998 = vtanh.pop %v997
    %1000 = vrot.lane.b32.xlu0 %v998, 32
    %v1001 = vpop.permute.xlu0 %1000
    %v1003 = vmul.f32 %v982, %v1001
    %v1004 = vmax.f32 %v1003, 0.0
    %v1006 = vrot.slane %v1003, 2
    %1007 = vrot.lane.b32.xlu0 %v1006, 64
    %v1008 = vpop.permute.xlu0 %1007
    %v1009 = vsel %vm370, %v1008, 0
    %1011 = vmatprep.subr.mxu0 0.0
    %1012 = vmatpush1.msra.mxu0 %v366
    %1013 = vmatprep.subr.mxu0 0.0
    %1014 = vmatpush1.msra.mxu0 %v367
    %1015 = vmatprep.subr.mxu0 0.0
    %1016 = vmatpush1.msra.mxu0 %v368
    %1017 = vmatprep.subr.mxu0 0.0
    %1018 = vmatpush1.msra.mxu0 %v369
    %1019 = vmatprep.subr.mxu0 0.0
    %1020 = vmatpush1.msra.mxu0 0.0
    %1021 = vmatprep.subr.mxu0 0.0
    %1022 = vmatpush1.msra.mxu0 0.0
    %1023 = vmatprep.subr.mxu0 0.0
    %1024 = vmatpush1.msra.mxu0 0.0
    %1025 = vmatprep.subr.mxu0 0.0
    %1026 = vmatpush1.msra.mxu0 0.0
    %1027 = vmatprep.subr.mxu0 0.0
    %1028 = vmatpush1.msra.mxu0 0.0
    %1029 = vmatprep.subr.mxu0 0.0
    %1030 = vmatpush1.msra.mxu0 0.0
    %1031 = vmatprep.subr.mxu0 0.0
    %1032 = vmatpush1.msra.mxu0 0.0
    %1033 = vmatprep.subr.mxu0 0.0
    %1034 = vmatpush1.msra.mxu0 0.0
    %1035 = vmatprep.subr.mxu0 0.0
    %1036 = vmatpush1.msra.mxu0 0.0
    %1037 = vmatprep.subr.mxu0 0.0
    %1038 = vmatpush1.msra.mxu0 0.0
    %1039 = vmatprep.subr.mxu0 0.0
    %1040 = vmatpush1.msra.mxu0 0.0
    %1041 = vmatprep.subr.mxu0 0.0
    %1042 = vmatpush1.msra.mxu0 0.0
    %1043 = vmatprep.subr.mxu0 0.0
    %1044 = vmatpush1.msra.mxu0 0.0
    %1045 = vmatprep.subr.mxu0 0.0
    %1046 = vmatpush1.msra.mxu0 0.0
    %1047 = vmatprep.subr.mxu0 0.0
    %1048 = vmatpush1.msra.mxu0 0.0
    %1049 = vmatprep.subr.mxu0 0.0
    %1050 = vmatpush1.msra.mxu0 0.0
    %1051 = vmatprep.subr.mxu0 0.0
    %1052 = vmatpush1.msra.mxu0 0.0
    %1053 = vmatprep.subr.mxu0 0.0
    %1054 = vmatpush1.msra.mxu0 0.0
    %1055 = vmatprep.subr.mxu0 0.0
    %1056 = vmatpush1.msra.mxu0 0.0
    %1057 = vmatprep.subr.mxu0 0.0
    %1058 = vmatpush1.msra.mxu0 0.0
    %1059 = vmatprep.subr.mxu0 0.0
    %1060 = vmatpush1.msra.mxu0 0.0
    %1061 = vmatprep.subr.mxu0 0.0
    %1062 = vmatpush1.msra.mxu0 0.0
    %1063 = vmatprep.subr.mxu0 0.0
    %1064 = vmatpush1.msra.mxu0 0.0
    %1065 = vmatprep.subr.mxu0 0.0
    %1066 = vmatpush1.msra.mxu0 0.0
    %1067 = vmatprep.subr.mxu0 0.0
    %1068 = vmatpush1.msra.mxu0 0.0
    %1069 = vmatprep.subr.mxu0 0.0
    %1070 = vmatpush1.msra.mxu0 0.0
    %1071 = vmatprep.subr.mxu0 0.0
    %1072 = vmatpush1.msra.mxu0 0.0
    %1073 = vmatprep.subr.mxu0 0.0
    %1074 = vmatpush1.msra.mxu0 0.0
    %1075 = vmatprep.mubr.f32.mxu0 0.0
    %1076 = vmatmul.mubr.f32.gmra.mrb[0].mxu0 %v1009
    %v1077 = vpop.f32.mrb[0].mxu0
    %v1078 = vadd.f32 0.0, %v1077
    %v1079 = vpop.f32.mrb[0].mxu0
    %1080 = vdwg.mxu0
    %v1082 = vrot.slane %v1078, 4
    %v1084 = vadd.f32 %v363, %v1082
    %v1085 = vxor.u32 %v1084, 2147483648
    %v1086 = vmul.f32 %v1085, 1.442695
    %v1087 = vpow.pop %v1086
    %v1088 = vadd.f32 %v1087, 1.0
    %v1089 = vrcp.pop %v1088
    %v1090 = vmul.f32 1.0, %v1089
    %v1091 = vtanh.pop %v1084
    %v1093 = vrot.slane %v997, 6
    %v1095 = vmul.f32 %v1090, %v1093
    %1097 = vrot.lane.b32.xlu0 %v1091, 32
    %v1098 = vpop.permute.xlu0 %1097
    %v1100 = vmul.f32 %v1090, %v1098
    %1102 = vrot.lane.b32.xlu0 %v1100, 32
    %v1103 = vpop.permute.xlu0 %1102
    %v1105 = vadd.f32 %v1095, %v1103
    %v1106 = vtanh.pop %v1105
    %1108 = vrot.lane.b32.xlu0 %v1106, 32
    %v1109 = vpop.permute.xlu0 %1108
    %v1111 = vmul.f32 %v1090, %v1109
    %v1112 = vmax.f32 %v1111, 0.0
    %v1114 = vrot.slane %v1111, 4
    %1115 = vrot.lane.b32.xlu0 %v1114, 64
    %v1116 = vpop.permute.xlu0 %1115
    %v1117 = vsel %vm370, %v1116, 0
    %1119 = vmatprep.subr.mxu0 0.0
    %1120 = vmatpush1.msra.mxu0 %v366
    %1121 = vmatprep.subr.mxu0 0.0
    %1122 = vmatpush1.msra.mxu0 %v367
    %1123 = vmatprep.subr.mxu0 0.0
    %1124 = vmatpush1.msra.mxu0 %v368
    %1125 = vmatprep.subr.mxu0 0.0
    %1126 = vmatpush1.msra.mxu0 %v369
    %1127 = vmatprep.subr.mxu0 0.0
    %1128 = vmatpush1.msra.mxu0 0.0
    %1129 = vmatprep.subr.mxu0 0.0
    %1130 = vmatpush1.msra.mxu0 0.0
    %1131 = vmatprep.subr.mxu0 0.0
    %1132 = vmatpush1.msra.mxu0 0.0
    %1133 = vmatprep.subr.mxu0 0.0
    %1134 = vmatpush1.msra.mxu0 0.0
    %1135 = vmatprep.subr.mxu0 0.0
    %1136 = vmatpush1.msra.mxu0 0.0
    %1137 = vmatprep.subr.mxu0 0.0
    %1138 = vmatpush1.msra.mxu0 0.0
    %1139 = vmatprep.subr.mxu0 0.0
    %1140 = vmatpush1.msra.mxu0 0.0
    %1141 = vmatprep.subr.mxu0 0.0
    %1142 = vmatpush1.msra.mxu0 0.0
    %1143 = vmatprep.subr.mxu0 0.0
    %1144 = vmatpush1.msra.mxu0 0.0
    %1145 = vmatprep.subr.mxu0 0.0
    %1146 = vmatpush1.msra.mxu0 0.0
    %1147 = vmatprep.subr.mxu0 0.0
    %1148 = vmatpush1.msra.mxu0 0.0
    %1149 = vmatprep.subr.mxu0 0.0
    %1150 = vmatpush1.msra.mxu0 0.0
    %1151 = vmatprep.subr.mxu0 0.0
    %1152 = vmatpush1.msra.mxu0 0.0
    %1153 = vmatprep.subr.mxu0 0.0
    %1154 = vmatpush1.msra.mxu0 0.0
    %1155 = vmatprep.subr.mxu0 0.0
    %1156 = vmatpush1.msra.mxu0 0.0
    %1157 = vmatprep.subr.mxu0 0.0
    %1158 = vmatpush1.msra.mxu0 0.0
    %1159 = vmatprep.subr.mxu0 0.0
    %1160 = vmatpush1.msra.mxu0 0.0
    %1161 = vmatprep.subr.mxu0 0.0
    %1162 = vmatpush1.msra.mxu0 0.0
    %1163 = vmatprep.subr.mxu0 0.0
    %1164 = vmatpush1.msra.mxu0 0.0
    %1165 = vmatprep.subr.mxu0 0.0
    %1166 = vmatpush1.msra.mxu0 0.0
    %1167 = vmatprep.subr.mxu0 0.0
    %1168 = vmatpush1.msra.mxu0 0.0
    %1169 = vmatprep.subr.mxu0 0.0
    %1170 = vmatpush1.msra.mxu0 0.0
    %1171 = vmatprep.subr.mxu0 0.0
    %1172 = vmatpush1.msra.mxu0 0.0
    %1173 = vmatprep.subr.mxu0 0.0
    %1174 = vmatpush1.msra.mxu0 0.0
    %1175 = vmatprep.subr.mxu0 0.0
    %1176 = vmatpush1.msra.mxu0 0.0
    %1177 = vmatprep.subr.mxu0 0.0
    %1178 = vmatpush1.msra.mxu0 0.0
    %1179 = vmatprep.subr.mxu0 0.0
    %1180 = vmatpush1.msra.mxu0 0.0
    %1181 = vmatprep.subr.mxu0 0.0
    %1182 = vmatpush1.msra.mxu0 0.0
    %1183 = vmatprep.mubr.f32.mxu0 0.0
    %1184 = vmatmul.mubr.f32.gmra.mrb[0].mxu0 %v1117
    %v1185 = vpop.f32.mrb[0].mxu0
    %v1186 = vadd.f32 0.0, %v1185
    %v1187 = vpop.f32.mrb[0].mxu0
    %1188 = vdwg.mxu0
    %v1190 = vrot.slane %v1186, 2
    %v1192 = vadd.f32 %v363, %v1190
    %v1193 = vxor.u32 %v1192, 2147483648
    %v1194 = vmul.f32 %v1193, 1.442695
    %v1195 = vpow.pop %v1194
    %v1196 = vadd.f32 %v1195, 1.0
    %v1197 = vrcp.pop %v1196
    %v1198 = vmul.f32 1.0, %v1197
    %v1199 = vtanh.pop %v1192
    %v1201 = vrot.slane %v1105, 6
    %v1203 = vmul.f32 %v1198, %v1201
    %1205 = vrot.lane.b32.xlu0 %v1199, 32
    %v1206 = vpop.permute.xlu0 %1205
    %v1208 = vmul.f32 %v1198, %v1206
    %1210 = vrot.lane.b32.xlu0 %v1208, 32
    %v1211 = vpop.permute.xlu0 %1210
    %v1213 = vadd.f32 %v1203, %v1211
    %v1214 = vtanh.pop %v1213
    %1216 = vrot.lane.b32.xlu0 %v1214, 32
    %v1217 = vpop.permute.xlu0 %1216
    %v1219 = vmul.f32 %v1198, %v1217
    %v1220 = vmax.f32 %v1219, 0.0
    %v1221 = vld [vmem:[#allocation10] sm:$0xff]
    %v1222 = vld [vmem:[#allocation10 + $0x8] sm:$0xff]
    %v1223 = vld [vmem:[#allocation10 + $0x10] sm:$0xff]
    %v1224 = vld [vmem:[#allocation10 + $0x18] sm:$0xff]
    %v1225 = vld [vmem:[#allocation11] sm:$0xff]
    %v1226 = vld [vmem:[#allocation11 + $0x8] sm:$0xff]
    %v1227 = vld [vmem:[#allocation11 + $0x10] sm:$0xff]
    %v1228 = vld [vmem:[#allocation11 + $0x18] sm:$0xff]
    %v1229 = vld [vmem:[#allocation13] sm:$0x1]
    %v1231 = vlaneseq
    %v1232 = vshrl.u32 %v1231, 7
    %v1233 = vsub.s32 0, %v1232
    %v1234 = vrot.slane %v1229, %v1233
    %1237 = vrot.lane.b32.xlu0 %v469, 64
    %v1238 = vpop.permute.xlu0 %1237
    %v1239 = vsel %vm370, %v1238, 0
    %1241 = vmatprep.subr.mxu0 0.0
    %1242 = vmatpush1.msra.mxu0 %v1221
    %1243 = vmatprep.subr.mxu0 0.0
    %1244 = vmatpush1.msra.mxu0 %v1222
    %1245 = vmatprep.subr.mxu0 0.0
    %1246 = vmatpush1.msra.mxu0 %v1223
    %1247 = vmatprep.subr.mxu0 0.0
    %1248 = vmatpush1.msra.mxu0 %v1224
    %1249 = vmatprep.subr.mxu0 0.0
    %1250 = vmatpush1.msra.mxu0 0.0
    %1251 = vmatprep.subr.mxu0 0.0
    %1252 = vmatpush1.msra.mxu0 0.0
    %1253 = vmatprep.subr.mxu0 0.0
    %1254 = vmatpush1.msra.mxu0 0.0
    %1255 = vmatprep.subr.mxu0 0.0
    %1256 = vmatpush1.msra.mxu0 0.0
    %1257 = vmatprep.subr.mxu0 0.0
    %1258 = vmatpush1.msra.mxu0 0.0
    %1259 = vmatprep.subr.mxu0 0.0
    %1260 = vmatpush1.msra.mxu0 0.0
    %1261 = vmatprep.subr.mxu0 0.0
    %1262 = vmatpush1.msra.mxu0 0.0
    %1263 = vmatprep.subr.mxu0 0.0
    %1264 = vmatpush1.msra.mxu0 0.0
    %1265 = vmatprep.subr.mxu0 0.0
    %1266 = vmatpush1.msra.mxu0 0.0
    %1267 = vmatprep.subr.mxu0 0.0
    %1268 = vmatpush1.msra.mxu0 0.0
    %1269 = vmatprep.subr.mxu0 0.0
    %1270 = vmatpush1.msra.mxu0 0.0
    %1271 = vmatprep.subr.mxu0 0.0
    %1272 = vmatpush1.msra.mxu0 0.0
    %1273 = vmatprep.subr.mxu0 0.0
    %1274 = vmatpush1.msra.mxu0 0.0
    %1275 = vmatprep.subr.mxu0 0.0
    %1276 = vmatpush1.msra.mxu0 0.0
    %1277 = vmatprep.subr.mxu0 0.0
    %1278 = vmatpush1.msra.mxu0 0.0
    %1279 = vmatprep.subr.mxu0 0.0
    %1280 = vmatpush1.msra.mxu0 0.0
    %1281 = vmatprep.subr.mxu0 0.0
    %1282 = vmatpush1.msra.mxu0 0.0
    %1283 = vmatprep.subr.mxu0 0.0
    %1284 = vmatpush1.msra.mxu0 0.0
    %1285 = vmatprep.subr.mxu0 0.0
    %1286 = vmatpush1.msra.mxu0 0.0
    %1287 = vmatprep.subr.mxu0 0.0
    %1288 = vmatpush1.msra.mxu0 0.0
    %1289 = vmatprep.subr.mxu0 0.0
    %1290 = vmatpush1.msra.mxu0 0.0
    %1291 = vmatprep.subr.mxu0 0.0
    %1292 = vmatpush1.msra.mxu0 0.0
    %1293 = vmatprep.subr.mxu0 0.0
    %1294 = vmatpush1.msra.mxu0 0.0
    %1295 = vmatprep.subr.mxu0 0.0
    %1296 = vmatpush1.msra.mxu0 0.0
    %1297 = vmatprep.subr.mxu0 0.0
    %1298 = vmatpush1.msra.mxu0 0.0
    %1299 = vmatprep.subr.mxu0 0.0
    %1300 = vmatpush1.msra.mxu0 0.0
    %1301 = vmatprep.subr.mxu0 0.0
    %1302 = vmatpush1.msra.mxu0 0.0
    %1303 = vmatprep.subr.mxu0 0.0
    %1304 = vmatpush1.msra.mxu0 0.0
    %1305 = vmatprep.mubr.f32.mxu0 0.0
    %1306 = vmatmul.mubr.f32.gmra.mrb[0].mxu0 %v1239
    %v1307 = vpop.f32.mrb[0].mxu0
    %v1308 = vadd.f32 %v1234, %v1307
    %v1309 = vpop.f32.mrb[0].mxu0
    %1310 = vdwg.mxu0
    %1311 = vmatprep.subr.mxu0 0.0
    %1312 = vmatpush1.msra.mxu0 %v1225
    %1313 = vmatprep.subr.mxu0 0.0
    %1314 = vmatpush1.msra.mxu0 %v1226
    %1315 = vmatprep.subr.mxu0 0.0
    %1316 = vmatpush1.msra.mxu0 %v1227
    %1317 = vmatprep.subr.mxu0 0.0
    %1318 = vmatpush1.msra.mxu0 %v1228
    %1319 = vmatprep.subr.mxu0 0.0
    %1320 = vmatpush1.msra.mxu0 0.0
    %1321 = vmatprep.subr.mxu0 0.0
    %1322 = vmatpush1.msra.mxu0 0.0
    %1323 = vmatprep.subr.mxu0 0.0
    %1324 = vmatpush1.msra.mxu0 0.0
    %1325 = vmatprep.subr.mxu0 0.0
    %1326 = vmatpush1.msra.mxu0 0.0
    %1327 = vmatprep.subr.mxu0 0.0
    %1328 = vmatpush1.msra.mxu0 0.0
    %1329 = vmatprep.subr.mxu0 0.0
    %1330 = vmatpush1.msra.mxu0 0.0
    %1331 = vmatprep.subr.mxu0 0.0
    %1332 = vmatpush1.msra.mxu0 0.0
    %1333 = vmatprep.subr.mxu0 0.0
    %1334 = vmatpush1.msra.mxu0 0.0
    %1335 = vmatprep.subr.mxu0 0.0
    %1336 = vmatpush1.msra.mxu0 0.0
    %1337 = vmatprep.subr.mxu0 0.0
    %1338 = vmatpush1.msra.mxu0 0.0
    %1339 = vmatprep.subr.mxu0 0.0
    %1340 = vmatpush1.msra.mxu0 0.0
    %1341 = vmatprep.subr.mxu0 0.0
    %1342 = vmatpush1.msra.mxu0 0.0
    %1343 = vmatprep.subr.mxu0 0.0
    %1344 = vmatpush1.msra.mxu0 0.0
    %1345 = vmatprep.subr.mxu0 0.0
    %1346 = vmatpush1.msra.mxu0 0.0
    %1347 = vmatprep.subr.mxu0 0.0
    %1348 = vmatpush1.msra.mxu0 0.0
    %1349 = vmatprep.subr.mxu0 0.0
    %1350 = vmatpush1.msra.mxu0 0.0
    %1351 = vmatprep.subr.mxu0 0.0
    %1352 = vmatpush1.msra.mxu0 0.0
    %1353 = vmatprep.subr.mxu0 0.0
    %1354 = vmatpush1.msra.mxu0 0.0
    %1355 = vmatprep.subr.mxu0 0.0
    %1356 = vmatpush1.msra.mxu0 0.0
    %1357 = vmatprep.subr.mxu0 0.0
    %1358 = vmatpush1.msra.mxu0 0.0
    %1359 = vmatprep.subr.mxu0 0.0
    %1360 = vmatpush1.msra.mxu0 0.0
    %1361 = vmatprep.subr.mxu0 0.0
    %1362 = vmatpush1.msra.mxu0 0.0
    %1363 = vmatprep.subr.mxu0 0.0
    %1364 = vmatpush1.msra.mxu0 0.0
    %1365 = vmatprep.subr.mxu0 0.0
    %1366 = vmatpush1.msra.mxu0 0.0
    %1367 = vmatprep.subr.mxu0 0.0
    %1368 = vmatpush1.msra.mxu0 0.0
    %1369 = vmatprep.subr.mxu0 0.0
    %1370 = vmatpush1.msra.mxu0 0.0
    %1371 = vmatprep.subr.mxu0 0.0
    %1372 = vmatpush1.msra.mxu0 0.0
    %1373 = vmatprep.subr.mxu0 0.0
    %1374 = vmatpush1.msra.mxu0 0.0
    %1375 = vmatprep.mubr.f32.mxu0 0.0
    %1376 = vmatmul.mubr.f32.gmra.mrb[0].mxu0 %v372
    %v1377 = vpop.f32.mrb[0].mxu0
    %v1378 = vadd.f32 0.0, %v1377
    %v1379 = vpop.f32.mrb[0].mxu0
    %1380 = vdwg.mxu0
    %v1381 = vadd.f32 %v1308, %v1378
    %v1382 = vxor.u32 %v1381, 2147483648
    %v1383 = vmul.f32 %v1382, 1.442695
    %v1384 = vpow.pop %v1383
    %v1385 = vadd.f32 %v1384, 1.0
    %v1386 = vrcp.pop %v1385
    %v1387 = vmul.f32 1.0, %v1386
    %v1388 = vtanh.pop %v1381
    %v1389 = vmul.f32 %v1387, 0.0
    %1391 = vrot.lane.b32.xlu0 %v1388, 32
    %v1392 = vpop.permute.xlu0 %1391
    %v1394 = vmul.f32 %v1387, %v1392
    %1396 = vrot.lane.b32.xlu0 %v1394, 32
    %v1397 = vpop.permute.xlu0 %1396
    %v1399 = vadd.f32 %v1389, %v1397
    %v1400 = vtanh.pop %v1399
    %1402 = vrot.lane.b32.xlu0 %v1400, 32
    %v1403 = vpop.permute.xlu0 %1402
    %v1405 = vmul.f32 %v1387, %v1403
    %v1407 = vrot.slane %v576, 2
    %1408 = vrot.lane.b32.xlu0 %v1407, 64
    %v1409 = vpop.permute.xlu0 %1408
    %v1410 = vsel %vm370, %v1409, 0
    %1412 = vmatprep.subr.mxu0 0.0
    %1413 = vmatpush1.msra.mxu0 %v1221
    %1414 = vmatprep.subr.mxu0 0.0
    %1415 = vmatpush1.msra.mxu0 %v1222
    %1416 = vmatprep.subr.mxu0 0.0
    %1417 = vmatpush1.msra.mxu0 %v1223
    %1418 = vmatprep.subr.mxu0 0.0
    %1419 = vmatpush1.msra.mxu0 %v1224
    %1420 = vmatprep.subr.mxu0 0.0
    %1421 = vmatpush1.msra.mxu0 0.0
    %1422 = vmatprep.subr.mxu0 0.0
    %1423 = vmatpush1.msra.mxu0 0.0
    %1424 = vmatprep.subr.mxu0 0.0
    %1425 = vmatpush1.msra.mxu0 0.0
    %1426 = vmatprep.subr.mxu0 0.0
    %1427 = vmatpush1.msra.mxu0 0.0
    %1428 = vmatprep.subr.mxu0 0.0
    %1429 = vmatpush1.msra.mxu0 0.0
    %1430 = vmatprep.subr.mxu0 0.0
    %1431 = vmatpush1.msra.mxu0 0.0
    %1432 = vmatprep.subr.mxu0 0.0
    %1433 = vmatpush1.msra.mxu0 0.0
    %1434 = vmatprep.subr.mxu0 0.0
    %1435 = vmatpush1.msra.mxu0 0.0
    %1436 = vmatprep.subr.mxu0 0.0
    %1437 = vmatpush1.msra.mxu0 0.0
    %1438 = vmatprep.subr.mxu0 0.0
    %1439 = vmatpush1.msra.mxu0 0.0
    %1440 = vmatprep.subr.mxu0 0.0
    %1441 = vmatpush1.msra.mxu0 0.0
    %1442 = vmatprep.subr.mxu0 0.0
    %1443 = vmatpush1.msra.mxu0 0.0
    %1444 = vmatprep.subr.mxu0 0.0
    %1445 = vmatpush1.msra.mxu0 0.0
    %1446 = vmatprep.subr.mxu0 0.0
    %1447 = vmatpush1.msra.mxu0 0.0
    %1448 = vmatprep.subr.mxu0 0.0
    %1449 = vmatpush1.msra.mxu0 0.0
    %1450 = vmatprep.subr.mxu0 0.0
    %1451 = vmatpush1.msra.mxu0 0.0
    %1452 = vmatprep.subr.mxu0 0.0
    %1453 = vmatpush1.msra.mxu0 0.0
    %1454 = vmatprep.subr.mxu0 0.0
    %1455 = vmatpush1.msra.mxu0 0.0
    %1456 = vmatprep.subr.mxu0 0.0
    %1457 = vmatpush1.msra.mxu0 0.0
    %1458 = vmatprep.subr.mxu0 0.0
    %1459 = vmatpush1.msra.mxu0 0.0
    %1460 = vmatprep.subr.mxu0 0.0
    %1461 = vmatpush1.msra.mxu0 0.0
    %1462 = vmatprep.subr.mxu0 0.0
    %1463 = vmatpush1.msra.mxu0 0.0
    %1464 = vmatprep.subr.mxu0 0.0
    %1465 = vmatpush1.msra.mxu0 0.0
    %1466 = vmatprep.subr.mxu0 0.0
    %1467 = vmatpush1.msra.mxu0 0.0
    %1468 = vmatprep.subr.mxu0 0.0
    %1469 = vmatpush1.msra.mxu0 0.0
    %1470 = vmatprep.subr.mxu0 0.0
    %1471 = vmatpush1.msra.mxu0 0.0
    %1472 = vmatprep.subr.mxu0 0.0
    %1473 = vmatpush1.msra.mxu0 0.0
    %1474 = vmatprep.subr.mxu0 0.0
    %1475 = vmatpush1.msra.mxu0 0.0
    %1476 = vmatprep.mubr.f32.mxu0 0.0
    %1477 = vmatmul.mubr.f32.gmra.mrb[0].mxu0 %v1410
    %v1478 = vpop.f32.mrb[0].mxu0
    %v1479 = vadd.f32 %v1234, %v1478
    %v1480 = vpop.f32.mrb[0].mxu0
    %1481 = vdwg.mxu0
    %1483 = vrot.lane.b32.xlu0 %v1405, 64
    %v1484 = vpop.permute.xlu0 %1483
    %v1485 = vsel %vm370, %v1484, 0
    %1487 = vmatprep.subr.mxu0 0.0
    %1488 = vmatpush1.msra.mxu0 %v1225
    %1489 = vmatprep.subr.mxu0 0.0
    %1490 = vmatpush1.msra.mxu0 %v1226
    %1491 = vmatprep.subr.mxu0 0.0
    %1492 = vmatpush1.msra.mxu0 %v1227
    %1493 = vmatprep.subr.mxu0 0.0
    %1494 = vmatpush1.msra.mxu0 %v1228
    %1495 = vmatprep.subr.mxu0 0.0
    %1496 = vmatpush1.msra.mxu0 0.0
    %1497 = vmatprep.subr.mxu0 0.0
    %1498 = vmatpush1.msra.mxu0 0.0
    %1499 = vmatprep.subr.mxu0 0.0
    %1500 = vmatpush1.msra.mxu0 0.0
    %1501 = vmatprep.subr.mxu0 0.0
    %1502 = vmatpush1.msra.mxu0 0.0
    %1503 = vmatprep.subr.mxu0 0.0
    %1504 = vmatpush1.msra.mxu0 0.0
    %1505 = vmatprep.subr.mxu0 0.0
    %1506 = vmatpush1.msra.mxu0 0.0
    %1507 = vmatprep.subr.mxu0 0.0
    %1508 = vmatpush1.msra.mxu0 0.0
    %1509 = vmatprep.subr.mxu0 0.0
    %1510 = vmatpush1.msra.mxu0 0.0
    %1511 = vmatprep.subr.mxu0 0.0
    %1512 = vmatpush1.msra.mxu0 0.0
    %1513 = vmatprep.subr.mxu0 0.0
    %1514 = vmatpush1.msra.mxu0 0.0
    %1515 = vmatprep.subr.mxu0 0.0
    %1516 = vmatpush1.msra.mxu0 0.0
    %1517 = vmatprep.subr.mxu0 0.0
    %1518 = vmatpush1.msra.mxu0 0.0
    %1519 = vmatprep.subr.mxu0 0.0
    %1520 = vmatpush1.msra.mxu0 0.0
    %1521 = vmatprep.subr.mxu0 0.0
    %1522 = vmatpush1.msra.mxu0 0.0
    %1523 = vmatprep.subr.mxu0 0.0
    %1524 = vmatpush1.msra.mxu0 0.0
    %1525 = vmatprep.subr.mxu0 0.0
    %1526 = vmatpush1.msra.mxu0 0.0
    %1527 = vmatprep.subr.mxu0 0.0
    %1528 = vmatpush1.msra.mxu0 0.0
    %1529 = vmatprep.subr.mxu0 0.0
    %1530 = vmatpush1.msra.mxu0 0.0
    %1531 = vmatprep.subr.mxu0 0.0
    %1532 = vmatpush1.msra.mxu0 0.0
    %1533 = vmatprep.subr.mxu0 0.0
    %1534 = vmatpush1.msra.mxu0 0.0
    %1535 = vmatprep.subr.mxu0 0.0
    %1536 = vmatpush1.msra.mxu0 0.0
    %1537 = vmatprep.subr.mxu0 0.0
    %1538 = vmatpush1.msra.mxu0 0.0
    %1539 = vmatprep.subr.mxu0 0.0
    %1540 = vmatpush1.msra.mxu0 0.0
    %1541 = vmatprep.subr.mxu0 0.0
    %1542 = vmatpush1.msra.mxu0 0.0
    %1543 = vmatprep.subr.mxu0 0.0
    %1544 = vmatpush1.msra.mxu0 0.0
    %1545 = vmatprep.subr.mxu0 0.0
    %1546 = vmatpush1.msra.mxu0 0.0
    %1547 = vmatprep.subr.mxu0 0.0
    %1548 = vmatpush1.msra.mxu0 0.0
    %1549 = vmatprep.subr.mxu0 0.0
    %1550 = vmatpush1.msra.mxu0 0.0
    %1551 = vmatprep.mubr.f32.mxu0 0.0
    %1552 = vmatmul.mubr.f32.gmra.mrb[0].mxu0 %v1485
    %v1553 = vpop.f32.mrb[0].mxu0
    %v1554 = vadd.f32 0.0, %v1553
    %v1555 = vpop.f32.mrb[0].mxu0
    %1556 = vdwg.mxu0
    %v1557 = vadd.f32 %v1479, %v1554
    %v1558 = vxor.u32 %v1557, 2147483648
    %v1559 = vmul.f32 %v1558, 1.442695
    %v1560 = vpow.pop %v1559
    %v1561 = vadd.f32 %v1560, 1.0
    %v1562 = vrcp.pop %v1561
    %v1563 = vmul.f32 1.0, %v1562
    %v1564 = vtanh.pop %v1557
    %v1565 = vmul.f32 %v1563, %v1399
    %1567 = vrot.lane.b32.xlu0 %v1564, 32
    %v1568 = vpop.permute.xlu0 %1567
    %v1570 = vmul.f32 %v1563, %v1568
    %1572 = vrot.lane.b32.xlu0 %v1570, 32
    %v1573 = vpop.permute.xlu0 %1572
    %v1575 = vadd.f32 %v1565, %v1573
    %v1576 = vtanh.pop %v1575
    %1578 = vrot.lane.b32.xlu0 %v1576, 32
    %v1579 = vpop.permute.xlu0 %1578
    %v1581 = vmul.f32 %v1563, %v1579
    %v1583 = vrot.slane %v684, 4
    %1584 = vrot.lane.b32.xlu0 %v1583, 64
    %v1585 = vpop.permute.xlu0 %1584
    %v1586 = vsel %vm370, %v1585, 0
    %1588 = vmatprep.subr.mxu0 0.0
    %1589 = vmatpush1.msra.mxu0 %v1221
    %1590 = vmatprep.subr.mxu0 0.0
    %1591 = vmatpush1.msra.mxu0 %v1222
    %1592 = vmatprep.subr.mxu0 0.0
    %1593 = vmatpush1.msra.mxu0 %v1223
    %1594 = vmatprep.subr.mxu0 0.0
    %1595 = vmatpush1.msra.mxu0 %v1224
    %1596 = vmatprep.subr.mxu0 0.0
    %1597 = vmatpush1.msra.mxu0 0.0
    %1598 = vmatprep.subr.mxu0 0.0
    %1599 = vmatpush1.msra.mxu0 0.0
    %1600 = vmatprep.subr.mxu0 0.0
    %1601 = vmatpush1.msra.mxu0 0.0
    %1602 = vmatprep.subr.mxu0 0.0
    %1603 = vmatpush1.msra.mxu0 0.0
    %1604 = vmatprep.subr.mxu0 0.0
    %1605 = vmatpush1.msra.mxu0 0.0
    %1606 = vmatprep.subr.mxu0 0.0
    %1607 = vmatpush1.msra.mxu0 0.0
    %1608 = vmatprep.subr.mxu0 0.0
    %1609 = vmatpush1.msra.mxu0 0.0
    %1610 = vmatprep.subr.mxu0 0.0
    %1611 = vmatpush1.msra.mxu0 0.0
    %1612 = vmatprep.subr.mxu0 0.0
    %1613 = vmatpush1.msra.mxu0 0.0
    %1614 = vmatprep.subr.mxu0 0.0
    %1615 = vmatpush1.msra.mxu0 0.0
    %1616 = vmatprep.subr.mxu0 0.0
    %1617 = vmatpush1.msra.mxu0 0.0
    %1618 = vmatprep.subr.mxu0 0.0
    %1619 = vmatpush1.msra.mxu0 0.0
    %1620 = vmatprep.subr.mxu0 0.0
    %1621 = vmatpush1.msra.mxu0 0.0
    %1622 = vmatprep.subr.mxu0 0.0
    %1623 = vmatpush1.msra.mxu0 0.0
    %1624 = vmatprep.subr.mxu0 0.0
    %1625 = vmatpush1.msra.mxu0 0.0
    %1626 = vmatprep.subr.mxu0 0.0
    %1627 = vmatpush1.msra.mxu0 0.0
    %1628 = vmatprep.subr.mxu0 0.0
    %1629 = vmatpush1.msra.mxu0 0.0
    %1630 = vmatprep.subr.mxu0 0.0
    %1631 = vmatpush1.msra.mxu0 0.0
    %1632 = vmatprep.subr.mxu0 0.0
    %1633 = vmatpush1.msra.mxu0 0.0
    %1634 = vmatprep.subr.mxu0 0.0
    %1635 = vmatpush1.msra.mxu0 0.0
    %1636 = vmatprep.subr.mxu0 0.0
    %1637 = vmatpush1.msra.mxu0 0.0
    %1638 = vmatprep.subr.mxu0 0.0
    %1639 = vmatpush1.msra.mxu0 0.0
    %1640 = vmatprep.subr.mxu0 0.0
    %1641 = vmatpush1.msra.mxu0 0.0
    %1642 = vmatprep.subr.mxu0 0.0
    %1643 = vmatpush1.msra.mxu0 0.0
    %1644 = vmatprep.subr.mxu0 0.0
    %1645 = vmatpush1.msra.mxu0 0.0
    %1646 = vmatprep.subr.mxu0 0.0
    %1647 = vmatpush1.msra.mxu0 0.0
    %1648 = vmatprep.subr.mxu0 0.0
    %1649 = vmatpush1.msra.mxu0 0.0
    %1650 = vmatprep.subr.mxu0 0.0
    %1651 = vmatpush1.msra.mxu0 0.0
    %1652 = vmatprep.mubr.f32.mxu0 0.0
    %1653 = vmatmul.mubr.f32.gmra.mrb[0].mxu0 %v1586
    %v1654 = vpop.f32.mrb[0].mxu0
    %v1655 = vadd.f32 %v1234, %v1654
    %v1656 = vpop.f32.mrb[0].mxu0
    %1657 = vdwg.mxu0
    %1659 = vrot.lane.b32.xlu0 %v1581, 64
    %v1660 = vpop.permute.xlu0 %1659
    %v1661 = vsel %vm370, %v1660, 0
    %1663 = vmatprep.subr.mxu0 0.0
    %1664 = vmatpush1.msra.mxu0 %v1225
    %1665 = vmatprep.subr.mxu0 0.0
    %1666 = vmatpush1.msra.mxu0 %v1226
    %1667 = vmatprep.subr.mxu0 0.0
    %1668 = vmatpush1.msra.mxu0 %v1227
    %1669 = vmatprep.subr.mxu0 0.0
    %1670 = vmatpush1.msra.mxu0 %v1228
    %1671 = vmatprep.subr.mxu0 0.0
    %1672 = vmatpush1.msra.mxu0 0.0
    %1673 = vmatprep.subr.mxu0 0.0
    %1674 = vmatpush1.msra.mxu0 0.0
    %1675 = vmatprep.subr.mxu0 0.0
    %1676 = vmatpush1.msra.mxu0 0.0
    %1677 = vmatprep.subr.mxu0 0.0
    %1678 = vmatpush1.msra.mxu0 0.0
    %1679 = vmatprep.subr.mxu0 0.0
    %1680 = vmatpush1.msra.mxu0 0.0
    %1681 = vmatprep.subr.mxu0 0.0
    %1682 = vmatpush1.msra.mxu0 0.0
    %1683 = vmatprep.subr.mxu0 0.0
    %1684 = vmatpush1.msra.mxu0 0.0
    %1685 = vmatprep.subr.mxu0 0.0
    %1686 = vmatpush1.msra.mxu0 0.0
    %1687 = vmatprep.subr.mxu0 0.0
    %1688 = vmatpush1.msra.mxu0 0.0
    %1689 = vmatprep.subr.mxu0 0.0
    %1690 = vmatpush1.msra.mxu0 0.0
    %1691 = vmatprep.subr.mxu0 0.0
    %1692 = vmatpush1.msra.mxu0 0.0
    %1693 = vmatprep.subr.mxu0 0.0
    %1694 = vmatpush1.msra.mxu0 0.0
    %1695 = vmatprep.subr.mxu0 0.0
    %1696 = vmatpush1.msra.mxu0 0.0
    %1697 = vmatprep.subr.mxu0 0.0
    %1698 = vmatpush1.msra.mxu0 0.0
    %1699 = vmatprep.subr.mxu0 0.0
    %1700 = vmatpush1.msra.mxu0 0.0
    %1701 = vmatprep.subr.mxu0 0.0
    %1702 = vmatpush1.msra.mxu0 0.0
    %1703 = vmatprep.subr.mxu0 0.0
    %1704 = vmatpush1.msra.mxu0 0.0
    %1705 = vmatprep.subr.mxu0 0.0
    %1706 = vmatpush1.msra.mxu0 0.0
    %1707 = vmatprep.subr.mxu0 0.0
    %1708 = vmatpush1.msra.mxu0 0.0
    %1709 = vmatprep.subr.mxu0 0.0
    %1710 = vmatpush1.msra.mxu0 0.0
    %1711 = vmatprep.subr.mxu0 0.0
    %1712 = vmatpush1.msra.mxu0 0.0
    %1713 = vmatprep.subr.mxu0 0.0
    %1714 = vmatpush1.msra.mxu0 0.0
    %1715 = vmatprep.subr.mxu0 0.0
    %1716 = vmatpush1.msra.mxu0 0.0
    %1717 = vmatprep.subr.mxu0 0.0
    %1718 = vmatpush1.msra.mxu0 0.0
    %1719 = vmatprep.subr.mxu0 0.0
    %1720 = vmatpush1.msra.mxu0 0.0
    %1721 = vmatprep.subr.mxu0 0.0
    %1722 = vmatpush1.msra.mxu0 0.0
    %1723 = vmatprep.subr.mxu0 0.0
    %1724 = vmatpush1.msra.mxu0 0.0
    %1725 = vmatprep.subr.mxu0 0.0
    %1726 = vmatpush1.msra.mxu0 0.0
    %1727 = vmatprep.mubr.f32.mxu0 0.0
    %1728 = vmatmul.mubr.f32.gmra.mrb[0].mxu0 %v1661
    %v1729 = vpop.f32.mrb[0].mxu0
    %v1730 = vadd.f32 0.0, %v1729
    %v1731 = vpop.f32.mrb[0].mxu0
    %1732 = vdwg.mxu0
    %v1733 = vadd.f32 %v1655, %v1730
    %v1734 = vxor.u32 %v1733, 2147483648
    %v1735 = vmul.f32 %v1734, 1.442695
    %v1736 = vpow.pop %v1735
    %v1737 = vadd.f32 %v1736, 1.0
    %v1738 = vrcp.pop %v1737
    %v1739 = vmul.f32 1.0, %v1738
    %v1740 = vtanh.pop %v1733
    %v1741 = vmul.f32 %v1739, %v1575
    %1743 = vrot.lane.b32.xlu0 %v1740, 32
    %v1744 = vpop.permute.xlu0 %1743
    %v1746 = vmul.f32 %v1739, %v1744
    %1748 = vrot.lane.b32.xlu0 %v1746, 32
    %v1749 = vpop.permute.xlu0 %1748
    %v1751 = vadd.f32 %v1741, %v1749
    %v1752 = vtanh.pop %v1751
    %1754 = vrot.lane.b32.xlu0 %v1752, 32
    %v1755 = vpop.permute.xlu0 %1754
    %v1757 = vmul.f32 %v1739, %v1755
    %v1759 = vrot.slane %v792, 6
    %1760 = vrot.lane.b32.xlu0 %v1759, 64
    %v1761 = vpop.permute.xlu0 %1760
    %v1762 = vsel %vm370, %v1761, 0
    %1764 = vmatprep.subr.mxu0 0.0
    %1765 = vmatpush1.msra.mxu0 %v1221
    %1766 = vmatprep.subr.mxu0 0.0
    %1767 = vmatpush1.msra.mxu0 %v1222
    %1768 = vmatprep.subr.mxu0 0.0
    %1769 = vmatpush1.msra.mxu0 %v1223
    %1770 = vmatprep.subr.mxu0 0.0
    %1771 = vmatpush1.msra.mxu0 %v1224
    %1772 = vmatprep.subr.mxu0 0.0
    %1773 = vmatpush1.msra.mxu0 0.0
    %1774 = vmatprep.subr.mxu0 0.0
    %1775 = vmatpush1.msra.mxu0 0.0
    %1776 = vmatprep.subr.mxu0 0.0
    %1777 = vmatpush1.msra.mxu0 0.0
    %1778 = vmatprep.subr.mxu0 0.0
    %1779 = vmatpush1.msra.mxu0 0.0
    %1780 = vmatprep.subr.mxu0 0.0
    %1781 = vmatpush1.msra.mxu0 0.0
    %1782 = vmatprep.subr.mxu0 0.0
    %1783 = vmatpush1.msra.mxu0 0.0
    %1784 = vmatprep.subr.mxu0 0.0
    %1785 = vmatpush1.msra.mxu0 0.0
    %1786 = vmatprep.subr.mxu0 0.0
    %1787 = vmatpush1.msra.mxu0 0.0
    %1788 = vmatprep.subr.mxu0 0.0
    %1789 = vmatpush1.msra.mxu0 0.0
    %1790 = vmatprep.subr.mxu0 0.0
    %1791 = vmatpush1.msra.mxu0 0.0
    %1792 = vmatprep.subr.mxu0 0.0
    %1793 = vmatpush1.msra.mxu0 0.0
    %1794 = vmatprep.subr.mxu0 0.0
    %1795 = vmatpush1.msra.mxu0 0.0
    %1796 = vmatprep.subr.mxu0 0.0
    %1797 = vmatpush1.msra.mxu0 0.0
    %1798 = vmatprep.subr.mxu0 0.0
    %1799 = vmatpush1.msra.mxu0 0.0
    %1800 = vmatprep.subr.mxu0 0.0
    %1801 = vmatpush1.msra.mxu0 0.0
    %1802 = vmatprep.subr.mxu0 0.0
    %1803 = vmatpush1.msra.mxu0 0.0
    %1804 = vmatprep.subr.mxu0 0.0
    %1805 = vmatpush1.msra.mxu0 0.0
    %1806 = vmatprep.subr.mxu0 0.0
    %1807 = vmatpush1.msra.mxu0 0.0
    %1808 = vmatprep.subr.mxu0 0.0
    %1809 = vmatpush1.msra.mxu0 0.0
    %1810 = vmatprep.subr.mxu0 0.0
    %1811 = vmatpush1.msra.mxu0 0.0
    %1812 = vmatprep.subr.mxu0 0.0
    %1813 = vmatpush1.msra.mxu0 0.0
    %1814 = vmatprep.subr.mxu0 0.0
    %1815 = vmatpush1.msra.mxu0 0.0
    %1816 = vmatprep.subr.mxu0 0.0
    %1817 = vmatpush1.msra.mxu0 0.0
    %1818 = vmatprep.subr.mxu0 0.0
    %1819 = vmatpush1.msra.mxu0 0.0
    %1820 = vmatprep.subr.mxu0 0.0
    %1821 = vmatpush1.msra.mxu0 0.0
    %1822 = vmatprep.subr.mxu0 0.0
    %1823 = vmatpush1.msra.mxu0 0.0
    %1824 = vmatprep.subr.mxu0 0.0
    %1825 = vmatpush1.msra.mxu0 0.0
    %1826 = vmatprep.subr.mxu0 0.0
    %1827 = vmatpush1.msra.mxu0 0.0
    %1828 = vmatprep.mubr.f32.mxu0 0.0
    %1829 = vmatmul.mubr.f32.gmra.mrb[0].mxu0 %v1762
    %v1830 = vpop.f32.mrb[0].mxu0
    %v1831 = vadd.f32 %v1234, %v1830
    %v1832 = vpop.f32.mrb[0].mxu0
    %1833 = vdwg.mxu0
    %1835 = vrot.lane.b32.xlu0 %v1757, 64
    %v1836 = vpop.permute.xlu0 %1835
    %v1837 = vsel %vm370, %v1836, 0
    %1839 = vmatprep.subr.mxu0 0.0
    %1840 = vmatpush1.msra.mxu0 %v1225
    %1841 = vmatprep.subr.mxu0 0.0
    %1842 = vmatpush1.msra.mxu0 %v1226
    %1843 = vmatprep.subr.mxu0 0.0
    %1844 = vmatpush1.msra.mxu0 %v1227
    %1845 = vmatprep.subr.mxu0 0.0
    %1846 = vmatpush1.msra.mxu0 %v1228
    %1847 = vmatprep.subr.mxu0 0.0
    %1848 = vmatpush1.msra.mxu0 0.0
    %1849 = vmatprep.subr.mxu0 0.0
    %1850 = vmatpush1.msra.mxu0 0.0
    %1851 = vmatprep.subr.mxu0 0.0
    %1852 = vmatpush1.msra.mxu0 0.0
    %1853 = vmatprep.subr.mxu0 0.0
    %1854 = vmatpush1.msra.mxu0 0.0
    %1855 = vmatprep.subr.mxu0 0.0
    %1856 = vmatpush1.msra.mxu0 0.0
    %1857 = vmatprep.subr.mxu0 0.0
    %1858 = vmatpush1.msra.mxu0 0.0
    %1859 = vmatprep.subr.mxu0 0.0
    %1860 = vmatpush1.msra.mxu0 0.0
    %1861 = vmatprep.subr.mxu0 0.0
    %1862 = vmatpush1.msra.mxu0 0.0
    %1863 = vmatprep.subr.mxu0 0.0
    %1864 = vmatpush1.msra.mxu0 0.0
    %1865 = vmatprep.subr.mxu0 0.0
    %1866 = vmatpush1.msra.mxu0 0.0
    %1867 = vmatprep.subr.mxu0 0.0
    %1868 = vmatpush1.msra.mxu0 0.0
    %1869 = vmatprep.subr.mxu0 0.0
    %1870 = vmatpush1.msra.mxu0 0.0
    %1871 = vmatprep.subr.mxu0 0.0
    %1872 = vmatpush1.msra.mxu0 0.0
    %1873 = vmatprep.subr.mxu0 0.0
    %1874 = vmatpush1.msra.mxu0 0.0
    %1875 = vmatprep.subr.mxu0 0.0
    %1876 = vmatpush1.msra.mxu0 0.0
    %1877 = vmatprep.subr.mxu0 0.0
    %1878 = vmatpush1.msra.mxu0 0.0
    %1879 = vmatprep.subr.mxu0 0.0
    %1880 = vmatpush1.msra.mxu0 0.0
    %1881 = vmatprep.subr.mxu0 0.0
    %1882 = vmatpush1.msra.mxu0 0.0
    %1883 = vmatprep.subr.mxu0 0.0
    %1884 = vmatpush1.msra.mxu0 0.0
    %1885 = vmatprep.subr.mxu0 0.0
    %1886 = vmatpush1.msra.mxu0 0.0
    %1887 = vmatprep.subr.mxu0 0.0
    %1888 = vmatpush1.msra.mxu0 0.0
    %1889 = vmatprep.subr.mxu0 0.0
    %1890 = vmatpush1.msra.mxu0 0.0
    %1891 = vmatprep.subr.mxu0 0.0
    %1892 = vmatpush1.msra.mxu0 0.0
    %1893 = vmatprep.subr.mxu0 0.0
    %1894 = vmatpush1.msra.mxu0 0.0
    %1895 = vmatprep.subr.mxu0 0.0
    %1896 = vmatpush1.msra.mxu0 0.0
    %1897 = vmatprep.subr.mxu0 0.0
    %1898 = vmatpush1.msra.mxu0 0.0
    %1899 = vmatprep.subr.mxu0 0.0
    %1900 = vmatpush1.msra.mxu0 0.0
    %1901 = vmatprep.subr.mxu0 0.0
    %1902 = vmatpush1.msra.mxu0 0.0
    %1903 = vmatprep.mubr.f32.mxu0 0.0
    %1904 = vmatmul.mubr.f32.gmra.mrb[0].mxu0 %v1837
    %v1905 = vpop.f32.mrb[0].mxu0
    %v1906 = vadd.f32 0.0, %v1905
    %v1907 = vpop.f32.mrb[0].mxu0
    %1908 = vdwg.mxu0
    %v1909 = vadd.f32 %v1831, %v1906
    %v1910 = vxor.u32 %v1909, 2147483648
    %v1911 = vmul.f32 %v1910, 1.442695
    %v1912 = vpow.pop %v1911
    %v1913 = vadd.f32 %v1912, 1.0
    %v1914 = vrcp.pop %v1913
    %v1915 = vmul.f32 1.0, %v1914
    %v1916 = vtanh.pop %v1909
    %v1917 = vmul.f32 %v1915, %v1751
    %1919 = vrot.lane.b32.xlu0 %v1916, 32
    %v1920 = vpop.permute.xlu0 %1919
    %v1922 = vmul.f32 %v1915, %v1920
    %1924 = vrot.lane.b32.xlu0 %v1922, 32
    %v1925 = vpop.permute.xlu0 %1924
    %v1927 = vadd.f32 %v1917, %v1925
    %v1928 = vtanh.pop %v1927
    %1930 = vrot.lane.b32.xlu0 %v1928, 32
    %v1931 = vpop.permute.xlu0 %1930
    %v1933 = vmul.f32 %v1915, %v1931
    %1935 = vrot.lane.b32.xlu0 %v897, 64
    %v1936 = vpop.permute.xlu0 %1935
    %v1937 = vsel %vm370, %v1936, 0
    %1939 = vmatprep.subr.mxu0 0.0
    %1940 = vmatpush1.msra.mxu0 %v1221
    %1941 = vmatprep.subr.mxu0 0.0
    %1942 = vmatpush1.msra.mxu0 %v1222
    %1943 = vmatprep.subr.mxu0 0.0
    %1944 = vmatpush1.msra.mxu0 %v1223
    %1945 = vmatprep.subr.mxu0 0.0
    %1946 = vmatpush1.msra.mxu0 %v1224
    %1947 = vmatprep.subr.mxu0 0.0
    %1948 = vmatpush1.msra.mxu0 0.0
    %1949 = vmatprep.subr.mxu0 0.0
    %1950 = vmatpush1.msra.mxu0 0.0
    %1951 = vmatprep.subr.mxu0 0.0
    %1952 = vmatpush1.msra.mxu0 0.0
    %1953 = vmatprep.subr.mxu0 0.0
    %1954 = vmatpush1.msra.mxu0 0.0
    %1955 = vmatprep.subr.mxu0 0.0
    %1956 = vmatpush1.msra.mxu0 0.0
    %1957 = vmatprep.subr.mxu0 0.0
    %1958 = vmatpush1.msra.mxu0 0.0
    %1959 = vmatprep.subr.mxu0 0.0
    %1960 = vmatpush1.msra.mxu0 0.0
    %1961 = vmatprep.subr.mxu0 0.0
    %1962 = vmatpush1.msra.mxu0 0.0
    %1963 = vmatprep.subr.mxu0 0.0
    %1964 = vmatpush1.msra.mxu0 0.0
    %1965 = vmatprep.subr.mxu0 0.0
    %1966 = vmatpush1.msra.mxu0 0.0
    %1967 = vmatprep.subr.mxu0 0.0
    %1968 = vmatpush1.msra.mxu0 0.0
    %1969 = vmatprep.subr.mxu0 0.0
    %1970 = vmatpush1.msra.mxu0 0.0
    %1971 = vmatprep.subr.mxu0 0.0
    %1972 = vmatpush1.msra.mxu0 0.0
    %1973 = vmatprep.subr.mxu0 0.0
    %1974 = vmatpush1.msra.mxu0 0.0
    %1975 = vmatprep.subr.mxu0 0.0
    %1976 = vmatpush1.msra.mxu0 0.0
    %1977 = vmatprep.subr.mxu0 0.0
    %1978 = vmatpush1.msra.mxu0 0.0
    %1979 = vmatprep.subr.mxu0 0.0
    %1980 = vmatpush1.msra.mxu0 0.0
    %1981 = vmatprep.subr.mxu0 0.0
    %1982 = vmatpush1.msra.mxu0 0.0
    %1983 = vmatprep.subr.mxu0 0.0
    %1984 = vmatpush1.msra.mxu0 0.0
    %1985 = vmatprep.subr.mxu0 0.0
    %1986 = vmatpush1.msra.mxu0 0.0
    %1987 = vmatprep.subr.mxu0 0.0
    %1988 = vmatpush1.msra.mxu0 0.0
    %1989 = vmatprep.subr.mxu0 0.0
    %1990 = vmatpush1.msra.mxu0 0.0
    %1991 = vmatprep.subr.mxu0 0.0
    %1992 = vmatpush1.msra.mxu0 0.0
    %1993 = vmatprep.subr.mxu0 0.0
    %1994 = vmatpush1.msra.mxu0 0.0
    %1995 = vmatprep.subr.mxu0 0.0
    %1996 = vmatpush1.msra.mxu0 0.0
    %1997 = vmatprep.subr.mxu0 0.0
    %1998 = vmatpush1.msra.mxu0 0.0
    %1999 = vmatprep.subr.mxu0 0.0
    %2000 = vmatpush1.msra.mxu0 0.0
    %2001 = vmatprep.subr.mxu0 0.0
    %2002 = vmatpush1.msra.mxu0 0.0
    %2003 = vmatprep.mubr.f32.mxu0 0.0
    %2004 = vmatmul.mubr.f32.gmra.mrb[0].mxu0 %v1937
    %v2005 = vpop.f32.mrb[0].mxu0
    %v2006 = vadd.f32 %v1234, %v2005
    %v2007 = vpop.f32.mrb[0].mxu0
    %2008 = vdwg.mxu0
    %2010 = vrot.lane.b32.xlu0 %v1933, 64
    %v2011 = vpop.permute.xlu0 %2010
    %v2012 = vsel %vm370, %v2011, 0
    %2014 = vmatprep.subr.mxu0 0.0
    %2015 = vmatpush1.msra.mxu0 %v1225
    %2016 = vmatprep.subr.mxu0 0.0
    %2017 = vmatpush1.msra.mxu0 %v1226
    %2018 = vmatprep.subr.mxu0 0.0
    %2019 = vmatpush1.msra.mxu0 %v1227
    %2020 = vmatprep.subr.mxu0 0.0
    %2021 = vmatpush1.msra.mxu0 %v1228
    %2022 = vmatprep.subr.mxu0 0.0
    %2023 = vmatpush1.msra.mxu0 0.0
    %2024 = vmatprep.subr.mxu0 0.0
    %2025 = vmatpush1.msra.mxu0 0.0
    %2026 = vmatprep.subr.mxu0 0.0
    %2027 = vmatpush1.msra.mxu0 0.0
    %2028 = vmatprep.subr.mxu0 0.0
    %2029 = vmatpush1.msra.mxu0 0.0
    %2030 = vmatprep.subr.mxu0 0.0
    %2031 = vmatpush1.msra.mxu0 0.0
    %2032 = vmatprep.subr.mxu0 0.0
    %2033 = vmatpush1.msra.mxu0 0.0
    %2034 = vmatprep.subr.mxu0 0.0
    %2035 = vmatpush1.msra.mxu0 0.0
    %2036 = vmatprep.subr.mxu0 0.0
    %2037 = vmatpush1.msra.mxu0 0.0
    %2038 = vmatprep.subr.mxu0 0.0
    %2039 = vmatpush1.msra.mxu0 0.0
    %2040 = vmatprep.subr.mxu0 0.0
    %2041 = vmatpush1.msra.mxu0 0.0
    %2042 = vmatprep.subr.mxu0 0.0
    %2043 = vmatpush1.msra.mxu0 0.0
    %2044 = vmatprep.subr.mxu0 0.0
    %2045 = vmatpush1.msra.mxu0 0.0
    %2046 = vmatprep.subr.mxu0 0.0
    %2047 = vmatpush1.msra.mxu0 0.0
    %2048 = vmatprep.subr.mxu0 0.0
    %2049 = vmatpush1.msra.mxu0 0.0
    %2050 = vmatprep.subr.mxu0 0.0
    %2051 = vmatpush1.msra.mxu0 0.0
    %2052 = vmatprep.subr.mxu0 0.0
    %2053 = vmatpush1.msra.mxu0 0.0
    %2054 = vmatprep.subr.mxu0 0.0
    %2055 = vmatpush1.msra.mxu0 0.0
    %2056 = vmatprep.subr.mxu0 0.0
    %2057 = vmatpush1.msra.mxu0 0.0
    %2058 = vmatprep.subr.mxu0 0.0
    %2059 = vmatpush1.msra.mxu0 0.0
    %2060 = vmatprep.subr.mxu0 0.0
    %2061 = vmatpush1.msra.mxu0 0.0
    %2062 = vmatprep.subr.mxu0 0.0
    %2063 = vmatpush1.msra.mxu0 0.0
    %2064 = vmatprep.subr.mxu0 0.0
    %2065 = vmatpush1.msra.mxu0 0.0
    %2066 = vmatprep.subr.mxu0 0.0
    %2067 = vmatpush1.msra.mxu0 0.0
    %2068 = vmatprep.subr.mxu0 0.0
    %2069 = vmatpush1.msra.mxu0 0.0
    %2070 = vmatprep.subr.mxu0 0.0
    %2071 = vmatpush1.msra.mxu0 0.0
    %2072 = vmatprep.subr.mxu0 0.0
    %2073 = vmatpush1.msra.mxu0 0.0
    %2074 = vmatprep.subr.mxu0 0.0
    %2075 = vmatpush1.msra.mxu0 0.0
    %2076 = vmatprep.subr.mxu0 0.0
    %2077 = vmatpush1.msra.mxu0 0.0
    %2078 = vmatprep.mubr.f32.mxu0 0.0
    %2079 = vmatmul.mubr.f32.gmra.mrb[0].mxu0 %v2012
    %v2080 = vpop.f32.mrb[0].mxu0
    %v2081 = vadd.f32 0.0, %v2080
    %v2082 = vpop.f32.mrb[0].mxu0
    %2083 = vdwg.mxu0
    %v2084 = vadd.f32 %v2006, %v2081
    %v2085 = vxor.u32 %v2084, 2147483648
    %v2086 = vmul.f32 %v2085, 1.442695
    %v2087 = vpow.pop %v2086
    %v2088 = vadd.f32 %v2087, 1.0
    %v2089 = vrcp.pop %v2088
    %v2090 = vmul.f32 1.0, %v2089
    %v2091 = vtanh.pop %v2084
    %v2092 = vmul.f32 %v2090, %v1927
    %2094 = vrot.lane.b32.xlu0 %v2091, 32
    %v2095 = vpop.permute.xlu0 %2094
    %v2097 = vmul.f32 %v2090, %v2095
    %2099 = vrot.lane.b32.xlu0 %v2097, 32
    %v2100 = vpop.permute.xlu0 %2099
    %v2102 = vadd.f32 %v2092, %v2100
    %v2103 = vtanh.pop %v2102
    %2105 = vrot.lane.b32.xlu0 %v2103, 32
    %v2106 = vpop.permute.xlu0 %2105
    %v2108 = vmul.f32 %v2090, %v2106
    %v2110 = vrot.slane %v1004, 2
    %2111 = vrot.lane.b32.xlu0 %v2110, 64
    %v2112 = vpop.permute.xlu0 %2111
    %v2113 = vsel %vm370, %v2112, 0
    %2115 = vmatprep.subr.mxu0 0.0
    %2116 = vmatpush1.msra.mxu0 %v1221
    %2117 = vmatprep.subr.mxu0 0.0
    %2118 = vmatpush1.msra.mxu0 %v1222
    %2119 = vmatprep.subr.mxu0 0.0
    %2120 = vmatpush1.msra.mxu0 %v1223
    %2121 = vmatprep.subr.mxu0 0.0
    %2122 = vmatpush1.msra.mxu0 %v1224
    %2123 = vmatprep.subr.mxu0 0.0
    %2124 = vmatpush1.msra.mxu0 0.0
    %2125 = vmatprep.subr.mxu0 0.0
    %2126 = vmatpush1.msra.mxu0 0.0
    %2127 = vmatprep.subr.mxu0 0.0
    %2128 = vmatpush1.msra.mxu0 0.0
    %2129 = vmatprep.subr.mxu0 0.0
    %2130 = vmatpush1.msra.mxu0 0.0
    %2131 = vmatprep.subr.mxu0 0.0
    %2132 = vmatpush1.msra.mxu0 0.0
    %2133 = vmatprep.subr.mxu0 0.0
    %2134 = vmatpush1.msra.mxu0 0.0
    %2135 = vmatprep.subr.mxu0 0.0
    %2136 = vmatpush1.msra.mxu0 0.0
    %2137 = vmatprep.subr.mxu0 0.0
    %2138 = vmatpush1.msra.mxu0 0.0
    %2139 = vmatprep.subr.mxu0 0.0
    %2140 = vmatpush1.msra.mxu0 0.0
    %2141 = vmatprep.subr.mxu0 0.0
    %2142 = vmatpush1.msra.mxu0 0.0
    %2143 = vmatprep.subr.mxu0 0.0
    %2144 = vmatpush1.msra.mxu0 0.0
    %2145 = vmatprep.subr.mxu0 0.0
    %2146 = vmatpush1.msra.mxu0 0.0
    %2147 = vmatprep.subr.mxu0 0.0
    %2148 = vmatpush1.msra.mxu0 0.0
    %2149 = vmatprep.subr.mxu0 0.0
    %2150 = vmatpush1.msra.mxu0 0.0
    %2151 = vmatprep.subr.mxu0 0.0
    %2152 = vmatpush1.msra.mxu0 0.0
    %2153 = vmatprep.subr.mxu0 0.0
    %2154 = vmatpush1.msra.mxu0 0.0
    %2155 = vmatprep.subr.mxu0 0.0
    %2156 = vmatpush1.msra.mxu0 0.0
    %2157 = vmatprep.subr.mxu0 0.0
    %2158 = vmatpush1.msra.mxu0 0.0
    %2159 = vmatprep.subr.mxu0 0.0
    %2160 = vmatpush1.msra.mxu0 0.0
    %2161 = vmatprep.subr.mxu0 0.0
    %2162 = vmatpush1.msra.mxu0 0.0
    %2163 = vmatprep.subr.mxu0 0.0
    %2164 = vmatpush1.msra.mxu0 0.0
    %2165 = vmatprep.subr.mxu0 0.0
    %2166 = vmatpush1.msra.mxu0 0.0
    %2167 = vmatprep.subr.mxu0 0.0
    %2168 = vmatpush1.msra.mxu0 0.0
    %2169 = vmatprep.subr.mxu0 0.0
    %2170 = vmatpush1.msra.mxu0 0.0
    %2171 = vmatprep.subr.mxu0 0.0
    %2172 = vmatpush1.msra.mxu0 0.0
    %2173 = vmatprep.subr.mxu0 0.0
    %2174 = vmatpush1.msra.mxu0 0.0
    %2175 = vmatprep.subr.mxu0 0.0
    %2176 = vmatpush1.msra.mxu0 0.0
    %2177 = vmatprep.subr.mxu0 0.0
    %2178 = vmatpush1.msra.mxu0 0.0
    %2179 = vmatprep.mubr.f32.mxu0 0.0
    %2180 = vmatmul.mubr.f32.gmra.mrb[0].mxu0 %v2113
    %v2181 = vpop.f32.mrb[0].mxu0
    %v2182 = vadd.f32 %v1234, %v2181
    %v2183 = vpop.f32.mrb[0].mxu0
    %2184 = vdwg.mxu0
    %2186 = vrot.lane.b32.xlu0 %v2108, 64
    %v2187 = vpop.permute.xlu0 %2186
    %v2188 = vsel %vm370, %v2187, 0
    %2190 = vmatprep.subr.mxu0 0.0
    %2191 = vmatpush1.msra.mxu0 %v1225
    %2192 = vmatprep.subr.mxu0 0.0
    %2193 = vmatpush1.msra.mxu0 %v1226
    %2194 = vmatprep.subr.mxu0 0.0
    %2195 = vmatpush1.msra.mxu0 %v1227
    %2196 = vmatprep.subr.mxu0 0.0
    %2197 = vmatpush1.msra.mxu0 %v1228
    %2198 = vmatprep.subr.mxu0 0.0
    %2199 = vmatpush1.msra.mxu0 0.0
    %2200 = vmatprep.subr.mxu0 0.0
    %2201 = vmatpush1.msra.mxu0 0.0
    %2202 = vmatprep.subr.mxu0 0.0
    %2203 = vmatpush1.msra.mxu0 0.0
    %2204 = vmatprep.subr.mxu0 0.0
    %2205 = vmatpush1.msra.mxu0 0.0
    %2206 = vmatprep.subr.mxu0 0.0
    %2207 = vmatpush1.msra.mxu0 0.0
    %2208 = vmatprep.subr.mxu0 0.0
    %2209 = vmatpush1.msra.mxu0 0.0
    %2210 = vmatprep.subr.mxu0 0.0
    %2211 = vmatpush1.msra.mxu0 0.0
    %2212 = vmatprep.subr.mxu0 0.0
    %2213 = vmatpush1.msra.mxu0 0.0
    %2214 = vmatprep.subr.mxu0 0.0
    %2215 = vmatpush1.msra.mxu0 0.0
    %2216 = vmatprep.subr.mxu0 0.0
    %2217 = vmatpush1.msra.mxu0 0.0
    %2218 = vmatprep.subr.mxu0 0.0
    %2219 = vmatpush1.msra.mxu0 0.0
    %2220 = vmatprep.subr.mxu0 0.0
    %2221 = vmatpush1.msra.mxu0 0.0
    %2222 = vmatprep.subr.mxu0 0.0
    %2223 = vmatpush1.msra.mxu0 0.0
    %2224 = vmatprep.subr.mxu0 0.0
    %2225 = vmatpush1.msra.mxu0 0.0
    %2226 = vmatprep.subr.mxu0 0.0
    %2227 = vmatpush1.msra.mxu0 0.0
    %2228 = vmatprep.subr.mxu0 0.0
    %2229 = vmatpush1.msra.mxu0 0.0
    %2230 = vmatprep.subr.mxu0 0.0
    %2231 = vmatpush1.msra.mxu0 0.0
    %2232 = vmatprep.subr.mxu0 0.0
    %2233 = vmatpush1.msra.mxu0 0.0
    %2234 = vmatprep.subr.mxu0 0.0
    %2235 = vmatpush1.msra.mxu0 0.0
    %2236 = vmatprep.subr.mxu0 0.0
    %2237 = vmatpush1.msra.mxu0 0.0
    %2238 = vmatprep.subr.mxu0 0.0
    %2239 = vmatpush1.msra.mxu0 0.0
    %2240 = vmatprep.subr.mxu0 0.0
    %2241 = vmatpush1.msra.mxu0 0.0
    %2242 = vmatprep.subr.mxu0 0.0
    %2243 = vmatpush1.msra.mxu0 0.0
    %2244 = vmatprep.subr.mxu0 0.0
    %2245 = vmatpush1.msra.mxu0 0.0
    %2246 = vmatprep.subr.mxu0 0.0
    %2247 = vmatpush1.msra.mxu0 0.0
    %2248 = vmatprep.subr.mxu0 0.0
    %2249 = vmatpush1.msra.mxu0 0.0
    %2250 = vmatprep.subr.mxu0 0.0
    %2251 = vmatpush1.msra.mxu0 0.0
    %2252 = vmatprep.subr.mxu0 0.0
    %2253 = vmatpush1.msra.mxu0 0.0
    %2254 = vmatprep.mubr.f32.mxu0 0.0
    %2255 = vmatmul.mubr.f32.gmra.mrb[0].mxu0 %v2188
    %v2256 = vpop.f32.mrb[0].mxu0
    %v2257 = vadd.f32 0.0, %v2256
    %v2258 = vpop.f32.mrb[0].mxu0
    %2259 = vdwg.mxu0
    %v2260 = vadd.f32 %v2182, %v2257
    %v2261 = vxor.u32 %v2260, 2147483648
    %v2262 = vmul.f32 %v2261, 1.442695
    %v2263 = vpow.pop %v2262
    %v2264 = vadd.f32 %v2263, 1.0
    %v2265 = vrcp.pop %v2264
    %v2266 = vmul.f32 1.0, %v2265
    %v2267 = vtanh.pop %v2260
    %v2268 = vmul.f32 %v2266, %v2102
    %2270 = vrot.lane.b32.xlu0 %v2267, 32
    %v2271 = vpop.permute.xlu0 %2270
    %v2273 = vmul.f32 %v2266, %v2271
    %2275 = vrot.lane.b32.xlu0 %v2273, 32
    %v2276 = vpop.permute.xlu0 %2275
    %v2278 = vadd.f32 %v2268, %v2276
    %v2279 = vtanh.pop %v2278
    %2281 = vrot.lane.b32.xlu0 %v2279, 32
    %v2282 = vpop.permute.xlu0 %2281
    %v2284 = vmul.f32 %v2266, %v2282
    %v2286 = vrot.slane %v1112, 4
    %2287 = vrot.lane.b32.xlu0 %v2286, 64
    %v2288 = vpop.permute.xlu0 %2287
    %v2289 = vsel %vm370, %v2288, 0
    %2291 = vmatprep.subr.mxu0 0.0
    %2292 = vmatpush1.msra.mxu0 %v1221
    %2293 = vmatprep.subr.mxu0 0.0
    %2294 = vmatpush1.msra.mxu0 %v1222
    %2295 = vmatprep.subr.mxu0 0.0
    %2296 = vmatpush1.msra.mxu0 %v1223
    %2297 = vmatprep.subr.mxu0 0.0
    %2298 = vmatpush1.msra.mxu0 %v1224
    %2299 = vmatprep.subr.mxu0 0.0
    %2300 = vmatpush1.msra.mxu0 0.0
    %2301 = vmatprep.subr.mxu0 0.0
    %2302 = vmatpush1.msra.mxu0 0.0
    %2303 = vmatprep.subr.mxu0 0.0
    %2304 = vmatpush1.msra.mxu0 0.0
    %2305 = vmatprep.subr.mxu0 0.0
    %2306 = vmatpush1.msra.mxu0 0.0
    %2307 = vmatprep.subr.mxu0 0.0
    %2308 = vmatpush1.msra.mxu0 0.0
    %2309 = vmatprep.subr.mxu0 0.0
    %2310 = vmatpush1.msra.mxu0 0.0
    %2311 = vmatprep.subr.mxu0 0.0
    %2312 = vmatpush1.msra.mxu0 0.0
    %2313 = vmatprep.subr.mxu0 0.0
    %2314 = vmatpush1.msra.mxu0 0.0
    %2315 = vmatprep.subr.mxu0 0.0
    %2316 = vmatpush1.msra.mxu0 0.0
    %2317 = vmatprep.subr.mxu0 0.0
    %2318 = vmatpush1.msra.mxu0 0.0
    %2319 = vmatprep.subr.mxu0 0.0
    %2320 = vmatpush1.msra.mxu0 0.0
    %2321 = vmatprep.subr.mxu0 0.0
    %2322 = vmatpush1.msra.mxu0 0.0
    %2323 = vmatprep.subr.mxu0 0.0
    %2324 = vmatpush1.msra.mxu0 0.0
    %2325 = vmatprep.subr.mxu0 0.0
    %2326 = vmatpush1.msra.mxu0 0.0
    %2327 = vmatprep.subr.mxu0 0.0
    %2328 = vmatpush1.msra.mxu0 0.0
    %2329 = vmatprep.subr.mxu0 0.0
    %2330 = vmatpush1.msra.mxu0 0.0
    %2331 = vmatprep.subr.mxu0 0.0
    %2332 = vmatpush1.msra.mxu0 0.0
    %2333 = vmatprep.subr.mxu0 0.0
    %2334 = vmatpush1.msra.mxu0 0.0
    %2335 = vmatprep.subr.mxu0 0.0
    %2336 = vmatpush1.msra.mxu0 0.0
    %2337 = vmatprep.subr.mxu0 0.0
    %2338 = vmatpush1.msra.mxu0 0.0
    %2339 = vmatprep.subr.mxu0 0.0
    %2340 = vmatpush1.msra.mxu0 0.0
    %2341 = vmatprep.subr.mxu0 0.0
    %2342 = vmatpush1.msra.mxu0 0.0
    %2343 = vmatprep.subr.mxu0 0.0
    %2344 = vmatpush1.msra.mxu0 0.0
    %2345 = vmatprep.subr.mxu0 0.0
    %2346 = vmatpush1.msra.mxu0 0.0
    %2347 = vmatprep.subr.mxu0 0.0
    %2348 = vmatpush1.msra.mxu0 0.0
    %2349 = vmatprep.subr.mxu0 0.0
    %2350 = vmatpush1.msra.mxu0 0.0
    %2351 = vmatprep.subr.mxu0 0.0
    %2352 = vmatpush1.msra.mxu0 0.0
    %2353 = vmatprep.subr.mxu0 0.0
    %2354 = vmatpush1.msra.mxu0 0.0
    %2355 = vmatprep.mubr.f32.mxu0 0.0
    %2356 = vmatmul.mubr.f32.gmra.mrb[0].mxu0 %v2289
    %v2357 = vpop.f32.mrb[0].mxu0
    %v2358 = vadd.f32 %v1234, %v2357
    %v2359 = vpop.f32.mrb[0].mxu0
    %2360 = vdwg.mxu0
    %2362 = vrot.lane.b32.xlu0 %v2284, 64
    %v2363 = vpop.permute.xlu0 %2362
    %v2364 = vsel %vm370, %v2363, 0
    %2366 = vmatprep.subr.mxu0 0.0
    %2367 = vmatpush1.msra.mxu0 %v1225
    %2368 = vmatprep.subr.mxu0 0.0
    %2369 = vmatpush1.msra.mxu0 %v1226
    %2370 = vmatprep.subr.mxu0 0.0
    %2371 = vmatpush1.msra.mxu0 %v1227
    %2372 = vmatprep.subr.mxu0 0.0
    %2373 = vmatpush1.msra.mxu0 %v1228
    %2374 = vmatprep.subr.mxu0 0.0
    %2375 = vmatpush1.msra.mxu0 0.0
    %2376 = vmatprep.subr.mxu0 0.0
    %2377 = vmatpush1.msra.mxu0 0.0
    %2378 = vmatprep.subr.mxu0 0.0
    %2379 = vmatpush1.msra.mxu0 0.0
    %2380 = vmatprep.subr.mxu0 0.0
    %2381 = vmatpush1.msra.mxu0 0.0
    %2382 = vmatprep.subr.mxu0 0.0
    %2383 = vmatpush1.msra.mxu0 0.0
    %2384 = vmatprep.subr.mxu0 0.0
    %2385 = vmatpush1.msra.mxu0 0.0
    %2386 = vmatprep.subr.mxu0 0.0
    %2387 = vmatpush1.msra.mxu0 0.0
    %2388 = vmatprep.subr.mxu0 0.0
    %2389 = vmatpush1.msra.mxu0 0.0
    %2390 = vmatprep.subr.mxu0 0.0
    %2391 = vmatpush1.msra.mxu0 0.0
    %2392 = vmatprep.subr.mxu0 0.0
    %2393 = vmatpush1.msra.mxu0 0.0
    %2394 = vmatprep.subr.mxu0 0.0
    %2395 = vmatpush1.msra.mxu0 0.0
    %2396 = vmatprep.subr.mxu0 0.0
    %2397 = vmatpush1.msra.mxu0 0.0
    %2398 = vmatprep.subr.mxu0 0.0
    %2399 = vmatpush1.msra.mxu0 0.0
    %2400 = vmatprep.subr.mxu0 0.0
    %2401 = vmatpush1.msra.mxu0 0.0
    %2402 = vmatprep.subr.mxu0 0.0
    %2403 = vmatpush1.msra.mxu0 0.0
    %2404 = vmatprep.subr.mxu0 0.0
    %2405 = vmatpush1.msra.mxu0 0.0
    %2406 = vmatprep.subr.mxu0 0.0
    %2407 = vmatpush1.msra.mxu0 0.0
    %2408 = vmatprep.subr.mxu0 0.0
    %2409 = vmatpush1.msra.mxu0 0.0
    %2410 = vmatprep.subr.mxu0 0.0
    %2411 = vmatpush1.msra.mxu0 0.0
    %2412 = vmatprep.subr.mxu0 0.0
    %2413 = vmatpush1.msra.mxu0 0.0
    %2414 = vmatprep.subr.mxu0 0.0
    %2415 = vmatpush1.msra.mxu0 0.0
    %2416 = vmatprep.subr.mxu0 0.0
    %2417 = vmatpush1.msra.mxu0 0.0
    %2418 = vmatprep.subr.mxu0 0.0
    %2419 = vmatpush1.msra.mxu0 0.0
    %2420 = vmatprep.subr.mxu0 0.0
    %2421 = vmatpush1.msra.mxu0 0.0
    %2422 = vmatprep.subr.mxu0 0.0
    %2423 = vmatpush1.msra.mxu0 0.0
    %2424 = vmatprep.subr.mxu0 0.0
    %2425 = vmatpush1.msra.mxu0 0.0
    %2426 = vmatprep.subr.mxu0 0.0
    %2427 = vmatpush1.msra.mxu0 0.0
    %2428 = vmatprep.subr.mxu0 0.0
    %2429 = vmatpush1.msra.mxu0 0.0
    %2430 = vmatprep.mubr.f32.mxu0 0.0
    %2431 = vmatmul.mubr.f32.gmra.mrb[0].mxu0 %v2364
    %v2432 = vpop.f32.mrb[0].mxu0
    %v2433 = vadd.f32 0.0, %v2432
    %v2434 = vpop.f32.mrb[0].mxu0
    %2435 = vdwg.mxu0
    %v2436 = vadd.f32 %v2358, %v2433
    %v2437 = vxor.u32 %v2436, 2147483648
    %v2438 = vmul.f32 %v2437, 1.442695
    %v2439 = vpow.pop %v2438
    %v2440 = vadd.f32 %v2439, 1.0
    %v2441 = vrcp.pop %v2440
    %v2442 = vmul.f32 1.0, %v2441
    %v2443 = vtanh.pop %v2436
    %v2444 = vmul.f32 %v2442, %v2278
    %2446 = vrot.lane.b32.xlu0 %v2443, 32
    %v2447 = vpop.permute.xlu0 %2446
    %v2449 = vmul.f32 %v2442, %v2447
    %2451 = vrot.lane.b32.xlu0 %v2449, 32
    %v2452 = vpop.permute.xlu0 %2451
    %v2454 = vadd.f32 %v2444, %v2452
    %v2455 = vtanh.pop %v2454
    %2457 = vrot.lane.b32.xlu0 %v2455, 32
    %v2458 = vpop.permute.xlu0 %2457
    %v2460 = vmul.f32 %v2442, %v2458
    %v2462 = vrot.slane %v1220, 6
    %2463 = vrot.lane.b32.xlu0 %v2462, 64
    %v2464 = vpop.permute.xlu0 %2463
    %v2465 = vsel %vm370, %v2464, 0
    %2467 = vmatprep.subr.mxu0 0.0
    %2468 = vmatpush1.msra.mxu0 %v1221
    %2469 = vmatprep.subr.mxu0 0.0
    %2470 = vmatpush1.msra.mxu0 %v1222
    %2471 = vmatprep.subr.mxu0 0.0
    %2472 = vmatpush1.msra.mxu0 %v1223
    %2473 = vmatprep.subr.mxu0 0.0
    %2474 = vmatpush1.msra.mxu0 %v1224
    %2475 = vmatprep.subr.mxu0 0.0
    %2476 = vmatpush1.msra.mxu0 0.0
    %2477 = vmatprep.subr.mxu0 0.0
    %2478 = vmatpush1.msra.mxu0 0.0
    %2479 = vmatprep.subr.mxu0 0.0
    %2480 = vmatpush1.msra.mxu0 0.0
    %2481 = vmatprep.subr.mxu0 0.0
    %2482 = vmatpush1.msra.mxu0 0.0
    %2483 = vmatprep.subr.mxu0 0.0
    %2484 = vmatpush1.msra.mxu0 0.0
    %2485 = vmatprep.subr.mxu0 0.0
    %2486 = vmatpush1.msra.mxu0 0.0
    %2487 = vmatprep.subr.mxu0 0.0
    %2488 = vmatpush1.msra.mxu0 0.0
    %2489 = vmatprep.subr.mxu0 0.0
    %2490 = vmatpush1.msra.mxu0 0.0
    %2491 = vmatprep.subr.mxu0 0.0
    %2492 = vmatpush1.msra.mxu0 0.0
    %2493 = vmatprep.subr.mxu0 0.0
    %2494 = vmatpush1.msra.mxu0 0.0
    %2495 = vmatprep.subr.mxu0 0.0
    %2496 = vmatpush1.msra.mxu0 0.0
    %2497 = vmatprep.subr.mxu0 0.0
    %2498 = vmatpush1.msra.mxu0 0.0
    %2499 = vmatprep.subr.mxu0 0.0
    %2500 = vmatpush1.msra.mxu0 0.0
    %2501 = vmatprep.subr.mxu0 0.0
    %2502 = vmatpush1.msra.mxu0 0.0
    %2503 = vmatprep.subr.mxu0 0.0
    %2504 = vmatpush1.msra.mxu0 0.0
    %2505 = vmatprep.subr.mxu0 0.0
    %2506 = vmatpush1.msra.mxu0 0.0
    %2507 = vmatprep.subr.mxu0 0.0
    %2508 = vmatpush1.msra.mxu0 0.0
    %2509 = vmatprep.subr.mxu0 0.0
    %2510 = vmatpush1.msra.mxu0 0.0
    %2511 = vmatprep.subr.mxu0 0.0
    %2512 = vmatpush1.msra.mxu0 0.0
    %2513 = vmatprep.subr.mxu0 0.0
    %2514 = vmatpush1.msra.mxu0 0.0
    %2515 = vmatprep.subr.mxu0 0.0
    %2516 = vmatpush1.msra.mxu0 0.0
    %2517 = vmatprep.subr.mxu0 0.0
    %2518 = vmatpush1.msra.mxu0 0.0
    %2519 = vmatprep.subr.mxu0 0.0
    %2520 = vmatpush1.msra.mxu0 0.0
    %2521 = vmatprep.subr.mxu0 0.0
    %2522 = vmatpush1.msra.mxu0 0.0
    %2523 = vmatprep.subr.mxu0 0.0
    %2524 = vmatpush1.msra.mxu0 0.0
    %2525 = vmatprep.subr.mxu0 0.0
    %2526 = vmatpush1.msra.mxu0 0.0
    %2527 = vmatprep.subr.mxu0 0.0
    %2528 = vmatpush1.msra.mxu0 0.0
    %2529 = vmatprep.subr.mxu0 0.0
    %2530 = vmatpush1.msra.mxu0 0.0
    %2531 = vmatprep.mubr.f32.mxu0 0.0
    %2532 = vmatmul.mubr.f32.gmra.mrb[0].mxu0 %v2465
    %v2533 = vpop.f32.mrb[0].mxu0
    %v2534 = vadd.f32 %v1234, %v2533
    %v2535 = vpop.f32.mrb[0].mxu0
    %2536 = vdwg.mxu0
    %2538 = vrot.lane.b32.xlu0 %v2460, 64
    %v2539 = vpop.permute.xlu0 %2538
    %v2540 = vsel %vm370, %v2539, 0
    %2542 = vmatprep.subr.mxu0 0.0
    %2543 = vmatpush1.msra.mxu0 %v1225
    %2544 = vmatprep.subr.mxu0 0.0
    %2545 = vmatpush1.msra.mxu0 %v1226
    %2546 = vmatprep.subr.mxu0 0.0
    %2547 = vmatpush1.msra.mxu0 %v1227
    %2548 = vmatprep.subr.mxu0 0.0
    %2549 = vmatpush1.msra.mxu0 %v1228
    %2550 = vmatprep.subr.mxu0 0.0
    %2551 = vmatpush1.msra.mxu0 0.0
    %2552 = vmatprep.subr.mxu0 0.0
    %2553 = vmatpush1.msra.mxu0 0.0
    %2554 = vmatprep.subr.mxu0 0.0
    %2555 = vmatpush1.msra.mxu0 0.0
    %2556 = vmatprep.subr.mxu0 0.0
    %2557 = vmatpush1.msra.mxu0 0.0
    %2558 = vmatprep.subr.mxu0 0.0
    %2559 = vmatpush1.msra.mxu0 0.0
    %2560 = vmatprep.subr.mxu0 0.0
    %2561 = vmatpush1.msra.mxu0 0.0
    %2562 = vmatprep.subr.mxu0 0.0
    %2563 = vmatpush1.msra.mxu0 0.0
    %2564 = vmatprep.subr.mxu0 0.0
    %2565 = vmatpush1.msra.mxu0 0.0
    %2566 = vmatprep.subr.mxu0 0.0
    %2567 = vmatpush1.msra.mxu0 0.0
    %2568 = vmatprep.subr.mxu0 0.0
    %2569 = vmatpush1.msra.mxu0 0.0
    %2570 = vmatprep.subr.mxu0 0.0
    %2571 = vmatpush1.msra.mxu0 0.0
    %2572 = vmatprep.subr.mxu0 0.0
    %2573 = vmatpush1.msra.mxu0 0.0
    %2574 = vmatprep.subr.mxu0 0.0
    %2575 = vmatpush1.msra.mxu0 0.0
    %2576 = vmatprep.subr.mxu0 0.0
    %2577 = vmatpush1.msra.mxu0 0.0
    %2578 = vmatprep.subr.mxu0 0.0
    %2579 = vmatpush1.msra.mxu0 0.0
    %2580 = vmatprep.subr.mxu0 0.0
    %2581 = vmatpush1.msra.mxu0 0.0
    %2582 = vmatprep.subr.mxu0 0.0
    %2583 = vmatpush1.msra.mxu0 0.0
    %2584 = vmatprep.subr.mxu0 0.0
    %2585 = vmatpush1.msra.mxu0 0.0
    %2586 = vmatprep.subr.mxu0 0.0
    %2587 = vmatpush1.msra.mxu0 0.0
    %2588 = vmatprep.subr.mxu0 0.0
    %2589 = vmatpush1.msra.mxu0 0.0
    %2590 = vmatprep.subr.mxu0 0.0
    %2591 = vmatpush1.msra.mxu0 0.0
    %2592 = vmatprep.subr.mxu0 0.0
    %2593 = vmatpush1.msra.mxu0 0.0
    %2594 = vmatprep.subr.mxu0 0.0
    %2595 = vmatpush1.msra.mxu0 0.0
    %2596 = vmatprep.subr.mxu0 0.0
    %2597 = vmatpush1.msra.mxu0 0.0
    %2598 = vmatprep.subr.mxu0 0.0
    %2599 = vmatpush1.msra.mxu0 0.0
    %2600 = vmatprep.subr.mxu0 0.0
    %2601 = vmatpush1.msra.mxu0 0.0
    %2602 = vmatprep.subr.mxu0 0.0
    %2603 = vmatpush1.msra.mxu0 0.0
    %2604 = vmatprep.subr.mxu0 0.0
    %2605 = vmatpush1.msra.mxu0 0.0
    %2606 = vmatprep.mubr.f32.mxu0 0.0
    %2607 = vmatmul.mubr.f32.gmra.mrb[0].mxu0 %v2540
    %v2608 = vpop.f32.mrb[0].mxu0
    %v2609 = vadd.f32 0.0, %v2608
    %v2610 = vpop.f32.mrb[0].mxu0
    %2611 = vdwg.mxu0
    %v2612 = vadd.f32 %v2534, %v2609
    %v2613 = vxor.u32 %v2612, 2147483648
    %v2614 = vmul.f32 %v2613, 1.442695
    %v2615 = vpow.pop %v2614
    %v2616 = vadd.f32 %v2615, 1.0
    %v2617 = vrcp.pop %v2616
    %v2618 = vmul.f32 1.0, %v2617
    %v2619 = vtanh.pop %v2612
    %v2620 = vmul.f32 %v2618, %v2454
    %2622 = vrot.lane.b32.xlu0 %v2619, 32
    %v2623 = vpop.permute.xlu0 %2622
    %v2625 = vmul.f32 %v2618, %v2623
    %2627 = vrot.lane.b32.xlu0 %v2625, 32
    %v2628 = vpop.permute.xlu0 %2627
    %v2630 = vadd.f32 %v2620, %v2628
    %v2631 = vtanh.pop %v2630
    %2633 = vrot.lane.b32.xlu0 %v2631, 32
    %v2634 = vpop.permute.xlu0 %2633
    %v2636 = vmul.f32 %v2618, %v2634
    %2638 = vrot.lane.b32.xlu0 %v1581, 80
    %v2639 = vpop.permute.xlu0 %2638
    %2641 = vrot.lane.b32.xlu0 %v1757, 96
    %v2642 = vpop.permute.xlu0 %2641
    %2644 = vrot.lane.b32.xlu0 %v1933, 112
    %v2645 = vpop.permute.xlu0 %2644
    %2647 = vrot.lane.b32.xlu0 %v2284, 16
    %v2648 = vpop.permute.xlu0 %2647
    %2650 = vrot.lane.b32.xlu0 %v2460, 32
    %v2651 = vpop.permute.xlu0 %2650
    %2654 = vrot.lane.b32.xlu0 %v2636, 48
    %v2655 = vpop.permute.xlu0 %2654
    %vm2657 = vcmask 130048
    %v2658 = vsel %vm2657, %v1484, %v2639
    %v2659 = vsel %vm370, %v2658, %v2642
    %vm2660 = vcmask 392192
    %v2661 = vsel %vm2660, %v2659, %v2645
    %vm2662 = vcmask 523264
    %v2663 = vsel %vm2662, %v2661, %v2108
    %vm2664 = vcmask 654336
    %v2665 = vsel %vm2664, %v2663, %v2648
    %vm2666 = vcmask 785408
    %v2667 = vsel %vm2666, %v2665, %v2651
    %vm2668 = vcmask 916480
    %v2669 = vsel %vm2668, %v2667, %v2655
    %2670 = vrot.lane.b32.xlu0 %v1405, 48
    %v2671 = vpop.permute.xlu0 %2670
    %2674 = vrot.lane.b32.xlu0 %v1757, 80
    %v2675 = vpop.permute.xlu0 %2674
    %2677 = vrot.lane.b32.xlu0 %v1933, 96
    %v2678 = vpop.permute.xlu0 %2677
    %2680 = vrot.lane.b32.xlu0 %v2108, 112
    %v2681 = vpop.permute.xlu0 %2680
    %2683 = vrot.lane.b32.xlu0 %v2460, 16
    %v2684 = vpop.permute.xlu0 %2683
    %2686 = vrot.lane.b32.xlu0 %v2636, 32
    %v2687 = vpop.permute.xlu0 %2686
    %v2689 = vsel %vm2657, %v2671, %v1660
    %v2690 = vsel %vm370, %v2689, %v2675
    %v2691 = vsel %vm2660, %v2690, %v2678
    %v2692 = vsel %vm2662, %v2691, %v2681
    %v2693 = vsel %vm2664, %v2692, %v2284
    %v2694 = vsel %vm2666, %v2693, %v2684
    %v2695 = vsel %vm2668, %v2694, %v2687
    %v2696 = vld [vmem:[%s7] sm:$0xff]
    %v2697 = vld [vmem:[%s7 + $0x8] sm:$0xff]
    %v2698 = vld [vmem:[%s7 + $0x10] sm:$0xff]
    %v2699 = vld [vmem:[%s7 + $0x18] sm:$0xff]
    %v2700 = vld [vmem:[%s7 + $0x20] sm:$0xff]
    %v2701 = vld [vmem:[%s7 + $0x28] sm:$0xff]
    %v2702 = vld [vmem:[%s7 + $0x30] sm:$0xff]
    %v2703 = vld [vmem:[%s7 + $0x38] sm:$0xff]
    %v2704 = vld [vmem:[%s7 + $0x40] sm:$0xff]
    %v2705 = vld [vmem:[%s7 + $0x48] sm:$0xff]
    %v2706 = vld [vmem:[%s7 + $0x50] sm:$0xff]
    %v2707 = vld [vmem:[%s7 + $0x58] sm:$0xff]
    %v2708 = vld [vmem:[%s7 + $0x60] sm:$0xff]
    %v2709 = vld [vmem:[%s7 + $0x68] sm:$0xff]
    %v2710 = vld [vmem:[%s7 + $0x70] sm:$0xff]
    %v2711 = vld [vmem:[%s7 + $0x78] sm:$0xff]
    %v2712 = vld [vmem:[#allocation14] sm:$0x1]
    %v2713 = vld [vmem:[%s9] sm:$0xff]
    %v2714 = vld [vmem:[%s9 + $0x8] sm:$0xff]
    %v2715 = vld [vmem:[%s9 + $0x10] sm:$0xff]
    %v2716 = vld [vmem:[%s9 + $0x18] sm:$0xff]
    %v2717 = vld [vmem:[%s9 + $0x20] sm:$0xff]
    %v2718 = vld [vmem:[%s9 + $0x28] sm:$0xff]
    %v2719 = vld [vmem:[%s9 + $0x30] sm:$0xff]
    %v2720 = vld [vmem:[%s9 + $0x38] sm:$0xff]
    %v2721 = vld [vmem:[%s9 + $0x40] sm:$0xff]
    %v2722 = vld [vmem:[%s9 + $0x48] sm:$0xff]
    %v2723 = vld [vmem:[%s9 + $0x50] sm:$0xff]
    %v2724 = vld [vmem:[%s9 + $0x58] sm:$0xff]
    %v2725 = vld [vmem:[%s9 + $0x60] sm:$0xff]
    %v2726 = vld [vmem:[%s9 + $0x68] sm:$0xff]
    %v2727 = vld [vmem:[%s9 + $0x70] sm:$0xff]
    %v2728 = vld [vmem:[%s9 + $0x78] sm:$0xff]
    %v2729 = vld [vmem:[#allocation16] sm:$0x1]
    %v2731 = vlaneseq
    %v2732 = vshrl.u32 %v2731, 7
    %v2733 = vsub.s32 0, %v2732
    %v2734 = vrot.slane %v2712, %v2733
    %2736 = vmatprep.subr.mxu0 0.0
    %2737 = vmatpush1.msra.mxu0 %v2696
    %2738 = vmatprep.subr.mxu0 0.0
    %2739 = vmatpush1.msra.mxu0 %v2697
    %2740 = vmatprep.subr.mxu0 0.0
    %2741 = vmatpush1.msra.mxu0 %v2698
    %2742 = vmatprep.subr.mxu0 0.0
    %2743 = vmatpush1.msra.mxu0 %v2699
    %2744 = vmatprep.subr.mxu0 0.0
    %2745 = vmatpush1.msra.mxu0 %v2700
    %2746 = vmatprep.subr.mxu0 0.0
    %2747 = vmatpush1.msra.mxu0 %v2701
    %2748 = vmatprep.subr.mxu0 0.0
    %2749 = vmatpush1.msra.mxu0 %v2702
    %2750 = vmatprep.subr.mxu0 0.0
    %2751 = vmatpush1.msra.mxu0 %v2703
    %2752 = vmatprep.subr.mxu0 0.0
    %2753 = vmatpush1.msra.mxu0 %v2704
    %2754 = vmatprep.subr.mxu0 0.0
    %2755 = vmatpush1.msra.mxu0 %v2705
    %2756 = vmatprep.subr.mxu0 0.0
    %2757 = vmatpush1.msra.mxu0 %v2706
    %2758 = vmatprep.subr.mxu0 0.0
    %2759 = vmatpush1.msra.mxu0 %v2707
    %2760 = vmatprep.subr.mxu0 0.0
    %2761 = vmatpush1.msra.mxu0 %v2708
    %2762 = vmatprep.subr.mxu0 0.0
    %2763 = vmatpush1.msra.mxu0 %v2709
    %2764 = vmatprep.subr.mxu0 0.0
    %2765 = vmatpush1.msra.mxu0 %v2710
    %2766 = vmatprep.subr.mxu0 0.0
    %2767 = vmatpush1.msra.mxu0 %v2711
    %2768 = vmatprep.subr.mxu0 0.0
    %2769 = vmatpush1.msra.mxu0 0.0
    %2770 = vmatprep.subr.mxu0 0.0
    %2771 = vmatpush1.msra.mxu0 0.0
    %2772 = vmatprep.subr.mxu0 0.0
    %2773 = vmatpush1.msra.mxu0 0.0
    %2774 = vmatprep.subr.mxu0 0.0
    %2775 = vmatpush1.msra.mxu0 0.0
    %2776 = vmatprep.subr.mxu0 0.0
    %2777 = vmatpush1.msra.mxu0 0.0
    %2778 = vmatprep.subr.mxu0 0.0
    %2779 = vmatpush1.msra.mxu0 0.0
    %2780 = vmatprep.subr.mxu0 0.0
    %2781 = vmatpush1.msra.mxu0 0.0
    %2782 = vmatprep.subr.mxu0 0.0
    %2783 = vmatpush1.msra.mxu0 0.0
    %2784 = vmatprep.subr.mxu0 0.0
    %2785 = vmatpush1.msra.mxu0 0.0
    %2786 = vmatprep.subr.mxu0 0.0
    %2787 = vmatpush1.msra.mxu0 0.0
    %2788 = vmatprep.subr.mxu0 0.0
    %2789 = vmatpush1.msra.mxu0 0.0
    %2790 = vmatprep.subr.mxu0 0.0
    %2791 = vmatpush1.msra.mxu0 0.0
    %2792 = vmatprep.subr.mxu0 0.0
    %2793 = vmatpush1.msra.mxu0 0.0
    %2794 = vmatprep.subr.mxu0 0.0
    %2795 = vmatpush1.msra.mxu0 0.0
    %2796 = vmatprep.subr.mxu0 0.0
    %2797 = vmatpush1.msra.mxu0 0.0
    %2798 = vmatprep.subr.mxu0 0.0
    %2799 = vmatpush1.msra.mxu0 0.0
    %2800 = vmatprep.mubr.f32.mxu0 0.0
    %2801 = vmatmul.mubr.f32.gmra.mrb[0].mxu0 %v2669
    %v2802 = vpop.f32.mrb[0].mxu0
    %v2803 = vadd.f32 %v2734, %v2802
    %v2804 = vpop.f32.mrb[0].mxu0
    %2805 = vdwg.mxu0
    %v2806 = vmax.f32 %v2803, 0.0
    %v2808 = vlaneseq
    %v2809 = vshrl.u32 %v2808, 7
    %v2810 = vsub.s32 0, %v2809
    %v2811 = vrot.slane %v2729, %v2810
    %2813 = vmatprep.subr.mxu0 0.0
    %2814 = vmatpush1.msra.mxu0 %v2713
    %2815 = vmatprep.subr.mxu0 0.0
    %2816 = vmatpush1.msra.mxu0 %v2714
    %2817 = vmatprep.subr.mxu0 0.0
    %2818 = vmatpush1.msra.mxu0 %v2715
    %2819 = vmatprep.subr.mxu0 0.0
    %2820 = vmatpush1.msra.mxu0 %v2716
    %2821 = vmatprep.subr.mxu0 0.0
    %2822 = vmatpush1.msra.mxu0 %v2717
    %2823 = vmatprep.subr.mxu0 0.0
    %2824 = vmatpush1.msra.mxu0 %v2718
    %2825 = vmatprep.subr.mxu0 0.0
    %2826 = vmatpush1.msra.mxu0 %v2719
    %2827 = vmatprep.subr.mxu0 0.0
    %2828 = vmatpush1.msra.mxu0 %v2720
    %2829 = vmatprep.subr.mxu0 0.0
    %2830 = vmatpush1.msra.mxu0 %v2721
    %2831 = vmatprep.subr.mxu0 0.0
    %2832 = vmatpush1.msra.mxu0 %v2722
    %2833 = vmatprep.subr.mxu0 0.0
    %2834 = vmatpush1.msra.mxu0 %v2723
    %2835 = vmatprep.subr.mxu0 0.0
    %2836 = vmatpush1.msra.mxu0 %v2724
    %2837 = vmatprep.subr.mxu0 0.0
    %2838 = vmatpush1.msra.mxu0 %v2725
    %2839 = vmatprep.subr.mxu0 0.0
    %2840 = vmatpush1.msra.mxu0 %v2726
    %2841 = vmatprep.subr.mxu0 0.0
    %2842 = vmatpush1.msra.mxu0 %v2727
    %2843 = vmatprep.subr.mxu0 0.0
    %2844 = vmatpush1.msra.mxu0 %v2728
    %2845 = vmatprep.subr.mxu0 0.0
    %2846 = vmatpush1.msra.mxu0 0.0
    %2847 = vmatprep.subr.mxu0 0.0
    %2848 = vmatpush1.msra.mxu0 0.0
    %2849 = vmatprep.subr.mxu0 0.0
    %2850 = vmatpush1.msra.mxu0 0.0
    %2851 = vmatprep.subr.mxu0 0.0
    %2852 = vmatpush1.msra.mxu0 0.0
    %2853 = vmatprep.subr.mxu0 0.0
    %2854 = vmatpush1.msra.mxu0 0.0
    %2855 = vmatprep.subr.mxu0 0.0
    %2856 = vmatpush1.msra.mxu0 0.0
    %2857 = vmatprep.subr.mxu0 0.0
    %2858 = vmatpush1.msra.mxu0 0.0
    %2859 = vmatprep.subr.mxu0 0.0
    %2860 = vmatpush1.msra.mxu0 0.0
    %2861 = vmatprep.subr.mxu0 0.0
    %2862 = vmatpush1.msra.mxu0 0.0
    %2863 = vmatprep.subr.mxu0 0.0
    %2864 = vmatpush1.msra.mxu0 0.0
    %2865 = vmatprep.subr.mxu0 0.0
    %2866 = vmatpush1.msra.mxu0 0.0
    %2867 = vmatprep.subr.mxu0 0.0
    %2868 = vmatpush1.msra.mxu0 0.0
    %2869 = vmatprep.subr.mxu0 0.0
    %2870 = vmatpush1.msra.mxu0 0.0
    %2871 = vmatprep.subr.mxu0 0.0
    %2872 = vmatpush1.msra.mxu0 0.0
    %2873 = vmatprep.subr.mxu0 0.0
    %2874 = vmatpush1.msra.mxu0 0.0
    %2875 = vmatprep.subr.mxu0 0.0
    %2876 = vmatpush1.msra.mxu0 0.0
    %2877 = vmatprep.mubr.f32.mxu0 0.0
    %2878 = vmatmul.mubr.f32.gmra.mrb[0].mxu0 %v2806
    %v2879 = vpop.f32.mrb[0].mxu0
    %v2880 = vadd.f32 %v2811, %v2879
    %v2881 = vpop.f32.mrb[0].mxu0
    %2882 = vdwg.mxu0
    %v2883 = vmax.f32 %v2880, 0.0
    %2884 = vmatprep.subr.mxu0 0.0
    %2885 = vmatpush1.msra.mxu0 %v2696
    %2886 = vmatprep.subr.mxu0 0.0
    %2887 = vmatpush1.msra.mxu0 %v2697
    %2888 = vmatprep.subr.mxu0 0.0
    %2889 = vmatpush1.msra.mxu0 %v2698
    %2890 = vmatprep.subr.mxu0 0.0
    %2891 = vmatpush1.msra.mxu0 %v2699
    %2892 = vmatprep.subr.mxu0 0.0
    %2893 = vmatpush1.msra.mxu0 %v2700
    %2894 = vmatprep.subr.mxu0 0.0
    %2895 = vmatpush1.msra.mxu0 %v2701
    %2896 = vmatprep.subr.mxu0 0.0
    %2897 = vmatpush1.msra.mxu0 %v2702
    %2898 = vmatprep.subr.mxu0 0.0
    %2899 = vmatpush1.msra.mxu0 %v2703
    %2900 = vmatprep.subr.mxu0 0.0
    %2901 = vmatpush1.msra.mxu0 %v2704
    %2902 = vmatprep.subr.mxu0 0.0
    %2903 = vmatpush1.msra.mxu0 %v2705
    %2904 = vmatprep.subr.mxu0 0.0
    %2905 = vmatpush1.msra.mxu0 %v2706
    %2906 = vmatprep.subr.mxu0 0.0
    %2907 = vmatpush1.msra.mxu0 %v2707
    %2908 = vmatprep.subr.mxu0 0.0
    %2909 = vmatpush1.msra.mxu0 %v2708
    %2910 = vmatprep.subr.mxu0 0.0
    %2911 = vmatpush1.msra.mxu0 %v2709
    %2912 = vmatprep.subr.mxu0 0.0
    %2913 = vmatpush1.msra.mxu0 %v2710
    %2914 = vmatprep.subr.mxu0 0.0
    %2915 = vmatpush1.msra.mxu0 %v2711
    %2916 = vmatprep.subr.mxu0 0.0
    %2917 = vmatpush1.msra.mxu0 0.0
    %2918 = vmatprep.subr.mxu0 0.0
    %2919 = vmatpush1.msra.mxu0 0.0
    %2920 = vmatprep.subr.mxu0 0.0
    %2921 = vmatpush1.msra.mxu0 0.0
    %2922 = vmatprep.subr.mxu0 0.0
    %2923 = vmatpush1.msra.mxu0 0.0
    %2924 = vmatprep.subr.mxu0 0.0
    %2925 = vmatpush1.msra.mxu0 0.0
    %2926 = vmatprep.subr.mxu0 0.0
    %2927 = vmatpush1.msra.mxu0 0.0
    %2928 = vmatprep.subr.mxu0 0.0
    %2929 = vmatpush1.msra.mxu0 0.0
    %2930 = vmatprep.subr.mxu0 0.0
    %2931 = vmatpush1.msra.mxu0 0.0
    %2932 = vmatprep.subr.mxu0 0.0
    %2933 = vmatpush1.msra.mxu0 0.0
    %2934 = vmatprep.subr.mxu0 0.0
    %2935 = vmatpush1.msra.mxu0 0.0
    %2936 = vmatprep.subr.mxu0 0.0
    %2937 = vmatpush1.msra.mxu0 0.0
    %2938 = vmatprep.subr.mxu0 0.0
    %2939 = vmatpush1.msra.mxu0 0.0
    %2940 = vmatprep.subr.mxu0 0.0
    %2941 = vmatpush1.msra.mxu0 0.0
    %2942 = vmatprep.subr.mxu0 0.0
    %2943 = vmatpush1.msra.mxu0 0.0
    %2944 = vmatprep.subr.mxu0 0.0
    %2945 = vmatpush1.msra.mxu0 0.0
    %2946 = vmatprep.subr.mxu0 0.0
    %2947 = vmatpush1.msra.mxu0 0.0
    %2948 = vmatprep.mubr.f32.mxu0 0.0
    %2949 = vmatmul.mubr.f32.gmra.mrb[0].mxu0 %v2695
    %v2950 = vpop.f32.mrb[0].mxu0
    %v2951 = vadd.f32 %v2734, %v2950
    %v2952 = vpop.f32.mrb[0].mxu0
    %2953 = vdwg.mxu0
    %v2954 = vmax.f32 %v2951, 0.0
    %2955 = vmatprep.subr.mxu0 0.0
    %2956 = vmatpush1.msra.mxu0 %v2713
    %2957 = vmatprep.subr.mxu0 0.0
    %2958 = vmatpush1.msra.mxu0 %v2714
    %2959 = vmatprep.subr.mxu0 0.0
    %2960 = vmatpush1.msra.mxu0 %v2715
    %2961 = vmatprep.subr.mxu0 0.0
    %2962 = vmatpush1.msra.mxu0 %v2716
    %2963 = vmatprep.subr.mxu0 0.0
    %2964 = vmatpush1.msra.mxu0 %v2717
    %2965 = vmatprep.subr.mxu0 0.0
    %2966 = vmatpush1.msra.mxu0 %v2718
    %2967 = vmatprep.subr.mxu0 0.0
    %2968 = vmatpush1.msra.mxu0 %v2719
    %2969 = vmatprep.subr.mxu0 0.0
    %2970 = vmatpush1.msra.mxu0 %v2720
    %2971 = vmatprep.subr.mxu0 0.0
    %2972 = vmatpush1.msra.mxu0 %v2721
    %2973 = vmatprep.subr.mxu0 0.0
    %2974 = vmatpush1.msra.mxu0 %v2722
    %2975 = vmatprep.subr.mxu0 0.0
    %2976 = vmatpush1.msra.mxu0 %v2723
    %2977 = vmatprep.subr.mxu0 0.0
    %2978 = vmatpush1.msra.mxu0 %v2724
    %2979 = vmatprep.subr.mxu0 0.0
    %2980 = vmatpush1.msra.mxu0 %v2725
    %2981 = vmatprep.subr.mxu0 0.0
    %2982 = vmatpush1.msra.mxu0 %v2726
    %2983 = vmatprep.subr.mxu0 0.0
    %2984 = vmatpush1.msra.mxu0 %v2727
    %2985 = vmatprep.subr.mxu0 0.0
    %2986 = vmatpush1.msra.mxu0 %v2728
    %2987 = vmatprep.subr.mxu0 0.0
    %2988 = vmatpush1.msra.mxu0 0.0
    %2989 = vmatprep.subr.mxu0 0.0
    %2990 = vmatpush1.msra.mxu0 0.0
    %2991 = vmatprep.subr.mxu0 0.0
    %2992 = vmatpush1.msra.mxu0 0.0
    %2993 = vmatprep.subr.mxu0 0.0
    %2994 = vmatpush1.msra.mxu0 0.0
    %2995 = vmatprep.subr.mxu0 0.0
    %2996 = vmatpush1.msra.mxu0 0.0
    %2997 = vmatprep.subr.mxu0 0.0
    %2998 = vmatpush1.msra.mxu0 0.0
    %2999 = vmatprep.subr.mxu0 0.0
    %3000 = vmatpush1.msra.mxu0 0.0
    %3001 = vmatprep.subr.mxu0 0.0
    %3002 = vmatpush1.msra.mxu0 0.0
    %3003 = vmatprep.subr.mxu0 0.0
    %3004 = vmatpush1.msra.mxu0 0.0
    %3005 = vmatprep.subr.mxu0 0.0
    %3006 = vmatpush1.msra.mxu0 0.0
    %3007 = vmatprep.subr.mxu0 0.0
    %3008 = vmatpush1.msra.mxu0 0.0
    %3009 = vmatprep.subr.mxu0 0.0
    %3010 = vmatpush1.msra.mxu0 0.0
    %3011 = vmatprep.subr.mxu0 0.0
    %3012 = vmatpush1.msra.mxu0 0.0
    %3013 = vmatprep.subr.mxu0 0.0
    %3014 = vmatpush1.msra.mxu0 0.0
    %3015 = vmatprep.subr.mxu0 0.0
    %3016 = vmatpush1.msra.mxu0 0.0
    %3017 = vmatprep.subr.mxu0 0.0
    %3018 = vmatpush1.msra.mxu0 0.0
    %3019 = vmatprep.mubr.f32.mxu0 0.0
    %3020 = vmatmul.mubr.f32.gmra.mrb[0].mxu0 %v2954
    %v3021 = vpop.f32.mrb[0].mxu0
    %v3022 = vadd.f32 %v2811, %v3021
    %v3023 = vpop.f32.mrb[0].mxu0
    %3024 = vdwg.mxu0
    %v3025 = vmax.f32 %v3022, 0.0
    %vm3026 = vcmask 254976
    %3027 = vst.msk [vmem:[#allocation28] sm:$0x3] %vm3026, %v2883
    %3028 = vst.msk [vmem:[#allocation29] sm:$0x3] %vm3026, %v3025
    %v3029 = vld [vmem:[%s11] sm:$0xff]
    %v3030 = vld [vmem:[%s11 + $0x8] sm:$0xff]
    %v3031 = vld [vmem:[%s11 + $0x10] sm:$0xff]
    %v3032 = vld [vmem:[%s11 + $0x18] sm:$0xff]
    %v3033 = vld [vmem:[#allocation17] sm:$0x1]
    %v3035 = vlaneseq
    %v3036 = vshrl.u32 %v3035, 7
    %v3037 = vsub.s32 0, %v3036
    %v3038 = vrot.slane %v3033, %v3037
    %v3041 = vsel %vm370, %v2883, 0
    %3043 = vmatprep.subr.mxu0 0.0
    %3044 = vmatpush1.msra.mxu0 %v3029
    %3045 = vmatprep.subr.mxu0 0.0
    %3046 = vmatpush1.msra.mxu0 %v3030
    %3047 = vmatprep.subr.mxu0 0.0
    %3048 = vmatpush1.msra.mxu0 %v3031
    %3049 = vmatprep.subr.mxu0 0.0
    %3050 = vmatpush1.msra.mxu0 %v3032
    %3051 = vmatprep.subr.mxu0 0.0
    %3052 = vmatpush1.msra.mxu0 0.0
    %3053 = vmatprep.subr.mxu0 0.0
    %3054 = vmatpush1.msra.mxu0 0.0
    %3055 = vmatprep.subr.mxu0 0.0
    %3056 = vmatpush1.msra.mxu0 0.0
    %3057 = vmatprep.subr.mxu0 0.0
    %3058 = vmatpush1.msra.mxu0 0.0
    %3059 = vmatprep.subr.mxu0 0.0
    %3060 = vmatpush1.msra.mxu0 0.0
    %3061 = vmatprep.subr.mxu0 0.0
    %3062 = vmatpush1.msra.mxu0 0.0
    %3063 = vmatprep.subr.mxu0 0.0
    %3064 = vmatpush1.msra.mxu0 0.0
    %3065 = vmatprep.subr.mxu0 0.0
    %3066 = vmatpush1.msra.mxu0 0.0
    %3067 = vmatprep.subr.mxu0 0.0
    %3068 = vmatpush1.msra.mxu0 0.0
    %3069 = vmatprep.subr.mxu0 0.0
    %3070 = vmatpush1.msra.mxu0 0.0
    %3071 = vmatprep.subr.mxu0 0.0
    %3072 = vmatpush1.msra.mxu0 0.0
    %3073 = vmatprep.subr.mxu0 0.0
    %3074 = vmatpush1.msra.mxu0 0.0
    %3075 = vmatprep.subr.mxu0 0.0
    %3076 = vmatpush1.msra.mxu0 0.0
    %3077 = vmatprep.subr.mxu0 0.0
    %3078 = vmatpush1.msra.mxu0 0.0
    %3079 = vmatprep.subr.mxu0 0.0
    %3080 = vmatpush1.msra.mxu0 0.0
    %3081 = vmatprep.subr.mxu0 0.0
    %3082 = vmatpush1.msra.mxu0 0.0
    %3083 = vmatprep.subr.mxu0 0.0
    %3084 = vmatpush1.msra.mxu0 0.0
    %3085 = vmatprep.subr.mxu0 0.0
    %3086 = vmatpush1.msra.mxu0 0.0
    %3087 = vmatprep.subr.mxu0 0.0
    %3088 = vmatpush1.msra.mxu0 0.0
    %3089 = vmatprep.subr.mxu0 0.0
    %3090 = vmatpush1.msra.mxu0 0.0
    %3091 = vmatprep.subr.mxu0 0.0
    %3092 = vmatpush1.msra.mxu0 0.0
    %3093 = vmatprep.subr.mxu0 0.0
    %3094 = vmatpush1.msra.mxu0 0.0
    %3095 = vmatprep.subr.mxu0 0.0
    %3096 = vmatpush1.msra.mxu0 0.0
    %3097 = vmatprep.subr.mxu0 0.0
    %3098 = vmatpush1.msra.mxu0 0.0
    %3099 = vmatprep.subr.mxu0 0.0
    %3100 = vmatpush1.msra.mxu0 0.0
    %3101 = vmatprep.subr.mxu0 0.0
    %3102 = vmatpush1.msra.mxu0 0.0
    %3103 = vmatprep.subr.mxu0 0.0
    %3104 = vmatpush1.msra.mxu0 0.0
    %3105 = vmatprep.subr.mxu0 0.0
    %3106 = vmatpush1.msra.mxu0 0.0
    %3107 = vmatprep.mubr.f32.mxu0 0.0
    %3108 = vmatmul.mubr.f32.gmra.mrb[0].mxu0 %v3041
    %v3109 = vpop.f32.mrb[0].mxu0
    %v3110 = vadd.f32 %v3038, %v3109
    %v3111 = vpop.f32.mrb[0].mxu0
    %3112 = vdwg.mxu0
    %v3113 = vmax.f32 %v3110, 0.0
    %v3114 = vld [vmem:[#allocation19] sm:$0xff]
    %v3115 = vld [vmem:[#allocation19 + $0x8] sm:$0xff]
    %v3116 = vld [vmem:[#allocation19 + $0x10] sm:$0xff]
    %v3117 = vld [vmem:[#allocation19 + $0x18] sm:$0xff]
    %v3118 = vld [vmem:[#allocation19 + $0x20] sm:$0xff]
    %v3119 = vld [vmem:[#allocation19 + $0x28] sm:$0xff]
    %v3120 = vld [vmem:[#allocation19 + $0x30] sm:$0xff]
    %v3121 = vld [vmem:[#allocation19 + $0x38] sm:$0xff]
    %v3122 = vld [vmem:[#allocation19 + $0x40] sm:$0xff]
    %v3123 = vld [vmem:[#allocation19 + $0x48] sm:$0xff]
    %v3124 = vld [vmem:[#allocation19 + $0x50] sm:$0xff]
    %v3125 = vld [vmem:[#allocation19 + $0x58] sm:$0xff]
    %v3126 = vld [vmem:[#allocation19 + $0x60] sm:$0xff]
    %v3127 = vld [vmem:[#allocation19 + $0x68] sm:$0xff]
    %v3128 = vld [vmem:[#allocation19 + $0x70] sm:$0xff]
    %v3129 = vld [vmem:[#allocation19 + $0x78] sm:$0xff]
    %v3130 = vld [vmem:[%s14] sm:$0x1]
    %v3132 = vlaneseq
    %v3133 = vshrl.u32 %v3132, 7
    %v3134 = vsub.s32 0, %v3133
    %v3135 = vrot.slane %v3130, %v3134
    %3137 = vmatprep.subr.mxu0 0.0
    %3138 = vmatpush1.msra.mxu0 %v3114
    %3139 = vmatprep.subr.mxu0 0.0
    %3140 = vmatpush1.msra.mxu0 %v3115
    %3141 = vmatprep.subr.mxu0 0.0
    %3142 = vmatpush1.msra.mxu0 %v3116
    %3143 = vmatprep.subr.mxu0 0.0
    %3144 = vmatpush1.msra.mxu0 %v3117
    %3145 = vmatprep.subr.mxu0 0.0
    %3146 = vmatpush1.msra.mxu0 %v3118
    %3147 = vmatprep.subr.mxu0 0.0
    %3148 = vmatpush1.msra.mxu0 %v3119
    %3149 = vmatprep.subr.mxu0 0.0
    %3150 = vmatpush1.msra.mxu0 %v3120
    %3151 = vmatprep.subr.mxu0 0.0
    %3152 = vmatpush1.msra.mxu0 %v3121
    %3153 = vmatprep.subr.mxu0 0.0
    %3154 = vmatpush1.msra.mxu0 %v3122
    %3155 = vmatprep.subr.mxu0 0.0
    %3156 = vmatpush1.msra.mxu0 %v3123
    %3157 = vmatprep.subr.mxu0 0.0
    %3158 = vmatpush1.msra.mxu0 %v3124
    %3159 = vmatprep.subr.mxu0 0.0
    %3160 = vmatpush1.msra.mxu0 %v3125
    %3161 = vmatprep.subr.mxu0 0.0
    %3162 = vmatpush1.msra.mxu0 %v3126
    %3163 = vmatprep.subr.mxu0 0.0
    %3164 = vmatpush1.msra.mxu0 %v3127
    %3165 = vmatprep.subr.mxu0 0.0
    %3166 = vmatpush1.msra.mxu0 %v3128
    %3167 = vmatprep.subr.mxu0 0.0
    %3168 = vmatpush1.msra.mxu0 %v3129
    %3169 = vmatprep.subr.mxu0 0.0
    %3170 = vmatpush1.msra.mxu0 0.0
    %3171 = vmatprep.subr.mxu0 0.0
    %3172 = vmatpush1.msra.mxu0 0.0
    %3173 = vmatprep.subr.mxu0 0.0
    %3174 = vmatpush1.msra.mxu0 0.0
    %3175 = vmatprep.subr.mxu0 0.0
    %3176 = vmatpush1.msra.mxu0 0.0
    %3177 = vmatprep.subr.mxu0 0.0
    %3178 = vmatpush1.msra.mxu0 0.0
    %3179 = vmatprep.subr.mxu0 0.0
    %3180 = vmatpush1.msra.mxu0 0.0
    %3181 = vmatprep.subr.mxu0 0.0
    %3182 = vmatpush1.msra.mxu0 0.0
    %3183 = vmatprep.subr.mxu0 0.0
    %3184 = vmatpush1.msra.mxu0 0.0
    %3185 = vmatprep.subr.mxu0 0.0
    %3186 = vmatpush1.msra.mxu0 0.0
    %3187 = vmatprep.subr.mxu0 0.0
    %3188 = vmatpush1.msra.mxu0 0.0
    %3189 = vmatprep.subr.mxu0 0.0
    %3190 = vmatpush1.msra.mxu0 0.0
    %3191 = vmatprep.subr.mxu0 0.0
    %3192 = vmatpush1.msra.mxu0 0.0
    %3193 = vmatprep.subr.mxu0 0.0
    %3194 = vmatpush1.msra.mxu0 0.0
    %3195 = vmatprep.subr.mxu0 0.0
    %3196 = vmatpush1.msra.mxu0 0.0
    %3197 = vmatprep.subr.mxu0 0.0
    %3198 = vmatpush1.msra.mxu0 0.0
    %3199 = vmatprep.subr.mxu0 0.0
    %3200 = vmatpush1.msra.mxu0 0.0
    %3201 = vmatprep.mubr.f32.mxu0 0.0
    %3202 = vmatmul.mubr.f32.gmra.mrb[0].mxu0 %v3113
    %v3203 = vpop.f32.mrb[0].mxu0
    %v3204 = vadd.f32 %v3135, %v3203
    %v3205 = vpop.f32.mrb[0].mxu0
    %3206 = vdwg.mxu0
    %v3207 = vmax.f32 %v3204, 0.0
    %v3208 = vld [vmem:[#allocation20] sm:$0xff]
    %v3209 = vld [vmem:[#allocation20 + $0x8] sm:$0xff]
    %v3210 = vld [vmem:[#allocation20 + $0x10] sm:$0xff]
    %v3211 = vld [vmem:[#allocation20 + $0x18] sm:$0xff]
    %v3212 = vld [vmem:[#allocation22] sm:$0xff]
    %v3213 = vld [vmem:[#allocation22 + $0x8] sm:$0xff]
    %v3214 = vld [vmem:[#allocation22 + $0x10] sm:$0xff]
    %v3215 = vld [vmem:[#allocation22 + $0x18] sm:$0xff]
    %v3216 = vld [vmem:[#allocation22 + $0x20] sm:$0xff]
    %v3217 = vld [vmem:[#allocation22 + $0x28] sm:$0xff]
    %v3218 = vld [vmem:[#allocation22 + $0x30] sm:$0xff]
    %v3219 = vld [vmem:[#allocation22 + $0x38] sm:$0xff]
    %v3220 = vld [vmem:[#allocation22 + $0x40] sm:$0xff]
    %v3221 = vld [vmem:[#allocation22 + $0x48] sm:$0xff]
    %v3222 = vld [vmem:[#allocation22 + $0x50] sm:$0xff]
    %v3223 = vld [vmem:[#allocation22 + $0x58] sm:$0xff]
    %v3224 = vld [vmem:[#allocation22 + $0x60] sm:$0xff]
    %v3225 = vld [vmem:[#allocation22 + $0x68] sm:$0xff]
    %v3226 = vld [vmem:[#allocation22 + $0x70] sm:$0xff]
    %v3227 = vld [vmem:[#allocation22 + $0x78] sm:$0xff]
    %v3228 = vld [vmem:[#allocation23] sm:$0x3]
    %v3230 = vlaneseq
    %v3231 = vshrl.u32 %v3230, 7
    %v3232 = vsub.s32 0, %v3231
    %v3233 = vrot.slane %v3228, %v3232
    %v3234 = vlaneseq
    %v3235 = vshrl.u32 %v3234, 7
    %v3236 = vsub.s32 1, %v3235
    %v3237 = vrot.slane %v3228, %v3236
    %v3241 = vsel %vm2657, %v3207, 0
    %3243 = vmatprep.subr.mxu0 %v3209
    %3244 = vmatpush1.msra.mxu0 %v3208
    %3245 = vmatprep.subr.mxu0 %v3211
    %3246 = vmatpush1.msra.mxu0 %v3210
    %3247 = vmatprep.subr.mxu0 0.0
    %3248 = vmatpush1.msra.mxu0 0.0
    %3249 = vmatprep.subr.mxu0 0.0
    %3250 = vmatpush1.msra.mxu0 0.0
    %3251 = vmatprep.subr.mxu0 0.0
    %3252 = vmatpush1.msra.mxu0 0.0
    %3253 = vmatprep.subr.mxu0 0.0
    %3254 = vmatpush1.msra.mxu0 0.0
    %3255 = vmatprep.subr.mxu0 0.0
    %3256 = vmatpush1.msra.mxu0 0.0
    %3257 = vmatprep.subr.mxu0 0.0
    %3258 = vmatpush1.msra.mxu0 0.0
    %3259 = vmatprep.subr.mxu0 0.0
    %3260 = vmatpush1.msra.mxu0 0.0
    %3261 = vmatprep.subr.mxu0 0.0
    %3262 = vmatpush1.msra.mxu0 0.0
    %3263 = vmatprep.subr.mxu0 0.0
    %3264 = vmatpush1.msra.mxu0 0.0
    %3265 = vmatprep.subr.mxu0 0.0
    %3266 = vmatpush1.msra.mxu0 0.0
    %3267 = vmatprep.subr.mxu0 0.0
    %3268 = vmatpush1.msra.mxu0 0.0
    %3269 = vmatprep.subr.mxu0 0.0
    %3270 = vmatpush1.msra.mxu0 0.0
    %3271 = vmatprep.subr.mxu0 0.0
    %3272 = vmatpush1.msra.mxu0 0.0
    %3273 = vmatprep.subr.mxu0 0.0
    %3274 = vmatpush1.msra.mxu0 0.0
    %3275 = vmatprep.subr.mxu0 0.0
    %3276 = vmatpush1.msra.mxu0 0.0
    %3277 = vmatprep.subr.mxu0 0.0
    %3278 = vmatpush1.msra.mxu0 0.0
    %3279 = vmatprep.subr.mxu0 0.0
    %3280 = vmatpush1.msra.mxu0 0.0
    %3281 = vmatprep.subr.mxu0 0.0
    %3282 = vmatpush1.msra.mxu0 0.0
    %3283 = vmatprep.subr.mxu0 0.0
    %3284 = vmatpush1.msra.mxu0 0.0
    %3285 = vmatprep.subr.mxu0 0.0
    %3286 = vmatpush1.msra.mxu0 0.0
    %3287 = vmatprep.subr.mxu0 0.0
    %3288 = vmatpush1.msra.mxu0 0.0
    %3289 = vmatprep.subr.mxu0 0.0
    %3290 = vmatpush1.msra.mxu0 0.0
    %3291 = vmatprep.subr.mxu0 0.0
    %3292 = vmatpush1.msra.mxu0 0.0
    %3293 = vmatprep.subr.mxu0 0.0
    %3294 = vmatpush1.msra.mxu0 0.0
    %3295 = vmatprep.subr.mxu0 0.0
    %3296 = vmatpush1.msra.mxu0 0.0
    %3297 = vmatprep.subr.mxu0 0.0
    %3298 = vmatpush1.msra.mxu0 0.0
    %3299 = vmatprep.subr.mxu0 0.0
    %3300 = vmatpush1.msra.mxu0 0.0
    %3301 = vmatprep.subr.mxu0 0.0
    %3302 = vmatpush1.msra.mxu0 0.0
    %3303 = vmatprep.subr.mxu0 0.0
    %3304 = vmatpush1.msra.mxu0 0.0
    %3305 = vmatprep.subr.mxu0 0.0
    %3306 = vmatpush1.msra.mxu0 0.0
    %3307 = vmatprep.mubr.f32.mxu0 0.0
    %3308 = vmatmul.mubr.f32.gmra.mrb[0].mxu0 %v3241
    %v3309 = vpop.f32.mrb[0].mxu0
    %v3310 = vadd.f32 %v3233, %v3309
    %v3311 = vpop.f32.mrb[0].mxu0
    %v3312 = vadd.f32 %v3237, %v3311
    %3313 = vdwg.mxu0
    %v3314 = vsel %vm2662, 0.0, 0
    %3316 = vmatprep.subr.mxu0 %v3213
    %3317 = vmatpush1.msra.mxu0 %v3212
    %3318 = vmatprep.subr.mxu0 %v3215
    %3319 = vmatpush1.msra.mxu0 %v3214
    %3320 = vmatprep.subr.mxu0 %v3217
    %3321 = vmatpush1.msra.mxu0 %v3216
    %3322 = vmatprep.subr.mxu0 %v3219
    %3323 = vmatpush1.msra.mxu0 %v3218
    %3324 = vmatprep.subr.mxu0 %v3221
    %3325 = vmatpush1.msra.mxu0 %v3220
    %3326 = vmatprep.subr.mxu0 %v3223
    %3327 = vmatpush1.msra.mxu0 %v3222
    %3328 = vmatprep.subr.mxu0 %v3225
    %3329 = vmatpush1.msra.mxu0 %v3224
    %3330 = vmatprep.subr.mxu0 %v3227
    %3331 = vmatpush1.msra.mxu0 %v3226
    %3332 = vmatprep.subr.mxu0 0.0
    %3333 = vmatpush1.msra.mxu0 0.0
    %3334 = vmatprep.subr.mxu0 0.0
    %3335 = vmatpush1.msra.mxu0 0.0
    %3336 = vmatprep.subr.mxu0 0.0
    %3337 = vmatpush1.msra.mxu0 0.0
    %3338 = vmatprep.subr.mxu0 0.0
    %3339 = vmatpush1.msra.mxu0 0.0
    %3340 = vmatprep.subr.mxu0 0.0
    %3341 = vmatpush1.msra.mxu0 0.0
    %3342 = vmatprep.subr.mxu0 0.0
    %3343 = vmatpush1.msra.mxu0 0.0
    %3344 = vmatprep.subr.mxu0 0.0
    %3345 = vmatpush1.msra.mxu0 0.0
    %3346 = vmatprep.subr.mxu0 0.0
    %3347 = vmatpush1.msra.mxu0 0.0
    %3348 = vmatprep.subr.mxu0 0.0
    %3349 = vmatpush1.msra.mxu0 0.0
    %3350 = vmatprep.subr.mxu0 0.0
    %3351 = vmatpush1.msra.mxu0 0.0
    %3352 = vmatprep.subr.mxu0 0.0
    %3353 = vmatpush1.msra.mxu0 0.0
    %3354 = vmatprep.subr.mxu0 0.0
    %3355 = vmatpush1.msra.mxu0 0.0
    %3356 = vmatprep.subr.mxu0 0.0
    %3357 = vmatpush1.msra.mxu0 0.0
    %3358 = vmatprep.subr.mxu0 0.0
    %3359 = vmatpush1.msra.mxu0 0.0
    %3360 = vmatprep.subr.mxu0 0.0
    %3361 = vmatpush1.msra.mxu0 0.0
    %3362 = vmatprep.subr.mxu0 0.0
    %3363 = vmatpush1.msra.mxu0 0.0
    %3364 = vmatprep.subr.mxu0 0.0
    %3365 = vmatpush1.msra.mxu0 0.0
    %3366 = vmatprep.subr.mxu0 0.0
    %3367 = vmatpush1.msra.mxu0 0.0
    %3368 = vmatprep.subr.mxu0 0.0
    %3369 = vmatpush1.msra.mxu0 0.0
    %3370 = vmatprep.subr.mxu0 0.0
    %3371 = vmatpush1.msra.mxu0 0.0
    %3372 = vmatprep.subr.mxu0 0.0
    %3373 = vmatpush1.msra.mxu0 0.0
    %3374 = vmatprep.subr.mxu0 0.0
    %3375 = vmatpush1.msra.mxu0 0.0
    %3376 = vmatprep.subr.mxu0 0.0
    %3377 = vmatpush1.msra.mxu0 0.0
    %3378 = vmatprep.subr.mxu0 0.0
    %3379 = vmatpush1.msra.mxu0 0.0
    %3380 = vmatprep.mubr.f32.mxu0 0.0
    %3381 = vmatmul.mubr.f32.gmra.mrb[0].mxu0 %v3314
    %v3382 = vpop.f32.mrb[0].mxu0
    %v3383 = vadd.f32 0.0, %v3382
    %v3384 = vpop.f32.mrb[0].mxu0
    %v3385 = vadd.f32 0.0, %v3384
    %3386 = vdwg.mxu0
    %v3387 = vadd.f32 %v3310, %v3383
    %v3388 = vadd.f32 %v3312, %v3385
    %v3389 = vxor.u32 %v3387, 2147483648
    %v3390 = vxor.u32 %v3388, 2147483648
    %v3391 = vmul.f32 %v3389, 1.442695
    %v3392 = vpow.pop %v3391
    %v3393 = vmul.f32 %v3390, 1.442695
    %v3394 = vpow.pop %v3393
    %v3395 = vadd.f32 %v3392, 1.0
    %v3396 = vadd.f32 %v3394, 1.0
    %v3397 = vrcp.pop %v3395
    %v3398 = vmul.f32 1.0, %v3397
    %v3399 = vrcp.pop %v3396
    %v3400 = vmul.f32 1.0, %v3399
    %v3401 = vtanh.pop %v3388
    %v3402 = vmul.f32 %v3398, 0.0
    %3404 = vrot.lane.b32.xlu0 %v3401, 64
    %v3405 = vpop.permute.xlu0 %3404
    %v3407 = vmul.f32 %v3398, %v3405
    %3409 = vrot.lane.b32.xlu0 %v3407, 64
    %v3410 = vpop.permute.xlu0 %3409
    %v3412 = vadd.f32 %v3402, %v3410
    %v3413 = vtanh.pop %v3412
    %3415 = vrot.lane.b32.xlu0 %v3413, 64
    %v3416 = vpop.permute.xlu0 %3415
    %v3418 = vmul.f32 %v3400, %v3416
    %v3419 = vmax.f32 %v3418, 0.0
    %3420 = vrot.lane.b32.xlu0 %v3207, 112
    %v3421 = vpop.permute.xlu0 %3420
    %v3422 = vsel %vm2657, %v3421, 0
    %3424 = vmatprep.subr.mxu0 %v3209
    %3425 = vmatpush1.msra.mxu0 %v3208
    %3426 = vmatprep.subr.mxu0 %v3211
    %3427 = vmatpush1.msra.mxu0 %v3210
    %3428 = vmatprep.subr.mxu0 0.0
    %3429 = vmatpush1.msra.mxu0 0.0
    %3430 = vmatprep.subr.mxu0 0.0
    %3431 = vmatpush1.msra.mxu0 0.0
    %3432 = vmatprep.subr.mxu0 0.0
    %3433 = vmatpush1.msra.mxu0 0.0
    %3434 = vmatprep.subr.mxu0 0.0
    %3435 = vmatpush1.msra.mxu0 0.0
    %3436 = vmatprep.subr.mxu0 0.0
    %3437 = vmatpush1.msra.mxu0 0.0
    %3438 = vmatprep.subr.mxu0 0.0
    %3439 = vmatpush1.msra.mxu0 0.0
    %3440 = vmatprep.subr.mxu0 0.0
    %3441 = vmatpush1.msra.mxu0 0.0
    %3442 = vmatprep.subr.mxu0 0.0
    %3443 = vmatpush1.msra.mxu0 0.0
    %3444 = vmatprep.subr.mxu0 0.0
    %3445 = vmatpush1.msra.mxu0 0.0
    %3446 = vmatprep.subr.mxu0 0.0
    %3447 = vmatpush1.msra.mxu0 0.0
    %3448 = vmatprep.subr.mxu0 0.0
    %3449 = vmatpush1.msra.mxu0 0.0
    %3450 = vmatprep.subr.mxu0 0.0
    %3451 = vmatpush1.msra.mxu0 0.0
    %3452 = vmatprep.subr.mxu0 0.0
    %3453 = vmatpush1.msra.mxu0 0.0
    %3454 = vmatprep.subr.mxu0 0.0
    %3455 = vmatpush1.msra.mxu0 0.0
    %3456 = vmatprep.subr.mxu0 0.0
    %3457 = vmatpush1.msra.mxu0 0.0
    %3458 = vmatprep.subr.mxu0 0.0
    %3459 = vmatpush1.msra.mxu0 0.0
    %3460 = vmatprep.subr.mxu0 0.0
    %3461 = vmatpush1.msra.mxu0 0.0
    %3462 = vmatprep.subr.mxu0 0.0
    %3463 = vmatpush1.msra.mxu0 0.0
    %3464 = vmatprep.subr.mxu0 0.0
    %3465 = vmatpush1.msra.mxu0 0.0
    %3466 = vmatprep.subr.mxu0 0.0
    %3467 = vmatpush1.msra.mxu0 0.0
    %3468 = vmatprep.subr.mxu0 0.0
    %3469 = vmatpush1.msra.mxu0 0.0
    %3470 = vmatprep.subr.mxu0 0.0
    %3471 = vmatpush1.msra.mxu0 0.0
    %3472 = vmatprep.subr.mxu0 0.0
    %3473 = vmatpush1.msra.mxu0 0.0
    %3474 = vmatprep.subr.mxu0 0.0
    %3475 = vmatpush1.msra.mxu0 0.0
    %3476 = vmatprep.subr.mxu0 0.0
    %3477 = vmatpush1.msra.mxu0 0.0
    %3478 = vmatprep.subr.mxu0 0.0
    %3479 = vmatpush1.msra.mxu0 0.0
    %3480 = vmatprep.subr.mxu0 0.0
    %3481 = vmatpush1.msra.mxu0 0.0
    %3482 = vmatprep.subr.mxu0 0.0
    %3483 = vmatpush1.msra.mxu0 0.0
    %3484 = vmatprep.subr.mxu0 0.0
    %3485 = vmatpush1.msra.mxu0 0.0
    %3486 = vmatprep.subr.mxu0 0.0
    %3487 = vmatpush1.msra.mxu0 0.0
    %3488 = vmatprep.mubr.f32.mxu0 0.0
    %3489 = vmatmul.mubr.f32.gmra.mrb[0].mxu0 %v3422
    %v3490 = vpop.f32.mrb[0].mxu0
    %v3491 = vadd.f32 %v3233, %v3490
    %v3492 = vpop.f32.mrb[0].mxu0
    %v3493 = vadd.f32 %v3237, %v3492
    %3494 = vdwg.mxu0
    %v3496 = vsel %vm2662, %v3418, 0
    %3498 = vmatprep.subr.mxu0 %v3213
    %3499 = vmatpush1.msra.mxu0 %v3212
    %3500 = vmatprep.subr.mxu0 %v3215
    %3501 = vmatpush1.msra.mxu0 %v3214
    %3502 = vmatprep.subr.mxu0 %v3217
    %3503 = vmatpush1.msra.mxu0 %v3216
    %3504 = vmatprep.subr.mxu0 %v3219
    %3505 = vmatpush1.msra.mxu0 %v3218
    %3506 = vmatprep.subr.mxu0 %v3221
    %3507 = vmatpush1.msra.mxu0 %v3220
    %3508 = vmatprep.subr.mxu0 %v3223
    %3509 = vmatpush1.msra.mxu0 %v3222
    %3510 = vmatprep.subr.mxu0 %v3225
    %3511 = vmatpush1.msra.mxu0 %v3224
    %3512 = vmatprep.subr.mxu0 %v3227
    %3513 = vmatpush1.msra.mxu0 %v3226
    %3514 = vmatprep.subr.mxu0 0.0
    %3515 = vmatpush1.msra.mxu0 0.0
    %3516 = vmatprep.subr.mxu0 0.0
    %3517 = vmatpush1.msra.mxu0 0.0
    %3518 = vmatprep.subr.mxu0 0.0
    %3519 = vmatpush1.msra.mxu0 0.0
    %3520 = vmatprep.subr.mxu0 0.0
    %3521 = vmatpush1.msra.mxu0 0.0
    %3522 = vmatprep.subr.mxu0 0.0
    %3523 = vmatpush1.msra.mxu0 0.0
    %3524 = vmatprep.subr.mxu0 0.0
    %3525 = vmatpush1.msra.mxu0 0.0
    %3526 = vmatprep.subr.mxu0 0.0
    %3527 = vmatpush1.msra.mxu0 0.0
    %3528 = vmatprep.subr.mxu0 0.0
    %3529 = vmatpush1.msra.mxu0 0.0
    %3530 = vmatprep.subr.mxu0 0.0
    %3531 = vmatpush1.msra.mxu0 0.0
    %3532 = vmatprep.subr.mxu0 0.0
    %3533 = vmatpush1.msra.mxu0 0.0
    %3534 = vmatprep.subr.mxu0 0.0
    %3535 = vmatpush1.msra.mxu0 0.0
    %3536 = vmatprep.subr.mxu0 0.0
    %3537 = vmatpush1.msra.mxu0 0.0
    %3538 = vmatprep.subr.mxu0 0.0
    %3539 = vmatpush1.msra.mxu0 0.0
    %3540 = vmatprep.subr.mxu0 0.0
    %3541 = vmatpush1.msra.mxu0 0.0
    %3542 = vmatprep.subr.mxu0 0.0
    %3543 = vmatpush1.msra.mxu0 0.0
    %3544 = vmatprep.subr.mxu0 0.0
    %3545 = vmatpush1.msra.mxu0 0.0
    %3546 = vmatprep.subr.mxu0 0.0
    %3547 = vmatpush1.msra.mxu0 0.0
    %3548 = vmatprep.subr.mxu0 0.0
    %3549 = vmatpush1.msra.mxu0 0.0
    %3550 = vmatprep.subr.mxu0 0.0
    %3551 = vmatpush1.msra.mxu0 0.0
    %3552 = vmatprep.subr.mxu0 0.0
    %3553 = vmatpush1.msra.mxu0 0.0
    %3554 = vmatprep.subr.mxu0 0.0
    %3555 = vmatpush1.msra.mxu0 0.0
    %3556 = vmatprep.subr.mxu0 0.0
    %3557 = vmatpush1.msra.mxu0 0.0
    %3558 = vmatprep.subr.mxu0 0.0
    %3559 = vmatpush1.msra.mxu0 0.0
    %3560 = vmatprep.subr.mxu0 0.0
    %3561 = vmatpush1.msra.mxu0 0.0
    %3562 = vmatprep.mubr.f32.mxu0 0.0
    %3563 = vmatmul.mubr.f32.gmra.mrb[0].mxu0 %v3496
    %v3564 = vpop.f32.mrb[0].mxu0
    %v3565 = vadd.f32 0.0, %v3564
    %v3566 = vpop.f32.mrb[0].mxu0
    %v3567 = vadd.f32 0.0, %v3566
    %3568 = vdwg.mxu0
    %v3569 = vadd.f32 %v3491, %v3565
    %v3570 = vadd.f32 %v3493, %v3567
    %v3571 = vxor.u32 %v3569, 2147483648
    %v3572 = vxor.u32 %v3570, 2147483648
    %v3573 = vmul.f32 %v3571, 1.442695
    %v3574 = vpow.pop %v3573
    %v3575 = vmul.f32 %v3572, 1.442695
    %v3576 = vpow.pop %v3575
    %v3577 = vadd.f32 %v3574, 1.0
    %v3578 = vadd.f32 %v3576, 1.0
    %v3579 = vrcp.pop %v3577
    %v3580 = vmul.f32 1.0, %v3579
    %v3581 = vrcp.pop %v3578
    %v3582 = vmul.f32 1.0, %v3581
    %v3583 = vtanh.pop %v3570
    %v3584 = vmul.f32 %v3580, %v3412
    %3586 = vrot.lane.b32.xlu0 %v3583, 64
    %v3587 = vpop.permute.xlu0 %3586
    %v3589 = vmul.f32 %v3580, %v3587
    %3591 = vrot.lane.b32.xlu0 %v3589, 64
    %v3592 = vpop.permute.xlu0 %3591
    %v3594 = vadd.f32 %v3584, %v3592
    %v3595 = vtanh.pop %v3594
    %3597 = vrot.lane.b32.xlu0 %v3595, 64
    %v3598 = vpop.permute.xlu0 %3597
    %v3600 = vmul.f32 %v3582, %v3598
    %v3601 = vmax.f32 %v3600, 0.0
    %3602 = vrot.lane.b32.xlu0 %v3207, 96
    %v3603 = vpop.permute.xlu0 %3602
    %v3604 = vsel %vm2657, %v3603, 0
    %3606 = vmatprep.subr.mxu0 %v3209
    %3607 = vmatpush1.msra.mxu0 %v3208
    %3608 = vmatprep.subr.mxu0 %v3211
    %3609 = vmatpush1.msra.mxu0 %v3210
    %3610 = vmatprep.subr.mxu0 0.0
    %3611 = vmatpush1.msra.mxu0 0.0
    %3612 = vmatprep.subr.mxu0 0.0
    %3613 = vmatpush1.msra.mxu0 0.0
    %3614 = vmatprep.subr.mxu0 0.0
    %3615 = vmatpush1.msra.mxu0 0.0
    %3616 = vmatprep.subr.mxu0 0.0
    %3617 = vmatpush1.msra.mxu0 0.0
    %3618 = vmatprep.subr.mxu0 0.0
    %3619 = vmatpush1.msra.mxu0 0.0
    %3620 = vmatprep.subr.mxu0 0.0
    %3621 = vmatpush1.msra.mxu0 0.0
    %3622 = vmatprep.subr.mxu0 0.0
    %3623 = vmatpush1.msra.mxu0 0.0
    %3624 = vmatprep.subr.mxu0 0.0
    %3625 = vmatpush1.msra.mxu0 0.0
    %3626 = vmatprep.subr.mxu0 0.0
    %3627 = vmatpush1.msra.mxu0 0.0
    %3628 = vmatprep.subr.mxu0 0.0
    %3629 = vmatpush1.msra.mxu0 0.0
    %3630 = vmatprep.subr.mxu0 0.0
    %3631 = vmatpush1.msra.mxu0 0.0
    %3632 = vmatprep.subr.mxu0 0.0
    %3633 = vmatpush1.msra.mxu0 0.0
    %3634 = vmatprep.subr.mxu0 0.0
    %3635 = vmatpush1.msra.mxu0 0.0
    %3636 = vmatprep.subr.mxu0 0.0
    %3637 = vmatpush1.msra.mxu0 0.0
    %3638 = vmatprep.subr.mxu0 0.0
    %3639 = vmatpush1.msra.mxu0 0.0
    %3640 = vmatprep.subr.mxu0 0.0
    %3641 = vmatpush1.msra.mxu0 0.0
    %3642 = vmatprep.subr.mxu0 0.0
    %3643 = vmatpush1.msra.mxu0 0.0
    %3644 = vmatprep.subr.mxu0 0.0
    %3645 = vmatpush1.msra.mxu0 0.0
    %3646 = vmatprep.subr.mxu0 0.0
    %3647 = vmatpush1.msra.mxu0 0.0
    %3648 = vmatprep.subr.mxu0 0.0
    %3649 = vmatpush1.msra.mxu0 0.0
    %3650 = vmatprep.subr.mxu0 0.0
    %3651 = vmatpush1.msra.mxu0 0.0
    %3652 = vmatprep.subr.mxu0 0.0
    %3653 = vmatpush1.msra.mxu0 0.0
    %3654 = vmatprep.subr.mxu0 0.0
    %3655 = vmatpush1.msra.mxu0 0.0
    %3656 = vmatprep.subr.mxu0 0.0
    %3657 = vmatpush1.msra.mxu0 0.0
    %3658 = vmatprep.subr.mxu0 0.0
    %3659 = vmatpush1.msra.mxu0 0.0
    %3660 = vmatprep.subr.mxu0 0.0
    %3661 = vmatpush1.msra.mxu0 0.0
    %3662 = vmatprep.subr.mxu0 0.0
    %3663 = vmatpush1.msra.mxu0 0.0
    %3664 = vmatprep.subr.mxu0 0.0
    %3665 = vmatpush1.msra.mxu0 0.0
    %3666 = vmatprep.subr.mxu0 0.0
    %3667 = vmatpush1.msra.mxu0 0.0
    %3668 = vmatprep.subr.mxu0 0.0
    %3669 = vmatpush1.msra.mxu0 0.0
    %3670 = vmatprep.mubr.f32.mxu0 0.0
    %3671 = vmatmul.mubr.f32.gmra.mrb[0].mxu0 %v3604
    %v3672 = vpop.f32.mrb[0].mxu0
    %v3673 = vadd.f32 %v3233, %v3672
    %v3674 = vpop.f32.mrb[0].mxu0
    %v3675 = vadd.f32 %v3237, %v3674
    %3676 = vdwg.mxu0
    %v3678 = vsel %vm2662, %v3600, 0
    %3680 = vmatprep.subr.mxu0 %v3213
    %3681 = vmatpush1.msra.mxu0 %v3212
    %3682 = vmatprep.subr.mxu0 %v3215
    %3683 = vmatpush1.msra.mxu0 %v3214
    %3684 = vmatprep.subr.mxu0 %v3217
    %3685 = vmatpush1.msra.mxu0 %v3216
    %3686 = vmatprep.subr.mxu0 %v3219
    %3687 = vmatpush1.msra.mxu0 %v3218
    %3688 = vmatprep.subr.mxu0 %v3221
    %3689 = vmatpush1.msra.mxu0 %v3220
    %3690 = vmatprep.subr.mxu0 %v3223
    %3691 = vmatpush1.msra.mxu0 %v3222
    %3692 = vmatprep.subr.mxu0 %v3225
    %3693 = vmatpush1.msra.mxu0 %v3224
    %3694 = vmatprep.subr.mxu0 %v3227
    %3695 = vmatpush1.msra.mxu0 %v3226
    %3696 = vmatprep.subr.mxu0 0.0
    %3697 = vmatpush1.msra.mxu0 0.0
    %3698 = vmatprep.subr.mxu0 0.0
    %3699 = vmatpush1.msra.mxu0 0.0
    %3700 = vmatprep.subr.mxu0 0.0
    %3701 = vmatpush1.msra.mxu0 0.0
    %3702 = vmatprep.subr.mxu0 0.0
    %3703 = vmatpush1.msra.mxu0 0.0
    %3704 = vmatprep.subr.mxu0 0.0
    %3705 = vmatpush1.msra.mxu0 0.0
    %3706 = vmatprep.subr.mxu0 0.0
    %3707 = vmatpush1.msra.mxu0 0.0
    %3708 = vmatprep.subr.mxu0 0.0
    %3709 = vmatpush1.msra.mxu0 0.0
    %3710 = vmatprep.subr.mxu0 0.0
    %3711 = vmatpush1.msra.mxu0 0.0
    %3712 = vmatprep.subr.mxu0 0.0
    %3713 = vmatpush1.msra.mxu0 0.0
    %3714 = vmatprep.subr.mxu0 0.0
    %3715 = vmatpush1.msra.mxu0 0.0
    %3716 = vmatprep.subr.mxu0 0.0
    %3717 = vmatpush1.msra.mxu0 0.0
    %3718 = vmatprep.subr.mxu0 0.0
    %3719 = vmatpush1.msra.mxu0 0.0
    %3720 = vmatprep.subr.mxu0 0.0
    %3721 = vmatpush1.msra.mxu0 0.0
    %3722 = vmatprep.subr.mxu0 0.0
    %3723 = vmatpush1.msra.mxu0 0.0
    %3724 = vmatprep.subr.mxu0 0.0
    %3725 = vmatpush1.msra.mxu0 0.0
    %3726 = vmatprep.subr.mxu0 0.0
    %3727 = vmatpush1.msra.mxu0 0.0
    %3728 = vmatprep.subr.mxu0 0.0
    %3729 = vmatpush1.msra.mxu0 0.0
    %3730 = vmatprep.subr.mxu0 0.0
    %3731 = vmatpush1.msra.mxu0 0.0
    %3732 = vmatprep.subr.mxu0 0.0
    %3733 = vmatpush1.msra.mxu0 0.0
    %3734 = vmatprep.subr.mxu0 0.0
    %3735 = vmatpush1.msra.mxu0 0.0
    %3736 = vmatprep.subr.mxu0 0.0
    %3737 = vmatpush1.msra.mxu0 0.0
    %3738 = vmatprep.subr.mxu0 0.0
    %3739 = vmatpush1.msra.mxu0 0.0
    %3740 = vmatprep.subr.mxu0 0.0
    %3741 = vmatpush1.msra.mxu0 0.0
    %3742 = vmatprep.subr.mxu0 0.0
    %3743 = vmatpush1.msra.mxu0 0.0
    %3744 = vmatprep.mubr.f32.mxu0 0.0
    %3745 = vmatmul.mubr.f32.gmra.mrb[0].mxu0 %v3678
    %v3746 = vpop.f32.mrb[0].mxu0
    %v3747 = vadd.f32 0.0, %v3746
    %v3748 = vpop.f32.mrb[0].mxu0
    %v3749 = vadd.f32 0.0, %v3748
    %3750 = vdwg.mxu0
    %v3751 = vadd.f32 %v3673, %v3747
    %v3752 = vadd.f32 %v3675, %v3749
    %v3753 = vxor.u32 %v3751, 2147483648
    %v3754 = vxor.u32 %v3752, 2147483648
    %v3755 = vmul.f32 %v3753, 1.442695
    %v3756 = vpow.pop %v3755
    %v3757 = vmul.f32 %v3754, 1.442695
    %v3758 = vpow.pop %v3757
    %v3759 = vadd.f32 %v3756, 1.0
    %v3760 = vadd.f32 %v3758, 1.0
    %v3761 = vrcp.pop %v3759
    %v3762 = vmul.f32 1.0, %v3761
    %v3763 = vrcp.pop %v3760
    %v3764 = vmul.f32 1.0, %v3763
    %v3765 = vtanh.pop %v3752
    %v3766 = vmul.f32 %v3762, %v3594
    %3768 = vrot.lane.b32.xlu0 %v3765, 64
    %v3769 = vpop.permute.xlu0 %3768
    %v3771 = vmul.f32 %v3762, %v3769
    %3773 = vrot.lane.b32.xlu0 %v3771, 64
    %v3774 = vpop.permute.xlu0 %3773
    %v3776 = vadd.f32 %v3766, %v3774
    %v3777 = vtanh.pop %v3776
    %3779 = vrot.lane.b32.xlu0 %v3777, 64
    %v3780 = vpop.permute.xlu0 %3779
    %v3782 = vmul.f32 %v3764, %v3780
    %v3783 = vmax.f32 %v3782, 0.0
    %3784 = vrot.lane.b32.xlu0 %v3207, 80
    %v3785 = vpop.permute.xlu0 %3784
    %v3786 = vsel %vm2657, %v3785, 0
    %3788 = vmatprep.subr.mxu0 %v3209
    %3789 = vmatpush1.msra.mxu0 %v3208
    %3790 = vmatprep.subr.mxu0 %v3211
    %3791 = vmatpush1.msra.mxu0 %v3210
    %3792 = vmatprep.subr.mxu0 0.0
    %3793 = vmatpush1.msra.mxu0 0.0
    %3794 = vmatprep.subr.mxu0 0.0
    %3795 = vmatpush1.msra.mxu0 0.0
    %3796 = vmatprep.subr.mxu0 0.0
    %3797 = vmatpush1.msra.mxu0 0.0
    %3798 = vmatprep.subr.mxu0 0.0
    %3799 = vmatpush1.msra.mxu0 0.0
    %3800 = vmatprep.subr.mxu0 0.0
    %3801 = vmatpush1.msra.mxu0 0.0
    %3802 = vmatprep.subr.mxu0 0.0
    %3803 = vmatpush1.msra.mxu0 0.0
    %3804 = vmatprep.subr.mxu0 0.0
    %3805 = vmatpush1.msra.mxu0 0.0
    %3806 = vmatprep.subr.mxu0 0.0
    %3807 = vmatpush1.msra.mxu0 0.0
    %3808 = vmatprep.subr.mxu0 0.0
    %3809 = vmatpush1.msra.mxu0 0.0
    %3810 = vmatprep.subr.mxu0 0.0
    %3811 = vmatpush1.msra.mxu0 0.0
    %3812 = vmatprep.subr.mxu0 0.0
    %3813 = vmatpush1.msra.mxu0 0.0
    %3814 = vmatprep.subr.mxu0 0.0
    %3815 = vmatpush1.msra.mxu0 0.0
    %3816 = vmatprep.subr.mxu0 0.0
    %3817 = vmatpush1.msra.mxu0 0.0
    %3818 = vmatprep.subr.mxu0 0.0
    %3819 = vmatpush1.msra.mxu0 0.0
    %3820 = vmatprep.subr.mxu0 0.0
    %3821 = vmatpush1.msra.mxu0 0.0
    %3822 = vmatprep.subr.mxu0 0.0
    %3823 = vmatpush1.msra.mxu0 0.0
    %3824 = vmatprep.subr.mxu0 0.0
    %3825 = vmatpush1.msra.mxu0 0.0
    %3826 = vmatprep.subr.mxu0 0.0
    %3827 = vmatpush1.msra.mxu0 0.0
    %3828 = vmatprep.subr.mxu0 0.0
    %3829 = vmatpush1.msra.mxu0 0.0
    %3830 = vmatprep.subr.mxu0 0.0
    %3831 = vmatpush1.msra.mxu0 0.0
    %3832 = vmatprep.subr.mxu0 0.0
    %3833 = vmatpush1.msra.mxu0 0.0
    %3834 = vmatprep.subr.mxu0 0.0
    %3835 = vmatpush1.msra.mxu0 0.0
    %3836 = vmatprep.subr.mxu0 0.0
    %3837 = vmatpush1.msra.mxu0 0.0
    %3838 = vmatprep.subr.mxu0 0.0
    %3839 = vmatpush1.msra.mxu0 0.0
    %3840 = vmatprep.subr.mxu0 0.0
    %3841 = vmatpush1.msra.mxu0 0.0
    %3842 = vmatprep.subr.mxu0 0.0
    %3843 = vmatpush1.msra.mxu0 0.0
    %3844 = vmatprep.subr.mxu0 0.0
    %3845 = vmatpush1.msra.mxu0 0.0
    %3846 = vmatprep.subr.mxu0 0.0
    %3847 = vmatpush1.msra.mxu0 0.0
    %3848 = vmatprep.subr.mxu0 0.0
    %3849 = vmatpush1.msra.mxu0 0.0
    %3850 = vmatprep.subr.mxu0 0.0
    %3851 = vmatpush1.msra.mxu0 0.0
    %3852 = vmatprep.mubr.f32.mxu0 0.0
    %3853 = vmatmul.mubr.f32.gmra.mrb[0].mxu0 %v3786
    %v3854 = vpop.f32.mrb[0].mxu0
    %v3855 = vadd.f32 %v3233, %v3854
    %v3856 = vpop.f32.mrb[0].mxu0
    %v3857 = vadd.f32 %v3237, %v3856
    %3858 = vdwg.mxu0
    %v3860 = vsel %vm2662, %v3782, 0
    %3862 = vmatprep.subr.mxu0 %v3213
    %3863 = vmatpush1.msra.mxu0 %v3212
    %3864 = vmatprep.subr.mxu0 %v3215
    %3865 = vmatpush1.msra.mxu0 %v3214
    %3866 = vmatprep.subr.mxu0 %v3217
    %3867 = vmatpush1.msra.mxu0 %v3216
    %3868 = vmatprep.subr.mxu0 %v3219
    %3869 = vmatpush1.msra.mxu0 %v3218
    %3870 = vmatprep.subr.mxu0 %v3221
    %3871 = vmatpush1.msra.mxu0 %v3220
    %3872 = vmatprep.subr.mxu0 %v3223
    %3873 = vmatpush1.msra.mxu0 %v3222
    %3874 = vmatprep.subr.mxu0 %v3225
    %3875 = vmatpush1.msra.mxu0 %v3224
    %3876 = vmatprep.subr.mxu0 %v3227
    %3877 = vmatpush1.msra.mxu0 %v3226
    %3878 = vmatprep.subr.mxu0 0.0
    %3879 = vmatpush1.msra.mxu0 0.0
    %3880 = vmatprep.subr.mxu0 0.0
    %3881 = vmatpush1.msra.mxu0 0.0
    %3882 = vmatprep.subr.mxu0 0.0
    %3883 = vmatpush1.msra.mxu0 0.0
    %3884 = vmatprep.subr.mxu0 0.0
    %3885 = vmatpush1.msra.mxu0 0.0
    %3886 = vmatprep.subr.mxu0 0.0
    %3887 = vmatpush1.msra.mxu0 0.0
    %3888 = vmatprep.subr.mxu0 0.0
    %3889 = vmatpush1.msra.mxu0 0.0
    %3890 = vmatprep.subr.mxu0 0.0
    %3891 = vmatpush1.msra.mxu0 0.0
    %3892 = vmatprep.subr.mxu0 0.0
    %3893 = vmatpush1.msra.mxu0 0.0
    %3894 = vmatprep.subr.mxu0 0.0
    %3895 = vmatpush1.msra.mxu0 0.0
    %3896 = vmatprep.subr.mxu0 0.0
    %3897 = vmatpush1.msra.mxu0 0.0
    %3898 = vmatprep.subr.mxu0 0.0
    %3899 = vmatpush1.msra.mxu0 0.0
    %3900 = vmatprep.subr.mxu0 0.0
    %3901 = vmatpush1.msra.mxu0 0.0
    %3902 = vmatprep.subr.mxu0 0.0
    %3903 = vmatpush1.msra.mxu0 0.0
    %3904 = vmatprep.subr.mxu0 0.0
    %3905 = vmatpush1.msra.mxu0 0.0
    %3906 = vmatprep.subr.mxu0 0.0
    %3907 = vmatpush1.msra.mxu0 0.0
    %3908 = vmatprep.subr.mxu0 0.0
    %3909 = vmatpush1.msra.mxu0 0.0
    %3910 = vmatprep.subr.mxu0 0.0
    %3911 = vmatpush1.msra.mxu0 0.0
    %3912 = vmatprep.subr.mxu0 0.0
    %3913 = vmatpush1.msra.mxu0 0.0
    %3914 = vmatprep.subr.mxu0 0.0
    %3915 = vmatpush1.msra.mxu0 0.0
    %3916 = vmatprep.subr.mxu0 0.0
    %3917 = vmatpush1.msra.mxu0 0.0
    %3918 = vmatprep.subr.mxu0 0.0
    %3919 = vmatpush1.msra.mxu0 0.0
    %3920 = vmatprep.subr.mxu0 0.0
    %3921 = vmatpush1.msra.mxu0 0.0
    %3922 = vmatprep.subr.mxu0 0.0
    %3923 = vmatpush1.msra.mxu0 0.0
    %3924 = vmatprep.subr.mxu0 0.0
    %3925 = vmatpush1.msra.mxu0 0.0
    %3926 = vmatprep.mubr.f32.mxu0 0.0
    %3927 = vmatmul.mubr.f32.gmra.mrb[0].mxu0 %v3860
    %v3928 = vpop.f32.mrb[0].mxu0
    %v3929 = vadd.f32 0.0, %v3928
    %v3930 = vpop.f32.mrb[0].mxu0
    %v3931 = vadd.f32 0.0, %v3930
    %3932 = vdwg.mxu0
    %v3933 = vadd.f32 %v3855, %v3929
    %v3934 = vadd.f32 %v3857, %v3931
    %v3935 = vxor.u32 %v3933, 2147483648
    %v3936 = vxor.u32 %v3934, 2147483648
    %v3937 = vmul.f32 %v3935, 1.442695
    %v3938 = vpow.pop %v3937
    %v3939 = vmul.f32 %v3936, 1.442695
    %v3940 = vpow.pop %v3939
    %v3941 = vadd.f32 %v3938, 1.0
    %v3942 = vadd.f32 %v3940, 1.0
    %v3943 = vrcp.pop %v3941
    %v3944 = vmul.f32 1.0, %v3943
    %v3945 = vrcp.pop %v3942
    %v3946 = vmul.f32 1.0, %v3945
    %v3947 = vtanh.pop %v3934
    %v3948 = vmul.f32 %v3944, %v3776
    %3950 = vrot.lane.b32.xlu0 %v3947, 64
    %v3951 = vpop.permute.xlu0 %3950
    %v3953 = vmul.f32 %v3944, %v3951
    %3955 = vrot.lane.b32.xlu0 %v3953, 64
    %v3956 = vpop.permute.xlu0 %3955
    %v3958 = vadd.f32 %v3948, %v3956
    %v3959 = vtanh.pop %v3958
    %3961 = vrot.lane.b32.xlu0 %v3959, 64
    %v3962 = vpop.permute.xlu0 %3961
    %v3964 = vmul.f32 %v3946, %v3962
    %v3965 = vmax.f32 %v3964, 0.0
    %3966 = vrot.lane.b32.xlu0 %v3207, 64
    %v3967 = vpop.permute.xlu0 %3966
    %v3968 = vsel %vm2657, %v3967, 0
    %3970 = vmatprep.subr.mxu0 %v3209
    %3971 = vmatpush1.msra.mxu0 %v3208
    %3972 = vmatprep.subr.mxu0 %v3211
    %3973 = vmatpush1.msra.mxu0 %v3210
    %3974 = vmatprep.subr.mxu0 0.0
    %3975 = vmatpush1.msra.mxu0 0.0
    %3976 = vmatprep.subr.mxu0 0.0
    %3977 = vmatpush1.msra.mxu0 0.0
    %3978 = vmatprep.subr.mxu0 0.0
    %3979 = vmatpush1.msra.mxu0 0.0
    %3980 = vmatprep.subr.mxu0 0.0
    %3981 = vmatpush1.msra.mxu0 0.0
    %3982 = vmatprep.subr.mxu0 0.0
    %3983 = vmatpush1.msra.mxu0 0.0
    %3984 = vmatprep.subr.mxu0 0.0
    %3985 = vmatpush1.msra.mxu0 0.0
    %3986 = vmatprep.subr.mxu0 0.0
    %3987 = vmatpush1.msra.mxu0 0.0
    %3988 = vmatprep.subr.mxu0 0.0
    %3989 = vmatpush1.msra.mxu0 0.0
    %3990 = vmatprep.subr.mxu0 0.0
    %3991 = vmatpush1.msra.mxu0 0.0
    %3992 = vmatprep.subr.mxu0 0.0
    %3993 = vmatpush1.msra.mxu0 0.0
    %3994 = vmatprep.subr.mxu0 0.0
    %3995 = vmatpush1.msra.mxu0 0.0
    %3996 = vmatprep.subr.mxu0 0.0
    %3997 = vmatpush1.msra.mxu0 0.0
    %3998 = vmatprep.subr.mxu0 0.0
    %3999 = vmatpush1.msra.mxu0 0.0
    %4000 = vmatprep.subr.mxu0 0.0
    %4001 = vmatpush1.msra.mxu0 0.0
    %4002 = vmatprep.subr.mxu0 0.0
    %4003 = vmatpush1.msra.mxu0 0.0
    %4004 = vmatprep.subr.mxu0 0.0
    %4005 = vmatpush1.msra.mxu0 0.0
    %4006 = vmatprep.subr.mxu0 0.0
    %4007 = vmatpush1.msra.mxu0 0.0
    %4008 = vmatprep.subr.mxu0 0.0
    %4009 = vmatpush1.msra.mxu0 0.0
    %4010 = vmatprep.subr.mxu0 0.0
    %4011 = vmatpush1.msra.mxu0 0.0
    %4012 = vmatprep.subr.mxu0 0.0
    %4013 = vmatpush1.msra.mxu0 0.0
    %4014 = vmatprep.subr.mxu0 0.0
    %4015 = vmatpush1.msra.mxu0 0.0
    %4016 = vmatprep.subr.mxu0 0.0
    %4017 = vmatpush1.msra.mxu0 0.0
    %4018 = vmatprep.subr.mxu0 0.0
    %4019 = vmatpush1.msra.mxu0 0.0
    %4020 = vmatprep.subr.mxu0 0.0
    %4021 = vmatpush1.msra.mxu0 0.0
    %4022 = vmatprep.subr.mxu0 0.0
    %4023 = vmatpush1.msra.mxu0 0.0
    %4024 = vmatprep.subr.mxu0 0.0
    %4025 = vmatpush1.msra.mxu0 0.0
    %4026 = vmatprep.subr.mxu0 0.0
    %4027 = vmatpush1.msra.mxu0 0.0
    %4028 = vmatprep.subr.mxu0 0.0
    %4029 = vmatpush1.msra.mxu0 0.0
    %4030 = vmatprep.subr.mxu0 0.0
    %4031 = vmatpush1.msra.mxu0 0.0
    %4032 = vmatprep.subr.mxu0 0.0
    %4033 = vmatpush1.msra.mxu0 0.0
    %4034 = vmatprep.mubr.f32.mxu0 0.0
    %4035 = vmatmul.mubr.f32.gmra.mrb[0].mxu0 %v3968
    %v4036 = vpop.f32.mrb[0].mxu0
    %v4037 = vadd.f32 %v3233, %v4036
    %v4038 = vpop.f32.mrb[0].mxu0
    %v4039 = vadd.f32 %v3237, %v4038
    %4040 = vdwg.mxu0
    %v4042 = vsel %vm2662, %v3964, 0
    %4044 = vmatprep.subr.mxu0 %v3213
    %4045 = vmatpush1.msra.mxu0 %v3212
    %4046 = vmatprep.subr.mxu0 %v3215
    %4047 = vmatpush1.msra.mxu0 %v3214
    %4048 = vmatprep.subr.mxu0 %v3217
    %4049 = vmatpush1.msra.mxu0 %v3216
    %4050 = vmatprep.subr.mxu0 %v3219
    %4051 = vmatpush1.msra.mxu0 %v3218
    %4052 = vmatprep.subr.mxu0 %v3221
    %4053 = vmatpush1.msra.mxu0 %v3220
    %4054 = vmatprep.subr.mxu0 %v3223
    %4055 = vmatpush1.msra.mxu0 %v3222
    %4056 = vmatprep.subr.mxu0 %v3225
    %4057 = vmatpush1.msra.mxu0 %v3224
    %4058 = vmatprep.subr.mxu0 %v3227
    %4059 = vmatpush1.msra.mxu0 %v3226
    %4060 = vmatprep.subr.mxu0 0.0
    %4061 = vmatpush1.msra.mxu0 0.0
    %4062 = vmatprep.subr.mxu0 0.0
    %4063 = vmatpush1.msra.mxu0 0.0
    %4064 = vmatprep.subr.mxu0 0.0
    %4065 = vmatpush1.msra.mxu0 0.0
    %4066 = vmatprep.subr.mxu0 0.0
    %4067 = vmatpush1.msra.mxu0 0.0
    %4068 = vmatprep.subr.mxu0 0.0
    %4069 = vmatpush1.msra.mxu0 0.0
    %4070 = vmatprep.subr.mxu0 0.0
    %4071 = vmatpush1.msra.mxu0 0.0
    %4072 = vmatprep.subr.mxu0 0.0
    %4073 = vmatpush1.msra.mxu0 0.0
    %4074 = vmatprep.subr.mxu0 0.0
    %4075 = vmatpush1.msra.mxu0 0.0
    %4076 = vmatprep.subr.mxu0 0.0
    %4077 = vmatpush1.msra.mxu0 0.0
    %4078 = vmatprep.subr.mxu0 0.0
    %4079 = vmatpush1.msra.mxu0 0.0
    %4080 = vmatprep.subr.mxu0 0.0
    %4081 = vmatpush1.msra.mxu0 0.0
    %4082 = vmatprep.subr.mxu0 0.0
    %4083 = vmatpush1.msra.mxu0 0.0
    %4084 = vmatprep.subr.mxu0 0.0
    %4085 = vmatpush1.msra.mxu0 0.0
    %4086 = vmatprep.subr.mxu0 0.0
    %4087 = vmatpush1.msra.mxu0 0.0
    %4088 = vmatprep.subr.mxu0 0.0
    %4089 = vmatpush1.msra.mxu0 0.0
    %4090 = vmatprep.subr.mxu0 0.0
    %4091 = vmatpush1.msra.mxu0 0.0
    %4092 = vmatprep.subr.mxu0 0.0
    %4093 = vmatpush1.msra.mxu0 0.0
    %4094 = vmatprep.subr.mxu0 0.0
    %4095 = vmatpush1.msra.mxu0 0.0
    %4096 = vmatprep.subr.mxu0 0.0
    %4097 = vmatpush1.msra.mxu0 0.0
    %4098 = vmatprep.subr.mxu0 0.0
    %4099 = vmatpush1.msra.mxu0 0.0
    %4100 = vmatprep.subr.mxu0 0.0
    %4101 = vmatpush1.msra.mxu0 0.0
    %4102 = vmatprep.subr.mxu0 0.0
    %4103 = vmatpush1.msra.mxu0 0.0
    %4104 = vmatprep.subr.mxu0 0.0
    %4105 = vmatpush1.msra.mxu0 0.0
    %4106 = vmatprep.subr.mxu0 0.0
    %4107 = vmatpush1.msra.mxu0 0.0
    %4108 = vmatprep.mubr.f32.mxu0 0.0
    %4109 = vmatmul.mubr.f32.gmra.mrb[0].mxu0 %v4042
    %v4110 = vpop.f32.mrb[0].mxu0
    %v4111 = vadd.f32 0.0, %v4110
    %v4112 = vpop.f32.mrb[0].mxu0
    %v4113 = vadd.f32 0.0, %v4112
    %4114 = vdwg.mxu0
    %v4115 = vadd.f32 %v4037, %v4111
    %v4116 = vadd.f32 %v4039, %v4113
    %v4117 = vxor.u32 %v4115, 2147483648
    %v4118 = vxor.u32 %v4116, 2147483648
    %v4119 = vmul.f32 %v4117, 1.442695
    %v4120 = vpow.pop %v4119
    %v4121 = vmul.f32 %v4118, 1.442695
    %v4122 = vpow.pop %v4121
    %v4123 = vadd.f32 %v4120, 1.0
    %v4124 = vadd.f32 %v4122, 1.0
    %v4125 = vrcp.pop %v4123
    %v4126 = vmul.f32 1.0, %v4125
    %v4127 = vrcp.pop %v4124
    %v4128 = vmul.f32 1.0, %v4127
    %v4129 = vtanh.pop %v4116
    %v4130 = vmul.f32 %v4126, %v3958
    %4132 = vrot.lane.b32.xlu0 %v4129, 64
    %v4133 = vpop.permute.xlu0 %4132
    %v4135 = vmul.f32 %v4126, %v4133
    %4137 = vrot.lane.b32.xlu0 %v4135, 64
    %v4138 = vpop.permute.xlu0 %4137
    %v4140 = vadd.f32 %v4130, %v4138
    %v4141 = vtanh.pop %v4140
    %4143 = vrot.lane.b32.xlu0 %v4141, 64
    %v4144 = vpop.permute.xlu0 %4143
    %v4146 = vmul.f32 %v4128, %v4144
    %v4147 = vmax.f32 %v4146, 0.0
    %4148 = vrot.lane.b32.xlu0 %v3207, 48
    %v4149 = vpop.permute.xlu0 %4148
    %v4150 = vsel %vm2657, %v4149, 0
    %4152 = vmatprep.subr.mxu0 %v3209
    %4153 = vmatpush1.msra.mxu0 %v3208
    %4154 = vmatprep.subr.mxu0 %v3211
    %4155 = vmatpush1.msra.mxu0 %v3210
    %4156 = vmatprep.subr.mxu0 0.0
    %4157 = vmatpush1.msra.mxu0 0.0
    %4158 = vmatprep.subr.mxu0 0.0
    %4159 = vmatpush1.msra.mxu0 0.0
    %4160 = vmatprep.subr.mxu0 0.0
    %4161 = vmatpush1.msra.mxu0 0.0
    %4162 = vmatprep.subr.mxu0 0.0
    %4163 = vmatpush1.msra.mxu0 0.0
    %4164 = vmatprep.subr.mxu0 0.0
    %4165 = vmatpush1.msra.mxu0 0.0
    %4166 = vmatprep.subr.mxu0 0.0
    %4167 = vmatpush1.msra.mxu0 0.0
    %4168 = vmatprep.subr.mxu0 0.0
    %4169 = vmatpush1.msra.mxu0 0.0
    %4170 = vmatprep.subr.mxu0 0.0
    %4171 = vmatpush1.msra.mxu0 0.0
    %4172 = vmatprep.subr.mxu0 0.0
    %4173 = vmatpush1.msra.mxu0 0.0
    %4174 = vmatprep.subr.mxu0 0.0
    %4175 = vmatpush1.msra.mxu0 0.0
    %4176 = vmatprep.subr.mxu0 0.0
    %4177 = vmatpush1.msra.mxu0 0.0
    %4178 = vmatprep.subr.mxu0 0.0
    %4179 = vmatpush1.msra.mxu0 0.0
    %4180 = vmatprep.subr.mxu0 0.0
    %4181 = vmatpush1.msra.mxu0 0.0
    %4182 = vmatprep.subr.mxu0 0.0
    %4183 = vmatpush1.msra.mxu0 0.0
    %4184 = vmatprep.subr.mxu0 0.0
    %4185 = vmatpush1.msra.mxu0 0.0
    %4186 = vmatprep.subr.mxu0 0.0
    %4187 = vmatpush1.msra.mxu0 0.0
    %4188 = vmatprep.subr.mxu0 0.0
    %4189 = vmatpush1.msra.mxu0 0.0
    %4190 = vmatprep.subr.mxu0 0.0
    %4191 = vmatpush1.msra.mxu0 0.0
    %4192 = vmatprep.subr.mxu0 0.0
    %4193 = vmatpush1.msra.mxu0 0.0
    %4194 = vmatprep.subr.mxu0 0.0
    %4195 = vmatpush1.msra.mxu0 0.0
    %4196 = vmatprep.subr.mxu0 0.0
    %4197 = vmatpush1.msra.mxu0 0.0
    %4198 = vmatprep.subr.mxu0 0.0
    %4199 = vmatpush1.msra.mxu0 0.0
    %4200 = vmatprep.subr.mxu0 0.0
    %4201 = vmatpush1.msra.mxu0 0.0
    %4202 = vmatprep.subr.mxu0 0.0
    %4203 = vmatpush1.msra.mxu0 0.0
    %4204 = vmatprep.subr.mxu0 0.0
    %4205 = vmatpush1.msra.mxu0 0.0
    %4206 = vmatprep.subr.mxu0 0.0
    %4207 = vmatpush1.msra.mxu0 0.0
    %4208 = vmatprep.subr.mxu0 0.0
    %4209 = vmatpush1.msra.mxu0 0.0
    %4210 = vmatprep.subr.mxu0 0.0
    %4211 = vmatpush1.msra.mxu0 0.0
    %4212 = vmatprep.subr.mxu0 0.0
    %4213 = vmatpush1.msra.mxu0 0.0
    %4214 = vmatprep.subr.mxu0 0.0
    %4215 = vmatpush1.msra.mxu0 0.0
    %4216 = vmatprep.mubr.f32.mxu0 0.0
    %4217 = vmatmul.mubr.f32.gmra.mrb[0].mxu0 %v4150
    %v4218 = vpop.f32.mrb[0].mxu0
    %v4219 = vadd.f32 %v3233, %v4218
    %v4220 = vpop.f32.mrb[0].mxu0
    %v4221 = vadd.f32 %v3237, %v4220
    %4222 = vdwg.mxu0
    %v4224 = vsel %vm2662, %v4146, 0
    %4226 = vmatprep.subr.mxu0 %v3213
    %4227 = vmatpush1.msra.mxu0 %v3212
    %4228 = vmatprep.subr.mxu0 %v3215
    %4229 = vmatpush1.msra.mxu0 %v3214
    %4230 = vmatprep.subr.mxu0 %v3217
    %4231 = vmatpush1.msra.mxu0 %v3216
    %4232 = vmatprep.subr.mxu0 %v3219
    %4233 = vmatpush1.msra.mxu0 %v3218
    %4234 = vmatprep.subr.mxu0 %v3221
    %4235 = vmatpush1.msra.mxu0 %v3220
    %4236 = vmatprep.subr.mxu0 %v3223
    %4237 = vmatpush1.msra.mxu0 %v3222
    %4238 = vmatprep.subr.mxu0 %v3225
    %4239 = vmatpush1.msra.mxu0 %v3224
    %4240 = vmatprep.subr.mxu0 %v3227
    %4241 = vmatpush1.msra.mxu0 %v3226
    %4242 = vmatprep.subr.mxu0 0.0
    %4243 = vmatpush1.msra.mxu0 0.0
    %4244 = vmatprep.subr.mxu0 0.0
    %4245 = vmatpush1.msra.mxu0 0.0
    %4246 = vmatprep.subr.mxu0 0.0
    %4247 = vmatpush1.msra.mxu0 0.0
    %4248 = vmatprep.subr.mxu0 0.0
    %4249 = vmatpush1.msra.mxu0 0.0
    %4250 = vmatprep.subr.mxu0 0.0
    %4251 = vmatpush1.msra.mxu0 0.0
    %4252 = vmatprep.subr.mxu0 0.0
    %4253 = vmatpush1.msra.mxu0 0.0
    %4254 = vmatprep.subr.mxu0 0.0
    %4255 = vmatpush1.msra.mxu0 0.0
    %4256 = vmatprep.subr.mxu0 0.0
    %4257 = vmatpush1.msra.mxu0 0.0
    %4258 = vmatprep.subr.mxu0 0.0
    %4259 = vmatpush1.msra.mxu0 0.0
    %4260 = vmatprep.subr.mxu0 0.0
    %4261 = vmatpush1.msra.mxu0 0.0
    %4262 = vmatprep.subr.mxu0 0.0
    %4263 = vmatpush1.msra.mxu0 0.0
    %4264 = vmatprep.subr.mxu0 0.0
    %4265 = vmatpush1.msra.mxu0 0.0
    %4266 = vmatprep.subr.mxu0 0.0
    %4267 = vmatpush1.msra.mxu0 0.0
    %4268 = vmatprep.subr.mxu0 0.0
    %4269 = vmatpush1.msra.mxu0 0.0
    %4270 = vmatprep.subr.mxu0 0.0
    %4271 = vmatpush1.msra.mxu0 0.0
    %4272 = vmatprep.subr.mxu0 0.0
    %4273 = vmatpush1.msra.mxu0 0.0
    %4274 = vmatprep.subr.mxu0 0.0
    %4275 = vmatpush1.msra.mxu0 0.0
    %4276 = vmatprep.subr.mxu0 0.0
    %4277 = vmatpush1.msra.mxu0 0.0
    %4278 = vmatprep.subr.mxu0 0.0
    %4279 = vmatpush1.msra.mxu0 0.0
    %4280 = vmatprep.subr.mxu0 0.0
    %4281 = vmatpush1.msra.mxu0 0.0
    %4282 = vmatprep.subr.mxu0 0.0
    %4283 = vmatpush1.msra.mxu0 0.0
    %4284 = vmatprep.subr.mxu0 0.0
    %4285 = vmatpush1.msra.mxu0 0.0
    %4286 = vmatprep.subr.mxu0 0.0
    %4287 = vmatpush1.msra.mxu0 0.0
    %4288 = vmatprep.subr.mxu0 0.0
    %4289 = vmatpush1.msra.mxu0 0.0
    %4290 = vmatprep.mubr.f32.mxu0 0.0
    %4291 = vmatmul.mubr.f32.gmra.mrb[0].mxu0 %v4224
    %v4292 = vpop.f32.mrb[0].mxu0
    %v4293 = vadd.f32 0.0, %v4292
    %v4294 = vpop.f32.mrb[0].mxu0
    %v4295 = vadd.f32 0.0, %v4294
    %4296 = vdwg.mxu0
    %v4297 = vadd.f32 %v4219, %v4293
    %v4298 = vadd.f32 %v4221, %v4295
    %v4299 = vxor.u32 %v4297, 2147483648
    %v4300 = vxor.u32 %v4298, 2147483648
    %v4301 = vmul.f32 %v4299, 1.442695
    %v4302 = vpow.pop %v4301
    %v4303 = vmul.f32 %v4300, 1.442695
    %v4304 = vpow.pop %v4303
    %v4305 = vadd.f32 %v4302, 1.0
    %v4306 = vadd.f32 %v4304, 1.0
    %v4307 = vrcp.pop %v4305
    %v4308 = vmul.f32 1.0, %v4307
    %v4309 = vrcp.pop %v4306
    %v4310 = vmul.f32 1.0, %v4309
    %v4311 = vtanh.pop %v4298
    %v4312 = vmul.f32 %v4308, %v4140
    %4314 = vrot.lane.b32.xlu0 %v4311, 64
    %v4315 = vpop.permute.xlu0 %4314
    %v4317 = vmul.f32 %v4308, %v4315
    %4319 = vrot.lane.b32.xlu0 %v4317, 64
    %v4320 = vpop.permute.xlu0 %4319
    %v4322 = vadd.f32 %v4312, %v4320
    %v4323 = vtanh.pop %v4322
    %4325 = vrot.lane.b32.xlu0 %v4323, 64
    %v4326 = vpop.permute.xlu0 %4325
    %v4328 = vmul.f32 %v4310, %v4326
    %v4329 = vmax.f32 %v4328, 0.0
    %4330 = vrot.lane.b32.xlu0 %v3207, 32
    %v4331 = vpop.permute.xlu0 %4330
    %v4332 = vsel %vm2657, %v4331, 0
    %4334 = vmatprep.subr.mxu0 %v3209
    %4335 = vmatpush1.msra.mxu0 %v3208
    %4336 = vmatprep.subr.mxu0 %v3211
    %4337 = vmatpush1.msra.mxu0 %v3210
    %4338 = vmatprep.subr.mxu0 0.0
    %4339 = vmatpush1.msra.mxu0 0.0
    %4340 = vmatprep.subr.mxu0 0.0
    %4341 = vmatpush1.msra.mxu0 0.0
    %4342 = vmatprep.subr.mxu0 0.0
    %4343 = vmatpush1.msra.mxu0 0.0
    %4344 = vmatprep.subr.mxu0 0.0
    %4345 = vmatpush1.msra.mxu0 0.0
    %4346 = vmatprep.subr.mxu0 0.0
    %4347 = vmatpush1.msra.mxu0 0.0
    %4348 = vmatprep.subr.mxu0 0.0
    %4349 = vmatpush1.msra.mxu0 0.0
    %4350 = vmatprep.subr.mxu0 0.0
    %4351 = vmatpush1.msra.mxu0 0.0
    %4352 = vmatprep.subr.mxu0 0.0
    %4353 = vmatpush1.msra.mxu0 0.0
    %4354 = vmatprep.subr.mxu0 0.0
    %4355 = vmatpush1.msra.mxu0 0.0
    %4356 = vmatprep.subr.mxu0 0.0
    %4357 = vmatpush1.msra.mxu0 0.0
    %4358 = vmatprep.subr.mxu0 0.0
    %4359 = vmatpush1.msra.mxu0 0.0
    %4360 = vmatprep.subr.mxu0 0.0
    %4361 = vmatpush1.msra.mxu0 0.0
    %4362 = vmatprep.subr.mxu0 0.0
    %4363 = vmatpush1.msra.mxu0 0.0
    %4364 = vmatprep.subr.mxu0 0.0
    %4365 = vmatpush1.msra.mxu0 0.0
    %4366 = vmatprep.subr.mxu0 0.0
    %4367 = vmatpush1.msra.mxu0 0.0
    %4368 = vmatprep.subr.mxu0 0.0
    %4369 = vmatpush1.msra.mxu0 0.0
    %4370 = vmatprep.subr.mxu0 0.0
    %4371 = vmatpush1.msra.mxu0 0.0
    %4372 = vmatprep.subr.mxu0 0.0
    %4373 = vmatpush1.msra.mxu0 0.0
    %4374 = vmatprep.subr.mxu0 0.0
    %4375 = vmatpush1.msra.mxu0 0.0
    %4376 = vmatprep.subr.mxu0 0.0
    %4377 = vmatpush1.msra.mxu0 0.0
    %4378 = vmatprep.subr.mxu0 0.0
    %4379 = vmatpush1.msra.mxu0 0.0
    %4380 = vmatprep.subr.mxu0 0.0
    %4381 = vmatpush1.msra.mxu0 0.0
    %4382 = vmatprep.subr.mxu0 0.0
    %4383 = vmatpush1.msra.mxu0 0.0
    %4384 = vmatprep.subr.mxu0 0.0
    %4385 = vmatpush1.msra.mxu0 0.0
    %4386 = vmatprep.subr.mxu0 0.0
    %4387 = vmatpush1.msra.mxu0 0.0
    %4388 = vmatprep.subr.mxu0 0.0
    %4389 = vmatpush1.msra.mxu0 0.0
    %4390 = vmatprep.subr.mxu0 0.0
    %4391 = vmatpush1.msra.mxu0 0.0
    %4392 = vmatprep.subr.mxu0 0.0
    %4393 = vmatpush1.msra.mxu0 0.0
    %4394 = vmatprep.subr.mxu0 0.0
    %4395 = vmatpush1.msra.mxu0 0.0
    %4396 = vmatprep.subr.mxu0 0.0
    %4397 = vmatpush1.msra.mxu0 0.0
    %4398 = vmatprep.mubr.f32.mxu0 0.0
    %4399 = vmatmul.mubr.f32.gmra.mrb[0].mxu0 %v4332
    %v4400 = vpop.f32.mrb[0].mxu0
    %v4401 = vadd.f32 %v3233, %v4400
    %v4402 = vpop.f32.mrb[0].mxu0
    %v4403 = vadd.f32 %v3237, %v4402
    %4404 = vdwg.mxu0
    %v4406 = vsel %vm2662, %v4328, 0
    %4408 = vmatprep.subr.mxu0 %v3213
    %4409 = vmatpush1.msra.mxu0 %v3212
    %4410 = vmatprep.subr.mxu0 %v3215
    %4411 = vmatpush1.msra.mxu0 %v3214
    %4412 = vmatprep.subr.mxu0 %v3217
    %4413 = vmatpush1.msra.mxu0 %v3216
    %4414 = vmatprep.subr.mxu0 %v3219
    %4415 = vmatpush1.msra.mxu0 %v3218
    %4416 = vmatprep.subr.mxu0 %v3221
    %4417 = vmatpush1.msra.mxu0 %v3220
    %4418 = vmatprep.subr.mxu0 %v3223
    %4419 = vmatpush1.msra.mxu0 %v3222
    %4420 = vmatprep.subr.mxu0 %v3225
    %4421 = vmatpush1.msra.mxu0 %v3224
    %4422 = vmatprep.subr.mxu0 %v3227
    %4423 = vmatpush1.msra.mxu0 %v3226
    %4424 = vmatprep.subr.mxu0 0.0
    %4425 = vmatpush1.msra.mxu0 0.0
    %4426 = vmatprep.subr.mxu0 0.0
    %4427 = vmatpush1.msra.mxu0 0.0
    %4428 = vmatprep.subr.mxu0 0.0
    %4429 = vmatpush1.msra.mxu0 0.0
    %4430 = vmatprep.subr.mxu0 0.0
    %4431 = vmatpush1.msra.mxu0 0.0
    %4432 = vmatprep.subr.mxu0 0.0
    %4433 = vmatpush1.msra.mxu0 0.0
    %4434 = vmatprep.subr.mxu0 0.0
    %4435 = vmatpush1.msra.mxu0 0.0
    %4436 = vmatprep.subr.mxu0 0.0
    %4437 = vmatpush1.msra.mxu0 0.0
    %4438 = vmatprep.subr.mxu0 0.0
    %4439 = vmatpush1.msra.mxu0 0.0
    %4440 = vmatprep.subr.mxu0 0.0
    %4441 = vmatpush1.msra.mxu0 0.0
    %4442 = vmatprep.subr.mxu0 0.0
    %4443 = vmatpush1.msra.mxu0 0.0
    %4444 = vmatprep.subr.mxu0 0.0
    %4445 = vmatpush1.msra.mxu0 0.0
    %4446 = vmatprep.subr.mxu0 0.0
    %4447 = vmatpush1.msra.mxu0 0.0
    %4448 = vmatprep.subr.mxu0 0.0
    %4449 = vmatpush1.msra.mxu0 0.0
    %4450 = vmatprep.subr.mxu0 0.0
    %4451 = vmatpush1.msra.mxu0 0.0
    %4452 = vmatprep.subr.mxu0 0.0
    %4453 = vmatpush1.msra.mxu0 0.0
    %4454 = vmatprep.subr.mxu0 0.0
    %4455 = vmatpush1.msra.mxu0 0.0
    %4456 = vmatprep.subr.mxu0 0.0
    %4457 = vmatpush1.msra.mxu0 0.0
    %4458 = vmatprep.subr.mxu0 0.0
    %4459 = vmatpush1.msra.mxu0 0.0
    %4460 = vmatprep.subr.mxu0 0.0
    %4461 = vmatpush1.msra.mxu0 0.0
    %4462 = vmatprep.subr.mxu0 0.0
    %4463 = vmatpush1.msra.mxu0 0.0
    %4464 = vmatprep.subr.mxu0 0.0
    %4465 = vmatpush1.msra.mxu0 0.0
    %4466 = vmatprep.subr.mxu0 0.0
    %4467 = vmatpush1.msra.mxu0 0.0
    %4468 = vmatprep.subr.mxu0 0.0
    %4469 = vmatpush1.msra.mxu0 0.0
    %4470 = vmatprep.subr.mxu0 0.0
    %4471 = vmatpush1.msra.mxu0 0.0
    %4472 = vmatprep.mubr.f32.mxu0 0.0
    %4473 = vmatmul.mubr.f32.gmra.mrb[0].mxu0 %v4406
    %v4474 = vpop.f32.mrb[0].mxu0
    %v4475 = vadd.f32 0.0, %v4474
    %v4476 = vpop.f32.mrb[0].mxu0
    %v4477 = vadd.f32 0.0, %v4476
    %4478 = vdwg.mxu0
    %v4479 = vadd.f32 %v4401, %v4475
    %v4480 = vadd.f32 %v4403, %v4477
    %v4481 = vxor.u32 %v4479, 2147483648
    %v4482 = vxor.u32 %v4480, 2147483648
    %v4483 = vmul.f32 %v4481, 1.442695
    %v4484 = vpow.pop %v4483
    %v4485 = vmul.f32 %v4482, 1.442695
    %v4486 = vpow.pop %v4485
    %v4487 = vadd.f32 %v4484, 1.0
    %v4488 = vadd.f32 %v4486, 1.0
    %v4489 = vrcp.pop %v4487
    %v4490 = vmul.f32 1.0, %v4489
    %v4491 = vrcp.pop %v4488
    %v4492 = vmul.f32 1.0, %v4491
    %v4493 = vtanh.pop %v4480
    %v4494 = vmul.f32 %v4490, %v4322
    %4496 = vrot.lane.b32.xlu0 %v4493, 64
    %v4497 = vpop.permute.xlu0 %4496
    %v4499 = vmul.f32 %v4490, %v4497
    %4501 = vrot.lane.b32.xlu0 %v4499, 64
    %v4502 = vpop.permute.xlu0 %4501
    %v4504 = vadd.f32 %v4494, %v4502
    %v4505 = vtanh.pop %v4504
    %4507 = vrot.lane.b32.xlu0 %v4505, 64
    %v4508 = vpop.permute.xlu0 %4507
    %v4510 = vmul.f32 %v4492, %v4508
    %v4511 = vmax.f32 %v4510, 0.0
    %4512 = vrot.lane.b32.xlu0 %v3207, 16
    %v4513 = vpop.permute.xlu0 %4512
    %v4514 = vsel %vm2657, %v4513, 0
    %4516 = vmatprep.subr.mxu0 %v3209
    %4517 = vmatpush1.msra.mxu0 %v3208
    %4518 = vmatprep.subr.mxu0 %v3211
    %4519 = vmatpush1.msra.mxu0 %v3210
    %4520 = vmatprep.subr.mxu0 0.0
    %4521 = vmatpush1.msra.mxu0 0.0
    %4522 = vmatprep.subr.mxu0 0.0
    %4523 = vmatpush1.msra.mxu0 0.0
    %4524 = vmatprep.subr.mxu0 0.0
    %4525 = vmatpush1.msra.mxu0 0.0
    %4526 = vmatprep.subr.mxu0 0.0
    %4527 = vmatpush1.msra.mxu0 0.0
    %4528 = vmatprep.subr.mxu0 0.0
    %4529 = vmatpush1.msra.mxu0 0.0
    %4530 = vmatprep.subr.mxu0 0.0
    %4531 = vmatpush1.msra.mxu0 0.0
    %4532 = vmatprep.subr.mxu0 0.0
    %4533 = vmatpush1.msra.mxu0 0.0
    %4534 = vmatprep.subr.mxu0 0.0
    %4535 = vmatpush1.msra.mxu0 0.0
    %4536 = vmatprep.subr.mxu0 0.0
    %4537 = vmatpush1.msra.mxu0 0.0
    %4538 = vmatprep.subr.mxu0 0.0
    %4539 = vmatpush1.msra.mxu0 0.0
    %4540 = vmatprep.subr.mxu0 0.0
    %4541 = vmatpush1.msra.mxu0 0.0
    %4542 = vmatprep.subr.mxu0 0.0
    %4543 = vmatpush1.msra.mxu0 0.0
    %4544 = vmatprep.subr.mxu0 0.0
    %4545 = vmatpush1.msra.mxu0 0.0
    %4546 = vmatprep.subr.mxu0 0.0
    %4547 = vmatpush1.msra.mxu0 0.0
    %4548 = vmatprep.subr.mxu0 0.0
    %4549 = vmatpush1.msra.mxu0 0.0
    %4550 = vmatprep.subr.mxu0 0.0
    %4551 = vmatpush1.msra.mxu0 0.0
    %4552 = vmatprep.subr.mxu0 0.0
    %4553 = vmatpush1.msra.mxu0 0.0
    %4554 = vmatprep.subr.mxu0 0.0
    %4555 = vmatpush1.msra.mxu0 0.0
    %4556 = vmatprep.subr.mxu0 0.0
    %4557 = vmatpush1.msra.mxu0 0.0
    %4558 = vmatprep.subr.mxu0 0.0
    %4559 = vmatpush1.msra.mxu0 0.0
    %4560 = vmatprep.subr.mxu0 0.0
    %4561 = vmatpush1.msra.mxu0 0.0
    %4562 = vmatprep.subr.mxu0 0.0
    %4563 = vmatpush1.msra.mxu0 0.0
    %4564 = vmatprep.subr.mxu0 0.0
    %4565 = vmatpush1.msra.mxu0 0.0
    %4566 = vmatprep.subr.mxu0 0.0
    %4567 = vmatpush1.msra.mxu0 0.0
    %4568 = vmatprep.subr.mxu0 0.0
    %4569 = vmatpush1.msra.mxu0 0.0
    %4570 = vmatprep.subr.mxu0 0.0
    %4571 = vmatpush1.msra.mxu0 0.0
    %4572 = vmatprep.subr.mxu0 0.0
    %4573 = vmatpush1.msra.mxu0 0.0
    %4574 = vmatprep.subr.mxu0 0.0
    %4575 = vmatpush1.msra.mxu0 0.0
    %4576 = vmatprep.subr.mxu0 0.0
    %4577 = vmatpush1.msra.mxu0 0.0
    %4578 = vmatprep.subr.mxu0 0.0
    %4579 = vmatpush1.msra.mxu0 0.0
    %4580 = vmatprep.mubr.f32.mxu0 0.0
    %4581 = vmatmul.mubr.f32.gmra.mrb[0].mxu0 %v4514
    %v4582 = vpop.f32.mrb[0].mxu0
    %v4583 = vadd.f32 %v3233, %v4582
    %v4584 = vpop.f32.mrb[0].mxu0
    %v4585 = vadd.f32 %v3237, %v4584
    %4586 = vdwg.mxu0
    %v4588 = vsel %vm2662, %v4510, 0
    %4590 = vmatprep.subr.mxu0 %v3213
    %4591 = vmatpush1.msra.mxu0 %v3212
    %4592 = vmatprep.subr.mxu0 %v3215
    %4593 = vmatpush1.msra.mxu0 %v3214
    %4594 = vmatprep.subr.mxu0 %v3217
    %4595 = vmatpush1.msra.mxu0 %v3216
    %4596 = vmatprep.subr.mxu0 %v3219
    %4597 = vmatpush1.msra.mxu0 %v3218
    %4598 = vmatprep.subr.mxu0 %v3221
    %4599 = vmatpush1.msra.mxu0 %v3220
    %4600 = vmatprep.subr.mxu0 %v3223
    %4601 = vmatpush1.msra.mxu0 %v3222
    %4602 = vmatprep.subr.mxu0 %v3225
    %4603 = vmatpush1.msra.mxu0 %v3224
    %4604 = vmatprep.subr.mxu0 %v3227
    %4605 = vmatpush1.msra.mxu0 %v3226
    %4606 = vmatprep.subr.mxu0 0.0
    %4607 = vmatpush1.msra.mxu0 0.0
    %4608 = vmatprep.subr.mxu0 0.0
    %4609 = vmatpush1.msra.mxu0 0.0
    %4610 = vmatprep.subr.mxu0 0.0
    %4611 = vmatpush1.msra.mxu0 0.0
    %4612 = vmatprep.subr.mxu0 0.0
    %4613 = vmatpush1.msra.mxu0 0.0
    %4614 = vmatprep.subr.mxu0 0.0
    %4615 = vmatpush1.msra.mxu0 0.0
    %4616 = vmatprep.subr.mxu0 0.0
    %4617 = vmatpush1.msra.mxu0 0.0
    %4618 = vmatprep.subr.mxu0 0.0
    %4619 = vmatpush1.msra.mxu0 0.0
    %4620 = vmatprep.subr.mxu0 0.0
    %4621 = vmatpush1.msra.mxu0 0.0
    %4622 = vmatprep.subr.mxu0 0.0
    %4623 = vmatpush1.msra.mxu0 0.0
    %4624 = vmatprep.subr.mxu0 0.0
    %4625 = vmatpush1.msra.mxu0 0.0
    %4626 = vmatprep.subr.mxu0 0.0
    %4627 = vmatpush1.msra.mxu0 0.0
    %4628 = vmatprep.subr.mxu0 0.0
    %4629 = vmatpush1.msra.mxu0 0.0
    %4630 = vmatprep.subr.mxu0 0.0
    %4631 = vmatpush1.msra.mxu0 0.0
    %4632 = vmatprep.subr.mxu0 0.0
    %4633 = vmatpush1.msra.mxu0 0.0
    %4634 = vmatprep.subr.mxu0 0.0
    %4635 = vmatpush1.msra.mxu0 0.0
    %4636 = vmatprep.subr.mxu0 0.0
    %4637 = vmatpush1.msra.mxu0 0.0
    %4638 = vmatprep.subr.mxu0 0.0
    %4639 = vmatpush1.msra.mxu0 0.0
    %4640 = vmatprep.subr.mxu0 0.0
    %4641 = vmatpush1.msra.mxu0 0.0
    %4642 = vmatprep.subr.mxu0 0.0
    %4643 = vmatpush1.msra.mxu0 0.0
    %4644 = vmatprep.subr.mxu0 0.0
    %4645 = vmatpush1.msra.mxu0 0.0
    %4646 = vmatprep.subr.mxu0 0.0
    %4647 = vmatpush1.msra.mxu0 0.0
    %4648 = vmatprep.subr.mxu0 0.0
    %4649 = vmatpush1.msra.mxu0 0.0
    %4650 = vmatprep.subr.mxu0 0.0
    %4651 = vmatpush1.msra.mxu0 0.0
    %4652 = vmatprep.subr.mxu0 0.0
    %4653 = vmatpush1.msra.mxu0 0.0
    %4654 = vmatprep.mubr.f32.mxu0 0.0
    %4655 = vmatmul.mubr.f32.gmra.mrb[0].mxu0 %v4588
    %v4656 = vpop.f32.mrb[0].mxu0
    %v4657 = vadd.f32 0.0, %v4656
    %v4658 = vpop.f32.mrb[0].mxu0
    %v4659 = vadd.f32 0.0, %v4658
    %4660 = vdwg.mxu0
    %v4661 = vadd.f32 %v4583, %v4657
    %v4662 = vadd.f32 %v4585, %v4659
    %v4663 = vxor.u32 %v4661, 2147483648
    %v4664 = vxor.u32 %v4662, 2147483648
    %v4665 = vmul.f32 %v4663, 1.442695
    %v4666 = vpow.pop %v4665
    %v4667 = vmul.f32 %v4664, 1.442695
    %v4668 = vpow.pop %v4667
    %v4669 = vadd.f32 %v4666, 1.0
    %v4670 = vadd.f32 %v4668, 1.0
    %v4671 = vrcp.pop %v4669
    %v4672 = vmul.f32 1.0, %v4671
    %v4673 = vrcp.pop %v4670
    %v4674 = vmul.f32 1.0, %v4673
    %v4675 = vtanh.pop %v4662
    %v4676 = vmul.f32 %v4672, %v4504
    %4678 = vrot.lane.b32.xlu0 %v4675, 64
    %v4679 = vpop.permute.xlu0 %4678
    %v4681 = vmul.f32 %v4672, %v4679
    %4683 = vrot.lane.b32.xlu0 %v4681, 64
    %v4684 = vpop.permute.xlu0 %4683
    %v4686 = vadd.f32 %v4676, %v4684
    %v4687 = vtanh.pop %v4686
    %4689 = vrot.lane.b32.xlu0 %v4687, 64
    %v4690 = vpop.permute.xlu0 %4689
    %v4692 = vmul.f32 %v4674, %v4690
    %v4693 = vmax.f32 %v4692, 0.0
    %v4694 = vld [vmem:[%s18] sm:$0xff]
    %v4695 = vld [vmem:[%s18 + $0x8] sm:$0xff]
    %v4696 = vld [vmem:[%s18 + $0x10] sm:$0xff]
    %v4697 = vld [vmem:[%s18 + $0x18] sm:$0xff]
    %v4698 = vld [vmem:[%s18 + $0x20] sm:$0xff]
    %v4699 = vld [vmem:[%s18 + $0x28] sm:$0xff]
    %v4700 = vld [vmem:[%s18 + $0x30] sm:$0xff]
    %v4701 = vld [vmem:[%s18 + $0x38] sm:$0xff]
    %v4702 = vld [vmem:[#allocation25] sm:$0xff]
    %v4703 = vld [vmem:[#allocation25 + $0x8] sm:$0xff]
    %v4704 = vld [vmem:[#allocation26] sm:$0x1]
    %v4706 = vlaneseq
    %v4707 = vshrl.u32 %v4706, 7
    %v4708 = vsub.s32 0, %v4707
    %v4709 = vrot.slane %v4704, %v4708
    %v4712 = vsel %vm2662, %v3419, 0
    %4714 = vmatprep.subr.mxu0 0.0
    %4715 = vmatpush1.msra.mxu0 %v4694
    %4716 = vmatprep.subr.mxu0 0.0
    %4717 = vmatpush1.msra.mxu0 %v4695
    %4718 = vmatprep.subr.mxu0 0.0
    %4719 = vmatpush1.msra.mxu0 %v4696
    %4720 = vmatprep.subr.mxu0 0.0
    %4721 = vmatpush1.msra.mxu0 %v4697
    %4722 = vmatprep.subr.mxu0 0.0
    %4723 = vmatpush1.msra.mxu0 %v4698
    %4724 = vmatprep.subr.mxu0 0.0
    %4725 = vmatpush1.msra.mxu0 %v4699
    %4726 = vmatprep.subr.mxu0 0.0
    %4727 = vmatpush1.msra.mxu0 %v4700
    %4728 = vmatprep.subr.mxu0 0.0
    %4729 = vmatpush1.msra.mxu0 %v4701
    %4730 = vmatprep.subr.mxu0 0.0
    %4731 = vmatpush1.msra.mxu0 0.0
    %4732 = vmatprep.subr.mxu0 0.0
    %4733 = vmatpush1.msra.mxu0 0.0
    %4734 = vmatprep.subr.mxu0 0.0
    %4735 = vmatpush1.msra.mxu0 0.0
    %4736 = vmatprep.subr.mxu0 0.0
    %4737 = vmatpush1.msra.mxu0 0.0
    %4738 = vmatprep.subr.mxu0 0.0
    %4739 = vmatpush1.msra.mxu0 0.0
    %4740 = vmatprep.subr.mxu0 0.0
    %4741 = vmatpush1.msra.mxu0 0.0
    %4742 = vmatprep.subr.mxu0 0.0
    %4743 = vmatpush1.msra.mxu0 0.0
    %4744 = vmatprep.subr.mxu0 0.0
    %4745 = vmatpush1.msra.mxu0 0.0
    %4746 = vmatprep.subr.mxu0 0.0
    %4747 = vmatpush1.msra.mxu0 0.0
    %4748 = vmatprep.subr.mxu0 0.0
    %4749 = vmatpush1.msra.mxu0 0.0
    %4750 = vmatprep.subr.mxu0 0.0
    %4751 = vmatpush1.msra.mxu0 0.0
    %4752 = vmatprep.subr.mxu0 0.0
    %4753 = vmatpush1.msra.mxu0 0.0
    %4754 = vmatprep.subr.mxu0 0.0
    %4755 = vmatpush1.msra.mxu0 0.0
    %4756 = vmatprep.subr.mxu0 0.0
    %4757 = vmatpush1.msra.mxu0 0.0
    %4758 = vmatprep.subr.mxu0 0.0
    %4759 = vmatpush1.msra.mxu0 0.0
    %4760 = vmatprep.subr.mxu0 0.0
    %4761 = vmatpush1.msra.mxu0 0.0
    %4762 = vmatprep.subr.mxu0 0.0
    %4763 = vmatpush1.msra.mxu0 0.0
    %4764 = vmatprep.subr.mxu0 0.0
    %4765 = vmatpush1.msra.mxu0 0.0
    %4766 = vmatprep.subr.mxu0 0.0
    %4767 = vmatpush1.msra.mxu0 0.0
    %4768 = vmatprep.subr.mxu0 0.0
    %4769 = vmatpush1.msra.mxu0 0.0
    %4770 = vmatprep.subr.mxu0 0.0
    %4771 = vmatpush1.msra.mxu0 0.0
    %4772 = vmatprep.subr.mxu0 0.0
    %4773 = vmatpush1.msra.mxu0 0.0
    %4774 = vmatprep.subr.mxu0 0.0
    %4775 = vmatpush1.msra.mxu0 0.0
    %4776 = vmatprep.subr.mxu0 0.0
    %4777 = vmatpush1.msra.mxu0 0.0
    %4778 = vmatprep.mubr.f32.mxu0 0.0
    %4779 = vmatmul.mubr.f32.gmra.mrb[0].mxu0 %v4712
    %v4780 = vpop.f32.mrb[0].mxu0
    %v4781 = vadd.f32 %v4709, %v4780
    %v4782 = vpop.f32.mrb[0].mxu0
    %4783 = vdwg.mxu0
    %v4784 = vsel %vm2657, 0.0, 0
    %4786 = vmatprep.subr.mxu0 0.0
    %4787 = vmatpush1.msra.mxu0 %v4702
    %4788 = vmatprep.subr.mxu0 0.0
    %4789 = vmatpush1.msra.mxu0 %v4703
    %4790 = vmatprep.subr.mxu0 0.0
    %4791 = vmatpush1.msra.mxu0 0.0
    %4792 = vmatprep.subr.mxu0 0.0
    %4793 = vmatpush1.msra.mxu0 0.0
    %4794 = vmatprep.subr.mxu0 0.0
    %4795 = vmatpush1.msra.mxu0 0.0
    %4796 = vmatprep.subr.mxu0 0.0
    %4797 = vmatpush1.msra.mxu0 0.0
    %4798 = vmatprep.subr.mxu0 0.0
    %4799 = vmatpush1.msra.mxu0 0.0
    %4800 = vmatprep.subr.mxu0 0.0
    %4801 = vmatpush1.msra.mxu0 0.0
    %4802 = vmatprep.subr.mxu0 0.0
    %4803 = vmatpush1.msra.mxu0 0.0
    %4804 = vmatprep.subr.mxu0 0.0
    %4805 = vmatpush1.msra.mxu0 0.0
    %4806 = vmatprep.subr.mxu0 0.0
    %4807 = vmatpush1.msra.mxu0 0.0
    %4808 = vmatprep.subr.mxu0 0.0
    %4809 = vmatpush1.msra.mxu0 0.0
    %4810 = vmatprep.subr.mxu0 0.0
    %4811 = vmatpush1.msra.mxu0 0.0
    %4812 = vmatprep.subr.mxu0 0.0
    %4813 = vmatpush1.msra.mxu0 0.0
    %4814 = vmatprep.subr.mxu0 0.0
    %4815 = vmatpush1.msra.mxu0 0.0
    %4816 = vmatprep.subr.mxu0 0.0
    %4817 = vmatpush1.msra.mxu0 0.0
    %4818 = vmatprep.subr.mxu0 0.0
    %4819 = vmatpush1.msra.mxu0 0.0
    %4820 = vmatprep.subr.mxu0 0.0
    %4821 = vmatpush1.msra.mxu0 0.0
    %4822 = vmatprep.subr.mxu0 0.0
    %4823 = vmatpush1.msra.mxu0 0.0
    %4824 = vmatprep.subr.mxu0 0.0
    %4825 = vmatpush1.msra.mxu0 0.0
    %4826 = vmatprep.subr.mxu0 0.0
    %4827 = vmatpush1.msra.mxu0 0.0
    %4828 = vmatprep.subr.mxu0 0.0
    %4829 = vmatpush1.msra.mxu0 0.0
    %4830 = vmatprep.subr.mxu0 0.0
    %4831 = vmatpush1.msra.mxu0 0.0
    %4832 = vmatprep.subr.mxu0 0.0
    %4833 = vmatpush1.msra.mxu0 0.0
    %4834 = vmatprep.subr.mxu0 0.0
    %4835 = vmatpush1.msra.mxu0 0.0
    %4836 = vmatprep.subr.mxu0 0.0
    %4837 = vmatpush1.msra.mxu0 0.0
    %4838 = vmatprep.subr.mxu0 0.0
    %4839 = vmatpush1.msra.mxu0 0.0
    %4840 = vmatprep.subr.mxu0 0.0
    %4841 = vmatpush1.msra.mxu0 0.0
    %4842 = vmatprep.subr.mxu0 0.0
    %4843 = vmatpush1.msra.mxu0 0.0
    %4844 = vmatprep.subr.mxu0 0.0
    %4845 = vmatpush1.msra.mxu0 0.0
    %4846 = vmatprep.subr.mxu0 0.0
    %4847 = vmatpush1.msra.mxu0 0.0
    %4848 = vmatprep.subr.mxu0 0.0
    %4849 = vmatpush1.msra.mxu0 0.0
    %4850 = vmatprep.mubr.f32.mxu0 0.0
    %4851 = vmatmul.mubr.f32.gmra.mrb[0].mxu0 %v4784
    %v4852 = vpop.f32.mrb[0].mxu0
    %v4853 = vadd.f32 0.0, %v4852
    %v4854 = vpop.f32.mrb[0].mxu0
    %4855 = vdwg.mxu0
    %v4856 = vadd.f32 %v4781, %v4853
    %v4857 = vxor.u32 %v4856, 2147483648
    %v4858 = vmul.f32 %v4857, 1.442695
    %v4859 = vpow.pop %v4858
    %v4860 = vadd.f32 %v4859, 1.0
    %v4861 = vrcp.pop %v4860
    %v4862 = vmul.f32 1.0, %v4861
    %v4863 = vtanh.pop %v4856
    %v4864 = vmul.f32 %v4862, 0.0
    %4866 = vrot.lane.b32.xlu0 %v4863, 80
    %v4867 = vpop.permute.xlu0 %4866
    %v4869 = vmul.f32 %v4862, %v4867
    %4871 = vrot.lane.b32.xlu0 %v4869, 16
    %v4872 = vpop.permute.xlu0 %4871
    %v4874 = vadd.f32 %v4864, %v4872
    %v4875 = vtanh.pop %v4874
    %4877 = vrot.lane.b32.xlu0 %v4875, 16
    %v4878 = vpop.permute.xlu0 %4877
    %v4880 = vmul.f32 %v4862, %v4878
    %v4882 = vsel %vm2662, %v3601, 0
    %4884 = vmatprep.subr.mxu0 0.0
    %4885 = vmatpush1.msra.mxu0 %v4694
    %4886 = vmatprep.subr.mxu0 0.0
    %4887 = vmatpush1.msra.mxu0 %v4695
    %4888 = vmatprep.subr.mxu0 0.0
    %4889 = vmatpush1.msra.mxu0 %v4696
    %4890 = vmatprep.subr.mxu0 0.0
    %4891 = vmatpush1.msra.mxu0 %v4697
    %4892 = vmatprep.subr.mxu0 0.0
    %4893 = vmatpush1.msra.mxu0 %v4698
    %4894 = vmatprep.subr.mxu0 0.0
    %4895 = vmatpush1.msra.mxu0 %v4699
    %4896 = vmatprep.subr.mxu0 0.0
    %4897 = vmatpush1.msra.mxu0 %v4700
    %4898 = vmatprep.subr.mxu0 0.0
    %4899 = vmatpush1.msra.mxu0 %v4701
    %4900 = vmatprep.subr.mxu0 0.0
    %4901 = vmatpush1.msra.mxu0 0.0
    %4902 = vmatprep.subr.mxu0 0.0
    %4903 = vmatpush1.msra.mxu0 0.0
    %4904 = vmatprep.subr.mxu0 0.0
    %4905 = vmatpush1.msra.mxu0 0.0
    %4906 = vmatprep.subr.mxu0 0.0
    %4907 = vmatpush1.msra.mxu0 0.0
    %4908 = vmatprep.subr.mxu0 0.0
    %4909 = vmatpush1.msra.mxu0 0.0
    %4910 = vmatprep.subr.mxu0 0.0
    %4911 = vmatpush1.msra.mxu0 0.0
    %4912 = vmatprep.subr.mxu0 0.0
    %4913 = vmatpush1.msra.mxu0 0.0
    %4914 = vmatprep.subr.mxu0 0.0
    %4915 = vmatpush1.msra.mxu0 0.0
    %4916 = vmatprep.subr.mxu0 0.0
    %4917 = vmatpush1.msra.mxu0 0.0
    %4918 = vmatprep.subr.mxu0 0.0
    %4919 = vmatpush1.msra.mxu0 0.0
    %4920 = vmatprep.subr.mxu0 0.0
    %4921 = vmatpush1.msra.mxu0 0.0
    %4922 = vmatprep.subr.mxu0 0.0
    %4923 = vmatpush1.msra.mxu0 0.0
    %4924 = vmatprep.subr.mxu0 0.0
    %4925 = vmatpush1.msra.mxu0 0.0
    %4926 = vmatprep.subr.mxu0 0.0
    %4927 = vmatpush1.msra.mxu0 0.0
    %4928 = vmatprep.subr.mxu0 0.0
    %4929 = vmatpush1.msra.mxu0 0.0
    %4930 = vmatprep.subr.mxu0 0.0
    %4931 = vmatpush1.msra.mxu0 0.0
    %4932 = vmatprep.subr.mxu0 0.0
    %4933 = vmatpush1.msra.mxu0 0.0
    %4934 = vmatprep.subr.mxu0 0.0
    %4935 = vmatpush1.msra.mxu0 0.0
    %4936 = vmatprep.subr.mxu0 0.0
    %4937 = vmatpush1.msra.mxu0 0.0
    %4938 = vmatprep.subr.mxu0 0.0
    %4939 = vmatpush1.msra.mxu0 0.0
    %4940 = vmatprep.subr.mxu0 0.0
    %4941 = vmatpush1.msra.mxu0 0.0
    %4942 = vmatprep.subr.mxu0 0.0
    %4943 = vmatpush1.msra.mxu0 0.0
    %4944 = vmatprep.subr.mxu0 0.0
    %4945 = vmatpush1.msra.mxu0 0.0
    %4946 = vmatprep.subr.mxu0 0.0
    %4947 = vmatpush1.msra.mxu0 0.0
    %4948 = vmatprep.mubr.f32.mxu0 0.0
    %4949 = vmatmul.mubr.f32.gmra.mrb[0].mxu0 %v4882
    %v4950 = vpop.f32.mrb[0].mxu0
    %v4951 = vadd.f32 %v4709, %v4950
    %v4952 = vpop.f32.mrb[0].mxu0
    %4953 = vdwg.mxu0
    %4955 = vrot.lane.b32.xlu0 %v4880, 96
    %v4956 = vpop.permute.xlu0 %4955
    %v4957 = vsel %vm2657, %v4956, 0
    %4959 = vmatprep.subr.mxu0 0.0
    %4960 = vmatpush1.msra.mxu0 %v4702
    %4961 = vmatprep.subr.mxu0 0.0
    %4962 = vmatpush1.msra.mxu0 %v4703
    %4963 = vmatprep.subr.mxu0 0.0
    %4964 = vmatpush1.msra.mxu0 0.0
    %4965 = vmatprep.subr.mxu0 0.0
    %4966 = vmatpush1.msra.mxu0 0.0
    %4967 = vmatprep.subr.mxu0 0.0
    %4968 = vmatpush1.msra.mxu0 0.0
    %4969 = vmatprep.subr.mxu0 0.0
    %4970 = vmatpush1.msra.mxu0 0.0
    %4971 = vmatprep.subr.mxu0 0.0
    %4972 = vmatpush1.msra.mxu0 0.0
    %4973 = vmatprep.subr.mxu0 0.0
    %4974 = vmatpush1.msra.mxu0 0.0
    %4975 = vmatprep.subr.mxu0 0.0
    %4976 = vmatpush1.msra.mxu0 0.0
    %4977 = vmatprep.subr.mxu0 0.0
    %4978 = vmatpush1.msra.mxu0 0.0
    %4979 = vmatprep.subr.mxu0 0.0
    %4980 = vmatpush1.msra.mxu0 0.0
    %4981 = vmatprep.subr.mxu0 0.0
    %4982 = vmatpush1.msra.mxu0 0.0
    %4983 = vmatprep.subr.mxu0 0.0
    %4984 = vmatpush1.msra.mxu0 0.0
    %4985 = vmatprep.subr.mxu0 0.0
    %4986 = vmatpush1.msra.mxu0 0.0
    %4987 = vmatprep.subr.mxu0 0.0
    %4988 = vmatpush1.msra.mxu0 0.0
    %4989 = vmatprep.subr.mxu0 0.0
    %4990 = vmatpush1.msra.mxu0 0.0
    %4991 = vmatprep.subr.mxu0 0.0
    %4992 = vmatpush1.msra.mxu0 0.0
    %4993 = vmatprep.subr.mxu0 0.0
    %4994 = vmatpush1.msra.mxu0 0.0
    %4995 = vmatprep.subr.mxu0 0.0
    %4996 = vmatpush1.msra.mxu0 0.0
    %4997 = vmatprep.subr.mxu0 0.0
    %4998 = vmatpush1.msra.mxu0 0.0
    %4999 = vmatprep.subr.mxu0 0.0
    %5000 = vmatpush1.msra.mxu0 0.0
    %5001 = vmatprep.subr.mxu0 0.0
    %5002 = vmatpush1.msra.mxu0 0.0
    %5003 = vmatprep.subr.mxu0 0.0
    %5004 = vmatpush1.msra.mxu0 0.0
    %5005 = vmatprep.subr.mxu0 0.0
    %5006 = vmatpush1.msra.mxu0 0.0
    %5007 = vmatprep.subr.mxu0 0.0
    %5008 = vmatpush1.msra.mxu0 0.0
    %5009 = vmatprep.subr.mxu0 0.0
    %5010 = vmatpush1.msra.mxu0 0.0
    %5011 = vmatprep.subr.mxu0 0.0
    %5012 = vmatpush1.msra.mxu0 0.0
    %5013 = vmatprep.subr.mxu0 0.0
    %5014 = vmatpush1.msra.mxu0 0.0
    %5015 = vmatprep.subr.mxu0 0.0
    %5016 = vmatpush1.msra.mxu0 0.0
    %5017 = vmatprep.subr.mxu0 0.0
    %5018 = vmatpush1.msra.mxu0 0.0
    %5019 = vmatprep.subr.mxu0 0.0
    %5020 = vmatpush1.msra.mxu0 0.0
    %5021 = vmatprep.subr.mxu0 0.0
    %5022 = vmatpush1.msra.mxu0 0.0
    %5023 = vmatprep.mubr.f32.mxu0 0.0
    %5024 = vmatmul.mubr.f32.gmra.mrb[0].mxu0 %v4957
    %v5025 = vpop.f32.mrb[0].mxu0
    %v5026 = vadd.f32 0.0, %v5025
    %v5027 = vpop.f32.mrb[0].mxu0
    %5028 = vdwg.mxu0
    %v5029 = vadd.f32 %v4951, %v5026
    %v5030 = vxor.u32 %v5029, 2147483648
    %v5031 = vmul.f32 %v5030, 1.442695
    %v5032 = vpow.pop %v5031
    %v5033 = vadd.f32 %v5032, 1.0
    %v5034 = vrcp.pop %v5033
    %v5035 = vmul.f32 1.0, %v5034
    %v5036 = vtanh.pop %v5029
    %v5037 = vmul.f32 %v5035, %v4874
    %5039 = vrot.lane.b32.xlu0 %v5036, 80
    %v5040 = vpop.permute.xlu0 %5039
    %v5042 = vmul.f32 %v5035, %v5040
    %5044 = vrot.lane.b32.xlu0 %v5042, 16
    %v5045 = vpop.permute.xlu0 %5044
    %v5047 = vadd.f32 %v5037, %v5045
    %v5048 = vtanh.pop %v5047
    %5050 = vrot.lane.b32.xlu0 %v5048, 16
    %v5051 = vpop.permute.xlu0 %5050
    %v5053 = vmul.f32 %v5035, %v5051
    %v5055 = vsel %vm2662, %v3783, 0
    %5057 = vmatprep.subr.mxu0 0.0
    %5058 = vmatpush1.msra.mxu0 %v4694
    %5059 = vmatprep.subr.mxu0 0.0
    %5060 = vmatpush1.msra.mxu0 %v4695
    %5061 = vmatprep.subr.mxu0 0.0
    %5062 = vmatpush1.msra.mxu0 %v4696
    %5063 = vmatprep.subr.mxu0 0.0
    %5064 = vmatpush1.msra.mxu0 %v4697
    %5065 = vmatprep.subr.mxu0 0.0
    %5066 = vmatpush1.msra.mxu0 %v4698
    %5067 = vmatprep.subr.mxu0 0.0
    %5068 = vmatpush1.msra.mxu0 %v4699
    %5069 = vmatprep.subr.mxu0 0.0
    %5070 = vmatpush1.msra.mxu0 %v4700
    %5071 = vmatprep.subr.mxu0 0.0
    %5072 = vmatpush1.msra.mxu0 %v4701
    %5073 = vmatprep.subr.mxu0 0.0
    %5074 = vmatpush1.msra.mxu0 0.0
    %5075 = vmatprep.subr.mxu0 0.0
    %5076 = vmatpush1.msra.mxu0 0.0
    %5077 = vmatprep.subr.mxu0 0.0
    %5078 = vmatpush1.msra.mxu0 0.0
    %5079 = vmatprep.subr.mxu0 0.0
    %5080 = vmatpush1.msra.mxu0 0.0
    %5081 = vmatprep.subr.mxu0 0.0
    %5082 = vmatpush1.msra.mxu0 0.0
    %5083 = vmatprep.subr.mxu0 0.0
    %5084 = vmatpush1.msra.mxu0 0.0
    %5085 = vmatprep.subr.mxu0 0.0
    %5086 = vmatpush1.msra.mxu0 0.0
    %5087 = vmatprep.subr.mxu0 0.0
    %5088 = vmatpush1.msra.mxu0 0.0
    %5089 = vmatprep.subr.mxu0 0.0
    %5090 = vmatpush1.msra.mxu0 0.0
    %5091 = vmatprep.subr.mxu0 0.0
    %5092 = vmatpush1.msra.mxu0 0.0
    %5093 = vmatprep.subr.mxu0 0.0
    %5094 = vmatpush1.msra.mxu0 0.0
    %5095 = vmatprep.subr.mxu0 0.0
    %5096 = vmatpush1.msra.mxu0 0.0
    %5097 = vmatprep.subr.mxu0 0.0
    %5098 = vmatpush1.msra.mxu0 0.0
    %5099 = vmatprep.subr.mxu0 0.0
    %5100 = vmatpush1.msra.mxu0 0.0
    %5101 = vmatprep.subr.mxu0 0.0
    %5102 = vmatpush1.msra.mxu0 0.0
    %5103 = vmatprep.subr.mxu0 0.0
    %5104 = vmatpush1.msra.mxu0 0.0
    %5105 = vmatprep.subr.mxu0 0.0
    %5106 = vmatpush1.msra.mxu0 0.0
    %5107 = vmatprep.subr.mxu0 0.0
    %5108 = vmatpush1.msra.mxu0 0.0
    %5109 = vmatprep.subr.mxu0 0.0
    %5110 = vmatpush1.msra.mxu0 0.0
    %5111 = vmatprep.subr.mxu0 0.0
    %5112 = vmatpush1.msra.mxu0 0.0
    %5113 = vmatprep.subr.mxu0 0.0
    %5114 = vmatpush1.msra.mxu0 0.0
    %5115 = vmatprep.subr.mxu0 0.0
    %5116 = vmatpush1.msra.mxu0 0.0
    %5117 = vmatprep.subr.mxu0 0.0
    %5118 = vmatpush1.msra.mxu0 0.0
    %5119 = vmatprep.subr.mxu0 0.0
    %5120 = vmatpush1.msra.mxu0 0.0
    %5121 = vmatprep.mubr.f32.mxu0 0.0
    %5122 = vmatmul.mubr.f32.gmra.mrb[0].mxu0 %v5055
    %v5123 = vpop.f32.mrb[0].mxu0
    %v5124 = vadd.f32 %v4709, %v5123
    %v5125 = vpop.f32.mrb[0].mxu0
    %5126 = vdwg.mxu0
    %5128 = vrot.lane.b32.xlu0 %v5053, 96
    %v5129 = vpop.permute.xlu0 %5128
    %v5130 = vsel %vm2657, %v5129, 0
    %5132 = vmatprep.subr.mxu0 0.0
    %5133 = vmatpush1.msra.mxu0 %v4702
    %5134 = vmatprep.subr.mxu0 0.0
    %5135 = vmatpush1.msra.mxu0 %v4703
    %5136 = vmatprep.subr.mxu0 0.0
    %5137 = vmatpush1.msra.mxu0 0.0
    %5138 = vmatprep.subr.mxu0 0.0
    %5139 = vmatpush1.msra.mxu0 0.0
    %5140 = vmatprep.subr.mxu0 0.0
    %5141 = vmatpush1.msra.mxu0 0.0
    %5142 = vmatprep.subr.mxu0 0.0
    %5143 = vmatpush1.msra.mxu0 0.0
    %5144 = vmatprep.subr.mxu0 0.0
    %5145 = vmatpush1.msra.mxu0 0.0
    %5146 = vmatprep.subr.mxu0 0.0
    %5147 = vmatpush1.msra.mxu0 0.0
    %5148 = vmatprep.subr.mxu0 0.0
    %5149 = vmatpush1.msra.mxu0 0.0
    %5150 = vmatprep.subr.mxu0 0.0
    %5151 = vmatpush1.msra.mxu0 0.0
    %5152 = vmatprep.subr.mxu0 0.0
    %5153 = vmatpush1.msra.mxu0 0.0
    %5154 = vmatprep.subr.mxu0 0.0
    %5155 = vmatpush1.msra.mxu0 0.0
    %5156 = vmatprep.subr.mxu0 0.0
    %5157 = vmatpush1.msra.mxu0 0.0
    %5158 = vmatprep.subr.mxu0 0.0
    %5159 = vmatpush1.msra.mxu0 0.0
    %5160 = vmatprep.subr.mxu0 0.0
    %5161 = vmatpush1.msra.mxu0 0.0
    %5162 = vmatprep.subr.mxu0 0.0
    %5163 = vmatpush1.msra.mxu0 0.0
    %5164 = vmatprep.subr.mxu0 0.0
    %5165 = vmatpush1.msra.mxu0 0.0
    %5166 = vmatprep.subr.mxu0 0.0
    %5167 = vmatpush1.msra.mxu0 0.0
    %5168 = vmatprep.subr.mxu0 0.0
    %5169 = vmatpush1.msra.mxu0 0.0
    %5170 = vmatprep.subr.mxu0 0.0
    %5171 = vmatpush1.msra.mxu0 0.0
    %5172 = vmatprep.subr.mxu0 0.0
    %5173 = vmatpush1.msra.mxu0 0.0
    %5174 = vmatprep.subr.mxu0 0.0
    %5175 = vmatpush1.msra.mxu0 0.0
    %5176 = vmatprep.subr.mxu0 0.0
    %5177 = vmatpush1.msra.mxu0 0.0
    %5178 = vmatprep.subr.mxu0 0.0
    %5179 = vmatpush1.msra.mxu0 0.0
    %5180 = vmatprep.subr.mxu0 0.0
    %5181 = vmatpush1.msra.mxu0 0.0
    %5182 = vmatprep.subr.mxu0 0.0
    %5183 = vmatpush1.msra.mxu0 0.0
    %5184 = vmatprep.subr.mxu0 0.0
    %5185 = vmatpush1.msra.mxu0 0.0
    %5186 = vmatprep.subr.mxu0 0.0
    %5187 = vmatpush1.msra.mxu0 0.0
    %5188 = vmatprep.subr.mxu0 0.0
    %5189 = vmatpush1.msra.mxu0 0.0
    %5190 = vmatprep.subr.mxu0 0.0
    %5191 = vmatpush1.msra.mxu0 0.0
    %5192 = vmatprep.subr.mxu0 0.0
    %5193 = vmatpush1.msra.mxu0 0.0
    %5194 = vmatprep.subr.mxu0 0.0
    %5195 = vmatpush1.msra.mxu0 0.0
    %5196 = vmatprep.mubr.f32.mxu0 0.0
    %5197 = vmatmul.mubr.f32.gmra.mrb[0].mxu0 %v5130
    %v5198 = vpop.f32.mrb[0].mxu0
    %v5199 = vadd.f32 0.0, %v5198
    %v5200 = vpop.f32.mrb[0].mxu0
    %5201 = vdwg.mxu0
    %v5202 = vadd.f32 %v5124, %v5199
    %v5203 = vxor.u32 %v5202, 2147483648
    %v5204 = vmul.f32 %v5203, 1.442695
    %v5205 = vpow.pop %v5204
    %v5206 = vadd.f32 %v5205, 1.0
    %v5207 = vrcp.pop %v5206
    %v5208 = vmul.f32 1.0, %v5207
    %v5209 = vtanh.pop %v5202
    %v5210 = vmul.f32 %v5208, %v5047
    %5212 = vrot.lane.b32.xlu0 %v5209, 80
    %v5213 = vpop.permute.xlu0 %5212
    %v5215 = vmul.f32 %v5208, %v5213
    %5217 = vrot.lane.b32.xlu0 %v5215, 16
    %v5218 = vpop.permute.xlu0 %5217
    %v5220 = vadd.f32 %v5210, %v5218
    %v5221 = vtanh.pop %v5220
    %5223 = vrot.lane.b32.xlu0 %v5221, 16
    %v5224 = vpop.permute.xlu0 %5223
    %v5226 = vmul.f32 %v5208, %v5224
    %v5228 = vsel %vm2662, %v3965, 0
    %5230 = vmatprep.subr.mxu0 0.0
    %5231 = vmatpush1.msra.mxu0 %v4694
    %5232 = vmatprep.subr.mxu0 0.0
    %5233 = vmatpush1.msra.mxu0 %v4695
    %5234 = vmatprep.subr.mxu0 0.0
    %5235 = vmatpush1.msra.mxu0 %v4696
    %5236 = vmatprep.subr.mxu0 0.0
    %5237 = vmatpush1.msra.mxu0 %v4697
    %5238 = vmatprep.subr.mxu0 0.0
    %5239 = vmatpush1.msra.mxu0 %v4698
    %5240 = vmatprep.subr.mxu0 0.0
    %5241 = vmatpush1.msra.mxu0 %v4699
    %5242 = vmatprep.subr.mxu0 0.0
    %5243 = vmatpush1.msra.mxu0 %v4700
    %5244 = vmatprep.subr.mxu0 0.0
    %5245 = vmatpush1.msra.mxu0 %v4701
    %5246 = vmatprep.subr.mxu0 0.0
    %5247 = vmatpush1.msra.mxu0 0.0
    %5248 = vmatprep.subr.mxu0 0.0
    %5249 = vmatpush1.msra.mxu0 0.0
    %5250 = vmatprep.subr.mxu0 0.0
    %5251 = vmatpush1.msra.mxu0 0.0
    %5252 = vmatprep.subr.mxu0 0.0
    %5253 = vmatpush1.msra.mxu0 0.0
    %5254 = vmatprep.subr.mxu0 0.0
    %5255 = vmatpush1.msra.mxu0 0.0
    %5256 = vmatprep.subr.mxu0 0.0
    %5257 = vmatpush1.msra.mxu0 0.0
    %5258 = vmatprep.subr.mxu0 0.0
    %5259 = vmatpush1.msra.mxu0 0.0
    %5260 = vmatprep.subr.mxu0 0.0
    %5261 = vmatpush1.msra.mxu0 0.0
    %5262 = vmatprep.subr.mxu0 0.0
    %5263 = vmatpush1.msra.mxu0 0.0
    %5264 = vmatprep.subr.mxu0 0.0
    %5265 = vmatpush1.msra.mxu0 0.0
    %5266 = vmatprep.subr.mxu0 0.0
    %5267 = vmatpush1.msra.mxu0 0.0
    %5268 = vmatprep.subr.mxu0 0.0
    %5269 = vmatpush1.msra.mxu0 0.0
    %5270 = vmatprep.subr.mxu0 0.0
    %5271 = vmatpush1.msra.mxu0 0.0
    %5272 = vmatprep.subr.mxu0 0.0
    %5273 = vmatpush1.msra.mxu0 0.0
    %5274 = vmatprep.subr.mxu0 0.0
    %5275 = vmatpush1.msra.mxu0 0.0
    %5276 = vmatprep.subr.mxu0 0.0
    %5277 = vmatpush1.msra.mxu0 0.0
    %5278 = vmatprep.subr.mxu0 0.0
    %5279 = vmatpush1.msra.mxu0 0.0
    %5280 = vmatprep.subr.mxu0 0.0
    %5281 = vmatpush1.msra.mxu0 0.0
    %5282 = vmatprep.subr.mxu0 0.0
    %5283 = vmatpush1.msra.mxu0 0.0
    %5284 = vmatprep.subr.mxu0 0.0
    %5285 = vmatpush1.msra.mxu0 0.0
    %5286 = vmatprep.subr.mxu0 0.0
    %5287 = vmatpush1.msra.mxu0 0.0
    %5288 = vmatprep.subr.mxu0 0.0
    %5289 = vmatpush1.msra.mxu0 0.0
    %5290 = vmatprep.subr.mxu0 0.0
    %5291 = vmatpush1.msra.mxu0 0.0
    %5292 = vmatprep.subr.mxu0 0.0
    %5293 = vmatpush1.msra.mxu0 0.0
    %5294 = vmatprep.mubr.f32.mxu0 0.0
    %5295 = vmatmul.mubr.f32.gmra.mrb[0].mxu0 %v5228
    %v5296 = vpop.f32.mrb[0].mxu0
    %v5297 = vadd.f32 %v4709, %v5296
    %v5298 = vpop.f32.mrb[0].mxu0
    %5299 = vdwg.mxu0
    %5301 = vrot.lane.b32.xlu0 %v5226, 96
    %v5302 = vpop.permute.xlu0 %5301
    %v5303 = vsel %vm2657, %v5302, 0
    %5305 = vmatprep.subr.mxu0 0.0
    %5306 = vmatpush1.msra.mxu0 %v4702
    %5307 = vmatprep.subr.mxu0 0.0
    %5308 = vmatpush1.msra.mxu0 %v4703
    %5309 = vmatprep.subr.mxu0 0.0
    %5310 = vmatpush1.msra.mxu0 0.0
    %5311 = vmatprep.subr.mxu0 0.0
    %5312 = vmatpush1.msra.mxu0 0.0
    %5313 = vmatprep.subr.mxu0 0.0
    %5314 = vmatpush1.msra.mxu0 0.0
    %5315 = vmatprep.subr.mxu0 0.0
    %5316 = vmatpush1.msra.mxu0 0.0
    %5317 = vmatprep.subr.mxu0 0.0
    %5318 = vmatpush1.msra.mxu0 0.0
    %5319 = vmatprep.subr.mxu0 0.0
    %5320 = vmatpush1.msra.mxu0 0.0
    %5321 = vmatprep.subr.mxu0 0.0
    %5322 = vmatpush1.msra.mxu0 0.0
    %5323 = vmatprep.subr.mxu0 0.0
    %5324 = vmatpush1.msra.mxu0 0.0
    %5325 = vmatprep.subr.mxu0 0.0
    %5326 = vmatpush1.msra.mxu0 0.0
    %5327 = vmatprep.subr.mxu0 0.0
    %5328 = vmatpush1.msra.mxu0 0.0
    %5329 = vmatprep.subr.mxu0 0.0
    %5330 = vmatpush1.msra.mxu0 0.0
    %5331 = vmatprep.subr.mxu0 0.0
    %5332 = vmatpush1.msra.mxu0 0.0
    %5333 = vmatprep.subr.mxu0 0.0
    %5334 = vmatpush1.msra.mxu0 0.0
    %5335 = vmatprep.subr.mxu0 0.0
    %5336 = vmatpush1.msra.mxu0 0.0
    %5337 = vmatprep.subr.mxu0 0.0
    %5338 = vmatpush1.msra.mxu0 0.0
    %5339 = vmatprep.subr.mxu0 0.0
    %5340 = vmatpush1.msra.mxu0 0.0
    %5341 = vmatprep.subr.mxu0 0.0
    %5342 = vmatpush1.msra.mxu0 0.0
    %5343 = vmatprep.subr.mxu0 0.0
    %5344 = vmatpush1.msra.mxu0 0.0
    %5345 = vmatprep.subr.mxu0 0.0
    %5346 = vmatpush1.msra.mxu0 0.0
    %5347 = vmatprep.subr.mxu0 0.0
    %5348 = vmatpush1.msra.mxu0 0.0
    %5349 = vmatprep.subr.mxu0 0.0
    %5350 = vmatpush1.msra.mxu0 0.0
    %5351 = vmatprep.subr.mxu0 0.0
    %5352 = vmatpush1.msra.mxu0 0.0
    %5353 = vmatprep.subr.mxu0 0.0
    %5354 = vmatpush1.msra.mxu0 0.0
    %5355 = vmatprep.subr.mxu0 0.0
    %5356 = vmatpush1.msra.mxu0 0.0
    %5357 = vmatprep.subr.mxu0 0.0
    %5358 = vmatpush1.msra.mxu0 0.0
    %5359 = vmatprep.subr.mxu0 0.0
    %5360 = vmatpush1.msra.mxu0 0.0
    %5361 = vmatprep.subr.mxu0 0.0
    %5362 = vmatpush1.msra.mxu0 0.0
    %5363 = vmatprep.subr.mxu0 0.0
    %5364 = vmatpush1.msra.mxu0 0.0
    %5365 = vmatprep.subr.mxu0 0.0
    %5366 = vmatpush1.msra.mxu0 0.0
    %5367 = vmatprep.subr.mxu0 0.0
    %5368 = vmatpush1.msra.mxu0 0.0
    %5369 = vmatprep.mubr.f32.mxu0 0.0
    %5370 = vmatmul.mubr.f32.gmra.mrb[0].mxu0 %v5303
    %v5371 = vpop.f32.mrb[0].mxu0
    %v5372 = vadd.f32 0.0, %v5371
    %v5373 = vpop.f32.mrb[0].mxu0
    %5374 = vdwg.mxu0
    %v5375 = vadd.f32 %v5297, %v5372
    %v5376 = vxor.u32 %v5375, 2147483648
    %v5377 = vmul.f32 %v5376, 1.442695
    %v5378 = vpow.pop %v5377
    %v5379 = vadd.f32 %v5378, 1.0
    %v5380 = vrcp.pop %v5379
    %v5381 = vmul.f32 1.0, %v5380
    %v5382 = vtanh.pop %v5375
    %v5383 = vmul.f32 %v5381, %v5220
    %5385 = vrot.lane.b32.xlu0 %v5382, 80
    %v5386 = vpop.permute.xlu0 %5385
    %v5388 = vmul.f32 %v5381, %v5386
    %5390 = vrot.lane.b32.xlu0 %v5388, 16
    %v5391 = vpop.permute.xlu0 %5390
    %v5393 = vadd.f32 %v5383, %v5391
    %v5394 = vtanh.pop %v5393
    %5396 = vrot.lane.b32.xlu0 %v5394, 16
    %v5397 = vpop.permute.xlu0 %5396
    %v5399 = vmul.f32 %v5381, %v5397
    %v5401 = vsel %vm2662, %v4147, 0
    %5403 = vmatprep.subr.mxu0 0.0
    %5404 = vmatpush1.msra.mxu0 %v4694
    %5405 = vmatprep.subr.mxu0 0.0
    %5406 = vmatpush1.msra.mxu0 %v4695
    %5407 = vmatprep.subr.mxu0 0.0
    %5408 = vmatpush1.msra.mxu0 %v4696
    %5409 = vmatprep.subr.mxu0 0.0
    %5410 = vmatpush1.msra.mxu0 %v4697
    %5411 = vmatprep.subr.mxu0 0.0
    %5412 = vmatpush1.msra.mxu0 %v4698
    %5413 = vmatprep.subr.mxu0 0.0
    %5414 = vmatpush1.msra.mxu0 %v4699
    %5415 = vmatprep.subr.mxu0 0.0
    %5416 = vmatpush1.msra.mxu0 %v4700
    %5417 = vmatprep.subr.mxu0 0.0
    %5418 = vmatpush1.msra.mxu0 %v4701
    %5419 = vmatprep.subr.mxu0 0.0
    %5420 = vmatpush1.msra.mxu0 0.0
    %5421 = vmatprep.subr.mxu0 0.0
    %5422 = vmatpush1.msra.mxu0 0.0
    %5423 = vmatprep.subr.mxu0 0.0
    %5424 = vmatpush1.msra.mxu0 0.0
    %5425 = vmatprep.subr.mxu0 0.0
    %5426 = vmatpush1.msra.mxu0 0.0
    %5427 = vmatprep.subr.mxu0 0.0
    %5428 = vmatpush1.msra.mxu0 0.0
    %5429 = vmatprep.subr.mxu0 0.0
    %5430 = vmatpush1.msra.mxu0 0.0
    %5431 = vmatprep.subr.mxu0 0.0
    %5432 = vmatpush1.msra.mxu0 0.0
    %5433 = vmatprep.subr.mxu0 0.0
    %5434 = vmatpush1.msra.mxu0 0.0
    %5435 = vmatprep.subr.mxu0 0.0
    %5436 = vmatpush1.msra.mxu0 0.0
    %5437 = vmatprep.subr.mxu0 0.0
    %5438 = vmatpush1.msra.mxu0 0.0
    %5439 = vmatprep.subr.mxu0 0.0
    %5440 = vmatpush1.msra.mxu0 0.0
    %5441 = vmatprep.subr.mxu0 0.0
    %5442 = vmatpush1.msra.mxu0 0.0
    %5443 = vmatprep.subr.mxu0 0.0
    %5444 = vmatpush1.msra.mxu0 0.0
    %5445 = vmatprep.subr.mxu0 0.0
    %5446 = vmatpush1.msra.mxu0 0.0
    %5447 = vmatprep.subr.mxu0 0.0
    %5448 = vmatpush1.msra.mxu0 0.0
    %5449 = vmatprep.subr.mxu0 0.0
    %5450 = vmatpush1.msra.mxu0 0.0
    %5451 = vmatprep.subr.mxu0 0.0
    %5452 = vmatpush1.msra.mxu0 0.0
    %5453 = vmatprep.subr.mxu0 0.0
    %5454 = vmatpush1.msra.mxu0 0.0
    %5455 = vmatprep.subr.mxu0 0.0
    %5456 = vmatpush1.msra.mxu0 0.0
    %5457 = vmatprep.subr.mxu0 0.0
    %5458 = vmatpush1.msra.mxu0 0.0
    %5459 = vmatprep.subr.mxu0 0.0
    %5460 = vmatpush1.msra.mxu0 0.0
    %5461 = vmatprep.subr.mxu0 0.0
    %5462 = vmatpush1.msra.mxu0 0.0
    %5463 = vmatprep.subr.mxu0 0.0
    %5464 = vmatpush1.msra.mxu0 0.0
    %5465 = vmatprep.subr.mxu0 0.0
    %5466 = vmatpush1.msra.mxu0 0.0
    %5467 = vmatprep.mubr.f32.mxu0 0.0
    %5468 = vmatmul.mubr.f32.gmra.mrb[0].mxu0 %v5401
    %v5469 = vpop.f32.mrb[0].mxu0
    %v5470 = vadd.f32 %v4709, %v5469
    %v5471 = vpop.f32.mrb[0].mxu0
    %5472 = vdwg.mxu0
    %5474 = vrot.lane.b32.xlu0 %v5399, 96
    %v5475 = vpop.permute.xlu0 %5474
    %v5476 = vsel %vm2657, %v5475, 0
    %5478 = vmatprep.subr.mxu0 0.0
    %5479 = vmatpush1.msra.mxu0 %v4702
    %5480 = vmatprep.subr.mxu0 0.0
    %5481 = vmatpush1.msra.mxu0 %v4703
    %5482 = vmatprep.subr.mxu0 0.0
    %5483 = vmatpush1.msra.mxu0 0.0
    %5484 = vmatprep.subr.mxu0 0.0
    %5485 = vmatpush1.msra.mxu0 0.0
    %5486 = vmatprep.subr.mxu0 0.0
    %5487 = vmatpush1.msra.mxu0 0.0
    %5488 = vmatprep.subr.mxu0 0.0
    %5489 = vmatpush1.msra.mxu0 0.0
    %5490 = vmatprep.subr.mxu0 0.0
    %5491 = vmatpush1.msra.mxu0 0.0
    %5492 = vmatprep.subr.mxu0 0.0
    %5493 = vmatpush1.msra.mxu0 0.0
    %5494 = vmatprep.subr.mxu0 0.0
    %5495 = vmatpush1.msra.mxu0 0.0
    %5496 = vmatprep.subr.mxu0 0.0
    %5497 = vmatpush1.msra.mxu0 0.0
    %5498 = vmatprep.subr.mxu0 0.0
    %5499 = vmatpush1.msra.mxu0 0.0
    %5500 = vmatprep.subr.mxu0 0.0
    %5501 = vmatpush1.msra.mxu0 0.0
    %5502 = vmatprep.subr.mxu0 0.0
    %5503 = vmatpush1.msra.mxu0 0.0
    %5504 = vmatprep.subr.mxu0 0.0
    %5505 = vmatpush1.msra.mxu0 0.0
    %5506 = vmatprep.subr.mxu0 0.0
    %5507 = vmatpush1.msra.mxu0 0.0
    %5508 = vmatprep.subr.mxu0 0.0
    %5509 = vmatpush1.msra.mxu0 0.0
    %5510 = vmatprep.subr.mxu0 0.0
    %5511 = vmatpush1.msra.mxu0 0.0
    %5512 = vmatprep.subr.mxu0 0.0
    %5513 = vmatpush1.msra.mxu0 0.0
    %5514 = vmatprep.subr.mxu0 0.0
    %5515 = vmatpush1.msra.mxu0 0.0
    %5516 = vmatprep.subr.mxu0 0.0
    %5517 = vmatpush1.msra.mxu0 0.0
    %5518 = vmatprep.subr.mxu0 0.0
    %5519 = vmatpush1.msra.mxu0 0.0
    %5520 = vmatprep.subr.mxu0 0.0
    %5521 = vmatpush1.msra.mxu0 0.0
    %5522 = vmatprep.subr.mxu0 0.0
    %5523 = vmatpush1.msra.mxu0 0.0
    %5524 = vmatprep.subr.mxu0 0.0
    %5525 = vmatpush1.msra.mxu0 0.0
    %5526 = vmatprep.subr.mxu0 0.0
    %5527 = vmatpush1.msra.mxu0 0.0
    %5528 = vmatprep.subr.mxu0 0.0
    %5529 = vmatpush1.msra.mxu0 0.0
    %5530 = vmatprep.subr.mxu0 0.0
    %5531 = vmatpush1.msra.mxu0 0.0
    %5532 = vmatprep.subr.mxu0 0.0
    %5533 = vmatpush1.msra.mxu0 0.0
    %5534 = vmatprep.subr.mxu0 0.0
    %5535 = vmatpush1.msra.mxu0 0.0
    %5536 = vmatprep.subr.mxu0 0.0
    %5537 = vmatpush1.msra.mxu0 0.0
    %5538 = vmatprep.subr.mxu0 0.0
    %5539 = vmatpush1.msra.mxu0 0.0
    %5540 = vmatprep.subr.mxu0 0.0
    %5541 = vmatpush1.msra.mxu0 0.0
    %5542 = vmatprep.mubr.f32.mxu0 0.0
    %5543 = vmatmul.mubr.f32.gmra.mrb[0].mxu0 %v5476
    %v5544 = vpop.f32.mrb[0].mxu0
    %v5545 = vadd.f32 0.0, %v5544
    %v5546 = vpop.f32.mrb[0].mxu0
    %5547 = vdwg.mxu0
    %v5548 = vadd.f32 %v5470, %v5545
    %v5549 = vxor.u32 %v5548, 2147483648
    %v5550 = vmul.f32 %v5549, 1.442695
    %v5551 = vpow.pop %v5550
    %v5552 = vadd.f32 %v5551, 1.0
    %v5553 = vrcp.pop %v5552
    %v5554 = vmul.f32 1.0, %v5553
    %v5555 = vtanh.pop %v5548
    %v5556 = vmul.f32 %v5554, %v5393
    %5558 = vrot.lane.b32.xlu0 %v5555, 80
    %v5559 = vpop.permute.xlu0 %5558
    %v5561 = vmul.f32 %v5554, %v5559
    %5563 = vrot.lane.b32.xlu0 %v5561, 16
    %v5564 = vpop.permute.xlu0 %5563
    %v5566 = vadd.f32 %v5556, %v5564
    %v5567 = vtanh.pop %v5566
    %5569 = vrot.lane.b32.xlu0 %v5567, 16
    %v5570 = vpop.permute.xlu0 %5569
    %v5572 = vmul.f32 %v5554, %v5570
    %v5574 = vsel %vm2662, %v4329, 0
    %5576 = vmatprep.subr.mxu0 0.0
    %5577 = vmatpush1.msra.mxu0 %v4694
    %5578 = vmatprep.subr.mxu0 0.0
    %5579 = vmatpush1.msra.mxu0 %v4695
    %5580 = vmatprep.subr.mxu0 0.0
    %5581 = vmatpush1.msra.mxu0 %v4696
    %5582 = vmatprep.subr.mxu0 0.0
    %5583 = vmatpush1.msra.mxu0 %v4697
    %5584 = vmatprep.subr.mxu0 0.0
    %5585 = vmatpush1.msra.mxu0 %v4698
    %5586 = vmatprep.subr.mxu0 0.0
    %5587 = vmatpush1.msra.mxu0 %v4699
    %5588 = vmatprep.subr.mxu0 0.0
    %5589 = vmatpush1.msra.mxu0 %v4700
    %5590 = vmatprep.subr.mxu0 0.0
    %5591 = vmatpush1.msra.mxu0 %v4701
    %5592 = vmatprep.subr.mxu0 0.0
    %5593 = vmatpush1.msra.mxu0 0.0
    %5594 = vmatprep.subr.mxu0 0.0
    %5595 = vmatpush1.msra.mxu0 0.0
    %5596 = vmatprep.subr.mxu0 0.0
    %5597 = vmatpush1.msra.mxu0 0.0
    %5598 = vmatprep.subr.mxu0 0.0
    %5599 = vmatpush1.msra.mxu0 0.0
    %5600 = vmatprep.subr.mxu0 0.0
    %5601 = vmatpush1.msra.mxu0 0.0
    %5602 = vmatprep.subr.mxu0 0.0
    %5603 = vmatpush1.msra.mxu0 0.0
    %5604 = vmatprep.subr.mxu0 0.0
    %5605 = vmatpush1.msra.mxu0 0.0
    %5606 = vmatprep.subr.mxu0 0.0
    %5607 = vmatpush1.msra.mxu0 0.0
    %5608 = vmatprep.subr.mxu0 0.0
    %5609 = vmatpush1.msra.mxu0 0.0
    %5610 = vmatprep.subr.mxu0 0.0
    %5611 = vmatpush1.msra.mxu0 0.0
    %5612 = vmatprep.subr.mxu0 0.0
    %5613 = vmatpush1.msra.mxu0 0.0
    %5614 = vmatprep.subr.mxu0 0.0
    %5615 = vmatpush1.msra.mxu0 0.0
    %5616 = vmatprep.subr.mxu0 0.0
    %5617 = vmatpush1.msra.mxu0 0.0
    %5618 = vmatprep.subr.mxu0 0.0
    %5619 = vmatpush1.msra.mxu0 0.0
    %5620 = vmatprep.subr.mxu0 0.0
    %5621 = vmatpush1.msra.mxu0 0.0
    %5622 = vmatprep.subr.mxu0 0.0
    %5623 = vmatpush1.msra.mxu0 0.0
    %5624 = vmatprep.subr.mxu0 0.0
    %5625 = vmatpush1.msra.mxu0 0.0
    %5626 = vmatprep.subr.mxu0 0.0
    %5627 = vmatpush1.msra.mxu0 0.0
    %5628 = vmatprep.subr.mxu0 0.0
    %5629 = vmatpush1.msra.mxu0 0.0
    %5630 = vmatprep.subr.mxu0 0.0
    %5631 = vmatpush1.msra.mxu0 0.0
    %5632 = vmatprep.subr.mxu0 0.0
    %5633 = vmatpush1.msra.mxu0 0.0
    %5634 = vmatprep.subr.mxu0 0.0
    %5635 = vmatpush1.msra.mxu0 0.0
    %5636 = vmatprep.subr.mxu0 0.0
    %5637 = vmatpush1.msra.mxu0 0.0
    %5638 = vmatprep.subr.mxu0 0.0
    %5639 = vmatpush1.msra.mxu0 0.0
    %5640 = vmatprep.mubr.f32.mxu0 0.0
    %5641 = vmatmul.mubr.f32.gmra.mrb[0].mxu0 %v5574
    %v5642 = vpop.f32.mrb[0].mxu0
    %v5643 = vadd.f32 %v4709, %v5642
    %v5644 = vpop.f32.mrb[0].mxu0
    %5645 = vdwg.mxu0
    %5647 = vrot.lane.b32.xlu0 %v5572, 96
    %v5648 = vpop.permute.xlu0 %5647
    %v5649 = vsel %vm2657, %v5648, 0
    %5651 = vmatprep.subr.mxu0 0.0
    %5652 = vmatpush1.msra.mxu0 %v4702
    %5653 = vmatprep.subr.mxu0 0.0
    %5654 = vmatpush1.msra.mxu0 %v4703
    %5655 = vmatprep.subr.mxu0 0.0
    %5656 = vmatpush1.msra.mxu0 0.0
    %5657 = vmatprep.subr.mxu0 0.0
    %5658 = vmatpush1.msra.mxu0 0.0
    %5659 = vmatprep.subr.mxu0 0.0
    %5660 = vmatpush1.msra.mxu0 0.0
    %5661 = vmatprep.subr.mxu0 0.0
    %5662 = vmatpush1.msra.mxu0 0.0
    %5663 = vmatprep.subr.mxu0 0.0
    %5664 = vmatpush1.msra.mxu0 0.0
    %5665 = vmatprep.subr.mxu0 0.0
    %5666 = vmatpush1.msra.mxu0 0.0
    %5667 = vmatprep.subr.mxu0 0.0
    %5668 = vmatpush1.msra.mxu0 0.0
    %5669 = vmatprep.subr.mxu0 0.0
    %5670 = vmatpush1.msra.mxu0 0.0
    %5671 = vmatprep.subr.mxu0 0.0
    %5672 = vmatpush1.msra.mxu0 0.0
    %5673 = vmatprep.subr.mxu0 0.0
    %5674 = vmatpush1.msra.mxu0 0.0
    %5675 = vmatprep.subr.mxu0 0.0
    %5676 = vmatpush1.msra.mxu0 0.0
    %5677 = vmatprep.subr.mxu0 0.0
    %5678 = vmatpush1.msra.mxu0 0.0
    %5679 = vmatprep.subr.mxu0 0.0
    %5680 = vmatpush1.msra.mxu0 0.0
    %5681 = vmatprep.subr.mxu0 0.0
    %5682 = vmatpush1.msra.mxu0 0.0
    %5683 = vmatprep.subr.mxu0 0.0
    %5684 = vmatpush1.msra.mxu0 0.0
    %5685 = vmatprep.subr.mxu0 0.0
    %5686 = vmatpush1.msra.mxu0 0.0
    %5687 = vmatprep.subr.mxu0 0.0
    %5688 = vmatpush1.msra.mxu0 0.0
    %5689 = vmatprep.subr.mxu0 0.0
    %5690 = vmatpush1.msra.mxu0 0.0
    %5691 = vmatprep.subr.mxu0 0.0
    %5692 = vmatpush1.msra.mxu0 0.0
    %5693 = vmatprep.subr.mxu0 0.0
    %5694 = vmatpush1.msra.mxu0 0.0
    %5695 = vmatprep.subr.mxu0 0.0
    %5696 = vmatpush1.msra.mxu0 0.0
    %5697 = vmatprep.subr.mxu0 0.0
    %5698 = vmatpush1.msra.mxu0 0.0
    %5699 = vmatprep.subr.mxu0 0.0
    %5700 = vmatpush1.msra.mxu0 0.0
    %5701 = vmatprep.subr.mxu0 0.0
    %5702 = vmatpush1.msra.mxu0 0.0
    %5703 = vmatprep.subr.mxu0 0.0
    %5704 = vmatpush1.msra.mxu0 0.0
    %5705 = vmatprep.subr.mxu0 0.0
    %5706 = vmatpush1.msra.mxu0 0.0
    %5707 = vmatprep.subr.mxu0 0.0
    %5708 = vmatpush1.msra.mxu0 0.0
    %5709 = vmatprep.subr.mxu0 0.0
    %5710 = vmatpush1.msra.mxu0 0.0
    %5711 = vmatprep.subr.mxu0 0.0
    %5712 = vmatpush1.msra.mxu0 0.0
    %5713 = vmatprep.subr.mxu0 0.0
    %5714 = vmatpush1.msra.mxu0 0.0
    %5715 = vmatprep.mubr.f32.mxu0 0.0
    %5716 = vmatmul.mubr.f32.gmra.mrb[0].mxu0 %v5649
    %v5717 = vpop.f32.mrb[0].mxu0
    %v5718 = vadd.f32 0.0, %v5717
    %v5719 = vpop.f32.mrb[0].mxu0
    %5720 = vdwg.mxu0
    %v5721 = vadd.f32 %v5643, %v5718
    %v5722 = vxor.u32 %v5721, 2147483648
    %v5723 = vmul.f32 %v5722, 1.442695
    %v5724 = vpow.pop %v5723
    %v5725 = vadd.f32 %v5724, 1.0
    %v5726 = vrcp.pop %v5725
    %v5727 = vmul.f32 1.0, %v5726
    %v5728 = vtanh.pop %v5721
    %v5729 = vmul.f32 %v5727, %v5566
    %5731 = vrot.lane.b32.xlu0 %v5728, 80
    %v5732 = vpop.permute.xlu0 %5731
    %v5734 = vmul.f32 %v5727, %v5732
    %5736 = vrot.lane.b32.xlu0 %v5734, 16
    %v5737 = vpop.permute.xlu0 %5736
    %v5739 = vadd.f32 %v5729, %v5737
    %v5740 = vtanh.pop %v5739
    %5742 = vrot.lane.b32.xlu0 %v5740, 16
    %v5743 = vpop.permute.xlu0 %5742
    %v5745 = vmul.f32 %v5727, %v5743
    %v5747 = vsel %vm2662, %v4511, 0
    %5749 = vmatprep.subr.mxu0 0.0
    %5750 = vmatpush1.msra.mxu0 %v4694
    %5751 = vmatprep.subr.mxu0 0.0
    %5752 = vmatpush1.msra.mxu0 %v4695
    %5753 = vmatprep.subr.mxu0 0.0
    %5754 = vmatpush1.msra.mxu0 %v4696
    %5755 = vmatprep.subr.mxu0 0.0
    %5756 = vmatpush1.msra.mxu0 %v4697
    %5757 = vmatprep.subr.mxu0 0.0
    %5758 = vmatpush1.msra.mxu0 %v4698
    %5759 = vmatprep.subr.mxu0 0.0
    %5760 = vmatpush1.msra.mxu0 %v4699
    %5761 = vmatprep.subr.mxu0 0.0
    %5762 = vmatpush1.msra.mxu0 %v4700
    %5763 = vmatprep.subr.mxu0 0.0
    %5764 = vmatpush1.msra.mxu0 %v4701
    %5765 = vmatprep.subr.mxu0 0.0
    %5766 = vmatpush1.msra.mxu0 0.0
    %5767 = vmatprep.subr.mxu0 0.0
    %5768 = vmatpush1.msra.mxu0 0.0
    %5769 = vmatprep.subr.mxu0 0.0
    %5770 = vmatpush1.msra.mxu0 0.0
    %5771 = vmatprep.subr.mxu0 0.0
    %5772 = vmatpush1.msra.mxu0 0.0
    %5773 = vmatprep.subr.mxu0 0.0
    %5774 = vmatpush1.msra.mxu0 0.0
    %5775 = vmatprep.subr.mxu0 0.0
    %5776 = vmatpush1.msra.mxu0 0.0
    %5777 = vmatprep.subr.mxu0 0.0
    %5778 = vmatpush1.msra.mxu0 0.0
    %5779 = vmatprep.subr.mxu0 0.0
    %5780 = vmatpush1.msra.mxu0 0.0
    %5781 = vmatprep.subr.mxu0 0.0
    %5782 = vmatpush1.msra.mxu0 0.0
    %5783 = vmatprep.subr.mxu0 0.0
    %5784 = vmatpush1.msra.mxu0 0.0
    %5785 = vmatprep.subr.mxu0 0.0
    %5786 = vmatpush1.msra.mxu0 0.0
    %5787 = vmatprep.subr.mxu0 0.0
    %5788 = vmatpush1.msra.mxu0 0.0
    %5789 = vmatprep.subr.mxu0 0.0
    %5790 = vmatpush1.msra.mxu0 0.0
    %5791 = vmatprep.subr.mxu0 0.0
    %5792 = vmatpush1.msra.mxu0 0.0
    %5793 = vmatprep.subr.mxu0 0.0
    %5794 = vmatpush1.msra.mxu0 0.0
    %5795 = vmatprep.subr.mxu0 0.0
    %5796 = vmatpush1.msra.mxu0 0.0
    %5797 = vmatprep.subr.mxu0 0.0
    %5798 = vmatpush1.msra.mxu0 0.0
    %5799 = vmatprep.subr.mxu0 0.0
    %5800 = vmatpush1.msra.mxu0 0.0
    %5801 = vmatprep.subr.mxu0 0.0
    %5802 = vmatpush1.msra.mxu0 0.0
    %5803 = vmatprep.subr.mxu0 0.0
    %5804 = vmatpush1.msra.mxu0 0.0
    %5805 = vmatprep.subr.mxu0 0.0
    %5806 = vmatpush1.msra.mxu0 0.0
    %5807 = vmatprep.subr.mxu0 0.0
    %5808 = vmatpush1.msra.mxu0 0.0
    %5809 = vmatprep.subr.mxu0 0.0
    %5810 = vmatpush1.msra.mxu0 0.0
    %5811 = vmatprep.subr.mxu0 0.0
    %5812 = vmatpush1.msra.mxu0 0.0
    %5813 = vmatprep.mubr.f32.mxu0 0.0
    %5814 = vmatmul.mubr.f32.gmra.mrb[0].mxu0 %v5747
    %v5815 = vpop.f32.mrb[0].mxu0
    %v5816 = vadd.f32 %v4709, %v5815
    %v5817 = vpop.f32.mrb[0].mxu0
    %5818 = vdwg.mxu0
    %5820 = vrot.lane.b32.xlu0 %v5745, 96
    %v5821 = vpop.permute.xlu0 %5820
    %v5822 = vsel %vm2657, %v5821, 0
    %5824 = vmatprep.subr.mxu0 0.0
    %5825 = vmatpush1.msra.mxu0 %v4702
    %5826 = vmatprep.subr.mxu0 0.0
    %5827 = vmatpush1.msra.mxu0 %v4703
    %5828 = vmatprep.subr.mxu0 0.0
    %5829 = vmatpush1.msra.mxu0 0.0
    %5830 = vmatprep.subr.mxu0 0.0
    %5831 = vmatpush1.msra.mxu0 0.0
    %5832 = vmatprep.subr.mxu0 0.0
    %5833 = vmatpush1.msra.mxu0 0.0
    %5834 = vmatprep.subr.mxu0 0.0
    %5835 = vmatpush1.msra.mxu0 0.0
    %5836 = vmatprep.subr.mxu0 0.0
    %5837 = vmatpush1.msra.mxu0 0.0
    %5838 = vmatprep.subr.mxu0 0.0
    %5839 = vmatpush1.msra.mxu0 0.0
    %5840 = vmatprep.subr.mxu0 0.0
    %5841 = vmatpush1.msra.mxu0 0.0
    %5842 = vmatprep.subr.mxu0 0.0
    %5843 = vmatpush1.msra.mxu0 0.0
    %5844 = vmatprep.subr.mxu0 0.0
    %5845 = vmatpush1.msra.mxu0 0.0
    %5846 = vmatprep.subr.mxu0 0.0
    %5847 = vmatpush1.msra.mxu0 0.0
    %5848 = vmatprep.subr.mxu0 0.0
    %5849 = vmatpush1.msra.mxu0 0.0
    %5850 = vmatprep.subr.mxu0 0.0
    %5851 = vmatpush1.msra.mxu0 0.0
    %5852 = vmatprep.subr.mxu0 0.0
    %5853 = vmatpush1.msra.mxu0 0.0
    %5854 = vmatprep.subr.mxu0 0.0
    %5855 = vmatpush1.msra.mxu0 0.0
    %5856 = vmatprep.subr.mxu0 0.0
    %5857 = vmatpush1.msra.mxu0 0.0
    %5858 = vmatprep.subr.mxu0 0.0
    %5859 = vmatpush1.msra.mxu0 0.0
    %5860 = vmatprep.subr.mxu0 0.0
    %5861 = vmatpush1.msra.mxu0 0.0
    %5862 = vmatprep.subr.mxu0 0.0
    %5863 = vmatpush1.msra.mxu0 0.0
    %5864 = vmatprep.subr.mxu0 0.0
    %5865 = vmatpush1.msra.mxu0 0.0
    %5866 = vmatprep.subr.mxu0 0.0
    %5867 = vmatpush1.msra.mxu0 0.0
    %5868 = vmatprep.subr.mxu0 0.0
    %5869 = vmatpush1.msra.mxu0 0.0
    %5870 = vmatprep.subr.mxu0 0.0
    %5871 = vmatpush1.msra.mxu0 0.0
    %5872 = vmatprep.subr.mxu0 0.0
    %5873 = vmatpush1.msra.mxu0 0.0
    %5874 = vmatprep.subr.mxu0 0.0
    %5875 = vmatpush1.msra.mxu0 0.0
    %5876 = vmatprep.subr.mxu0 0.0
    %5877 = vmatpush1.msra.mxu0 0.0
    %5878 = vmatprep.subr.mxu0 0.0
    %5879 = vmatpush1.msra.mxu0 0.0
    %5880 = vmatprep.subr.mxu0 0.0
    %5881 = vmatpush1.msra.mxu0 0.0
    %5882 = vmatprep.subr.mxu0 0.0
    %5883 = vmatpush1.msra.mxu0 0.0
    %5884 = vmatprep.subr.mxu0 0.0
    %5885 = vmatpush1.msra.mxu0 0.0
    %5886 = vmatprep.subr.mxu0 0.0
    %5887 = vmatpush1.msra.mxu0 0.0
    %5888 = vmatprep.mubr.f32.mxu0 0.0
    %5889 = vmatmul.mubr.f32.gmra.mrb[0].mxu0 %v5822
    %v5890 = vpop.f32.mrb[0].mxu0
    %v5891 = vadd.f32 0.0, %v5890
    %v5892 = vpop.f32.mrb[0].mxu0
    %5893 = vdwg.mxu0
    %v5894 = vadd.f32 %v5816, %v5891
    %v5895 = vxor.u32 %v5894, 2147483648
    %v5896 = vmul.f32 %v5895, 1.442695
    %v5897 = vpow.pop %v5896
    %v5898 = vadd.f32 %v5897, 1.0
    %v5899 = vrcp.pop %v5898
    %v5900 = vmul.f32 1.0, %v5899
    %v5901 = vtanh.pop %v5894
    %v5902 = vmul.f32 %v5900, %v5739
    %5904 = vrot.lane.b32.xlu0 %v5901, 80
    %v5905 = vpop.permute.xlu0 %5904
    %v5907 = vmul.f32 %v5900, %v5905
    %5909 = vrot.lane.b32.xlu0 %v5907, 16
    %v5910 = vpop.permute.xlu0 %5909
    %v5912 = vadd.f32 %v5902, %v5910
    %v5913 = vtanh.pop %v5912
    %5915 = vrot.lane.b32.xlu0 %v5913, 16
    %v5916 = vpop.permute.xlu0 %5915
    %v5918 = vmul.f32 %v5900, %v5916
    %v5920 = vsel %vm2662, %v4693, 0
    %5922 = vmatprep.subr.mxu0 0.0
    %5923 = vmatpush1.msra.mxu0 %v4694
    %5924 = vmatprep.subr.mxu0 0.0
    %5925 = vmatpush1.msra.mxu0 %v4695
    %5926 = vmatprep.subr.mxu0 0.0
    %5927 = vmatpush1.msra.mxu0 %v4696
    %5928 = vmatprep.subr.mxu0 0.0
    %5929 = vmatpush1.msra.mxu0 %v4697
    %5930 = vmatprep.subr.mxu0 0.0
    %5931 = vmatpush1.msra.mxu0 %v4698
    %5932 = vmatprep.subr.mxu0 0.0
    %5933 = vmatpush1.msra.mxu0 %v4699
    %5934 = vmatprep.subr.mxu0 0.0
    %5935 = vmatpush1.msra.mxu0 %v4700
    %5936 = vmatprep.subr.mxu0 0.0
    %5937 = vmatpush1.msra.mxu0 %v4701
    %5938 = vmatprep.subr.mxu0 0.0
    %5939 = vmatpush1.msra.mxu0 0.0
    %5940 = vmatprep.subr.mxu0 0.0
    %5941 = vmatpush1.msra.mxu0 0.0
    %5942 = vmatprep.subr.mxu0 0.0
    %5943 = vmatpush1.msra.mxu0 0.0
    %5944 = vmatprep.subr.mxu0 0.0
    %5945 = vmatpush1.msra.mxu0 0.0
    %5946 = vmatprep.subr.mxu0 0.0
    %5947 = vmatpush1.msra.mxu0 0.0
    %5948 = vmatprep.subr.mxu0 0.0
    %5949 = vmatpush1.msra.mxu0 0.0
    %5950 = vmatprep.subr.mxu0 0.0
    %5951 = vmatpush1.msra.mxu0 0.0
    %5952 = vmatprep.subr.mxu0 0.0
    %5953 = vmatpush1.msra.mxu0 0.0
    %5954 = vmatprep.subr.mxu0 0.0
    %5955 = vmatpush1.msra.mxu0 0.0
    %5956 = vmatprep.subr.mxu0 0.0
    %5957 = vmatpush1.msra.mxu0 0.0
    %5958 = vmatprep.subr.mxu0 0.0
    %5959 = vmatpush1.msra.mxu0 0.0
    %5960 = vmatprep.subr.mxu0 0.0
    %5961 = vmatpush1.msra.mxu0 0.0
    %5962 = vmatprep.subr.mxu0 0.0
    %5963 = vmatpush1.msra.mxu0 0.0
    %5964 = vmatprep.subr.mxu0 0.0
    %5965 = vmatpush1.msra.mxu0 0.0
    %5966 = vmatprep.subr.mxu0 0.0
    %5967 = vmatpush1.msra.mxu0 0.0
    %5968 = vmatprep.subr.mxu0 0.0
    %5969 = vmatpush1.msra.mxu0 0.0
    %5970 = vmatprep.subr.mxu0 0.0
    %5971 = vmatpush1.msra.mxu0 0.0
    %5972 = vmatprep.subr.mxu0 0.0
    %5973 = vmatpush1.msra.mxu0 0.0
    %5974 = vmatprep.subr.mxu0 0.0
    %5975 = vmatpush1.msra.mxu0 0.0
    %5976 = vmatprep.subr.mxu0 0.0
    %5977 = vmatpush1.msra.mxu0 0.0
    %5978 = vmatprep.subr.mxu0 0.0
    %5979 = vmatpush1.msra.mxu0 0.0
    %5980 = vmatprep.subr.mxu0 0.0
    %5981 = vmatpush1.msra.mxu0 0.0
    %5982 = vmatprep.subr.mxu0 0.0
    %5983 = vmatpush1.msra.mxu0 0.0
    %5984 = vmatprep.subr.mxu0 0.0
    %5985 = vmatpush1.msra.mxu0 0.0
    %5986 = vmatprep.mubr.f32.mxu0 0.0
    %5987 = vmatmul.mubr.f32.gmra.mrb[0].mxu0 %v5920
    %v5988 = vpop.f32.mrb[0].mxu0
    %v5989 = vadd.f32 %v4709, %v5988
    %v5990 = vpop.f32.mrb[0].mxu0
    %5991 = vdwg.mxu0
    %5993 = vrot.lane.b32.xlu0 %v5918, 96
    %v5994 = vpop.permute.xlu0 %5993
    %v5995 = vsel %vm2657, %v5994, 0
    %5997 = vmatprep.subr.mxu0 0.0
    %5998 = vmatpush1.msra.mxu0 %v4702
    %5999 = vmatprep.subr.mxu0 0.0
    %6000 = vmatpush1.msra.mxu0 %v4703
    %6001 = vmatprep.subr.mxu0 0.0
    %6002 = vmatpush1.msra.mxu0 0.0
    %6003 = vmatprep.subr.mxu0 0.0
    %6004 = vmatpush1.msra.mxu0 0.0
    %6005 = vmatprep.subr.mxu0 0.0
    %6006 = vmatpush1.msra.mxu0 0.0
    %6007 = vmatprep.subr.mxu0 0.0
    %6008 = vmatpush1.msra.mxu0 0.0
    %6009 = vmatprep.subr.mxu0 0.0
    %6010 = vmatpush1.msra.mxu0 0.0
    %6011 = vmatprep.subr.mxu0 0.0
    %6012 = vmatpush1.msra.mxu0 0.0
    %6013 = vmatprep.subr.mxu0 0.0
    %6014 = vmatpush1.msra.mxu0 0.0
    %6015 = vmatprep.subr.mxu0 0.0
    %6016 = vmatpush1.msra.mxu0 0.0
    %6017 = vmatprep.subr.mxu0 0.0
    %6018 = vmatpush1.msra.mxu0 0.0
    %6019 = vmatprep.subr.mxu0 0.0
    %6020 = vmatpush1.msra.mxu0 0.0
    %6021 = vmatprep.subr.mxu0 0.0
    %6022 = vmatpush1.msra.mxu0 0.0
    %6023 = vmatprep.subr.mxu0 0.0
    %6024 = vmatpush1.msra.mxu0 0.0
    %6025 = vmatprep.subr.mxu0 0.0
    %6026 = vmatpush1.msra.mxu0 0.0
    %6027 = vmatprep.subr.mxu0 0.0
    %6028 = vmatpush1.msra.mxu0 0.0
    %6029 = vmatprep.subr.mxu0 0.0
    %6030 = vmatpush1.msra.mxu0 0.0
    %6031 = vmatprep.subr.mxu0 0.0
    %6032 = vmatpush1.msra.mxu0 0.0
    %6033 = vmatprep.subr.mxu0 0.0
    %6034 = vmatpush1.msra.mxu0 0.0
    %6035 = vmatprep.subr.mxu0 0.0
    %6036 = vmatpush1.msra.mxu0 0.0
    %6037 = vmatprep.subr.mxu0 0.0
    %6038 = vmatpush1.msra.mxu0 0.0
    %6039 = vmatprep.subr.mxu0 0.0
    %6040 = vmatpush1.msra.mxu0 0.0
    %6041 = vmatprep.subr.mxu0 0.0
    %6042 = vmatpush1.msra.mxu0 0.0
    %6043 = vmatprep.subr.mxu0 0.0
    %6044 = vmatpush1.msra.mxu0 0.0
    %6045 = vmatprep.subr.mxu0 0.0
    %6046 = vmatpush1.msra.mxu0 0.0
    %6047 = vmatprep.subr.mxu0 0.0
    %6048 = vmatpush1.msra.mxu0 0.0
    %6049 = vmatprep.subr.mxu0 0.0
    %6050 = vmatpush1.msra.mxu0 0.0
    %6051 = vmatprep.subr.mxu0 0.0
    %6052 = vmatpush1.msra.mxu0 0.0
    %6053 = vmatprep.subr.mxu0 0.0
    %6054 = vmatpush1.msra.mxu0 0.0
    %6055 = vmatprep.subr.mxu0 0.0
    %6056 = vmatpush1.msra.mxu0 0.0
    %6057 = vmatprep.subr.mxu0 0.0
    %6058 = vmatpush1.msra.mxu0 0.0
    %6059 = vmatprep.subr.mxu0 0.0
    %6060 = vmatpush1.msra.mxu0 0.0
    %6061 = vmatprep.mubr.f32.mxu0 0.0
    %6062 = vmatmul.mubr.f32.gmra.mrb[0].mxu0 %v5995
    %v6063 = vpop.f32.mrb[0].mxu0
    %v6064 = vadd.f32 0.0, %v6063
    %v6065 = vpop.f32.mrb[0].mxu0
    %6066 = vdwg.mxu0
    %v6067 = vadd.f32 %v5989, %v6064
    %v6068 = vxor.u32 %v6067, 2147483648
    %v6069 = vmul.f32 %v6068, 1.442695
    %v6070 = vpow.pop %v6069
    %v6071 = vadd.f32 %v6070, 1.0
    %v6072 = vrcp.pop %v6071
    %v6073 = vmul.f32 1.0, %v6072
    %v6074 = vtanh.pop %v6067
    %v6075 = vmul.f32 %v6073, %v5912
    %6077 = vrot.lane.b32.xlu0 %v6074, 80
    %v6078 = vpop.permute.xlu0 %6077
    %v6080 = vmul.f32 %v6073, %v6078
    %6082 = vrot.lane.b32.xlu0 %v6080, 16
    %v6083 = vpop.permute.xlu0 %6082
    %v6085 = vadd.f32 %v6075, %v6083
    %v6086 = vtanh.pop %v6085
    %6088 = vrot.lane.b32.xlu0 %v6086, 16
    %v6089 = vpop.permute.xlu0 %6088
    %v6091 = vmul.f32 %v6073, %v6089
    %6093 = vrot.lane.b32.xlu0 %v5053, 112
    %v6094 = vpop.permute.xlu0 %6093
    %6096 = vrot.lane.b32.xlu0 %v5399, 16
    %v6097 = vpop.permute.xlu0 %6096
    %6099 = vrot.lane.b32.xlu0 %v5572, 32
    %v6100 = vpop.permute.xlu0 %6099
    %6102 = vrot.lane.b32.xlu0 %v5745, 48
    %v6103 = vpop.permute.xlu0 %6102
    %6105 = vrot.lane.b32.xlu0 %v5918, 64
    %v6106 = vpop.permute.xlu0 %6105
    %6109 = vrot.lane.b32.xlu0 %v6091, 80
    %v6110 = vpop.permute.xlu0 %6109
    %v6112 = vsel %vm2657, %v4956, %v6094
    %v6113 = vsel %vm370, %v6112, %v5226
    %v6114 = vsel %vm2660, %v6113, %v6097
    %v6115 = vsel %vm2662, %v6114, %v6100
    %v6116 = vsel %vm2664, %v6115, %v6103
    %v6117 = vsel %vm2666, %v6116, %v6106
    %v6118 = vsel %vm2668, %v6117, %v6110
    %6119 = vst [vmem:[%s23] sm:$0x3] %v6118
    // Predicated region
    $region150: #{svs_vae_forward.1} parent=1 // pred_check
      _
    $region151: #{svs_vae_forward.1} parent=1 // pred_check_branch
      %6121 = sbr.rel (0) target = $region153
    $region152: #{svs_vae_forward.1} parent=1 // pred_region
      %s6123 = ssub.s32 32, 32
      %6124 = vsyncadd [#allocation4], %s6123
      %s6126 = sshll.u32 [#allocation28], 4
      %s6127 = int_to_ptr.vmem [resolvable:$true] %s6126
      %6129 = dma.vmem_to_hbm [thread:$0]  %s6127, 32, %s21, [#allocation4]
    $region153: #{svs_vae_forward.1} parent=1 // pred_fallthru
      _
    // Predicated region
    $region154: #{svs_vae_forward.1} parent=1 // pred_check
      _
    $region155: #{svs_vae_forward.1} parent=1 // pred_check_branch
      %6131 = sbr.rel (0) target = $region157
    $region156: #{svs_vae_forward.1} parent=1 // pred_region
      %s6133 = ssub.s32 32, 32
      %6134 = vsyncadd [#allocation30], %s6133
      %s6136 = sshll.u32 [#allocation29], 4
      %s6137 = int_to_ptr.vmem [resolvable:$true] %s6136
      %6139 = dma.vmem_to_hbm [thread:$0]  %s6137, 32, %s22, [#allocation30]
    $region157: #{svs_vae_forward.1} parent=1 // pred_fallthru
      _
    // Predicated region
    $region158: #{svs_vae_forward.1} parent=1 // pred_check
      _
    $region159: #{svs_vae_forward.1} parent=1 // pred_check_branch
      %6141 = sbr.rel (0) target = $region161
    $region160: #{svs_vae_forward.1} parent=1 // pred_region
      _
    $region161: #{svs_vae_forward.1} parent=1 // pred_fallthru
      _
    // Predicated region
    $region162: #{svs_vae_forward.1} parent=1 // pred_check
      _
    $region163: #{svs_vae_forward.1} parent=1 // pred_check_branch
      %6143 = sbr.rel (0) target = $region165
    $region164: #{svs_vae_forward.1} parent=1 // pred_region
      %6144 = dma.done [#allocation4], 32
    $region165: #{svs_vae_forward.1} parent=1 // pred_fallthru
      _
    // Predicated region
    $region166: #{svs_vae_forward.1} parent=1 // pred_check
      _
    $region167: #{svs_vae_forward.1} parent=1 // pred_check_branch
      %6146 = sbr.rel (0) target = $region169
    $region168: #{svs_vae_forward.1} parent=1 // pred_region
      %6147 = dma.done [#allocation30], 32
    $region169: #{svs_vae_forward.1} parent=1 // pred_fallthru
      _
    // Predicated region
    $region170: #{svs_vae_forward.1} parent=1 // pred_check
      _
    $region171: #{svs_vae_forward.1} parent=1 // pred_check_branch
      %6149 = sbr.rel (0) target = $region173
    $region172: #{svs_vae_forward.1} parent=1 // pred_region
      _
    $region173: #{svs_vae_forward.1} parent=1 // pred_fallthru
      _
    %6150 = vsyncpa [#allocation3], 1
    %6151 = vsyncpa [#allocation6], 1
    %6152 = vsyncpa [#allocation9], 1
    %6153 = vsyncpa [#allocation12], 1
    %6154 = vsyncpa [#allocation15], 1
    %6155 = vsyncpa [#allocation18], 1
    %6156 = vsyncpa [#allocation21], 1
    %6157 = vsyncpa [#allocation24], 1
    %6158 = vsyncpa [#allocation27], 1
    %6159 = vsyncpa [#allocation4], 1
    %6160 = vsyncpa [#allocation30], 1

</llo_original>
